<compile_context>
chip_gen: v6e
topology: v6e:2x2x1
jax: 0.10.0
libtpu: 0.0.40
codegen_flags: <defaults>
</compile_context>

<pallas_src>
import math
import functools

import jax
import jax.numpy as jnp
from jax import lax
from jax.experimental import pallas as pl
from jax.experimental.pallas import tpu as pltpu


_VMEM_LIMIT = 32 * 1024 * 1024   # explicit scoped-VMEM budget, safe on v5e/v6e/v7x


def _compiler_params(dims):
    return pltpu.CompilerParams(dimension_semantics=dims,
                                vmem_limit_bytes=_VMEM_LIMIT)


# ----------------------------------------------------------------------------
# Fused 3x3 conv (stride 1, pad 1, no bias) + folded BN + ReLU
# ----------------------------------------------------------------------------
def _pick_row_chunk(H, W, max_rows=2048):
    """Largest divisor TH of H with TH*W <= max_rows (at least 1)."""
    best = 1
    for th in range(1, H + 1):
        if H % th == 0 and th * W <= max_rows:
            best = th
    return best


def _make_conv_kernel(TH, W, Cin, Cout):
    def kernel(x_ref, w_ref, s_ref, b_ref, o_ref):
        # x_ref: (1, H+2, W+2, Cin) padded activation (bf16), VMEM-resident per batch
        # w_ref: (9, Cin, Cout) bf16 ; s_ref/b_ref: (1, Cout) f32 folded BN scale/shift
        # o_ref: (1, TH*W, Cout)
        h0 = pl.multiple_of(pl.program_id(1) * TH, TH)
        acc = jnp.zeros((TH * W, Cout), jnp.float32)
        for dh in range(3):                      # 9 taps accumulated in-kernel
            for dw in range(3):
                tap = x_ref[0, pl.ds(h0 + dh, TH), pl.ds(dw, W), :]   # (TH, W, Cin)
                tap = tap.reshape(TH * W, Cin)
                acc = acc + jnp.dot(tap, w_ref[dh * 3 + dw],
                                    preferred_element_type=jnp.float32)
        y = acc * s_ref[...] + b_ref[...]
        o_ref[0] = jnp.maximum(y, 0.0).astype(o_ref.dtype)
    return kernel


def conv3x3_bn_relu(x, w_hwio, bn_scale, bn_shift):
    """x: (B, H, W, Cin) -> (B, H*W, Cout) bf16 = relu(bn(conv3x3(x)))."""
    B, H, W, Cin = x.shape
    Cout = w_hwio.shape[-1]
    # TODO(synk): the 1-pixel spatial zero-pad stays in plain JAX (single cheap pass);
    # for very large feature maps the padded image should be row-tiled with halo DMA.
    xp = jnp.pad(x.astype(jnp.bfloat16), ((0, 0), (1, 1), (1, 1), (0, 0)))
    w9 = w_hwio.reshape(9, Cin, Cout).astype(jnp.bfloat16)
    s = bn_scale.reshape(1, Cout).astype(jnp.float32)
    b = bn_shift.reshape(1, Cout).astype(jnp.float32)

    TH = _pick_row_chunk(H, W)
    R = H // TH

    return pl.pallas_call(
        _make_conv_kernel(TH, W, Cin, Cout),
        out_shape=jax.ShapeDtypeStruct((B, H * W, Cout), jnp.bfloat16),
        grid_spec=pltpu.PrefetchScalarGridSpec(
            num_scalar_prefetch=0,
            grid=(B, R),
            in_specs=[
                # full padded image per batch; re-used (not re-DMA'd) across row chunks
                pl.BlockSpec((1, H + 2, W + 2, Cin), lambda bb, r: (bb, 0, 0, 0)),
                pl.BlockSpec((9, Cin, Cout), lambda bb, r: (0, 0, 0)),
                pl.BlockSpec((1, Cout), lambda bb, r: (0, 0)),
                pl.BlockSpec((1, Cout), lambda bb, r: (0, 0)),
            ],
            out_specs=pl.BlockSpec((1, TH * W, Cout), lambda bb, r: (bb, r, 0)),
        ),
        compiler_params=_compiler_params(("parallel", "parallel")),
    )(xp, w9, s, b)


# ----------------------------------------------------------------------------
# Fused channel self-attention: q/k/v proj + softmax(qk^T/sqrt(C)) v + residual
# + ReLU + (optionally) 2x2 average pool, one kernel invocation per batch element
# ----------------------------------------------------------------------------
def _make_attention_kernel(inv_sqrt_c, fuse_avg_pool):
    def _attend(x_ref, wq_ref, bq_ref, wkv_ref, bkv_ref):
        x = x_ref[0]                                                     # (S, C) bf16
        # q is produced pre-transposed: qT[i, s] = sum_c Wq[i, c] x[s, c] + bq[i]
        qT = lax.dot_general(wq_ref[...], x, (((1,), (1,)), ((), ())),
                             preferred_element_type=jnp.float32) + bq_ref[...]   # (C, S)
        k = jnp.dot(x, wkv_ref[0], preferred_element_type=jnp.float32) + bkv_ref[0]  # (S, C)
        v = jnp.dot(x, wkv_ref[1], preferred_element_type=jnp.float32) + bkv_ref[1]  # (S, C)
        # scores[i, j] = sum_s q[s, i] k[s, j]   (contraction over spatial positions)
        scores = jnp.dot(qT.astype(jnp.bfloat16), k.astype(jnp.bfloat16),
                         preferred_element_type=jnp.float32) * inv_sqrt_c         # (C, C)
        scores = scores - jnp.max(scores, axis=-1, keepdims=True)
        e = jnp.exp(scores)
        p = e * pl.reciprocal(jnp.sum(e, axis=-1, keepdims=True), approx=True)
        # attn[s, i] = sum_j p[i, j] v[s, j]
        attn = lax.dot_general(v.astype(jnp.bfloat16), p.astype(jnp.bfloat16),
                               (((1,), (1,)), ((), ())),
                               preferred_element_type=jnp.float32)                # (S, C)
        return jnp.maximum(x.astype(jnp.float32) + attn, 0.0)

    if fuse_avg_pool:
        def kernel(x_ref, wq_ref, bq_ref, wkv_ref, bkv_ref, pool_ref, o_ref):
            y = _attend(x_ref, wq_ref, bq_ref, wkv_ref, bkv_ref)
            # 2x2 avg-pool as a tiny (Sp, S) matmul on VMEM-resident data
            pooled = jnp.dot(pool_ref[...], y.astype(jnp.bfloat16),
                             preferred_element_type=jnp.float32)                  # (Sp, C)
            o_ref[0] = pooled.astype(o_ref.dtype)
    else:
        def kernel(x_ref, wq_ref, bq_ref, wkv_ref, bkv_ref, o_ref):
            y = _attend(x_ref, wq_ref, bq_ref, wkv_ref, bkv_ref)
            o_ref[0] = y.astype(o_ref.dtype)
    return kernel


def _build_pool_matrix(H, W, ph, pw):
    """(Hp*Wp, H*W) average-pooling matrix (exact 1/(ph*pw) weights, bf16-safe)."""
    Hp, Wp = H // ph, W // pw
    s = jnp.arange(H * W)
    h, w = s // W, s % W
    dest = (h // ph) * Wp + (w // pw)
    valid = ((h < Hp * ph) & (w < Wp * pw)).astype(jnp.float32)
    onehot = jax.nn.one_hot(dest, Hp * Wp, dtype=jnp.float32) * valid[:, None]
    return (onehot / float(ph * pw)).T.astype(jnp.bfloat16)


def _pool2d_jax(x, pool_size, pool_type):
    B, H, W, C = x.shape
    ph, pw = pool_size
    Hp, Wp = H // ph, W // pw
    xv = x[:, :Hp * ph, :Wp * pw, :].reshape(B, Hp, ph, Wp, pw, C)
    if pool_type == "avg":
        return xv.mean(axis=(2, 4))
    if pool_type == "max":
        return xv.max(axis=(2, 4))
    if pool_type == "avg+max":
        return xv.mean(axis=(2, 4)) + xv.max(axis=(2, 4))
    raise Exception("Incorrect argument!")


def attention_relu_pool(x_bsc, H, W, w_q, b_q, w_kv, b_kv, pool_size, pool_type):
    """pool(relu(x + Attention(x)));  avg-pool is fused into the kernel."""
    B, S, C = x_bsc.shape
    assert S == H * W
    inv_sqrt_c = 1.0 / math.sqrt(C)

    wq = w_q.astype(jnp.bfloat16)                      # (C, C), torch (out, in) layout
    bq = b_q.reshape(C, 1).astype(jnp.float32)
    wkv = w_kv.astype(jnp.bfloat16)                    # (2, C, C), (in, out) layout
    bkv = b_kv.reshape(2, 1, C).astype(jnp.float32)

    ph, pw = pool_size
    Hp, Wp = H // ph, W // pw
    # Only fuse the avg-pool while the O(S^2/(ph*pw)) pooling matrix stays small.
    fuse_pool = (pool_type == "avg") and (S * Hp * Wp * 2 <= 8 * 1024 * 1024)

    # v7x landmine: per-batch attention working set must fit scoped VMEM.
    approx_bytes = S * C * (2 + 3 * 4 + 4) + (Hp * Wp * S * 2 if fuse_pool else 0)
    assert approx_bytes < _VMEM_LIMIT // 2, \
        "attention working set too large for VMEM; tile the spatial axis"

    common_in_specs = [
        pl.BlockSpec((1, S, C), lambda n: (n, 0, 0)),
        pl.BlockSpec((C, C), lambda n: (0, 0)),
        pl.BlockSpec((C, 1), lambda n: (0, 0)),
        pl.BlockSpec((2, C, C), lambda n: (0, 0, 0)),
        pl.BlockSpec((2, 1, C), lambda n: (0, 0, 0)),
    ]

    if fuse_pool:
        m_pool = _build_pool_matrix(H, W, ph, pw)      # (Hp*Wp, S) bf16
        out = pl.pallas_call(
            _make_attention_kernel(inv_sqrt_c, True),
            out_shape=jax.ShapeDtypeStruct((B, Hp * Wp, C), jnp.float32),
            grid_spec=pltpu.PrefetchScalarGridSpec(
                num_scalar_prefetch=0,
                grid=(B,),
                in_specs=common_in_specs
                         + [pl.BlockSpec((Hp * Wp, S), lambda n: (0, 0))],
                out_specs=pl.BlockSpec((1, Hp * Wp, C), lambda n: (n, 0, 0)),
            ),
            compiler_params=_compiler_params(("parallel",)),
        )(x_bsc, wq, bq, wkv, bkv, m_pool)
        return out.reshape(B, Hp, Wp, C)

    # TODO(synk): max / avg+max pooling is not fused; the kernel emits the
    # full-resolution relu(x + attention) in bf16 and pooling runs in plain JAX.
    y = pl.pallas_call(
        _make_attention_kernel(inv_sqrt_c, False),
        out_shape=jax.ShapeDtypeStruct((B, S, C), jnp.bfloat16),
        grid_spec=pltpu.PrefetchScalarGridSpec(
            num_scalar_prefetch=0,
            grid=(B,),
            in_specs=common_in_specs,
            out_specs=pl.BlockSpec((1, S, C), lambda n: (n, 0, 0)),
        ),
        compiler_params=_compiler_params(("parallel",)),
    )(x_bsc, wq, bq, wkv, bkv)
    y = y.reshape(B, H, W, C).astype(jnp.float32)
    return _pool2d_jax(y, pool_size, pool_type)


# ----------------------------------------------------------------------------
# ConvBlock_Attention forward (eval mode), NCHW in / NCHW out like PyTorch
# ----------------------------------------------------------------------------
def conv_block_attention_forward(params, x_nchw, pool_size=(2, 2), pool_type="avg"):
    x = jnp.transpose(x_nchw, (0, 2, 3, 1))             # NCHW -> NHWC
    B, H, W, _ = x.shape
    y = conv3x3_bn_relu(x, params["w1"], params["bn1_scale"], params["bn1_shift"])
    y = y.reshape(B, H, W, -1)
    y = conv3x3_bn_relu(y, params["w2"], params["bn2_scale"], params["bn2_shift"])
    out = attention_relu_pool(y, H, W,
                              params["w_q"], params["b_q"],
                              params["w_kv"], params["b_kv"],
                              pool_size, pool_type)
    return jnp.transpose(out, (0, 3, 1, 2))             # NHWC -> NCHW


# ----------------------------------------------------------------------------
# Parameters matching the module's init (xavier convs, eval-mode folded BN,
# identity-initialized q/k/v 1x1 convs with zero bias)
# ----------------------------------------------------------------------------
def _fold_bn(gamma, beta, mean, var, eps=1e-5):
    scale = gamma / jnp.sqrt(var + eps)
    shift = beta - mean * scale
    return scale, shift


def build_params(key, in_channels, out_channels, eps=1e-5):
    def xavier(k, shape, fan_in, fan_out):
        bound = math.sqrt(6.0 / (fan_in + fan_out))
        return jax.random.uniform(k, shape, jnp.float32, -bound, bound)

    k1, k2 = jax.random.split(key)
    # conv weights in HWIO (tap-major ordering matches the in-kernel 9-tap loop)
    w1 = xavier(k1, (3, 3, in_channels, out_channels),
                in_channels * 9, out_channels * 9)
    w2 = xavier(k2, (3, 3, out_channels, out_channels),
                out_channels * 9, out_channels * 9)

    ones = jnp.ones((out_channels,), jnp.float32)
    zeros = jnp.zeros((out_channels,), jnp.float32)
    # eval-mode BatchNorm fold (gamma=1, beta=0, running_mean=0, running_var=1)
    bn1_scale, bn1_shift = _fold_bn(ones, zeros, zeros, ones, eps)
    bn2_scale, bn2_shift = _fold_bn(ones, zeros, zeros, ones, eps)

    eye = jnp.eye(out_channels, dtype=jnp.float32)      # init_layer_identity on q/k/v
    return {
        "w1": w1, "bn1_scale": bn1_scale, "bn1_shift": bn1_shift,
        "w2": w2, "bn2_scale": bn2_scale, "bn2_shift": bn2_shift,
        "w_q": eye,                                     # torch layout (out, in)
        "b_q": zeros,
        "w_kv": jnp.stack([eye, eye]),                  # (in, out) layout for k and v
        "b_kv": jnp.zeros((2, out_channels), jnp.float32),
    }


# ----------------------------------------------------------------------------
if __name__ == "__main__":
    batch, in_channels, out_channels = 2, 4, 64
    H = W = 16

    key = jax.random.PRNGKey(0)
    pkey, xkey = jax.random.split(key)
    params = build_params(pkey, in_channels, out_channels)
    x = jax.random.normal(xkey, (batch, in_channels, H, W), jnp.float32)

    fwd = jax.jit(functools.partial(conv_block_attention_forward,
                                    pool_size=(2, 2), pool_type="avg"))
    out = jax.block_until_ready(fwd(params, x))

    assert out.shape == (batch, out_channels, H // 2, W // 2), out.shape
    assert bool(jnp.all(jnp.isfinite(out)))
    print("KERNEL_OK")
</pallas_src>

<mosaic_0001>
module attributes {stable_mosaic.version = 11 : i64} {
  func.func @kernel(%arg0: i32, %arg1: i32, %arg2: memref<1x18x18x4xbf16, #tpu.memory_space<vmem>>, %arg3: memref<9x4x64xbf16, #tpu.memory_space<vmem>>, %arg4: memref<1x64xf32, #tpu.memory_space<vmem>>, %arg5: memref<1x64xf32, #tpu.memory_space<vmem>>, %arg6: memref<1x256x64xbf16, #tpu.memory_space<vmem>>) attributes {dimension_semantics = [#tpu.dimension_semantics<parallel>, #tpu.dimension_semantics<parallel>], iteration_bounds = array<i64: 2, 1>, scalar_prefetch = 0 : i64, scratch_operands = 0 : i64, tpu.core_type = #tpu.core_type<tc>, window_params = [{transform_indices = @transform_0, window_bounds = array<i64: 1, 18, 18, 4>}, {pipeline_mode = #tpu.pipeline_mode<synchronous>, transform_indices = @transform_1, window_bounds = array<i64: 9, 4, 64>}, {pipeline_mode = #tpu.pipeline_mode<synchronous>, transform_indices = @transform_2, window_bounds = array<i64: 1, 64>}, {pipeline_mode = #tpu.pipeline_mode<synchronous>, transform_indices = @transform_3, window_bounds = array<i64: 1, 64>}, {transform_indices = @transform_4, window_bounds = array<i64: 1, 256, 64>}]} {
    %c16_i32 = arith.constant 16 : i32
    %0 = arith.muli %arg1, %c16_i32 : i32
    %1 = tpu.assume_multiple %0, 16 : i32
    %cst = arith.constant 0.000000e+00 : f32
    %2 = vector.broadcast %cst : f32 to vector<256x64xf32>
    %c0_i32 = arith.constant 0 : i32
    %3 = arith.addi %1, %c0_i32 : i32
    %c0 = arith.constant 0 : index
    %4 = arith.index_cast %3 : i32 to index
    %c0_0 = arith.constant 0 : index
    %c0_1 = arith.constant 0 : index
    %5 = vector.load %arg2[%c0, %4, %c0_0, %c0_1] : memref<1x18x18x4xbf16, #tpu.memory_space<vmem>>, vector<1x16x16x4xbf16>
    %6 = vector.shape_cast %5 : vector<1x16x16x4xbf16> to vector<16x16x4xbf16>
    %7 = vector.shape_cast %6 : vector<16x16x4xbf16> to vector<256x4xbf16>
    %c0_2 = arith.constant 0 : index
    %c0_3 = arith.constant 0 : index
    %c0_4 = arith.constant 0 : index
    %8 = vector.load %arg3[%c0_2, %c0_3, %c0_4] : memref<9x4x64xbf16, #tpu.memory_space<vmem>>, vector<1x4x64xbf16>
    %9 = vector.shape_cast %8 : vector<1x4x64xbf16> to vector<4x64xbf16>
    %cst_5 = arith.constant dense<0.000000e+00> : vector<256x64xf32>
    %10 = tpu.matmul %7, %9, %cst_5 {dimension_numbers = #tpu.dot_dimension_numbers<[1], [0], [0], [1], [0, 0, 1, 1], [], []>} : vector<256x4xbf16>, vector<4x64xbf16>, vector<256x64xf32> -> vector<256x64xf32>
    %11 = arith.addf %2, %10 : vector<256x64xf32>
    %c0_i32_6 = arith.constant 0 : i32
    %12 = arith.addi %1, %c0_i32_6 : i32
    %c0_7 = arith.constant 0 : index
    %13 = arith.index_cast %12 : i32 to index
    %c1 = arith.constant 1 : index
    %c0_8 = arith.constant 0 : index
    %14 = vector.load %arg2[%c0_7, %13, %c1, %c0_8] : memref<1x18x18x4xbf16, #tpu.memory_space<vmem>>, vector<1x16x16x4xbf16>
    %15 = vector.shape_cast %14 : vector<1x16x16x4xbf16> to vector<16x16x4xbf16>
    %16 = vector.shape_cast %15 : vector<16x16x4xbf16> to vector<256x4xbf16>
    %c1_9 = arith.constant 1 : index
    %c0_10 = arith.constant 0 : index
    %c0_11 = arith.constant 0 : index
    %17 = vector.load %arg3[%c1_9, %c0_10, %c0_11] : memref<9x4x64xbf16, #tpu.memory_space<vmem>>, vector<1x4x64xbf16>
    %18 = vector.shape_cast %17 : vector<1x4x64xbf16> to vector<4x64xbf16>
    %cst_12 = arith.constant dense<0.000000e+00> : vector<256x64xf32>
    %19 = tpu.matmul %16, %18, %cst_12 {dimension_numbers = #tpu.dot_dimension_numbers<[1], [0], [0], [1], [0, 0, 1, 1], [], []>} : vector<256x4xbf16>, vector<4x64xbf16>, vector<256x64xf32> -> vector<256x64xf32>
    %20 = arith.addf %11, %19 : vector<256x64xf32>
    %c0_i32_13 = arith.constant 0 : i32
    %21 = arith.addi %1, %c0_i32_13 : i32
    %c0_14 = arith.constant 0 : index
    %22 = arith.index_cast %21 : i32 to index
    %c2 = arith.constant 2 : index
    %c0_15 = arith.constant 0 : index
    %23 = vector.load %arg2[%c0_14, %22, %c2, %c0_15] : memref<1x18x18x4xbf16, #tpu.memory_space<vmem>>, vector<1x16x16x4xbf16>
    %24 = vector.shape_cast %23 : vector<1x16x16x4xbf16> to vector<16x16x4xbf16>
    %25 = vector.shape_cast %24 : vector<16x16x4xbf16> to vector<256x4xbf16>
    %c2_16 = arith.constant 2 : index
    %c0_17 = arith.constant 0 : index
    %c0_18 = arith.constant 0 : index
    %26 = vector.load %arg3[%c2_16, %c0_17, %c0_18] : memref<9x4x64xbf16, #tpu.memory_space<vmem>>, vector<1x4x64xbf16>
    %27 = vector.shape_cast %26 : vector<1x4x64xbf16> to vector<4x64xbf16>
    %cst_19 = arith.constant dense<0.000000e+00> : vector<256x64xf32>
    %28 = tpu.matmul %25, %27, %cst_19 {dimension_numbers = #tpu.dot_dimension_numbers<[1], [0], [0], [1], [0, 0, 1, 1], [], []>} : vector<256x4xbf16>, vector<4x64xbf16>, vector<256x64xf32> -> vector<256x64xf32>
    %29 = arith.addf %20, %28 : vector<256x64xf32>
    %c1_i32 = arith.constant 1 : i32
    %30 = arith.addi %1, %c1_i32 : i32
    %c0_20 = arith.constant 0 : index
    %31 = arith.index_cast %30 : i32 to index
    %c0_21 = arith.constant 0 : index
    %c0_22 = arith.constant 0 : index
    %32 = vector.load %arg2[%c0_20, %31, %c0_21, %c0_22] : memref<1x18x18x4xbf16, #tpu.memory_space<vmem>>, vector<1x16x16x4xbf16>
    %33 = vector.shape_cast %32 : vector<1x16x16x4xbf16> to vector<16x16x4xbf16>
    %34 = vector.shape_cast %33 : vector<16x16x4xbf16> to vector<256x4xbf16>
    %c3 = arith.constant 3 : index
    %c0_23 = arith.constant 0 : index
    %c0_24 = arith.constant 0 : index
    %35 = vector.load %arg3[%c3, %c0_23, %c0_24] : memref<9x4x64xbf16, #tpu.memory_space<vmem>>, vector<1x4x64xbf16>
    %36 = vector.shape_cast %35 : vector<1x4x64xbf16> to vector<4x64xbf16>
    %cst_25 = arith.constant dense<0.000000e+00> : vector<256x64xf32>
    %37 = tpu.matmul %34, %36, %cst_25 {dimension_numbers = #tpu.dot_dimension_numbers<[1], [0], [0], [1], [0, 0, 1, 1], [], []>} : vector<256x4xbf16>, vector<4x64xbf16>, vector<256x64xf32> -> vector<256x64xf32>
    %38 = arith.addf %29, %37 : vector<256x64xf32>
    %c1_i32_26 = arith.constant 1 : i32
    %39 = arith.addi %1, %c1_i32_26 : i32
    %c0_27 = arith.constant 0 : index
    %40 = arith.index_cast %39 : i32 to index
    %c1_28 = arith.constant 1 : index
    %c0_29 = arith.constant 0 : index
    %41 = vector.load %arg2[%c0_27, %40, %c1_28, %c0_29] : memref<1x18x18x4xbf16, #tpu.memory_space<vmem>>, vector<1x16x16x4xbf16>
    %42 = vector.shape_cast %41 : vector<1x16x16x4xbf16> to vector<16x16x4xbf16>
    %43 = vector.shape_cast %42 : vector<16x16x4xbf16> to vector<256x4xbf16>
    %c4 = arith.constant 4 : index
    %c0_30 = arith.constant 0 : index
    %c0_31 = arith.constant 0 : index
    %44 = vector.load %arg3[%c4, %c0_30, %c0_31] : memref<9x4x64xbf16, #tpu.memory_space<vmem>>, vector<1x4x64xbf16>
    %45 = vector.shape_cast %44 : vector<1x4x64xbf16> to vector<4x64xbf16>
    %cst_32 = arith.constant dense<0.000000e+00> : vector<256x64xf32>
    %46 = tpu.matmul %43, %45, %cst_32 {dimension_numbers = #tpu.dot_dimension_numbers<[1], [0], [0], [1], [0, 0, 1, 1], [], []>} : vector<256x4xbf16>, vector<4x64xbf16>, vector<256x64xf32> -> vector<256x64xf32>
    %47 = arith.addf %38, %46 : vector<256x64xf32>
    %c1_i32_33 = arith.constant 1 : i32
    %48 = arith.addi %1, %c1_i32_33 : i32
    %c0_34 = arith.constant 0 : index
    %49 = arith.index_cast %48 : i32 to index
    %c2_35 = arith.constant 2 : index
    %c0_36 = arith.constant 0 : index
    %50 = vector.load %arg2[%c0_34, %49, %c2_35, %c0_36] : memref<1x18x18x4xbf16, #tpu.memory_space<vmem>>, vector<1x16x16x4xbf16>
    %51 = vector.shape_cast %50 : vector<1x16x16x4xbf16> to vector<16x16x4xbf16>
    %52 = vector.shape_cast %51 : vector<16x16x4xbf16> to vector<256x4xbf16>
    %c5 = arith.constant 5 : index
    %c0_37 = arith.constant 0 : index
    %c0_38 = arith.constant 0 : index
    %53 = vector.load %arg3[%c5, %c0_37, %c0_38] : memref<9x4x64xbf16, #tpu.memory_space<vmem>>, vector<1x4x64xbf16>
    %54 = vector.shape_cast %53 : vector<1x4x64xbf16> to vector<4x64xbf16>
    %cst_39 = arith.constant dense<0.000000e+00> : vector<256x64xf32>
    %55 = tpu.matmul %52, %54, %cst_39 {dimension_numbers = #tpu.dot_dimension_numbers<[1], [0], [0], [1], [0, 0, 1, 1], [], []>} : vector<256x4xbf16>, vector<4x64xbf16>, vector<256x64xf32> -> vector<256x64xf32>
    %56 = arith.addf %47, %55 : vector<256x64xf32>
    %c2_i32 = arith.constant 2 : i32
    %57 = arith.addi %1, %c2_i32 : i32
    %c0_40 = arith.constant 0 : index
    %58 = arith.index_cast %57 : i32 to index
    %c0_41 = arith.constant 0 : index
    %c0_42 = arith.constant 0 : index
    %59 = vector.load %arg2[%c0_40, %58, %c0_41, %c0_42] : memref<1x18x18x4xbf16, #tpu.memory_space<vmem>>, vector<1x16x16x4xbf16>
    %60 = vector.shape_cast %59 : vector<1x16x16x4xbf16> to vector<16x16x4xbf16>
    %61 = vector.shape_cast %60 : vector<16x16x4xbf16> to vector<256x4xbf16>
    %c6 = arith.constant 6 : index
    %c0_43 = arith.constant 0 : index
    %c0_44 = arith.constant 0 : index
    %62 = vector.load %arg3[%c6, %c0_43, %c0_44] : memref<9x4x64xbf16, #tpu.memory_space<vmem>>, vector<1x4x64xbf16>
    %63 = vector.shape_cast %62 : vector<1x4x64xbf16> to vector<4x64xbf16>
    %cst_45 = arith.constant dense<0.000000e+00> : vector<256x64xf32>
    %64 = tpu.matmul %61, %63, %cst_45 {dimension_numbers = #tpu.dot_dimension_numbers<[1], [0], [0], [1], [0, 0, 1, 1], [], []>} : vector<256x4xbf16>, vector<4x64xbf16>, vector<256x64xf32> -> vector<256x64xf32>
    %65 = arith.addf %56, %64 : vector<256x64xf32>
    %c2_i32_46 = arith.constant 2 : i32
    %66 = arith.addi %1, %c2_i32_46 : i32
    %c0_47 = arith.constant 0 : index
    %67 = arith.index_cast %66 : i32 to index
    %c1_48 = arith.constant 1 : index
    %c0_49 = arith.constant 0 : index
    %68 = vector.load %arg2[%c0_47, %67, %c1_48, %c0_49] : memref<1x18x18x4xbf16, #tpu.memory_space<vmem>>, vector<1x16x16x4xbf16>
    %69 = vector.shape_cast %68 : vector<1x16x16x4xbf16> to vector<16x16x4xbf16>
    %70 = vector.shape_cast %69 : vector<16x16x4xbf16> to vector<256x4xbf16>
    %c7 = arith.constant 7 : index
    %c0_50 = arith.constant 0 : index
    %c0_51 = arith.constant 0 : index
    %71 = vector.load %arg3[%c7, %c0_50, %c0_51] : memref<9x4x64xbf16, #tpu.memory_space<vmem>>, vector<1x4x64xbf16>
    %72 = vector.shape_cast %71 : vector<1x4x64xbf16> to vector<4x64xbf16>
    %cst_52 = arith.constant dense<0.000000e+00> : vector<256x64xf32>
    %73 = tpu.matmul %70, %72, %cst_52 {dimension_numbers = #tpu.dot_dimension_numbers<[1], [0], [0], [1], [0, 0, 1, 1], [], []>} : vector<256x4xbf16>, vector<4x64xbf16>, vector<256x64xf32> -> vector<256x64xf32>
    %74 = arith.addf %65, %73 : vector<256x64xf32>
    %c2_i32_53 = arith.constant 2 : i32
    %75 = arith.addi %1, %c2_i32_53 : i32
    %c0_54 = arith.constant 0 : index
    %76 = arith.index_cast %75 : i32 to index
    %c2_55 = arith.constant 2 : index
    %c0_56 = arith.constant 0 : index
    %77 = vector.load %arg2[%c0_54, %76, %c2_55, %c0_56] : memref<1x18x18x4xbf16, #tpu.memory_space<vmem>>, vector<1x16x16x4xbf16>
    %78 = vector.shape_cast %77 : vector<1x16x16x4xbf16> to vector<16x16x4xbf16>
    %79 = vector.shape_cast %78 : vector<16x16x4xbf16> to vector<256x4xbf16>
    %c8 = arith.constant 8 : index
    %c0_57 = arith.constant 0 : index
    %c0_58 = arith.constant 0 : index
    %80 = vector.load %arg3[%c8, %c0_57, %c0_58] : memref<9x4x64xbf16, #tpu.memory_space<vmem>>, vector<1x4x64xbf16>
    %81 = vector.shape_cast %80 : vector<1x4x64xbf16> to vector<4x64xbf16>
    %cst_59 = arith.constant dense<0.000000e+00> : vector<256x64xf32>
    %82 = tpu.matmul %79, %81, %cst_59 {dimension_numbers = #tpu.dot_dimension_numbers<[1], [0], [0], [1], [0, 0, 1, 1], [], []>} : vector<256x4xbf16>, vector<4x64xbf16>, vector<256x64xf32> -> vector<256x64xf32>
    %83 = arith.addf %74, %82 : vector<256x64xf32>
    %c0_60 = arith.constant 0 : index
    %c0_61 = arith.constant 0 : index
    %84 = vector.load %arg4[%c0_60, %c0_61] : memref<1x64xf32, #tpu.memory_space<vmem>>, vector<1x64xf32>
    %85 = vector.broadcast %84 : vector<1x64xf32> to vector<256x64xf32>
    %86 = arith.mulf %83, %85 : vector<256x64xf32>
    %c0_62 = arith.constant 0 : index
    %c0_63 = arith.constant 0 : index
    %87 = vector.load %arg5[%c0_62, %c0_63] : memref<1x64xf32, #tpu.memory_space<vmem>>, vector<1x64xf32>
    %88 = vector.broadcast %87 : vector<1x64xf32> to vector<256x64xf32>
    %89 = arith.addf %86, %88 : vector<256x64xf32>
    %cst_64 = arith.constant 0.000000e+00 : f32
    %90 = vector.broadcast %cst_64 : f32 to vector<256x64xf32>
    %91 = arith.maximumf %89, %90 : vector<256x64xf32>
    %92 = arith.truncf %91 : vector<256x64xf32> to vector<256x64xbf16>
    %c0_65 = arith.constant 0 : index
    %c0_66 = arith.constant 0 : index
    %c0_67 = arith.constant 0 : index
    %93 = vector.load %arg6[%c0_65, %c0_66, %c0_67] : memref<1x256x64xbf16, #tpu.memory_space<vmem>>, vector<1x256x64xbf16>
    %94 = vector.shape_cast %93 : vector<1x256x64xbf16> to vector<256x64xbf16>
    %95 = vector.shape_cast %92 : vector<256x64xbf16> to vector<1x256x64xbf16>
    tpu.vector_store %arg6[%c0_65, %c0_66, %c0_67], %95 {strides = array<i32>} : memref<1x256x64xbf16, #tpu.memory_space<vmem>>, vector<1x256x64xbf16>,
    return
  }
  func.func @transform_0(%arg0: i32, %arg1: i32) -> (i32, i32, i32, i32) {
    %c0_i32 = arith.constant 0 : i32
    %c0_i32_0 = arith.constant 0 : i32
    %c0_i32_1 = arith.constant 0 : i32
    %c0_i32_2 = arith.constant 0 : i32
    return %arg0, %c0_i32, %c0_i32_0, %c0_i32_1 : i32, i32, i32, i32
  }
  func.func @transform_1(%arg0: i32, %arg1: i32) -> (i32, i32, i32) {
    %c0_i32 = arith.constant 0 : i32
    %c0_i32_0 = arith.constant 0 : i32
    %c0_i32_1 = arith.constant 0 : i32
    %c0_i32_2 = arith.constant 0 : i32
    return %c0_i32, %c0_i32_0, %c0_i32_1 : i32, i32, i32
  }
  func.func @transform_2(%arg0: i32, %arg1: i32) -> (i32, i32) {
    %c0_i32 = arith.constant 0 : i32
    %c0_i32_0 = arith.constant 0 : i32
    %c0_i32_1 = arith.constant 0 : i32
    return %c0_i32, %c0_i32_0 : i32, i32
  }
  func.func @transform_3(%arg0: i32, %arg1: i32) -> (i32, i32) {
    %c0_i32 = arith.constant 0 : i32
    %c0_i32_0 = arith.constant 0 : i32
    %c0_i32_1 = arith.constant 0 : i32
    return %c0_i32, %c0_i32_0 : i32, i32
  }
  func.func @transform_4(%arg0: i32, %arg1: i32) -> (i32, i32, i32) {
    %c0_i32 = arith.constant 0 : i32
    %c0_i32_0 = arith.constant 0 : i32
    return %arg0, %arg1, %c0_i32 : i32, i32, i32
  }
}

module attributes {stable_mosaic.version = 11 : i64} {
  func.func @kernel(%arg0: i32, %arg1: i32, %arg2: memref<1x18x18x64xbf16, #tpu.memory_space<vmem>>, %arg3: memref<9x64x64xbf16, #tpu.memory_space<vmem>>, %arg4: memref<1x64xf32, #tpu.memory_space<vmem>>, %arg5: memref<1x64xf32, #tpu.memory_space<vmem>>, %arg6: memref<1x256x64xbf16, #tpu.memory_space<vmem>>) attributes {dimension_semantics = [#tpu.dimension_semantics<parallel>, #tpu.dimension_semantics<parallel>], iteration_bounds = array<i64: 2, 1>, scalar_prefetch = 0 : i64, scratch_operands = 0 : i64, tpu.core_type = #tpu.core_type<tc>, window_params = [{transform_indices = @transform_0, window_bounds = array<i64: 1, 18, 18, 64>}, {pipeline_mode = #tpu.pipeline_mode<synchronous>, transform_indices = @transform_1, window_bounds = array<i64: 9, 64, 64>}, {pipeline_mode = #tpu.pipeline_mode<synchronous>, transform_indices = @transform_2, window_bounds = array<i64: 1, 64>}, {pipeline_mode = #tpu.pipeline_mode<synchronous>, transform_indices = @transform_3, window_bounds = array<i64: 1, 64>}, {transform_indices = @transform_4, window_bounds = array<i64: 1, 256, 64>}]} {
    %c16_i32 = arith.constant 16 : i32
    %0 = arith.muli %arg1, %c16_i32 : i32
    %1 = tpu.assume_multiple %0, 16 : i32
    %cst = arith.constant 0.000000e+00 : f32
    %2 = vector.broadcast %cst : f32 to vector<256x64xf32>
    %c0_i32 = arith.constant 0 : i32
    %3 = arith.addi %1, %c0_i32 : i32
    %c0 = arith.constant 0 : index
    %4 = arith.index_cast %3 : i32 to index
    %c0_0 = arith.constant 0 : index
    %c0_1 = arith.constant 0 : index
    %5 = vector.load %arg2[%c0, %4, %c0_0, %c0_1] : memref<1x18x18x64xbf16, #tpu.memory_space<vmem>>, vector<1x16x16x64xbf16>
    %6 = vector.shape_cast %5 : vector<1x16x16x64xbf16> to vector<16x16x64xbf16>
    %7 = vector.shape_cast %6 : vector<16x16x64xbf16> to vector<256x64xbf16>
    %c0_2 = arith.constant 0 : index
    %c0_3 = arith.constant 0 : index
    %c0_4 = arith.constant 0 : index
    %8 = vector.load %arg3[%c0_2, %c0_3, %c0_4] : memref<9x64x64xbf16, #tpu.memory_space<vmem>>, vector<1x64x64xbf16>
    %9 = vector.shape_cast %8 : vector<1x64x64xbf16> to vector<64x64xbf16>
    %cst_5 = arith.constant dense<0.000000e+00> : vector<256x64xf32>
    %10 = tpu.matmul %7, %9, %cst_5 {dimension_numbers = #tpu.dot_dimension_numbers<[1], [0], [0], [1], [0, 0, 1, 1], [], []>} : vector<256x64xbf16>, vector<64x64xbf16>, vector<256x64xf32> -> vector<256x64xf32>
    %11 = arith.addf %2, %10 : vector<256x64xf32>
    %c0_i32_6 = arith.constant 0 : i32
    %12 = arith.addi %1, %c0_i32_6 : i32
    %c0_7 = arith.constant 0 : index
    %13 = arith.index_cast %12 : i32 to index
    %c1 = arith.constant 1 : index
    %c0_8 = arith.constant 0 : index
    %14 = vector.load %arg2[%c0_7, %13, %c1, %c0_8] : memref<1x18x18x64xbf16, #tpu.memory_space<vmem>>, vector<1x16x16x64xbf16>
    %15 = vector.shape_cast %14 : vector<1x16x16x64xbf16> to vector<16x16x64xbf16>
    %16 = vector.shape_cast %15 : vector<16x16x64xbf16> to vector<256x64xbf16>
    %c1_9 = arith.constant 1 : index
    %c0_10 = arith.constant 0 : index
    %c0_11 = arith.constant 0 : index
    %17 = vector.load %arg3[%c1_9, %c0_10, %c0_11] : memref<9x64x64xbf16, #tpu.memory_space<vmem>>, vector<1x64x64xbf16>
    %18 = vector.shape_cast %17 : vector<1x64x64xbf16> to vector<64x64xbf16>
    %cst_12 = arith.constant dense<0.000000e+00> : vector<256x64xf32>
    %19 = tpu.matmul %16, %18, %cst_12 {dimension_numbers = #tpu.dot_dimension_numbers<[1], [0], [0], [1], [0, 0, 1, 1], [], []>} : vector<256x64xbf16>, vector<64x64xbf16>, vector<256x64xf32> -> vector<256x64xf32>
    %20 = arith.addf %11, %19 : vector<256x64xf32>
    %c0_i32_13 = arith.constant 0 : i32
    %21 = arith.addi %1, %c0_i32_13 : i32
    %c0_14 = arith.constant 0 : index
    %22 = arith.index_cast %21 : i32 to index
    %c2 = arith.constant 2 : index
    %c0_15 = arith.constant 0 : index
    %23 = vector.load %arg2[%c0_14, %22, %c2, %c0_15] : memref<1x18x18x64xbf16, #tpu.memory_space<vmem>>, vector<1x16x16x64xbf16>
    %24 = vector.shape_cast %23 : vector<1x16x16x64xbf16> to vector<16x16x64xbf16>
    %25 = vector.shape_cast %24 : vector<16x16x64xbf16> to vector<256x64xbf16>
    %c2_16 = arith.constant 2 : index
    %c0_17 = arith.constant 0 : index
    %c0_18 = arith.constant 0 : index
    %26 = vector.load %arg3[%c2_16, %c0_17, %c0_18] : memref<9x64x64xbf16, #tpu.memory_space<vmem>>, vector<1x64x64xbf16>
    %27 = vector.shape_cast %26 : vector<1x64x64xbf16> to vector<64x64xbf16>
    %cst_19 = arith.constant dense<0.000000e+00> : vector<256x64xf32>
    %28 = tpu.matmul %25, %27, %cst_19 {dimension_numbers = #tpu.dot_dimension_numbers<[1], [0], [0], [1], [0, 0, 1, 1], [], []>} : vector<256x64xbf16>, vector<64x64xbf16>, vector<256x64xf32> -> vector<256x64xf32>
    %29 = arith.addf %20, %28 : vector<256x64xf32>
    %c1_i32 = arith.constant 1 : i32
    %30 = arith.addi %1, %c1_i32 : i32
    %c0_20 = arith.constant 0 : index
    %31 = arith.index_cast %30 : i32 to index
    %c0_21 = arith.constant 0 : index
    %c0_22 = arith.constant 0 : index
    %32 = vector.load %arg2[%c0_20, %31, %c0_21, %c0_22] : memref<1x18x18x64xbf16, #tpu.memory_space<vmem>>, vector<1x16x16x64xbf16>
    %33 = vector.shape_cast %32 : vector<1x16x16x64xbf16> to vector<16x16x64xbf16>
    %34 = vector.shape_cast %33 : vector<16x16x64xbf16> to vector<256x64xbf16>
    %c3 = arith.constant 3 : index
    %c0_23 = arith.constant 0 : index
    %c0_24 = arith.constant 0 : index
    %35 = vector.load %arg3[%c3, %c0_23, %c0_24] : memref<9x64x64xbf16, #tpu.memory_space<vmem>>, vector<1x64x64xbf16>
    %36 = vector.shape_cast %35 : vector<1x64x64xbf16> to vector<64x64xbf16>
    %cst_25 = arith.constant dense<0.000000e+00> : vector<256x64xf32>
    %37 = tpu.matmul %34, %36, %cst_25 {dimension_numbers = #tpu.dot_dimension_numbers<[1], [0], [0], [1], [0, 0, 1, 1], [], []>} : vector<256x64xbf16>, vector<64x64xbf16>, vector<256x64xf32> -> vector<256x64xf32>
    %38 = arith.addf %29, %37 : vector<256x64xf32>
    %c1_i32_26 = arith.constant 1 : i32
    %39 = arith.addi %1, %c1_i32_26 : i32
    %c0_27 = arith.constant 0 : index
    %40 = arith.index_cast %39 : i32 to index
    %c1_28 = arith.constant 1 : index
    %c0_29 = arith.constant 0 : index
    %41 = vector.load %arg2[%c0_27, %40, %c1_28, %c0_29] : memref<1x18x18x64xbf16, #tpu.memory_space<vmem>>, vector<1x16x16x64xbf16>
    %42 = vector.shape_cast %41 : vector<1x16x16x64xbf16> to vector<16x16x64xbf16>
    %43 = vector.shape_cast %42 : vector<16x16x64xbf16> to vector<256x64xbf16>
    %c4 = arith.constant 4 : index
    %c0_30 = arith.constant 0 : index
    %c0_31 = arith.constant 0 : index
    %44 = vector.load %arg3[%c4, %c0_30, %c0_31] : memref<9x64x64xbf16, #tpu.memory_space<vmem>>, vector<1x64x64xbf16>
    %45 = vector.shape_cast %44 : vector<1x64x64xbf16> to vector<64x64xbf16>
    %cst_32 = arith.constant dense<0.000000e+00> : vector<256x64xf32>
    %46 = tpu.matmul %43, %45, %cst_32 {dimension_numbers = #tpu.dot_dimension_numbers<[1], [0], [0], [1], [0, 0, 1, 1], [], []>} : vector<256x64xbf16>, vector<64x64xbf16>, vector<256x64xf32> -> vector<256x64xf32>
    %47 = arith.addf %38, %46 : vector<256x64xf32>
    %c1_i32_33 = arith.constant 1 : i32
    %48 = arith.addi %1, %c1_i32_33 : i32
    %c0_34 = arith.constant 0 : index
    %49 = arith.index_cast %48 : i32 to index
    %c2_35 = arith.constant 2 : index
    %c0_36 = arith.constant 0 : index
    %50 = vector.load %arg2[%c0_34, %49, %c2_35, %c0_36] : memref<1x18x18x64xbf16, #tpu.memory_space<vmem>>, vector<1x16x16x64xbf16>
    %51 = vector.shape_cast %50 : vector<1x16x16x64xbf16> to vector<16x16x64xbf16>
    %52 = vector.shape_cast %51 : vector<16x16x64xbf16> to vector<256x64xbf16>
    %c5 = arith.constant 5 : index
    %c0_37 = arith.constant 0 : index
    %c0_38 = arith.constant 0 : index
    %53 = vector.load %arg3[%c5, %c0_37, %c0_38] : memref<9x64x64xbf16, #tpu.memory_space<vmem>>, vector<1x64x64xbf16>
    %54 = vector.shape_cast %53 : vector<1x64x64xbf16> to vector<64x64xbf16>
    %cst_39 = arith.constant dense<0.000000e+00> : vector<256x64xf32>
    %55 = tpu.matmul %52, %54, %cst_39 {dimension_numbers = #tpu.dot_dimension_numbers<[1], [0], [0], [1], [0, 0, 1, 1], [], []>} : vector<256x64xbf16>, vector<64x64xbf16>, vector<256x64xf32> -> vector<256x64xf32>
    %56 = arith.addf %47, %55 : vector<256x64xf32>
    %c2_i32 = arith.constant 2 : i32
    %57 = arith.addi %1, %c2_i32 : i32
    %c0_40 = arith.constant 0 : index
    %58 = arith.index_cast %57 : i32 to index
    %c0_41 = arith.constant 0 : index
    %c0_42 = arith.constant 0 : index
    %59 = vector.load %arg2[%c0_40, %58, %c0_41, %c0_42] : memref<1x18x18x64xbf16, #tpu.memory_space<vmem>>, vector<1x16x16x64xbf16>
    %60 = vector.shape_cast %59 : vector<1x16x16x64xbf16> to vector<16x16x64xbf16>
    %61 = vector.shape_cast %60 : vector<16x16x64xbf16> to vector<256x64xbf16>
    %c6 = arith.constant 6 : index
    %c0_43 = arith.constant 0 : index
    %c0_44 = arith.constant 0 : index
    %62 = vector.load %arg3[%c6, %c0_43, %c0_44] : memref<9x64x64xbf16, #tpu.memory_space<vmem>>, vector<1x64x64xbf16>
    %63 = vector.shape_cast %62 : vector<1x64x64xbf16> to vector<64x64xbf16>
    %cst_45 = arith.constant dense<0.000000e+00> : vector<256x64xf32>
    %64 = tpu.matmul %61, %63, %cst_45 {dimension_numbers = #tpu.dot_dimension_numbers<[1], [0], [0], [1], [0, 0, 1, 1], [], []>} : vector<256x64xbf16>, vector<64x64xbf16>, vector<256x64xf32> -> vector<256x64xf32>
    %65 = arith.addf %56, %64 : vector<256x64xf32>
    %c2_i32_46 = arith.constant 2 : i32
    %66 = arith.addi %1, %c2_i32_46 : i32
    %c0_47 = arith.constant 0 : index
    %67 = arith.index_cast %66 : i32 to index
    %c1_48 = arith.constant 1 : index
    %c0_49 = arith.constant 0 : index
    %68 = vector.load %arg2[%c0_47, %67, %c1_48, %c0_49] : memref<1x18x18x64xbf16, #tpu.memory_space<vmem>>, vector<1x16x16x64xbf16>
    %69 = vector.shape_cast %68 : vector<1x16x16x64xbf16> to vector<16x16x64xbf16>
    %70 = vector.shape_cast %69 : vector<16x16x64xbf16> to vector<256x64xbf16>
    %c7 = arith.constant 7 : index
    %c0_50 = arith.constant 0 : index
    %c0_51 = arith.constant 0 : index
    %71 = vector.load %arg3[%c7, %c0_50, %c0_51] : memref<9x64x64xbf16, #tpu.memory_space<vmem>>, vector<1x64x64xbf16>
    %72 = vector.shape_cast %71 : vector<1x64x64xbf16> to vector<64x64xbf16>
    %cst_52 = arith.constant dense<0.000000e+00> : vector<256x64xf32>
    %73 = tpu.matmul %70, %72, %cst_52 {dimension_numbers = #tpu.dot_dimension_numbers<[1], [0], [0], [1], [0, 0, 1, 1], [], []>} : vector<256x64xbf16>, vector<64x64xbf16>, vector<256x64xf32> -> vector<256x64xf32>
    %74 = arith.addf %65, %73 : vector<256x64xf32>
    %c2_i32_53 = arith.constant 2 : i32
    %75 = arith.addi %1, %c2_i32_53 : i32
    %c0_54 = arith.constant 0 : index
    %76 = arith.index_cast %75 : i32 to index
    %c2_55 = arith.constant 2 : index
    %c0_56 = arith.constant 0 : index
    %77 = vector.load %arg2[%c0_54, %76, %c2_55, %c0_56] : memref<1x18x18x64xbf16, #tpu.memory_space<vmem>>, vector<1x16x16x64xbf16>
    %78 = vector.shape_cast %77 : vector<1x16x16x64xbf16> to vector<16x16x64xbf16>
    %79 = vector.shape_cast %78 : vector<16x16x64xbf16> to vector<256x64xbf16>
    %c8 = arith.constant 8 : index
    %c0_57 = arith.constant 0 : index
    %c0_58 = arith.constant 0 : index
    %80 = vector.load %arg3[%c8, %c0_57, %c0_58] : memref<9x64x64xbf16, #tpu.memory_space<vmem>>, vector<1x64x64xbf16>
    %81 = vector.shape_cast %80 : vector<1x64x64xbf16> to vector<64x64xbf16>
    %cst_59 = arith.constant dense<0.000000e+00> : vector<256x64xf32>
    %82 = tpu.matmul %79, %81, %cst_59 {dimension_numbers = #tpu.dot_dimension_numbers<[1], [0], [0], [1], [0, 0, 1, 1], [], []>} : vector<256x64xbf16>, vector<64x64xbf16>, vector<256x64xf32> -> vector<256x64xf32>
    %83 = arith.addf %74, %82 : vector<256x64xf32>
    %c0_60 = arith.constant 0 : index
    %c0_61 = arith.constant 0 : index
    %84 = vector.load %arg4[%c0_60, %c0_61] : memref<1x64xf32, #tpu.memory_space<vmem>>, vector<1x64xf32>
    %85 = vector.broadcast %84 : vector<1x64xf32> to vector<256x64xf32>
    %86 = arith.mulf %83, %85 : vector<256x64xf32>
    %c0_62 = arith.constant 0 : index
    %c0_63 = arith.constant 0 : index
    %87 = vector.load %arg5[%c0_62, %c0_63] : memref<1x64xf32, #tpu.memory_space<vmem>>, vector<1x64xf32>
    %88 = vector.broadcast %87 : vector<1x64xf32> to vector<256x64xf32>
    %89 = arith.addf %86, %88 : vector<256x64xf32>
    %cst_64 = arith.constant 0.000000e+00 : f32
    %90 = vector.broadcast %cst_64 : f32 to vector<256x64xf32>
    %91 = arith.maximumf %89, %90 : vector<256x64xf32>
    %92 = arith.truncf %91 : vector<256x64xf32> to vector<256x64xbf16>
    %c0_65 = arith.constant 0 : index
    %c0_66 = arith.constant 0 : index
    %c0_67 = arith.constant 0 : index
    %93 = vector.load %arg6[%c0_65, %c0_66, %c0_67] : memref<1x256x64xbf16, #tpu.memory_space<vmem>>, vector<1x256x64xbf16>
    %94 = vector.shape_cast %93 : vector<1x256x64xbf16> to vector<256x64xbf16>
    %95 = vector.shape_cast %92 : vector<256x64xbf16> to vector<1x256x64xbf16>
    tpu.vector_store %arg6[%c0_65, %c0_66, %c0_67], %95 {strides = array<i32>} : memref<1x256x64xbf16, #tpu.memory_space<vmem>>, vector<1x256x64xbf16>,
    return
  }
  func.func @transform_0(%arg0: i32, %arg1: i32) -> (i32, i32, i32, i32) {
    %c0_i32 = arith.constant 0 : i32
    %c0_i32_0 = arith.constant 0 : i32
    %c0_i32_1 = arith.constant 0 : i32
    %c0_i32_2 = arith.constant 0 : i32
    return %arg0, %c0_i32, %c0_i32_0, %c0_i32_1 : i32, i32, i32, i32
  }
  func.func @transform_1(%arg0: i32, %arg1: i32) -> (i32, i32, i32) {
    %c0_i32 = arith.constant 0 : i32
    %c0_i32_0 = arith.constant 0 : i32
    %c0_i32_1 = arith.constant 0 : i32
    %c0_i32_2 = arith.constant 0 : i32
    return %c0_i32, %c0_i32_0, %c0_i32_1 : i32, i32, i32
  }
  func.func @transform_2(%arg0: i32, %arg1: i32) -> (i32, i32) {
    %c0_i32 = arith.constant 0 : i32
    %c0_i32_0 = arith.constant 0 : i32
    %c0_i32_1 = arith.constant 0 : i32
    return %c0_i32, %c0_i32_0 : i32, i32
  }
  func.func @transform_3(%arg0: i32, %arg1: i32) -> (i32, i32) {
    %c0_i32 = arith.constant 0 : i32
    %c0_i32_0 = arith.constant 0 : i32
    %c0_i32_1 = arith.constant 0 : i32
    return %c0_i32, %c0_i32_0 : i32, i32
  }
  func.func @transform_4(%arg0: i32, %arg1: i32) -> (i32, i32, i32) {
    %c0_i32 = arith.constant 0 : i32
    %c0_i32_0 = arith.constant 0 : i32
    return %arg0, %arg1, %c0_i32 : i32, i32, i32
  }
}

module attributes {stable_mosaic.version = 11 : i64} {
  func.func @kernel(%arg0: i32, %arg1: memref<1x256x64xbf16, #tpu.memory_space<vmem>>, %arg2: memref<64x64xbf16, #tpu.memory_space<vmem>>, %arg3: memref<64x1xf32, #tpu.memory_space<vmem>>, %arg4: memref<2x64x64xbf16, #tpu.memory_space<vmem>>, %arg5: memref<2x1x64xf32, #tpu.memory_space<vmem>>, %arg6: memref<64x256xbf16, #tpu.memory_space<vmem>>, %arg7: memref<1x64x64xf32, #tpu.memory_space<vmem>>) attributes {dimension_semantics = [#tpu.dimension_semantics<parallel>], iteration_bounds = array<i64: 2>, scalar_prefetch = 0 : i64, scratch_operands = 0 : i64, tpu.core_type = #tpu.core_type<tc>, window_params = [{transform_indices = @transform_0, window_bounds = array<i64: 1, 256, 64>}, {pipeline_mode = #tpu.pipeline_mode<synchronous>, transform_indices = @transform_1, window_bounds = array<i64: 64, 64>}, {pipeline_mode = #tpu.pipeline_mode<synchronous>, transform_indices = @transform_2, window_bounds = array<i64: 64, 1>}, {pipeline_mode = #tpu.pipeline_mode<synchronous>, transform_indices = @transform_3, window_bounds = array<i64: 2, 64, 64>}, {pipeline_mode = #tpu.pipeline_mode<synchronous>, transform_indices = @transform_4, window_bounds = array<i64: 2, 1, 64>}, {pipeline_mode = #tpu.pipeline_mode<synchronous>, transform_indices = @transform_5, window_bounds = array<i64: 64, 256>}, {transform_indices = @transform_6, window_bounds = array<i64: 1, 64, 64>}]} {
    %c0 = arith.constant 0 : index
    %c0_0 = arith.constant 0 : index
    %c0_1 = arith.constant 0 : index
    %0 = vector.load %arg1[%c0, %c0_0, %c0_1] : memref<1x256x64xbf16, #tpu.memory_space<vmem>>, vector<1x256x64xbf16>
    %1 = vector.shape_cast %0 : vector<1x256x64xbf16> to vector<256x64xbf16>
    %c0_2 = arith.constant 0 : index
    %c0_3 = arith.constant 0 : index
    %2 = vector.load %arg2[%c0_2, %c0_3] : memref<64x64xbf16, #tpu.memory_space<vmem>>, vector<64x64xbf16>
    %cst = arith.constant dense<0.000000e+00> : vector<64x256xf32>
    %3 = tpu.matmul %2, %1, %cst {dimension_numbers = #tpu.dot_dimension_numbers<[1], [1], [0], [0], [0, 0, 1, 0], [], []>} : vector<64x64xbf16>, vector<256x64xbf16>, vector<64x256xf32> -> vector<64x256xf32>
    %c0_4 = arith.constant 0 : index
    %c0_5 = arith.constant 0 : index
    %4 = vector.load %arg3[%c0_4, %c0_5] : memref<64x1xf32, #tpu.memory_space<vmem>>, vector<64x1xf32>
    %5 = vector.broadcast %4 : vector<64x1xf32> to vector<64x256xf32>
    %6 = arith.addf %3, %5 : vector<64x256xf32>
    %c0_6 = arith.constant 0 : index
    %c0_7 = arith.constant 0 : index
    %c0_8 = arith.constant 0 : index
    %7 = vector.load %arg4[%c0_6, %c0_7, %c0_8] : memref<2x64x64xbf16, #tpu.memory_space<vmem>>, vector<1x64x64xbf16>
    %8 = vector.shape_cast %7 : vector<1x64x64xbf16> to vector<64x64xbf16>
    %cst_9 = arith.constant dense<0.000000e+00> : vector<256x64xf32>
    %9 = tpu.matmul %1, %8, %cst_9 {dimension_numbers = #tpu.dot_dimension_numbers<[1], [0], [0], [1], [0, 0, 1, 1], [], []>} : vector<256x64xbf16>, vector<64x64xbf16>, vector<256x64xf32> -> vector<256x64xf32>
    %c0_10 = arith.constant 0 : index
    %c0_11 = arith.constant 0 : index
    %c0_12 = arith.constant 0 : index
    %10 = vector.load %arg5[%c0_10, %c0_11, %c0_12] : memref<2x1x64xf32, #tpu.memory_space<vmem>>, vector<1x1x64xf32>
    %11 = vector.shape_cast %10 : vector<1x1x64xf32> to vector<1x64xf32>
    %12 = vector.broadcast %11 : vector<1x64xf32> to vector<256x64xf32>
    %13 = arith.addf %9, %12 : vector<256x64xf32>
    %c1 = arith.constant 1 : index
    %c0_13 = arith.constant 0 : index
    %c0_14 = arith.constant 0 : index
    %14 = vector.load %arg4[%c1, %c0_13, %c0_14] : memref<2x64x64xbf16, #tpu.memory_space<vmem>>, vector<1x64x64xbf16>
    %15 = vector.shape_cast %14 : vector<1x64x64xbf16> to vector<64x64xbf16>
    %cst_15 = arith.constant dense<0.000000e+00> : vector<256x64xf32>
    %16 = tpu.matmul %1, %15, %cst_15 {dimension_numbers = #tpu.dot_dimension_numbers<[1], [0], [0], [1], [0, 0, 1, 1], [], []>} : vector<256x64xbf16>, vector<64x64xbf16>, vector<256x64xf32> -> vector<256x64xf32>
    %c1_16 = arith.constant 1 : index
    %c0_17 = arith.constant 0 : index
    %c0_18 = arith.constant 0 : index
    %17 = vector.load %arg5[%c1_16, %c0_17, %c0_18] : memref<2x1x64xf32, #tpu.memory_space<vmem>>, vector<1x1x64xf32>
    %18 = vector.shape_cast %17 : vector<1x1x64xf32> to vector<1x64xf32>
    %19 = vector.broadcast %18 : vector<1x64xf32> to vector<256x64xf32>
    %20 = arith.addf %16, %19 : vector<256x64xf32>
    %21 = arith.truncf %6 : vector<64x256xf32> to vector<64x256xbf16>
    %22 = arith.truncf %13 : vector<256x64xf32> to vector<256x64xbf16>
    %cst_19 = arith.constant dense<0.000000e+00> : vector<64x64xf32>
    %23 = tpu.matmul %21, %22, %cst_19 {dimension_numbers = #tpu.dot_dimension_numbers<[1], [0], [0], [1], [0, 0, 1, 1], [], []>} : vector<64x256xbf16>, vector<256x64xbf16>, vector<64x64xf32> -> vector<64x64xf32>
    %cst_20 = arith.constant 1.250000e-01 : f32
    %24 = vector.broadcast %cst_20 : f32 to vector<64x64xf32>
    %25 = arith.mulf %23, %24 : vector<64x64xf32>
    %cst_21 = arith.constant dense<0xFF800000> : vector<64xf32>
    %26 = vector.multi_reduction <maximumf>, %25, %cst_21 [1] : vector<64x64xf32> to vector<64xf32>
    %27 = vector.shape_cast %26 : vector<64xf32> to vector<64x1xf32>
    %28 = vector.broadcast %27 : vector<64x1xf32> to vector<64x64xf32>
    %29 = arith.subf %25, %28 : vector<64x64xf32>
    %30 = math.exp %29 : vector<64x64xf32>
    %cst_22 = arith.constant dense<0.000000e+00> : vector<64xf32>
    %31 = vector.multi_reduction <add>, %30, %cst_22 [1] : vector<64x64xf32> to vector<64xf32>
    %32 = vector.shape_cast %31 : vector<64xf32> to vector<64x1xf32>
    %33 = tpu.reciprocal %32 {approx = true} : vector<64x1xf32> -> vector<64x1xf32>
    %34 = vector.broadcast %33 : vector<64x1xf32> to vector<64x64xf32>
    %35 = arith.mulf %30, %34 : vector<64x64xf32>
    %36 = arith.truncf %20 : vector<256x64xf32> to vector<256x64xbf16>
    %37 = arith.truncf %35 : vector<64x64xf32> to vector<64x64xbf16>
    %cst_23 = arith.constant dense<0.000000e+00> : vector<256x64xf32>
    %38 = tpu.matmul %36, %37, %cst_23 {dimension_numbers = #tpu.dot_dimension_numbers<[1], [1], [0], [0], [0, 0, 1, 0], [], []>} : vector<256x64xbf16>, vector<64x64xbf16>, vector<256x64xf32> -> vector<256x64xf32>
    %39 = arith.extf %1 : vector<256x64xbf16> to vector<256x64xf32>
    %40 = arith.addf %39, %38 : vector<256x64xf32>
    %cst_24 = arith.constant 0.000000e+00 : f32
    %41 = vector.broadcast %cst_24 : f32 to vector<256x64xf32>
    %42 = arith.maximumf %40, %41 : vector<256x64xf32>
    %c0_25 = arith.constant 0 : index
    %c0_26 = arith.constant 0 : index
    %43 = vector.load %arg6[%c0_25, %c0_26] : memref<64x256xbf16, #tpu.memory_space<vmem>>, vector<64x256xbf16>
    %44 = arith.truncf %42 : vector<256x64xf32> to vector<256x64xbf16>
    %cst_27 = arith.constant dense<0.000000e+00> : vector<64x64xf32>
    %45 = tpu.matmul %43, %44, %cst_27 {dimension_numbers = #tpu.dot_dimension_numbers<[1], [0], [0], [1], [0, 0, 1, 1], [], []>} : vector<64x256xbf16>, vector<256x64xbf16>, vector<64x64xf32> -> vector<64x64xf32>
    %c0_28 = arith.constant 0 : index
    %c0_29 = arith.constant 0 : index
    %c0_30 = arith.constant 0 : index
    %46 = vector.load %arg7[%c0_28, %c0_29, %c0_30] : memref<1x64x64xf32, #tpu.memory_space<vmem>>, vector<1x64x64xf32>
    %47 = vector.shape_cast %46 : vector<1x64x64xf32> to vector<64x64xf32>
    %48 = vector.shape_cast %45 : vector<64x64xf32> to vector<1x64x64xf32>
    tpu.vector_store %arg7[%c0_28, %c0_29, %c0_30], %48 {strides = array<i32>} : memref<1x64x64xf32, #tpu.memory_space<vmem>>, vector<1x64x64xf32>,
    return
  }
  func.func @transform_0(%arg0: i32) -> (i32, i32, i32) {
    %c0_i32 = arith.constant 0 : i32
    %c0_i32_0 = arith.constant 0 : i32
    %c0_i32_1 = arith.constant 0 : i32
    return %arg0, %c0_i32, %c0_i32_0 : i32, i32, i32
  }
  func.func @transform_1(%arg0: i32) -> (i32, i32) {
    %c0_i32 = arith.constant 0 : i32
    %c0_i32_0 = arith.constant 0 : i32
    %c0_i32_1 = arith.constant 0 : i32
    return %c0_i32, %c0_i32_0 : i32, i32
  }
  func.func @transform_2(%arg0: i32) -> (i32, i32) {
    %c0_i32 = arith.constant 0 : i32
    %c0_i32_0 = arith.constant 0 : i32
    %c0_i32_1 = arith.constant 0 : i32
    return %c0_i32, %c0_i32_0 : i32, i32
  }
  func.func @transform_3(%arg0: i32) -> (i32, i32, i32) {
    %c0_i32 = arith.constant 0 : i32
    %c0_i32_0 = arith.constant 0 : i32
    %c0_i32_1 = arith.constant 0 : i32
    %c0_i32_2 = arith.constant 0 : i32
    return %c0_i32, %c0_i32_0, %c0_i32_1 : i32, i32, i32
  }
  func.func @transform_4(%arg0: i32) -> (i32, i32, i32) {
    %c0_i32 = arith.constant 0 : i32
    %c0_i32_0 = arith.constant 0 : i32
    %c0_i32_1 = arith.constant 0 : i32
    %c0_i32_2 = arith.constant 0 : i32
    return %c0_i32, %c0_i32_0, %c0_i32_1 : i32, i32, i32
  }
  func.func @transform_5(%arg0: i32) -> (i32, i32) {
    %c0_i32 = arith.constant 0 : i32
    %c0_i32_0 = arith.constant 0 : i32
    %c0_i32_1 = arith.constant 0 : i32
    return %c0_i32, %c0_i32_0 : i32, i32
  }
  func.func @transform_6(%arg0: i32) -> (i32, i32, i32) {
    %c0_i32 = arith.constant 0 : i32
    %c0_i32_0 = arith.constant 0 : i32
    %c0_i32_1 = arith.constant 0 : i32
    return %arg0, %c0_i32, %c0_i32_0 : i32, i32, i32
  }
}

</mosaic_0001>

<llo_original>
// kernel: conv_block_attention_forward.5
$region0: #{conv_block_attention_forward.5}
  #allocation0 [shape = 'u32[]', space=smem, size = 0x4, offset = 0x4, fixed_abs, tag = 'smem constant byte address 0x4 - core index']
  #allocation1 [shape = 'u32[144,128]{1,0:T(1,128)}', space=vmem, size = 0x12000, scoped, tag = 'internal scratch']
  %s0 = inlined_call_operand.vmem [shape: bf16[2,256,64], index: 0, kind: input, shape index: {}]
  %s1 = inlined_call_operand.vmem [shape: bf16[64,64], index: 1, kind: input, shape index: {}]
  %s2 = inlined_call_operand.vmem [shape: f32[64,1], index: 2, kind: input, shape index: {}]
  %s3 = inlined_call_operand.vmem [shape: bf16[2,64,64], index: 3, kind: input, shape index: {}]
  %s4 = inlined_call_operand.vmem [shape: f32[2,1,64], index: 4, kind: input, shape index: {}]
  %s5 = inlined_call_operand.vmem [shape: bf16[64,256], index: 5, kind: input, shape index: {}]
  %s6 = inlined_call_operand.hbm [shape: f32[2,64,64], index: 6, kind: output, shape index: {}]
  %s7 = sld [smem:[#allocation0]]
  $region57: #{conv_block_attention_forward.5} parent=0
    _
  %s9 = ssub.s32 1, %s7
  %s10 = scalar_select 0, %s9, %s7
  $region1: #{conv_block_attention_forward.5} parent=0
    #allocation2 [shape = 'u8[65536]{0}', space=vmem, size = 0x10000, scoped, tag = 'output window, operand 0']
    #allocation3 [shape = 's32[2]{0}', space=sflag, size = 0x8, scoped, tag = 'scoped memory for conv_block_attention_forward.5']
    %11 = vsyncpa [#allocation3], 0
    %s12 = scalar_lea.sflag [#allocation3], 1
    %13 = vsyncpa %s12, 0
    loop: start=0, step=1, limit=4
    $region2: #{conv_block_attention_forward.5} parent=1 // loop_pre_header
      _
    $region3: #{conv_block_attention_forward.5} parent=1 // loop_header
      %s15 = sphi 0, %s19
      %p16 = scmp.ge.s32.totalorder %s15, 4
      %s25 = sphi 0, %s27
      %s28 = sphi 0, %s25
      %s29 = sphi 0, %s28
      %s45 = sphi 0, %s29
      %s49 = sphi 0, %s49
      %s51 = sphi 0, %s49
      %s52 = sphi 0, %s51
      %s66 = sphi 0, %s52
      %s70 = sphi 0, %s70
      %s72 = sphi 0, %s70
      %s73 = sphi 0, %s72
      %s87 = sphi 0, %s73
      %s91 = sphi 0, %s91
      %s93 = sphi 0, %s91
      %s94 = sphi 0, %s93
      %s108 = sphi 0, %s94
      %s112 = sphi 0, %s112
      %s114 = sphi 0, %s112
      %s115 = sphi 0, %s114
      %s129 = sphi 0, %s115
      %s133 = sphi 0, %s133
      %s135 = sphi 0, %s133
      %s136 = sphi 0, %s135
      %s150 = sphi 0, %s136
      %s156 = sphi 0, %s158
      %s159 = sphi 0, %s156
      %s160 = sphi 0, %s159
      %s176 = sphi 0, %s160
    $region4: #{conv_block_attention_forward.5} parent=1 // loop_header_branch
      %18 = sbr.rel (%p16) target = $region8
    $region5: #{conv_block_attention_forward.5} parent=1 // loop_body
      %s20 = ssub.s32 %s15, 1
      %s21 = ssub.s32 %s15, 2
      %s22 = sadd.s32 %s15, 1
      %s23 = ssub.s32 %s15, %s22
      %p24 = scmp.eq.s32.totalorder %s23, 0
      %s26 = sadd.s32 %s25, 1
      %s27 = scalar_select %p24, %s25, %s26
      %p30 = pneg %p24
      %p31 = scmp.eq.s32.totalorder %s15, 1
      %p32 = por %p30, %p31
      %p33 = scmp.ne.s32.totalorder %s25, %s28
      %p34 = scmp.eq.s32.totalorder %s15, 0
      %p35 = por %p33, %p34
      %p36 = scmp.ne.s32.totalorder %s25, %s28
      %p37 = scmp.eq.s32.totalorder %s20, 1
      %p38 = por %p36, %p37
      %p39 = scmp.ne.s32.totalorder %s28, %s29
      %p40 = scmp.eq.s32.totalorder %s20, 0
      %p41 = por %p39, %p40
      %p42 = scmp.ne.s32.totalorder %s28, %s29
      %p43 = scmp.eq.s32.totalorder %s21, 1
      %p44 = por %p42, %p43
      %p46 = scmp.ne.s32.totalorder %s29, %s45
      %p47 = scmp.eq.s32.totalorder %s21, 0
      %p48 = por %p46, %p47
      %s50 = sadd.s32 %s49, 1
      %p53 = scmp.eq.s32.totalorder %s15, 1
      %p54 = scmp.ne.s32.totalorder %s49, %s51
      %p55 = scmp.eq.s32.totalorder %s15, 0
      %p56 = por %p54, %p55
      %p57 = scmp.ne.s32.totalorder %s49, %s51
      %p58 = scmp.eq.s32.totalorder %s20, 1
      %p59 = por %p57, %p58
      %p60 = scmp.ne.s32.totalorder %s51, %s52
      %p61 = scmp.eq.s32.totalorder %s20, 0
      %p62 = por %p60, %p61
      %p63 = scmp.ne.s32.totalorder %s51, %s52
      %p64 = scmp.eq.s32.totalorder %s21, 1
      %p65 = por %p63, %p64
      %p67 = scmp.ne.s32.totalorder %s52, %s66
      %p68 = scmp.eq.s32.totalorder %s21, 0
      %p69 = por %p67, %p68
      %s71 = sadd.s32 %s70, 1
      %p74 = scmp.eq.s32.totalorder %s15, 1
      %p75 = scmp.ne.s32.totalorder %s70, %s72
      %p76 = scmp.eq.s32.totalorder %s15, 0
      %p77 = por %p75, %p76
      %p78 = scmp.ne.s32.totalorder %s70, %s72
      %p79 = scmp.eq.s32.totalorder %s20, 1
      %p80 = por %p78, %p79
      %p81 = scmp.ne.s32.totalorder %s72, %s73
      %p82 = scmp.eq.s32.totalorder %s20, 0
      %p83 = por %p81, %p82
      %p84 = scmp.ne.s32.totalorder %s72, %s73
      %p85 = scmp.eq.s32.totalorder %s21, 1
      %p86 = por %p84, %p85
      %p88 = scmp.ne.s32.totalorder %s73, %s87
      %p89 = scmp.eq.s32.totalorder %s21, 0
      %p90 = por %p88, %p89
      %s92 = sadd.s32 %s91, 1
      %p95 = scmp.eq.s32.totalorder %s15, 1
      %p96 = scmp.ne.s32.totalorder %s91, %s93
      %p97 = scmp.eq.s32.totalorder %s15, 0
      %p98 = por %p96, %p97
      %p99 = scmp.ne.s32.totalorder %s91, %s93
      %p100 = scmp.eq.s32.totalorder %s20, 1
      %p101 = por %p99, %p100
      %p102 = scmp.ne.s32.totalorder %s93, %s94
      %p103 = scmp.eq.s32.totalorder %s20, 0
      %p104 = por %p102, %p103
      %p105 = scmp.ne.s32.totalorder %s93, %s94
      %p106 = scmp.eq.s32.totalorder %s21, 1
      %p107 = por %p105, %p106
      %p109 = scmp.ne.s32.totalorder %s94, %s108
      %p110 = scmp.eq.s32.totalorder %s21, 0
      %p111 = por %p109, %p110
      %s113 = sadd.s32 %s112, 1
      %p116 = scmp.eq.s32.totalorder %s15, 1
      %p117 = scmp.ne.s32.totalorder %s112, %s114
      %p118 = scmp.eq.s32.totalorder %s15, 0
      %p119 = por %p117, %p118
      %p120 = scmp.ne.s32.totalorder %s112, %s114
      %p121 = scmp.eq.s32.totalorder %s20, 1
      %p122 = por %p120, %p121
      %p123 = scmp.ne.s32.totalorder %s114, %s115
      %p124 = scmp.eq.s32.totalorder %s20, 0
      %p125 = por %p123, %p124
      %p126 = scmp.ne.s32.totalorder %s114, %s115
      %p127 = scmp.eq.s32.totalorder %s21, 1
      %p128 = por %p126, %p127
      %p130 = scmp.ne.s32.totalorder %s115, %s129
      %p131 = scmp.eq.s32.totalorder %s21, 0
      %p132 = por %p130, %p131
      %s134 = sadd.s32 %s133, 1
      %p137 = scmp.eq.s32.totalorder %s15, 1
      %p138 = scmp.ne.s32.totalorder %s133, %s135
      %p139 = scmp.eq.s32.totalorder %s15, 0
      %p140 = por %p138, %p139
      %p141 = scmp.ne.s32.totalorder %s133, %s135
      %p142 = scmp.eq.s32.totalorder %s20, 1
      %p143 = por %p141, %p142
      %p144 = scmp.ne.s32.totalorder %s135, %s136
      %p145 = scmp.eq.s32.totalorder %s20, 0
      %p146 = por %p144, %p145
      %p147 = scmp.ne.s32.totalorder %s135, %s136
      %p148 = scmp.eq.s32.totalorder %s21, 1
      %p149 = por %p147, %p148
      %p151 = scmp.ne.s32.totalorder %s136, %s150
      %p152 = scmp.eq.s32.totalorder %s21, 0
      %p153 = por %p151, %p152
      %s154 = ssub.s32 %s15, %s22
      %p155 = scmp.eq.s32.totalorder %s154, 0
      %s157 = sadd.s32 %s156, 1
      %s158 = scalar_select %p155, %s156, %s157
      %p161 = pneg %p155
      %p162 = scmp.eq.s32.totalorder %s15, 1
      %p163 = por %p161, %p162
      %p164 = scmp.ne.s32.totalorder %s156, %s159
      %p165 = scmp.eq.s32.totalorder %s15, 0
      %p166 = por %p164, %p165
      %p167 = scmp.ne.s32.totalorder %s156, %s159
      %p168 = scmp.eq.s32.totalorder %s20, 1
      %p169 = por %p167, %p168
      %p170 = scmp.ne.s32.totalorder %s159, %s160
      %p171 = scmp.eq.s32.totalorder %s20, 0
      %p172 = por %p170, %p171
      %p173 = scmp.ne.s32.totalorder %s159, %s160
      %p174 = scmp.eq.s32.totalorder %s21, 1
      %p175 = por %p173, %p174
      %p177 = scmp.ne.s32.totalorder %s160, %s176
      %p178 = scmp.eq.s32.totalorder %s21, 0
      %p179 = por %p177, %p178
      %p180 = scmp.le.s32.totalorder 1, %s15
      %p181 = scmp.lt.s32.totalorder %s15, 3
      %p182 = pnand %p180, %p181
      %p183 = pneg %p182
      // Predicated region
      $region9: #{conv_block_attention_forward.5} parent=5 // pred_check
        _
      $region10: #{conv_block_attention_forward.5} parent=5 // pred_check_branch
        %185 = sbr.rel (%p182) target = $region12
      $region11: #{conv_block_attention_forward.5} parent=5 // pred_region
        %s186 = ssub.s32 %s15, 1
        // Predicated region
        $region13: #{conv_block_attention_forward.5} parent=11 // pred_check
          %p187 = pneg %p62
        $region14: #{conv_block_attention_forward.5} parent=11 // pred_check_branch
          %189 = sbr.rel (%p187) target = $region16
        $region15: #{conv_block_attention_forward.5} parent=11 // pred_region
          _
        $region16: #{conv_block_attention_forward.5} parent=11 // pred_fallthru
          _
        // Predicated region
        $region17: #{conv_block_attention_forward.5} parent=11 // pred_check
          %p190 = pneg %p83
        $region18: #{conv_block_attention_forward.5} parent=11 // pred_check_branch
          %192 = sbr.rel (%p190) target = $region20
        $region19: #{conv_block_attention_forward.5} parent=11 // pred_region
          _
        $region20: #{conv_block_attention_forward.5} parent=11 // pred_fallthru
          _
        // Predicated region
        $region21: #{conv_block_attention_forward.5} parent=11 // pred_check
          %p193 = pneg %p104
        $region22: #{conv_block_attention_forward.5} parent=11 // pred_check_branch
          %195 = sbr.rel (%p193) target = $region24
        $region23: #{conv_block_attention_forward.5} parent=11 // pred_region
          _
        $region24: #{conv_block_attention_forward.5} parent=11 // pred_fallthru
          _
        // Predicated region
        $region25: #{conv_block_attention_forward.5} parent=11 // pred_check
          %p196 = pneg %p125
        $region26: #{conv_block_attention_forward.5} parent=11 // pred_check_branch
          %198 = sbr.rel (%p196) target = $region28
        $region27: #{conv_block_attention_forward.5} parent=11 // pred_region
          _
        $region28: #{conv_block_attention_forward.5} parent=11 // pred_fallthru
          _
        // Predicated region
        $region29: #{conv_block_attention_forward.5} parent=11 // pred_check
          %p199 = pneg %p146
        $region30: #{conv_block_attention_forward.5} parent=11 // pred_check_branch
          %201 = sbr.rel (%p199) target = $region32
        $region31: #{conv_block_attention_forward.5} parent=11 // pred_region
          _
        $region32: #{conv_block_attention_forward.5} parent=11 // pred_fallthru
          _
      $region12: #{conv_block_attention_forward.5} parent=5 // pred_fallthru
        _
      %p202 = scmp.lt.s32.totalorder %s15, 2
      // Predicated region
      $region33: #{conv_block_attention_forward.5} parent=5 // pred_check
        %p203 = pneg %p202
      $region34: #{conv_block_attention_forward.5} parent=5 // pred_check_branch
        %205 = sbr.rel (%p203) target = $region36
      $region35: #{conv_block_attention_forward.5} parent=5 // pred_region
        // Predicated region
        $region37: #{conv_block_attention_forward.5} parent=35 // pred_check
          %p206 = pneg %p35
        $region38: #{conv_block_attention_forward.5} parent=35 // pred_check_branch
          %208 = sbr.rel (%p206) target = $region40
        $region39: #{conv_block_attention_forward.5} parent=35 // pred_region
          %p209 = scmp.lt.s32.totalorder %s15, 1
          %s210 = scalar_select %p209, %s15, 1
          %s211 = smul.addr %s210, 32
          %s212 = smul.addr %s211, 4
          %s213 = scalar_lea.vmem %s0, %s212
        $region40: #{conv_block_attention_forward.5} parent=35 // pred_fallthru
          _
      $region36: #{conv_block_attention_forward.5} parent=5 // pred_fallthru
        _
      %p214 = scmp.le.s32.totalorder 1, %s15
      %p215 = scmp.lt.s32.totalorder %s15, 3
      %p216 = pnand %p214, %p215
      %p217 = pneg %p216
      // Predicated region
      $region41: #{conv_block_attention_forward.5} parent=5 // pred_check
        _
      $region42: #{conv_block_attention_forward.5} parent=5 // pred_check_branch
        %219 = sbr.rel (%p216) target = $region44
      $region43: #{conv_block_attention_forward.5} parent=5 // pred_region
        %s220 = ssub.s32 %s15, 1
        %p221 = scmp.lt.s32.totalorder %s20, 1
        %s222 = scalar_select %p221, %s20, 1
        %s223 = smul.addr %s222, 32
        %s224 = smul.addr %s223, 4
        %s225 = scalar_lea.vmem %s0, %s224
        %p226 = pneg %p41
        %p227 = pneg %p38
        %p228 = pneg %p62
        %p229 = pneg %p59
        %p230 = pneg %p83
        %p231 = pneg %p80
        %p232 = pneg %p104
        %p233 = pneg %p101
        %p234 = pneg %p125
        %p235 = pneg %p122
        %p236 = pneg %p146
        %p237 = pneg %p143
        %p238 = pneg %p172
        %p239 = pneg %p169
        %s240 = sand.u32 %s159, 1
        %s241 = scalar_lea.sflag [#allocation3], %s240
        %s242 = sand.u32 %s159, 1
        %s243 = smul.addr %s242, 64
        %s244 = scalar_lea.vmem [#allocation2], %s243
        %p245 = scmp.lt.s32.totalorder %s20, 1
        %s246 = scalar_select %p245, %s20, 1
        %s247 = smul.addr %s246, 32
        %s248 = smul.addr %s247, 4
        %s249 = scalar_lea.vmem %s0, %s248
        %v251 = vld [vmem:[%s249] sm:$0xf]
        %v252 = vld [vmem:[%s249 + $0x4] sm:$0xf]
        %v253 = vld [vmem:[%s249 + $0x8] sm:$0xf]
        %v254 = vld [vmem:[%s249 + $0xc] sm:$0xf]
        %v255 = vld [vmem:[%s249 + $0x10] sm:$0xf]
        %v256 = vld [vmem:[%s249 + $0x14] sm:$0xf]
        %v257 = vld [vmem:[%s249 + $0x18] sm:$0xf]
        %v258 = vld [vmem:[%s249 + $0x1c] sm:$0xf]
        %v259 = vld [vmem:[%s249 + $0x20] sm:$0xf]
        %v260 = vld [vmem:[%s249 + $0x24] sm:$0xf]
        %v261 = vld [vmem:[%s249 + $0x28] sm:$0xf]
        %v262 = vld [vmem:[%s249 + $0x2c] sm:$0xf]
        %v263 = vld [vmem:[%s249 + $0x30] sm:$0xf]
        %v264 = vld [vmem:[%s249 + $0x34] sm:$0xf]
        %v265 = vld [vmem:[%s249 + $0x38] sm:$0xf]
        %v266 = vld [vmem:[%s249 + $0x3c] sm:$0xf]
        %v267 = vld [vmem:[%s249 + $0x40] sm:$0xf]
        %v268 = vld [vmem:[%s249 + $0x44] sm:$0xf]
        %v269 = vld [vmem:[%s249 + $0x48] sm:$0xf]
        %v270 = vld [vmem:[%s249 + $0x4c] sm:$0xf]
        %v271 = vld [vmem:[%s249 + $0x50] sm:$0xf]
        %v272 = vld [vmem:[%s249 + $0x54] sm:$0xf]
        %v273 = vld [vmem:[%s249 + $0x58] sm:$0xf]
        %v274 = vld [vmem:[%s249 + $0x5c] sm:$0xf]
        %v275 = vld [vmem:[%s249 + $0x60] sm:$0xf]
        %v276 = vld [vmem:[%s249 + $0x64] sm:$0xf]
        %v277 = vld [vmem:[%s249 + $0x68] sm:$0xf]
        %v278 = vld [vmem:[%s249 + $0x6c] sm:$0xf]
        %v279 = vld [vmem:[%s249 + $0x70] sm:$0xf]
        %v280 = vld [vmem:[%s249 + $0x74] sm:$0xf]
        %v281 = vld [vmem:[%s249 + $0x78] sm:$0xf]
        %v282 = vld [vmem:[%s249 + $0x7c] sm:$0xf]
        %v283 = vld [vmem:[%s1] sm:$0xf]
        %v284 = vld [vmem:[%s1 + $0x4] sm:$0xf]
        %v285 = vld [vmem:[%s1 + $0x8] sm:$0xf]
        %v286 = vld [vmem:[%s1 + $0xc] sm:$0xf]
        %v287 = vld [vmem:[%s1 + $0x10] sm:$0xf]
        %v288 = vld [vmem:[%s1 + $0x14] sm:$0xf]
        %v289 = vld [vmem:[%s1 + $0x18] sm:$0xf]
        %v290 = vld [vmem:[%s1 + $0x1c] sm:$0xf]
        %v291 = vld [vmem:[%s2] sm:$0xff]
        %v292 = vld [vmem:[%s2 + $0x8] sm:$0xff]
        %v293 = vld [vmem:[%s2 + $0x10] sm:$0xff]
        %v294 = vld [vmem:[%s2 + $0x18] sm:$0xff]
        %v295 = vld [vmem:[%s2 + $0x20] sm:$0xff]
        %v296 = vld [vmem:[%s2 + $0x28] sm:$0xff]
        %v297 = vld [vmem:[%s2 + $0x30] sm:$0xff]
        %v298 = vld [vmem:[%s2 + $0x38] sm:$0xff]
        %300 = vset.pattern.permute.xlu0 0
        %301 = vperm.xlu0 %300, %v291
        %v302 = vpop.permute.xlu0 %301
        %305 = vset.pattern.permute.xlu0 0
        %306 = vperm.xlu0 %305, %v292
        %v307 = vpop.permute.xlu0 %306
        %310 = vset.pattern.permute.xlu0 0
        %311 = vperm.xlu0 %310, %v293
        %v312 = vpop.permute.xlu0 %311
        %315 = vset.pattern.permute.xlu0 0
        %316 = vperm.xlu0 %315, %v294
        %v317 = vpop.permute.xlu0 %316
        %320 = vset.pattern.permute.xlu0 0
        %321 = vperm.xlu0 %320, %v295
        %v322 = vpop.permute.xlu0 %321
        %325 = vset.pattern.permute.xlu0 0
        %326 = vperm.xlu0 %325, %v296
        %v327 = vpop.permute.xlu0 %326
        %330 = vset.pattern.permute.xlu0 0
        %331 = vperm.xlu0 %330, %v297
        %v332 = vpop.permute.xlu0 %331
        %335 = vset.pattern.permute.xlu0 0
        %336 = vperm.xlu0 %335, %v298
        %v337 = vpop.permute.xlu0 %336
        %v347 = vunpack.c.l.b16 %v283
        %v348 = vunpack.c.l.b16 %v284
        %v349 = vunpack.c.l.b16 %v285
        %v350 = vunpack.c.l.b16 %v286
        %v351 = vunpack.c.l.b16 %v287
        %v352 = vunpack.c.l.b16 %v288
        %v353 = vunpack.c.l.b16 %v289
        %v354 = vunpack.c.l.b16 %v290
        %v355 = vpack.c.b16 %v348, %v347
        %v356 = vpack.c.b16 %v350, %v349
        %v357 = vpack.c.b16 %v352, %v351
        %v358 = vpack.c.b16 %v354, %v353
        %v391 = vunpack.c.l.b16 %v251
        %v392 = vunpack.c.l.b16 %v252
        %v393 = vunpack.c.l.b16 %v253
        %v394 = vunpack.c.l.b16 %v254
        %v395 = vunpack.c.l.b16 %v255
        %v396 = vunpack.c.l.b16 %v256
        %v397 = vunpack.c.l.b16 %v257
        %v398 = vunpack.c.l.b16 %v258
        %v399 = vunpack.c.l.b16 %v259
        %v400 = vunpack.c.l.b16 %v260
        %v401 = vunpack.c.l.b16 %v261
        %v402 = vunpack.c.l.b16 %v262
        %v403 = vunpack.c.l.b16 %v263
        %v404 = vunpack.c.l.b16 %v264
        %v405 = vunpack.c.l.b16 %v265
        %v406 = vunpack.c.l.b16 %v266
        %v407 = vunpack.c.l.b16 %v267
        %v408 = vunpack.c.l.b16 %v268
        %v409 = vunpack.c.l.b16 %v269
        %v410 = vunpack.c.l.b16 %v270
        %v411 = vunpack.c.l.b16 %v271
        %v412 = vunpack.c.l.b16 %v272
        %v413 = vunpack.c.l.b16 %v273
        %v414 = vunpack.c.l.b16 %v274
        %v415 = vunpack.c.l.b16 %v275
        %v416 = vunpack.c.l.b16 %v276
        %v417 = vunpack.c.l.b16 %v277
        %v418 = vunpack.c.l.b16 %v278
        %v419 = vunpack.c.l.b16 %v279
        %v420 = vunpack.c.l.b16 %v280
        %v421 = vunpack.c.l.b16 %v281
        %v422 = vunpack.c.l.b16 %v282
        %v423 = vpack.c.b16 %v392, %v391
        %v424 = vpack.c.b16 %v394, %v393
        %v425 = vpack.c.b16 %v396, %v395
        %v426 = vpack.c.b16 %v398, %v397
        %v427 = vpack.c.b16 %v400, %v399
        %v428 = vpack.c.b16 %v402, %v401
        %v429 = vpack.c.b16 %v404, %v403
        %v430 = vpack.c.b16 %v406, %v405
        %v431 = vpack.c.b16 %v408, %v407
        %v432 = vpack.c.b16 %v410, %v409
        %v433 = vpack.c.b16 %v412, %v411
        %v434 = vpack.c.b16 %v414, %v413
        %v435 = vpack.c.b16 %v416, %v415
        %v436 = vpack.c.b16 %v418, %v417
        %v437 = vpack.c.b16 %v420, %v419
        %v438 = vpack.c.b16 %v422, %v421
        %vm439 = vcmask 523264
        %v441 = vsel %vm439, %v355, 0
        %v444 = vsel %vm439, %v356, 0
        %v447 = vsel %vm439, %v357, 0
        %v450 = vsel %vm439, %v358, 0
        %v453 = vsel %vm439, %v423, 0
        %v456 = vsel %vm439, %v424, 0
        %v459 = vsel %vm439, %v425, 0
        %v462 = vsel %vm439, %v426, 0
        %v465 = vsel %vm439, %v427, 0
        %v468 = vsel %vm439, %v428, 0
        %v471 = vsel %vm439, %v429, 0
        %v474 = vsel %vm439, %v430, 0
        %v477 = vsel %vm439, %v431, 0
        %v480 = vsel %vm439, %v432, 0
        %v483 = vsel %vm439, %v433, 0
        %v486 = vsel %vm439, %v434, 0
        %v489 = vsel %vm439, %v435, 0
        %v492 = vsel %vm439, %v436, 0
        %v495 = vsel %vm439, %v437, 0
        %v498 = vsel %vm439, %v438, 0
        %500 = vmatprep.subr.bf16.mxu0 0
        %501 = vmatpush1.bf16.xpose.msra.mxu0 %v474
        %502 = vmatprep.subr.bf16.mxu0 0
        %503 = vmatpush1.bf16.xpose.msra.mxu0 %v471
        %504 = vmatprep.subr.bf16.mxu0 0
        %505 = vmatpush1.bf16.xpose.msra.mxu0 %v468
        %506 = vmatprep.subr.bf16.mxu0 0
        %507 = vmatpush1.bf16.xpose.msra.mxu0 %v465
        %508 = vmatprep.subr.bf16.mxu0 0
        %509 = vmatpush1.bf16.xpose.msra.mxu0 %v462
        %510 = vmatprep.subr.bf16.mxu0 0
        %511 = vmatpush1.bf16.xpose.msra.mxu0 %v459
        %512 = vmatprep.subr.bf16.mxu0 0
        %513 = vmatpush1.bf16.xpose.msra.mxu0 %v456
        %514 = vmatprep.subr.bf16.mxu0 0
        %515 = vmatpush1.bf16.xpose.msra.mxu0 %v453
        %516 = vmatprep.subr.bf16.mxu0 0
        %517 = vmatpush2.bf16.xpose.msra.mxu0 %v498
        %518 = vmatprep.subr.bf16.mxu0 0
        %519 = vmatpush2.bf16.xpose.msra.mxu0 %v495
        %520 = vmatprep.subr.bf16.mxu0 0
        %521 = vmatpush2.bf16.xpose.msra.mxu0 %v492
        %522 = vmatprep.subr.bf16.mxu0 0
        %523 = vmatpush2.bf16.xpose.msra.mxu0 %v489
        %524 = vmatprep.subr.bf16.mxu0 0
        %525 = vmatpush2.bf16.xpose.msra.mxu0 %v486
        %526 = vmatprep.subr.bf16.mxu0 0
        %527 = vmatpush2.bf16.xpose.msra.mxu0 %v483
        %528 = vmatprep.subr.bf16.mxu0 0
        %529 = vmatpush2.bf16.xpose.msra.mxu0 %v480
        %530 = vmatprep.subr.bf16.mxu0 0
        %531 = vmatpush2.bf16.xpose.msra.mxu0 %v477
        %532 = vmatprep.mubr.bf16.mxu0 0
        %533 = vmatmul.mubr.bf16.gmra.mxu0 %v441
        %v534 = vpop.f32.mrf.mxu0
        %v535 = vadd.f32 %v302, %v534
        %v536 = vpop.f32.mrf.mxu0
        %v537 = vadd.f32 %v302, %v536
        %v538 = vpop.f32.mrf.mxu0
        %v539 = vadd.f32 %v307, %v538
        %v540 = vpop.f32.mrf.mxu0
        %v541 = vadd.f32 %v307, %v540
        %542 = vmatprep.mubr.bf16.mxu0 0
        %543 = vmatmul.mubr.bf16.gmra.mxu0 %v444
        %v544 = vpop.f32.mrf.mxu0
        %v545 = vadd.f32 %v312, %v544
        %v546 = vpop.f32.mrf.mxu0
        %v547 = vadd.f32 %v312, %v546
        %v548 = vpop.f32.mrf.mxu0
        %v549 = vadd.f32 %v317, %v548
        %v550 = vpop.f32.mrf.mxu0
        %v551 = vadd.f32 %v317, %v550
        %552 = vmatprep.mubr.bf16.mxu0 0
        %553 = vmatmul.mubr.bf16.gmra.mxu0 %v447
        %v554 = vpop.f32.mrf.mxu0
        %v555 = vadd.f32 %v322, %v554
        %v556 = vpop.f32.mrf.mxu0
        %v557 = vadd.f32 %v322, %v556
        %v558 = vpop.f32.mrf.mxu0
        %v559 = vadd.f32 %v327, %v558
        %v560 = vpop.f32.mrf.mxu0
        %v561 = vadd.f32 %v327, %v560
        %562 = vmatprep.mubr.bf16.mxu0 0
        %563 = vmatmul.mubr.bf16.gmra.mxu0 %v450
        %v564 = vpop.f32.mrf.mxu0
        %v565 = vadd.f32 %v332, %v564
        %v566 = vpop.f32.mrf.mxu0
        %v567 = vadd.f32 %v332, %v566
        %v568 = vpop.f32.mrf.mxu0
        %v569 = vadd.f32 %v337, %v568
        %v570 = vpop.f32.mrf.mxu0
        %v571 = vadd.f32 %v337, %v570
        %572 = vdwg.mxu0
        %v573 = vld [vmem:[%s3] sm:$0xf]
        %v574 = vld [vmem:[%s3 + $0x4] sm:$0xf]
        %v575 = vld [vmem:[%s3 + $0x8] sm:$0xf]
        %v576 = vld [vmem:[%s3 + $0xc] sm:$0xf]
        %v577 = vld [vmem:[%s3 + $0x10] sm:$0xf]
        %v578 = vld [vmem:[%s3 + $0x14] sm:$0xf]
        %v579 = vld [vmem:[%s3 + $0x18] sm:$0xf]
        %v580 = vld [vmem:[%s3 + $0x1c] sm:$0xf]
        %v581 = vld [vmem:[%s4] sm:$0x1]
        %v583 = vlaneseq
        %v584 = vshrl.u32 %v583, 7
        %v585 = vsub.s32 0, %v584
        %v586 = vrot.slane %v581, %v585
        %v596 = vunpack.c.l.b16 %v573
        %v597 = vunpack.c.l.b16 %v574
        %v598 = vunpack.c.l.b16 %v575
        %v599 = vunpack.c.l.b16 %v576
        %v600 = vunpack.c.l.b16 %v577
        %v601 = vunpack.c.l.b16 %v578
        %v602 = vunpack.c.l.b16 %v579
        %v603 = vunpack.c.l.b16 %v580
        %v604 = vpack.c.b16 %v597, %v596
        %v605 = vpack.c.b16 %v599, %v598
        %v606 = vpack.c.b16 %v601, %v600
        %v607 = vpack.c.b16 %v603, %v602
        %612 = vmatprep.subr.bf16.mxu0 0
        %613 = vmatpush1.bf16.msra.mxu0 0
        %614 = vmatprep.subr.bf16.mxu0 0
        %615 = vmatpush1.bf16.msra.mxu0 0
        %616 = vmatprep.subr.bf16.mxu0 0
        %617 = vmatpush1.bf16.msra.mxu0 0
        %618 = vmatprep.subr.bf16.mxu0 0
        %619 = vmatpush1.bf16.msra.mxu0 0
        %620 = vmatprep.subr.bf16.mxu0 0
        %621 = vmatpush1.bf16.msra.mxu0 %v607
        %622 = vmatprep.subr.bf16.mxu0 0
        %623 = vmatpush1.bf16.msra.mxu0 %v606
        %624 = vmatprep.subr.bf16.mxu0 0
        %625 = vmatpush1.bf16.msra.mxu0 %v605
        %626 = vmatprep.subr.bf16.mxu0 0
        %627 = vmatpush1.bf16.msra.mxu0 %v604
        %628 = vmatprep.subr.bf16.mxu0 0
        %629 = vmatpush2.bf16.msra.mxu0 0
        %630 = vmatprep.subr.bf16.mxu0 0
        %631 = vmatpush2.bf16.msra.mxu0 0
        %632 = vmatprep.subr.bf16.mxu0 0
        %633 = vmatpush2.bf16.msra.mxu0 0
        %634 = vmatprep.subr.bf16.mxu0 0
        %635 = vmatpush2.bf16.msra.mxu0 0
        %636 = vmatprep.subr.bf16.mxu0 0
        %637 = vmatpush2.bf16.msra.mxu0 0
        %638 = vmatprep.subr.bf16.mxu0 0
        %639 = vmatpush2.bf16.msra.mxu0 0
        %640 = vmatprep.subr.bf16.mxu0 0
        %641 = vmatpush2.bf16.msra.mxu0 0
        %642 = vmatprep.subr.bf16.mxu0 0
        %643 = vmatpush2.bf16.msra.mxu0 0
        %644 = vmatprep.mubr.bf16.mxu0 0
        %645 = vmatmul.mubr.bf16.gmra.mxu0 %v453
        %v646 = vpop.f32.mrf.mxu0
        %v647 = vadd.f32 %v586, %v646
        %v648 = vpop.f32.mrf.mxu0
        %v649 = vpop.f32.mrf.mxu0
        %v650 = vadd.f32 %v586, %v649
        %v651 = vpop.f32.mrf.mxu0
        %652 = vmatprep.mubr.bf16.mxu0 0
        %653 = vmatmul.mubr.bf16.gmra.mxu0 %v456
        %v654 = vpop.f32.mrf.mxu0
        %v655 = vadd.f32 %v586, %v654
        %v656 = vpop.f32.mrf.mxu0
        %v657 = vpop.f32.mrf.mxu0
        %v658 = vadd.f32 %v586, %v657
        %v659 = vpop.f32.mrf.mxu0
        %660 = vmatprep.mubr.bf16.mxu0 0
        %661 = vmatmul.mubr.bf16.gmra.mxu0 %v459
        %v662 = vpop.f32.mrf.mxu0
        %v663 = vadd.f32 %v586, %v662
        %v664 = vpop.f32.mrf.mxu0
        %v665 = vpop.f32.mrf.mxu0
        %v666 = vadd.f32 %v586, %v665
        %v667 = vpop.f32.mrf.mxu0
        %668 = vmatprep.mubr.bf16.mxu0 0
        %669 = vmatmul.mubr.bf16.gmra.mxu0 %v462
        %v670 = vpop.f32.mrf.mxu0
        %v671 = vadd.f32 %v586, %v670
        %v672 = vpop.f32.mrf.mxu0
        %v673 = vpop.f32.mrf.mxu0
        %v674 = vadd.f32 %v586, %v673
        %v675 = vpop.f32.mrf.mxu0
        %676 = vmatprep.mubr.bf16.mxu0 0
        %677 = vmatmul.mubr.bf16.gmra.mxu0 %v465
        %v678 = vpop.f32.mrf.mxu0
        %v679 = vadd.f32 %v586, %v678
        %v680 = vpop.f32.mrf.mxu0
        %v681 = vpop.f32.mrf.mxu0
        %v682 = vadd.f32 %v586, %v681
        %v683 = vpop.f32.mrf.mxu0
        %684 = vmatprep.mubr.bf16.mxu0 0
        %685 = vmatmul.mubr.bf16.gmra.mxu0 %v468
        %v686 = vpop.f32.mrf.mxu0
        %v687 = vadd.f32 %v586, %v686
        %v688 = vpop.f32.mrf.mxu0
        %v689 = vpop.f32.mrf.mxu0
        %v690 = vadd.f32 %v586, %v689
        %v691 = vpop.f32.mrf.mxu0
        %692 = vmatprep.mubr.bf16.mxu0 0
        %693 = vmatmul.mubr.bf16.gmra.mxu0 %v471
        %v694 = vpop.f32.mrf.mxu0
        %v695 = vadd.f32 %v586, %v694
        %v696 = vpop.f32.mrf.mxu0
        %v697 = vpop.f32.mrf.mxu0
        %v698 = vadd.f32 %v586, %v697
        %v699 = vpop.f32.mrf.mxu0
        %700 = vmatprep.mubr.bf16.mxu0 0
        %701 = vmatmul.mubr.bf16.gmra.mxu0 %v474
        %v702 = vpop.f32.mrf.mxu0
        %v703 = vadd.f32 %v586, %v702
        %v704 = vpop.f32.mrf.mxu0
        %v705 = vpop.f32.mrf.mxu0
        %v706 = vadd.f32 %v586, %v705
        %v707 = vpop.f32.mrf.mxu0
        %708 = vmatprep.mubr.bf16.mxu0 0
        %709 = vmatmul.mubr.bf16.gmra.mxu0 %v477
        %v710 = vpop.f32.mrf.mxu0
        %v711 = vadd.f32 %v586, %v710
        %v712 = vpop.f32.mrf.mxu0
        %v713 = vpop.f32.mrf.mxu0
        %v714 = vadd.f32 %v586, %v713
        %v715 = vpop.f32.mrf.mxu0
        %716 = vmatprep.mubr.bf16.mxu0 0
        %717 = vmatmul.mubr.bf16.gmra.mxu0 %v480
        %v718 = vpop.f32.mrf.mxu0
        %v719 = vadd.f32 %v586, %v718
        %v720 = vpop.f32.mrf.mxu0
        %v721 = vpop.f32.mrf.mxu0
        %v722 = vadd.f32 %v586, %v721
        %v723 = vpop.f32.mrf.mxu0
        %724 = vmatprep.mubr.bf16.mxu0 0
        %725 = vmatmul.mubr.bf16.gmra.mxu0 %v483
        %v726 = vpop.f32.mrf.mxu0
        %v727 = vadd.f32 %v586, %v726
        %v728 = vpop.f32.mrf.mxu0
        %v729 = vpop.f32.mrf.mxu0
        %v730 = vadd.f32 %v586, %v729
        %v731 = vpop.f32.mrf.mxu0
        %732 = vmatprep.mubr.bf16.mxu0 0
        %733 = vmatmul.mubr.bf16.gmra.mxu0 %v486
        %v734 = vpop.f32.mrf.mxu0
        %v735 = vadd.f32 %v586, %v734
        %v736 = vpop.f32.mrf.mxu0
        %v737 = vpop.f32.mrf.mxu0
        %v738 = vadd.f32 %v586, %v737
        %v739 = vpop.f32.mrf.mxu0
        %740 = vmatprep.mubr.bf16.mxu0 0
        %741 = vmatmul.mubr.bf16.gmra.mxu0 %v489
        %v742 = vpop.f32.mrf.mxu0
        %v743 = vadd.f32 %v586, %v742
        %v744 = vpop.f32.mrf.mxu0
        %v745 = vpop.f32.mrf.mxu0
        %v746 = vadd.f32 %v586, %v745
        %v747 = vpop.f32.mrf.mxu0
        %748 = vmatprep.mubr.bf16.mxu0 0
        %749 = vmatmul.mubr.bf16.gmra.mxu0 %v492
        %v750 = vpop.f32.mrf.mxu0
        %v751 = vadd.f32 %v586, %v750
        %v752 = vpop.f32.mrf.mxu0
        %v753 = vpop.f32.mrf.mxu0
        %v754 = vadd.f32 %v586, %v753
        %v755 = vpop.f32.mrf.mxu0
        %756 = vmatprep.mubr.bf16.mxu0 0
        %757 = vmatmul.mubr.bf16.gmra.mxu0 %v495
        %v758 = vpop.f32.mrf.mxu0
        %v759 = vadd.f32 %v586, %v758
        %v760 = vpop.f32.mrf.mxu0
        %v761 = vpop.f32.mrf.mxu0
        %v762 = vadd.f32 %v586, %v761
        %v763 = vpop.f32.mrf.mxu0
        %764 = vmatprep.mubr.bf16.mxu0 0
        %765 = vmatmul.mubr.bf16.gmra.mxu0 %v498
        %v766 = vpop.f32.mrf.mxu0
        %v767 = vadd.f32 %v586, %v766
        %v768 = vpop.f32.mrf.mxu0
        %v769 = vpop.f32.mrf.mxu0
        %v770 = vadd.f32 %v586, %v769
        %v771 = vpop.f32.mrf.mxu0
        %772 = vdwg.mxu0
        %s773 = scalar_lea.vmem %s3, 32
        %v774 = vld [vmem:[%s773] sm:$0xf]
        %v775 = vld [vmem:[%s773 + $0x4] sm:$0xf]
        %v776 = vld [vmem:[%s773 + $0x8] sm:$0xf]
        %v777 = vld [vmem:[%s773 + $0xc] sm:$0xf]
        %v778 = vld [vmem:[%s773 + $0x10] sm:$0xf]
        %v779 = vld [vmem:[%s773 + $0x14] sm:$0xf]
        %v780 = vld [vmem:[%s773 + $0x18] sm:$0xf]
        %v781 = vld [vmem:[%s773 + $0x1c] sm:$0xf]
        %s782 = scalar_lea.vmem %s4, 1
        %v783 = vld [vmem:[%s782] sm:$0x1]
        %v785 = vlaneseq
        %v786 = vshrl.u32 %v785, 7
        %v787 = vsub.s32 0, %v786
        %v788 = vrot.slane %v783, %v787
        %v798 = vunpack.c.l.b16 %v774
        %v799 = vunpack.c.l.b16 %v775
        %v800 = vunpack.c.l.b16 %v776
        %v801 = vunpack.c.l.b16 %v777
        %v802 = vunpack.c.l.b16 %v778
        %v803 = vunpack.c.l.b16 %v779
        %v804 = vunpack.c.l.b16 %v780
        %v805 = vunpack.c.l.b16 %v781
        %v806 = vpack.c.b16 %v799, %v798
        %v807 = vpack.c.b16 %v801, %v800
        %v808 = vpack.c.b16 %v803, %v802
        %v809 = vpack.c.b16 %v805, %v804
        %814 = vmatprep.subr.bf16.mxu0 0
        %815 = vmatpush1.bf16.msra.mxu0 0
        %816 = vmatprep.subr.bf16.mxu0 0
        %817 = vmatpush1.bf16.msra.mxu0 0
        %818 = vmatprep.subr.bf16.mxu0 0
        %819 = vmatpush1.bf16.msra.mxu0 0
        %820 = vmatprep.subr.bf16.mxu0 0
        %821 = vmatpush1.bf16.msra.mxu0 0
        %822 = vmatprep.subr.bf16.mxu0 0
        %823 = vmatpush1.bf16.msra.mxu0 %v809
        %824 = vmatprep.subr.bf16.mxu0 0
        %825 = vmatpush1.bf16.msra.mxu0 %v808
        %826 = vmatprep.subr.bf16.mxu0 0
        %827 = vmatpush1.bf16.msra.mxu0 %v807
        %828 = vmatprep.subr.bf16.mxu0 0
        %829 = vmatpush1.bf16.msra.mxu0 %v806
        %830 = vmatprep.subr.bf16.mxu0 0
        %831 = vmatpush2.bf16.msra.mxu0 0
        %832 = vmatprep.subr.bf16.mxu0 0
        %833 = vmatpush2.bf16.msra.mxu0 0
        %834 = vmatprep.subr.bf16.mxu0 0
        %835 = vmatpush2.bf16.msra.mxu0 0
        %836 = vmatprep.subr.bf16.mxu0 0
        %837 = vmatpush2.bf16.msra.mxu0 0
        %838 = vmatprep.subr.bf16.mxu0 0
        %839 = vmatpush2.bf16.msra.mxu0 0
        %840 = vmatprep.subr.bf16.mxu0 0
        %841 = vmatpush2.bf16.msra.mxu0 0
        %842 = vmatprep.subr.bf16.mxu0 0
        %843 = vmatpush2.bf16.msra.mxu0 0
        %844 = vmatprep.subr.bf16.mxu0 0
        %845 = vmatpush2.bf16.msra.mxu0 0
        %846 = vmatprep.mubr.bf16.mxu0 0
        %847 = vmatmul.mubr.bf16.gmra.mxu0 %v453
        %v848 = vpop.f32.mrf.mxu0
        %v849 = vadd.f32 %v788, %v848
        %v850 = vpop.f32.mrf.mxu0
        %v851 = vpop.f32.mrf.mxu0
        %v852 = vadd.f32 %v788, %v851
        %v853 = vpop.f32.mrf.mxu0
        %854 = vmatprep.mubr.bf16.mxu0 0
        %855 = vmatmul.mubr.bf16.gmra.mxu0 %v456
        %v856 = vpop.f32.mrf.mxu0
        %v857 = vadd.f32 %v788, %v856
        %v858 = vpop.f32.mrf.mxu0
        %v859 = vpop.f32.mrf.mxu0
        %v860 = vadd.f32 %v788, %v859
        %v861 = vpop.f32.mrf.mxu0
        %862 = vmatprep.mubr.bf16.mxu0 0
        %863 = vmatmul.mubr.bf16.gmra.mxu0 %v459
        %v864 = vpop.f32.mrf.mxu0
        %v865 = vadd.f32 %v788, %v864
        %v866 = vpop.f32.mrf.mxu0
        %v867 = vpop.f32.mrf.mxu0
        %v868 = vadd.f32 %v788, %v867
        %v869 = vpop.f32.mrf.mxu0
        %870 = vmatprep.mubr.bf16.mxu0 0
        %871 = vmatmul.mubr.bf16.gmra.mxu0 %v462
        %v872 = vpop.f32.mrf.mxu0
        %v873 = vadd.f32 %v788, %v872
        %v874 = vpop.f32.mrf.mxu0
        %v875 = vpop.f32.mrf.mxu0
        %v876 = vadd.f32 %v788, %v875
        %v877 = vpop.f32.mrf.mxu0
        %878 = vmatprep.mubr.bf16.mxu0 0
        %879 = vmatmul.mubr.bf16.gmra.mxu0 %v465
        %v880 = vpop.f32.mrf.mxu0
        %v881 = vadd.f32 %v788, %v880
        %v882 = vpop.f32.mrf.mxu0
        %v883 = vpop.f32.mrf.mxu0
        %v884 = vadd.f32 %v788, %v883
        %v885 = vpop.f32.mrf.mxu0
        %886 = vmatprep.mubr.bf16.mxu0 0
        %887 = vmatmul.mubr.bf16.gmra.mxu0 %v468
        %v888 = vpop.f32.mrf.mxu0
        %v889 = vadd.f32 %v788, %v888
        %v890 = vpop.f32.mrf.mxu0
        %v891 = vpop.f32.mrf.mxu0
        %v892 = vadd.f32 %v788, %v891
        %v893 = vpop.f32.mrf.mxu0
        %894 = vmatprep.mubr.bf16.mxu0 0
        %895 = vmatmul.mubr.bf16.gmra.mxu0 %v471
        %v896 = vpop.f32.mrf.mxu0
        %v897 = vadd.f32 %v788, %v896
        %v898 = vpop.f32.mrf.mxu0
        %v899 = vpop.f32.mrf.mxu0
        %v900 = vadd.f32 %v788, %v899
        %v901 = vpop.f32.mrf.mxu0
        %902 = vmatprep.mubr.bf16.mxu0 0
        %903 = vmatmul.mubr.bf16.gmra.mxu0 %v474
        %v904 = vpop.f32.mrf.mxu0
        %v905 = vadd.f32 %v788, %v904
        %v906 = vpop.f32.mrf.mxu0
        %v907 = vpop.f32.mrf.mxu0
        %v908 = vadd.f32 %v788, %v907
        %v909 = vpop.f32.mrf.mxu0
        %910 = vmatprep.mubr.bf16.mxu0 0
        %911 = vmatmul.mubr.bf16.gmra.mxu0 %v477
        %v912 = vpop.f32.mrf.mxu0
        %v913 = vadd.f32 %v788, %v912
        %v914 = vpop.f32.mrf.mxu0
        %v915 = vpop.f32.mrf.mxu0
        %v916 = vadd.f32 %v788, %v915
        %v917 = vpop.f32.mrf.mxu0
        %918 = vmatprep.mubr.bf16.mxu0 0
        %919 = vmatmul.mubr.bf16.gmra.mxu0 %v480
        %v920 = vpop.f32.mrf.mxu0
        %v921 = vadd.f32 %v788, %v920
        %v922 = vpop.f32.mrf.mxu0
        %v923 = vpop.f32.mrf.mxu0
        %v924 = vadd.f32 %v788, %v923
        %v925 = vpop.f32.mrf.mxu0
        %926 = vmatprep.mubr.bf16.mxu0 0
        %927 = vmatmul.mubr.bf16.gmra.mxu0 %v483
        %v928 = vpop.f32.mrf.mxu0
        %v929 = vadd.f32 %v788, %v928
        %v930 = vpop.f32.mrf.mxu0
        %v931 = vpop.f32.mrf.mxu0
        %v932 = vadd.f32 %v788, %v931
        %v933 = vpop.f32.mrf.mxu0
        %934 = vmatprep.mubr.bf16.mxu0 0
        %935 = vmatmul.mubr.bf16.gmra.mxu0 %v486
        %v936 = vpop.f32.mrf.mxu0
        %v937 = vadd.f32 %v788, %v936
        %v938 = vpop.f32.mrf.mxu0
        %v939 = vpop.f32.mrf.mxu0
        %v940 = vadd.f32 %v788, %v939
        %v941 = vpop.f32.mrf.mxu0
        %942 = vmatprep.mubr.bf16.mxu0 0
        %943 = vmatmul.mubr.bf16.gmra.mxu0 %v489
        %v944 = vpop.f32.mrf.mxu0
        %v945 = vadd.f32 %v788, %v944
        %v946 = vpop.f32.mrf.mxu0
        %v947 = vpop.f32.mrf.mxu0
        %v948 = vadd.f32 %v788, %v947
        %v949 = vpop.f32.mrf.mxu0
        %950 = vmatprep.mubr.bf16.mxu0 0
        %951 = vmatmul.mubr.bf16.gmra.mxu0 %v492
        %v952 = vpop.f32.mrf.mxu0
        %v953 = vadd.f32 %v788, %v952
        %v954 = vpop.f32.mrf.mxu0
        %v955 = vpop.f32.mrf.mxu0
        %v956 = vadd.f32 %v788, %v955
        %v957 = vpop.f32.mrf.mxu0
        %958 = vmatprep.mubr.bf16.mxu0 0
        %959 = vmatmul.mubr.bf16.gmra.mxu0 %v495
        %v960 = vpop.f32.mrf.mxu0
        %v961 = vadd.f32 %v788, %v960
        %v962 = vpop.f32.mrf.mxu0
        %v963 = vpop.f32.mrf.mxu0
        %v964 = vadd.f32 %v788, %v963
        %v965 = vpop.f32.mrf.mxu0
        %966 = vmatprep.mubr.bf16.mxu0 0
        %967 = vmatmul.mubr.bf16.gmra.mxu0 %v498
        %v968 = vpop.f32.mrf.mxu0
        %v969 = vadd.f32 %v788, %v968
        %v970 = vpop.f32.mrf.mxu0
        %v971 = vpop.f32.mrf.mxu0
        %v972 = vadd.f32 %v788, %v971
        %v973 = vpop.f32.mrf.mxu0
        %974 = vdwg.mxu0
        %v975 = vpack.c.bf16 %v539, %v535
        %v976 = vpack.c.bf16 %v541, %v537
        %v977 = vpack.c.bf16 %v549, %v545
        %v978 = vpack.c.bf16 %v551, %v547
        %v979 = vpack.c.bf16 %v559, %v555
        %v980 = vpack.c.bf16 %v561, %v557
        %v981 = vpack.c.bf16 %v569, %v565
        %v982 = vpack.c.bf16 %v571, %v567
        %v983 = vpack.c.bf16 %v650, %v647
        %v984 = vpack.c.bf16 %v658, %v655
        %v985 = vpack.c.bf16 %v666, %v663
        %v986 = vpack.c.bf16 %v674, %v671
        %v987 = vpack.c.bf16 %v682, %v679
        %v988 = vpack.c.bf16 %v690, %v687
        %v989 = vpack.c.bf16 %v698, %v695
        %v990 = vpack.c.bf16 %v706, %v703
        %v991 = vpack.c.bf16 %v714, %v711
        %v992 = vpack.c.bf16 %v722, %v719
        %v993 = vpack.c.bf16 %v730, %v727
        %v994 = vpack.c.bf16 %v738, %v735
        %v995 = vpack.c.bf16 %v746, %v743
        %v996 = vpack.c.bf16 %v754, %v751
        %v997 = vpack.c.bf16 %v762, %v759
        %v998 = vpack.c.bf16 %v770, %v767
        %999 = vmatprep.subr.bf16.mxu0 0
        %1000 = vmatpush1.bf16.msra.mxu0 %v990
        %1001 = vmatprep.subr.bf16.mxu0 0
        %1002 = vmatpush1.bf16.msra.mxu0 %v989
        %1003 = vmatprep.subr.bf16.mxu0 0
        %1004 = vmatpush1.bf16.msra.mxu0 %v988
        %1005 = vmatprep.subr.bf16.mxu0 0
        %1006 = vmatpush1.bf16.msra.mxu0 %v987
        %1007 = vmatprep.subr.bf16.mxu0 0
        %1008 = vmatpush1.bf16.msra.mxu0 %v986
        %1009 = vmatprep.subr.bf16.mxu0 0
        %1010 = vmatpush1.bf16.msra.mxu0 %v985
        %1011 = vmatprep.subr.bf16.mxu0 0
        %1012 = vmatpush1.bf16.msra.mxu0 %v984
        %1013 = vmatprep.subr.bf16.mxu0 0
        %1014 = vmatpush1.bf16.msra.mxu0 %v983
        %1015 = vmatprep.subr.bf16.mxu0 0
        %1016 = vmatpush2.bf16.msra.mxu0 %v998
        %1017 = vmatprep.subr.bf16.mxu0 0
        %1018 = vmatpush2.bf16.msra.mxu0 %v997
        %1019 = vmatprep.subr.bf16.mxu0 0
        %1020 = vmatpush2.bf16.msra.mxu0 %v996
        %1021 = vmatprep.subr.bf16.mxu0 0
        %1022 = vmatpush2.bf16.msra.mxu0 %v995
        %1023 = vmatprep.subr.bf16.mxu0 0
        %1024 = vmatpush2.bf16.msra.mxu0 %v994
        %1025 = vmatprep.subr.bf16.mxu0 0
        %1026 = vmatpush2.bf16.msra.mxu0 %v993
        %1027 = vmatprep.subr.bf16.mxu0 0
        %1028 = vmatpush2.bf16.msra.mxu0 %v992
        %1029 = vmatprep.subr.bf16.mxu0 0
        %1030 = vmatpush2.bf16.msra.mxu0 %v991
        %1031 = vmatprep.mubr.bf16.mxu0 %v976
        %1032 = vmatmul.mubr.bf16.gmra.mxu0 %v975
        %v1033 = vpop.f32.mrf.mxu0
        %v1034 = vadd.f32 0.0, %v1033
        %v1035 = vpop.f32.mrf.mxu0
        %v1036 = vpop.f32.mrf.mxu0
        %v1037 = vadd.f32 0.0, %v1036
        %v1038 = vpop.f32.mrf.mxu0
        %1039 = vmatprep.mubr.bf16.mxu0 %v978
        %1040 = vmatmul.mubr.bf16.gmra.mxu0 %v977
        %v1041 = vpop.f32.mrf.mxu0
        %v1042 = vadd.f32 0.0, %v1041
        %v1043 = vpop.f32.mrf.mxu0
        %v1044 = vpop.f32.mrf.mxu0
        %v1045 = vadd.f32 0.0, %v1044
        %v1046 = vpop.f32.mrf.mxu0
        %1047 = vmatprep.mubr.bf16.mxu0 %v980
        %1048 = vmatmul.mubr.bf16.gmra.mxu0 %v979
        %v1049 = vpop.f32.mrf.mxu0
        %v1050 = vadd.f32 0.0, %v1049
        %v1051 = vpop.f32.mrf.mxu0
        %v1052 = vpop.f32.mrf.mxu0
        %v1053 = vadd.f32 0.0, %v1052
        %v1054 = vpop.f32.mrf.mxu0
        %1055 = vmatprep.mubr.bf16.mxu0 %v982
        %1056 = vmatmul.mubr.bf16.gmra.mxu0 %v981
        %v1057 = vpop.f32.mrf.mxu0
        %v1058 = vadd.f32 0.0, %v1057
        %v1059 = vpop.f32.mrf.mxu0
        %v1060 = vpop.f32.mrf.mxu0
        %v1061 = vadd.f32 0.0, %v1060
        %v1062 = vpop.f32.mrf.mxu0
        %1063 = vdwg.mxu0
        %v1064 = vmul.f32 %v1034, 0.125
        %v1065 = vmul.f32 %v1037, 0.125
        %v1066 = vmul.f32 %v1042, 0.125
        %v1067 = vmul.f32 %v1045, 0.125
        %v1068 = vmul.f32 %v1050, 0.125
        %v1069 = vmul.f32 %v1053, 0.125
        %v1070 = vmul.f32 %v1058, 0.125
        %v1071 = vmul.f32 %v1061, 0.125
        %v1072 = vsel %vm439, %v1064, -inf
        %1073 = vmax.xlane.f32.xlu0 %v1072
        %v1074 = vpop.xlane.xlu0 %1073
        %v1075 = vsel %vm439, %v1065, -inf
        %1076 = vmax.xlane.f32.xlu0 %v1075
        %v1077 = vpop.xlane.xlu0 %1076
        %v1078 = vsel %vm439, %v1066, -inf
        %1079 = vmax.xlane.f32.xlu0 %v1078
        %v1080 = vpop.xlane.xlu0 %1079
        %v1081 = vsel %vm439, %v1067, -inf
        %1082 = vmax.xlane.f32.xlu0 %v1081
        %v1083 = vpop.xlane.xlu0 %1082
        %v1084 = vsel %vm439, %v1068, -inf
        %1085 = vmax.xlane.f32.xlu0 %v1084
        %v1086 = vpop.xlane.xlu0 %1085
        %v1087 = vsel %vm439, %v1069, -inf
        %1088 = vmax.xlane.f32.xlu0 %v1087
        %v1089 = vpop.xlane.xlu0 %1088
        %v1090 = vsel %vm439, %v1070, -inf
        %1091 = vmax.xlane.f32.xlu0 %v1090
        %v1092 = vpop.xlane.xlu0 %1091
        %v1093 = vsel %vm439, %v1071, -inf
        %1094 = vmax.xlane.f32.xlu0 %v1093
        %v1095 = vpop.xlane.xlu0 %1094
        %v1096 = vsub.f32 %v1064, %v1074
        %v1097 = vsub.f32 %v1065, %v1077
        %v1098 = vsub.f32 %v1066, %v1080
        %v1099 = vsub.f32 %v1067, %v1083
        %v1100 = vsub.f32 %v1068, %v1086
        %v1101 = vsub.f32 %v1069, %v1089
        %v1102 = vsub.f32 %v1070, %v1092
        %v1103 = vsub.f32 %v1071, %v1095
        %v1104 = vmul.f32 %v1096, 1.442695
        %v1105 = vpow.pop %v1104
        %v1106 = vmul.f32 %v1097, 1.442695
        %v1107 = vpow.pop %v1106
        %v1108 = vmul.f32 %v1098, 1.442695
        %v1109 = vpow.pop %v1108
        %v1110 = vmul.f32 %v1099, 1.442695
        %v1111 = vpow.pop %v1110
        %v1112 = vmul.f32 %v1100, 1.442695
        %v1113 = vpow.pop %v1112
        %v1114 = vmul.f32 %v1101, 1.442695
        %v1115 = vpow.pop %v1114
        %v1116 = vmul.f32 %v1102, 1.442695
        %v1117 = vpow.pop %v1116
        %v1118 = vmul.f32 %v1103, 1.442695
        %v1119 = vpow.pop %v1118
        %v1120 = vsel %vm439, %v1105, 0.0
        %1121 = vadd.xlane.f32.xlu0 %v1120
        %v1122 = vpop.xlane.xlu0 %1121
        %v1123 = vsel %vm439, %v1107, 0.0
        %1124 = vadd.xlane.f32.xlu0 %v1123
        %v1125 = vpop.xlane.xlu0 %1124
        %v1126 = vsel %vm439, %v1109, 0.0
        %1127 = vadd.xlane.f32.xlu0 %v1126
        %v1128 = vpop.xlane.xlu0 %1127
        %v1129 = vsel %vm439, %v1111, 0.0
        %1130 = vadd.xlane.f32.xlu0 %v1129
        %v1131 = vpop.xlane.xlu0 %1130
        %v1132 = vsel %vm439, %v1113, 0.0
        %1133 = vadd.xlane.f32.xlu0 %v1132
        %v1134 = vpop.xlane.xlu0 %1133
        %v1135 = vsel %vm439, %v1115, 0.0
        %1136 = vadd.xlane.f32.xlu0 %v1135
        %v1137 = vpop.xlane.xlu0 %1136
        %v1138 = vsel %vm439, %v1117, 0.0
        %1139 = vadd.xlane.f32.xlu0 %v1138
        %v1140 = vpop.xlane.xlu0 %1139
        %v1141 = vsel %vm439, %v1119, 0.0
        %1142 = vadd.xlane.f32.xlu0 %v1141
        %v1143 = vpop.xlane.xlu0 %1142
        %v1144 = vrcp.pop %v1122
        %v1145 = vrcp.pop %v1125
        %v1146 = vrcp.pop %v1128
        %v1147 = vrcp.pop %v1131
        %v1148 = vrcp.pop %v1134
        %v1149 = vrcp.pop %v1137
        %v1150 = vrcp.pop %v1140
        %v1151 = vrcp.pop %v1143
        %v1152 = vmul.f32 %v1105, %v1144
        %v1153 = vmul.f32 %v1107, %v1145
        %v1154 = vmul.f32 %v1109, %v1146
        %v1155 = vmul.f32 %v1111, %v1147
        %v1156 = vmul.f32 %v1113, %v1148
        %v1157 = vmul.f32 %v1115, %v1149
        %v1158 = vmul.f32 %v1117, %v1150
        %v1159 = vmul.f32 %v1119, %v1151
        %v1160 = vpack.c.bf16 %v852, %v849
        %v1161 = vpack.c.bf16 %v860, %v857
        %v1162 = vpack.c.bf16 %v868, %v865
        %v1163 = vpack.c.bf16 %v876, %v873
        %v1164 = vpack.c.bf16 %v884, %v881
        %v1165 = vpack.c.bf16 %v892, %v889
        %v1166 = vpack.c.bf16 %v900, %v897
        %v1167 = vpack.c.bf16 %v908, %v905
        %v1168 = vpack.c.bf16 %v916, %v913
        %v1169 = vpack.c.bf16 %v924, %v921
        %v1170 = vpack.c.bf16 %v932, %v929
        %v1171 = vpack.c.bf16 %v940, %v937
        %v1172 = vpack.c.bf16 %v948, %v945
        %v1173 = vpack.c.bf16 %v956, %v953
        %v1174 = vpack.c.bf16 %v964, %v961
        %v1175 = vpack.c.bf16 %v972, %v969
        %v1176 = vpack.c.bf16 %v1153, %v1152
        %v1177 = vpack.c.bf16 %v1155, %v1154
        %v1178 = vpack.c.bf16 %v1157, %v1156
        %v1179 = vpack.c.bf16 %v1159, %v1158
        %v1181 = vsel %vm439, %v1160, 0
        %v1184 = vsel %vm439, %v1161, 0
        %v1187 = vsel %vm439, %v1162, 0
        %v1190 = vsel %vm439, %v1163, 0
        %v1193 = vsel %vm439, %v1164, 0
        %v1196 = vsel %vm439, %v1165, 0
        %v1199 = vsel %vm439, %v1166, 0
        %v1202 = vsel %vm439, %v1167, 0
        %v1205 = vsel %vm439, %v1168, 0
        %v1208 = vsel %vm439, %v1169, 0
        %v1211 = vsel %vm439, %v1170, 0
        %v1214 = vsel %vm439, %v1171, 0
        %v1217 = vsel %vm439, %v1172, 0
        %v1220 = vsel %vm439, %v1173, 0
        %v1223 = vsel %vm439, %v1174, 0
        %v1226 = vsel %vm439, %v1175, 0
        %v1229 = vsel %vm439, %v1176, 0
        %v1232 = vsel %vm439, %v1177, 0
        %v1235 = vsel %vm439, %v1178, 0
        %v1238 = vsel %vm439, %v1179, 0
        %1240 = vmatprep.subr.bf16.mxu0 0
        %1241 = vmatpush1.bf16.xpose.msra.mxu0 0
        %1242 = vmatprep.subr.bf16.mxu0 0
        %1243 = vmatpush1.bf16.xpose.msra.mxu0 0
        %1244 = vmatprep.subr.bf16.mxu0 0
        %1245 = vmatpush1.bf16.xpose.msra.mxu0 0
        %1246 = vmatprep.subr.bf16.mxu0 0
        %1247 = vmatpush1.bf16.xpose.msra.mxu0 0
        %1248 = vmatprep.subr.bf16.mxu0 0
        %1249 = vmatpush1.bf16.xpose.msra.mxu0 %v1238
        %1250 = vmatprep.subr.bf16.mxu0 0
        %1251 = vmatpush1.bf16.xpose.msra.mxu0 %v1235
        %1252 = vmatprep.subr.bf16.mxu0 0
        %1253 = vmatpush1.bf16.xpose.msra.mxu0 %v1232
        %1254 = vmatprep.subr.bf16.mxu0 0
        %1255 = vmatpush1.bf16.xpose.msra.mxu0 %v1229
        %1256 = vmatprep.subr.bf16.mxu0 0
        %1257 = vmatpush2.bf16.xpose.msra.mxu0 0
        %1258 = vmatprep.subr.bf16.mxu0 0
        %1259 = vmatpush2.bf16.xpose.msra.mxu0 0
        %1260 = vmatprep.subr.bf16.mxu0 0
        %1261 = vmatpush2.bf16.xpose.msra.mxu0 0
        %1262 = vmatprep.subr.bf16.mxu0 0
        %1263 = vmatpush2.bf16.xpose.msra.mxu0 0
        %1264 = vmatprep.subr.bf16.mxu0 0
        %1265 = vmatpush2.bf16.xpose.msra.mxu0 0
        %1266 = vmatprep.subr.bf16.mxu0 0
        %1267 = vmatpush2.bf16.xpose.msra.mxu0 0
        %1268 = vmatprep.subr.bf16.mxu0 0
        %1269 = vmatpush2.bf16.xpose.msra.mxu0 0
        %1270 = vmatprep.subr.bf16.mxu0 0
        %1271 = vmatpush2.bf16.xpose.msra.mxu0 0
        %1272 = vmatprep.mubr.bf16.mxu0 0
        %1273 = vmatmul.mubr.bf16.gmra.mxu0 %v1181
        %v1274 = vpop.f32.mrf.mxu0
        %v1275 = vadd.f32 0.0, %v1274
        %v1276 = vpop.f32.mrf.mxu0
        %v1277 = vpop.f32.mrf.mxu0
        %v1278 = vadd.f32 0.0, %v1277
        %v1279 = vpop.f32.mrf.mxu0
        %1280 = vmatprep.mubr.bf16.mxu0 0
        %1281 = vmatmul.mubr.bf16.gmra.mxu0 %v1184
        %v1282 = vpop.f32.mrf.mxu0
        %v1283 = vadd.f32 0.0, %v1282
        %v1284 = vpop.f32.mrf.mxu0
        %v1285 = vpop.f32.mrf.mxu0
        %v1286 = vadd.f32 0.0, %v1285
        %v1287 = vpop.f32.mrf.mxu0
        %1288 = vmatprep.mubr.bf16.mxu0 0
        %1289 = vmatmul.mubr.bf16.gmra.mxu0 %v1187
        %v1290 = vpop.f32.mrf.mxu0
        %v1291 = vadd.f32 0.0, %v1290
        %v1292 = vpop.f32.mrf.mxu0
        %v1293 = vpop.f32.mrf.mxu0
        %v1294 = vadd.f32 0.0, %v1293
        %v1295 = vpop.f32.mrf.mxu0
        %1296 = vmatprep.mubr.bf16.mxu0 0
        %1297 = vmatmul.mubr.bf16.gmra.mxu0 %v1190
        %v1298 = vpop.f32.mrf.mxu0
        %v1299 = vadd.f32 0.0, %v1298
        %v1300 = vpop.f32.mrf.mxu0
        %v1301 = vpop.f32.mrf.mxu0
        %v1302 = vadd.f32 0.0, %v1301
        %v1303 = vpop.f32.mrf.mxu0
        %1304 = vmatprep.mubr.bf16.mxu0 0
        %1305 = vmatmul.mubr.bf16.gmra.mxu0 %v1193
        %v1306 = vpop.f32.mrf.mxu0
        %v1307 = vadd.f32 0.0, %v1306
        %v1308 = vpop.f32.mrf.mxu0
        %v1309 = vpop.f32.mrf.mxu0
        %v1310 = vadd.f32 0.0, %v1309
        %v1311 = vpop.f32.mrf.mxu0
        %1312 = vmatprep.mubr.bf16.mxu0 0
        %1313 = vmatmul.mubr.bf16.gmra.mxu0 %v1196
        %v1314 = vpop.f32.mrf.mxu0
        %v1315 = vadd.f32 0.0, %v1314
        %v1316 = vpop.f32.mrf.mxu0
        %v1317 = vpop.f32.mrf.mxu0
        %v1318 = vadd.f32 0.0, %v1317
        %v1319 = vpop.f32.mrf.mxu0
        %1320 = vmatprep.mubr.bf16.mxu0 0
        %1321 = vmatmul.mubr.bf16.gmra.mxu0 %v1199
        %v1322 = vpop.f32.mrf.mxu0
        %v1323 = vadd.f32 0.0, %v1322
        %v1324 = vpop.f32.mrf.mxu0
        %v1325 = vpop.f32.mrf.mxu0
        %v1326 = vadd.f32 0.0, %v1325
        %v1327 = vpop.f32.mrf.mxu0
        %1328 = vmatprep.mubr.bf16.mxu0 0
        %1329 = vmatmul.mubr.bf16.gmra.mxu0 %v1202
        %v1330 = vpop.f32.mrf.mxu0
        %v1331 = vadd.f32 0.0, %v1330
        %v1332 = vpop.f32.mrf.mxu0
        %v1333 = vpop.f32.mrf.mxu0
        %v1334 = vadd.f32 0.0, %v1333
        %v1335 = vpop.f32.mrf.mxu0
        %1336 = vmatprep.mubr.bf16.mxu0 0
        %1337 = vmatmul.mubr.bf16.gmra.mxu0 %v1205
        %v1338 = vpop.f32.mrf.mxu0
        %v1339 = vadd.f32 0.0, %v1338
        %v1340 = vpop.f32.mrf.mxu0
        %v1341 = vpop.f32.mrf.mxu0
        %v1342 = vadd.f32 0.0, %v1341
        %v1343 = vpop.f32.mrf.mxu0
        %1344 = vmatprep.mubr.bf16.mxu0 0
        %1345 = vmatmul.mubr.bf16.gmra.mxu0 %v1208
        %v1346 = vpop.f32.mrf.mxu0
        %v1347 = vadd.f32 0.0, %v1346
        %v1348 = vpop.f32.mrf.mxu0
        %v1349 = vpop.f32.mrf.mxu0
        %v1350 = vadd.f32 0.0, %v1349
        %v1351 = vpop.f32.mrf.mxu0
        %1352 = vmatprep.mubr.bf16.mxu0 0
        %1353 = vmatmul.mubr.bf16.gmra.mxu0 %v1211
        %v1354 = vpop.f32.mrf.mxu0
        %v1355 = vadd.f32 0.0, %v1354
        %v1356 = vpop.f32.mrf.mxu0
        %v1357 = vpop.f32.mrf.mxu0
        %v1358 = vadd.f32 0.0, %v1357
        %v1359 = vpop.f32.mrf.mxu0
        %1360 = vmatprep.mubr.bf16.mxu0 0
        %1361 = vmatmul.mubr.bf16.gmra.mxu0 %v1214
        %v1362 = vpop.f32.mrf.mxu0
        %v1363 = vadd.f32 0.0, %v1362
        %v1364 = vpop.f32.mrf.mxu0
        %v1365 = vpop.f32.mrf.mxu0
        %v1366 = vadd.f32 0.0, %v1365
        %v1367 = vpop.f32.mrf.mxu0
        %1368 = vmatprep.mubr.bf16.mxu0 0
        %1369 = vmatmul.mubr.bf16.gmra.mxu0 %v1217
        %v1370 = vpop.f32.mrf.mxu0
        %v1371 = vadd.f32 0.0, %v1370
        %v1372 = vpop.f32.mrf.mxu0
        %v1373 = vpop.f32.mrf.mxu0
        %v1374 = vadd.f32 0.0, %v1373
        %v1375 = vpop.f32.mrf.mxu0
        %1376 = vmatprep.mubr.bf16.mxu0 0
        %1377 = vmatmul.mubr.bf16.gmra.mxu0 %v1220
        %v1378 = vpop.f32.mrf.mxu0
        %v1379 = vadd.f32 0.0, %v1378
        %v1380 = vpop.f32.mrf.mxu0
        %v1381 = vpop.f32.mrf.mxu0
        %v1382 = vadd.f32 0.0, %v1381
        %v1383 = vpop.f32.mrf.mxu0
        %1384 = vmatprep.mubr.bf16.mxu0 0
        %1385 = vmatmul.mubr.bf16.gmra.mxu0 %v1223
        %v1386 = vpop.f32.mrf.mxu0
        %v1387 = vadd.f32 0.0, %v1386
        %v1388 = vpop.f32.mrf.mxu0
        %v1389 = vpop.f32.mrf.mxu0
        %v1390 = vadd.f32 0.0, %v1389
        %v1391 = vpop.f32.mrf.mxu0
        %1392 = vmatprep.mubr.bf16.mxu0 0
        %1393 = vmatmul.mubr.bf16.gmra.mxu0 %v1226
        %v1394 = vpop.f32.mrf.mxu0
        %v1395 = vadd.f32 0.0, %v1394
        %v1396 = vpop.f32.mrf.mxu0
        %v1397 = vpop.f32.mrf.mxu0
        %v1398 = vadd.f32 0.0, %v1397
        %v1399 = vpop.f32.mrf.mxu0
        %1400 = vdwg.mxu0
        %v1401 = vunpack.c.l.bf16 %v251
        %v1402 = vunpack.c.l.bf16 %v252
        %v1403 = vunpack.c.l.bf16 %v253
        %v1404 = vunpack.c.l.bf16 %v254
        %v1405 = vunpack.c.l.bf16 %v255
        %v1406 = vunpack.c.l.bf16 %v256
        %v1407 = vunpack.c.l.bf16 %v257
        %v1408 = vunpack.c.l.bf16 %v258
        %v1409 = vunpack.c.l.bf16 %v259
        %v1410 = vunpack.c.l.bf16 %v260
        %v1411 = vunpack.c.l.bf16 %v261
        %v1412 = vunpack.c.l.bf16 %v262
        %v1413 = vunpack.c.l.bf16 %v263
        %v1414 = vunpack.c.l.bf16 %v264
        %v1415 = vunpack.c.l.bf16 %v265
        %v1416 = vunpack.c.l.bf16 %v266
        %v1417 = vunpack.c.l.bf16 %v267
        %v1418 = vunpack.c.l.bf16 %v268
        %v1419 = vunpack.c.l.bf16 %v269
        %v1420 = vunpack.c.l.bf16 %v270
        %v1421 = vunpack.c.l.bf16 %v271
        %v1422 = vunpack.c.l.bf16 %v272
        %v1423 = vunpack.c.l.bf16 %v273
        %v1424 = vunpack.c.l.bf16 %v274
        %v1425 = vunpack.c.l.bf16 %v275
        %v1426 = vunpack.c.l.bf16 %v276
        %v1427 = vunpack.c.l.bf16 %v277
        %v1428 = vunpack.c.l.bf16 %v278
        %v1429 = vunpack.c.l.bf16 %v279
        %v1430 = vunpack.c.l.bf16 %v280
        %v1431 = vunpack.c.l.bf16 %v281
        %v1432 = vunpack.c.l.bf16 %v282
        %v1433 = vadd.f32 %v1401, %v1275
        %v1434 = vadd.f32 %v1402, %v1278
        %v1435 = vadd.f32 %v1403, %v1283
        %v1436 = vadd.f32 %v1404, %v1286
        %v1437 = vadd.f32 %v1405, %v1291
        %v1438 = vadd.f32 %v1406, %v1294
        %v1439 = vadd.f32 %v1407, %v1299
        %v1440 = vadd.f32 %v1408, %v1302
        %v1441 = vadd.f32 %v1409, %v1307
        %v1442 = vadd.f32 %v1410, %v1310
        %v1443 = vadd.f32 %v1411, %v1315
        %v1444 = vadd.f32 %v1412, %v1318
        %v1445 = vadd.f32 %v1413, %v1323
        %v1446 = vadd.f32 %v1414, %v1326
        %v1447 = vadd.f32 %v1415, %v1331
        %v1448 = vadd.f32 %v1416, %v1334
        %v1449 = vadd.f32 %v1417, %v1339
        %v1450 = vadd.f32 %v1418, %v1342
        %v1451 = vadd.f32 %v1419, %v1347
        %v1452 = vadd.f32 %v1420, %v1350
        %v1453 = vadd.f32 %v1421, %v1355
        %v1454 = vadd.f32 %v1422, %v1358
        %v1455 = vadd.f32 %v1423, %v1363
        %v1456 = vadd.f32 %v1424, %v1366
        %v1457 = vadd.f32 %v1425, %v1371
        %v1458 = vadd.f32 %v1426, %v1374
        %v1459 = vadd.f32 %v1427, %v1379
        %v1460 = vadd.f32 %v1428, %v1382
        %v1461 = vadd.f32 %v1429, %v1387
        %v1462 = vadd.f32 %v1430, %v1390
        %v1463 = vadd.f32 %v1431, %v1395
        %v1464 = vadd.f32 %v1432, %v1398
        %v1465 = vmax.f32 %v1433, 0.0
        %v1466 = vmax.f32 %v1434, 0.0
        %v1467 = vmax.f32 %v1435, 0.0
        %v1468 = vmax.f32 %v1436, 0.0
        %v1469 = vmax.f32 %v1437, 0.0
        %v1470 = vmax.f32 %v1438, 0.0
        %v1471 = vmax.f32 %v1439, 0.0
        %v1472 = vmax.f32 %v1440, 0.0
        %v1473 = vmax.f32 %v1441, 0.0
        %v1474 = vmax.f32 %v1442, 0.0
        %v1475 = vmax.f32 %v1443, 0.0
        %v1476 = vmax.f32 %v1444, 0.0
        %v1477 = vmax.f32 %v1445, 0.0
        %v1478 = vmax.f32 %v1446, 0.0
        %v1479 = vmax.f32 %v1447, 0.0
        %v1480 = vmax.f32 %v1448, 0.0
        %v1481 = vmax.f32 %v1449, 0.0
        %v1482 = vmax.f32 %v1450, 0.0
        %v1483 = vmax.f32 %v1451, 0.0
        %v1484 = vmax.f32 %v1452, 0.0
        %v1485 = vmax.f32 %v1453, 0.0
        %v1486 = vmax.f32 %v1454, 0.0
        %v1487 = vmax.f32 %v1455, 0.0
        %v1488 = vmax.f32 %v1456, 0.0
        %v1489 = vmax.f32 %v1457, 0.0
        %v1490 = vmax.f32 %v1458, 0.0
        %v1491 = vmax.f32 %v1459, 0.0
        %v1492 = vmax.f32 %v1460, 0.0
        %v1493 = vmax.f32 %v1461, 0.0
        %v1494 = vmax.f32 %v1462, 0.0
        %v1495 = vmax.f32 %v1463, 0.0
        %v1496 = vmax.f32 %v1464, 0.0
        %v1497 = vld [vmem:[%s5] sm:$0xff]
        %v1498 = vld [vmem:[%s5 + $0x8] sm:$0xff]
        %v1499 = vld [vmem:[%s5 + $0x10] sm:$0xff]
        %v1500 = vld [vmem:[%s5 + $0x18] sm:$0xff]
        %v1501 = vld [vmem:[%s5 + $0x20] sm:$0xff]
        %v1502 = vld [vmem:[%s5 + $0x28] sm:$0xff]
        %v1503 = vld [vmem:[%s5 + $0x30] sm:$0xff]
        %v1504 = vld [vmem:[%s5 + $0x38] sm:$0xff]
        %v1505 = vpack.c.bf16 %v1466, %v1465
        %v1506 = vpack.c.bf16 %v1468, %v1467
        %v1507 = vpack.c.bf16 %v1470, %v1469
        %v1508 = vpack.c.bf16 %v1472, %v1471
        %v1509 = vpack.c.bf16 %v1474, %v1473
        %v1510 = vpack.c.bf16 %v1476, %v1475
        %v1511 = vpack.c.bf16 %v1478, %v1477
        %v1512 = vpack.c.bf16 %v1480, %v1479
        %v1513 = vpack.c.bf16 %v1482, %v1481
        %v1514 = vpack.c.bf16 %v1484, %v1483
        %v1515 = vpack.c.bf16 %v1486, %v1485
        %v1516 = vpack.c.bf16 %v1488, %v1487
        %v1517 = vpack.c.bf16 %v1490, %v1489
        %v1518 = vpack.c.bf16 %v1492, %v1491
        %v1519 = vpack.c.bf16 %v1494, %v1493
        %v1520 = vpack.c.bf16 %v1496, %v1495
        %v1529 = vunpack.c.l.b16 %v1497
        %v1530 = vunpack.c.h.b16 %v1497
        %v1531 = vunpack.c.l.b16 %v1498
        %v1532 = vunpack.c.h.b16 %v1498
        %v1533 = vunpack.c.l.b16 %v1499
        %v1534 = vunpack.c.h.b16 %v1499
        %v1535 = vunpack.c.l.b16 %v1500
        %v1536 = vunpack.c.h.b16 %v1500
        %v1537 = vunpack.c.l.b16 %v1501
        %v1538 = vunpack.c.h.b16 %v1501
        %v1539 = vunpack.c.l.b16 %v1502
        %v1540 = vunpack.c.h.b16 %v1502
        %v1541 = vunpack.c.l.b16 %v1503
        %v1542 = vunpack.c.h.b16 %v1503
        %v1543 = vunpack.c.l.b16 %v1504
        %v1544 = vunpack.c.h.b16 %v1504
        %v1545 = vpack.c.b16 %v1531, %v1529
        %v1546 = vpack.c.b16 %v1532, %v1530
        %v1547 = vpack.c.b16 %v1535, %v1533
        %v1548 = vpack.c.b16 %v1536, %v1534
        %v1549 = vpack.c.b16 %v1539, %v1537
        %v1550 = vpack.c.b16 %v1540, %v1538
        %v1551 = vpack.c.b16 %v1543, %v1541
        %v1552 = vpack.c.b16 %v1544, %v1542
        %1561 = vmatprep.subr.bf16.mxu0 0
        %1562 = vmatpush1.bf16.msra.mxu0 %v1512
        %1563 = vmatprep.subr.bf16.mxu0 0
        %1564 = vmatpush1.bf16.msra.mxu0 %v1511
        %1565 = vmatprep.subr.bf16.mxu0 0
        %1566 = vmatpush1.bf16.msra.mxu0 %v1510
        %1567 = vmatprep.subr.bf16.mxu0 0
        %1568 = vmatpush1.bf16.msra.mxu0 %v1509
        %1569 = vmatprep.subr.bf16.mxu0 0
        %1570 = vmatpush1.bf16.msra.mxu0 %v1508
        %1571 = vmatprep.subr.bf16.mxu0 0
        %1572 = vmatpush1.bf16.msra.mxu0 %v1507
        %1573 = vmatprep.subr.bf16.mxu0 0
        %1574 = vmatpush1.bf16.msra.mxu0 %v1506
        %1575 = vmatprep.subr.bf16.mxu0 0
        %1576 = vmatpush1.bf16.msra.mxu0 %v1505
        %1577 = vmatprep.subr.bf16.mxu0 0
        %1578 = vmatpush2.bf16.msra.mxu0 %v1520
        %1579 = vmatprep.subr.bf16.mxu0 0
        %1580 = vmatpush2.bf16.msra.mxu0 %v1519
        %1581 = vmatprep.subr.bf16.mxu0 0
        %1582 = vmatpush2.bf16.msra.mxu0 %v1518
        %1583 = vmatprep.subr.bf16.mxu0 0
        %1584 = vmatpush2.bf16.msra.mxu0 %v1517
        %1585 = vmatprep.subr.bf16.mxu0 0
        %1586 = vmatpush2.bf16.msra.mxu0 %v1516
        %1587 = vmatprep.subr.bf16.mxu0 0
        %1588 = vmatpush2.bf16.msra.mxu0 %v1515
        %1589 = vmatprep.subr.bf16.mxu0 0
        %1590 = vmatpush2.bf16.msra.mxu0 %v1514
        %1591 = vmatprep.subr.bf16.mxu0 0
        %1592 = vmatpush2.bf16.msra.mxu0 %v1513
        %1593 = vmatprep.mubr.bf16.mxu0 %v1546
        %1594 = vmatmul.mubr.bf16.gmra.mxu0 %v1545
        %v1595 = vpop.f32.mrf.mxu0
        %v1596 = vadd.f32 0.0, %v1595
        %v1597 = vpop.f32.mrf.mxu0
        %v1598 = vpop.f32.mrf.mxu0
        %v1599 = vadd.f32 0.0, %v1598
        %v1600 = vpop.f32.mrf.mxu0
        %1601 = vmatprep.mubr.bf16.mxu0 %v1548
        %1602 = vmatmul.mubr.bf16.gmra.mxu0 %v1547
        %v1603 = vpop.f32.mrf.mxu0
        %v1604 = vadd.f32 0.0, %v1603
        %v1605 = vpop.f32.mrf.mxu0
        %v1606 = vpop.f32.mrf.mxu0
        %v1607 = vadd.f32 0.0, %v1606
        %v1608 = vpop.f32.mrf.mxu0
        %1609 = vmatprep.mubr.bf16.mxu0 %v1550
        %1610 = vmatmul.mubr.bf16.gmra.mxu0 %v1549
        %v1611 = vpop.f32.mrf.mxu0
        %v1612 = vadd.f32 0.0, %v1611
        %v1613 = vpop.f32.mrf.mxu0
        %v1614 = vpop.f32.mrf.mxu0
        %v1615 = vadd.f32 0.0, %v1614
        %v1616 = vpop.f32.mrf.mxu0
        %1617 = vmatprep.mubr.bf16.mxu0 %v1552
        %1618 = vmatmul.mubr.bf16.gmra.mxu0 %v1551
        %v1619 = vpop.f32.mrf.mxu0
        %v1620 = vadd.f32 0.0, %v1619
        %v1621 = vpop.f32.mrf.mxu0
        %v1622 = vpop.f32.mrf.mxu0
        %v1623 = vadd.f32 0.0, %v1622
        %v1624 = vpop.f32.mrf.mxu0
        %1625 = vdwg.mxu0
        %1626 = vst.msk [vmem:[%s244] sm:$0xff] %vm439, %v1596
        %1627 = vst.msk [vmem:[%s244 + $0x8] sm:$0xff] %vm439, %v1599
        %1628 = vst.msk [vmem:[%s244 + $0x10] sm:$0xff] %vm439, %v1604
        %1629 = vst.msk [vmem:[%s244 + $0x18] sm:$0xff] %vm439, %v1607
        %1630 = vst.msk [vmem:[%s244 + $0x20] sm:$0xff] %vm439, %v1612
        %1631 = vst.msk [vmem:[%s244 + $0x28] sm:$0xff] %vm439, %v1615
        %1632 = vst.msk [vmem:[%s244 + $0x30] sm:$0xff] %vm439, %v1620
        %1633 = vst.msk [vmem:[%s244 + $0x38] sm:$0xff] %vm439, %v1623
        %s1634 = sand.u32 %s159, 1
        %s1635 = scalar_lea.sflag [#allocation3], %s1634
        %s1636 = sand.u32 %s159, 1
        %s1637 = smul.addr %s1636, 64
        %s1638 = scalar_lea.vmem [#allocation2], %s1637
        // Predicated region
        $region45: #{conv_block_attention_forward.5} parent=43 // pred_check
          %p1639 = pneg %p169
        $region46: #{conv_block_attention_forward.5} parent=43 // pred_check_branch
          %1641 = sbr.rel (%p1639) target = $region48
        $region47: #{conv_block_attention_forward.5} parent=43 // pred_region
          %s1643 = ssub.s32 1024, 1024
          %1644 = vsyncadd %s1635, %s1643
          %s1645 = smul.addr %s20, 8
          %s1646 = smul.addr %s1645, 128
          %s1647 = scalar_lea.hbm %s6, %s1646
          %s1648 = sshll.u32 %s1638, 4
          %s1649 = int_to_ptr.vmem [resolvable:$true] %s1648
          %1654 = dma.vmem_to_hbm [thread:$0]  %s1649, 1024, %s1647, %s1635, 128, 128, 8
        $region48: #{conv_block_attention_forward.5} parent=43 // pred_fallthru
          _
      $region44: #{conv_block_attention_forward.5} parent=5 // pred_fallthru
        _
      %p1655 = scmp.le.s32.totalorder 2, %s15
      // Predicated region
      $region49: #{conv_block_attention_forward.5} parent=5 // pred_check
        %p1656 = pneg %p1655
      $region50: #{conv_block_attention_forward.5} parent=5 // pred_check_branch
        %1658 = sbr.rel (%p1656) target = $region52
      $region51: #{conv_block_attention_forward.5} parent=5 // pred_region
        %s1659 = ssub.s32 %s15, 2
        // Predicated region
        $region53: #{conv_block_attention_forward.5} parent=51 // pred_check
          %p1660 = pneg %p175
        $region54: #{conv_block_attention_forward.5} parent=51 // pred_check_branch
          %1662 = sbr.rel (%p1660) target = $region56
        $region55: #{conv_block_attention_forward.5} parent=51 // pred_region
          %s1663 = sand.u32 %s160, 1
          %s1664 = scalar_lea.sflag [#allocation3], %s1663
          %s1665 = sand.u32 %s160, 1
          %s1666 = smul.addr %s1665, 64
          %s1667 = scalar_lea.vmem [#allocation2], %s1666
          %1668 = dma.done %s1664, 1024
        $region56: #{conv_block_attention_forward.5} parent=51 // pred_fallthru
          _
      $region52: #{conv_block_attention_forward.5} parent=5 // pred_fallthru
        _
    $region6: #{conv_block_attention_forward.5} parent=1 // loop_footer
      %s19 = sadd.s32 1, %s15
    $region7: #{conv_block_attention_forward.5} parent=1 // loop_footer_branch
      %14 = sbr.rel target = $region3
    $region8: #{conv_block_attention_forward.5} parent=1 // loop_exit
      _
    %1669 = vsyncpa [#allocation3], 1
    %s1670 = scalar_lea.sflag [#allocation3], 1
    %1671 = vsyncpa %s1670, 1

// kernel: conv_block_attention_forward.3
$region0: #{conv_block_attention_forward.3}
  #allocation0 [shape = 'u32[]', space=smem, size = 0x4, offset = 0x4, fixed_abs, tag = 'smem constant byte address 0x4 - core index']
  #allocation1 [shape = 'u32[144,128]{1,0:T(1,128)}', space=vmem, size = 0x12000, scoped, tag = 'internal scratch']
  %s0 = inlined_call_operand.vmem [shape: bf16[2,18,18,4], index: 0, kind: input, shape index: {}]
  %s1 = inlined_call_operand.vmem [shape: bf16[9,4,64], index: 1, kind: input, shape index: {}]
  %s2 = inlined_call_operand.vmem [shape: f32[1,64], index: 2, kind: input, shape index: {}]
  %s3 = inlined_call_operand.vmem [shape: f32[1,64], index: 3, kind: input, shape index: {}]
  %s4 = inlined_call_operand.vmem [shape: bf16[2,256,64], index: 4, kind: output, shape index: {}]
  %s5 = sld [smem:[#allocation0]]
  $region49: #{conv_block_attention_forward.3} parent=0
    _
  %s7 = ssub.s32 1, %s5
  %s8 = scalar_select 0, %s7, %s5
  loop: start=0, step=1, limit=4
  $region2: #{conv_block_attention_forward.3} parent=0 // loop_pre_header
    _
  $region3: #{conv_block_attention_forward.3} parent=0 // loop_header
    %s10 = sphi 0, %s14
    %p11 = scmp.ge.s32.totalorder %s10, 4
    %s17 = sphi 0, %s29
    %s18 = sphi 0, %s25
    %s19 = sphi 0, %s17
    %s20 = sphi 0, %s18
    %s21 = sphi 0, %s19
    %s22 = sphi 0, %s20
    %s32 = sphi 0, %s34
    %s35 = sphi 0, %s32
    %s36 = sphi 0, %s35
    %s52 = sphi 0, %s36
    %s56 = sphi 0, %s56
    %s58 = sphi 0, %s56
    %s59 = sphi 0, %s58
    %s73 = sphi 0, %s59
    %s77 = sphi 0, %s77
    %s79 = sphi 0, %s77
    %s80 = sphi 0, %s79
    %s94 = sphi 0, %s80
    %s98 = sphi 0, %s98
    %s100 = sphi 0, %s98
    %s101 = sphi 0, %s100
    %s115 = sphi 0, %s101
    %s123 = sphi 0, %s125
    %s126 = sphi 0, %s123
    %s127 = sphi 0, %s126
    %s143 = sphi 0, %s127
  $region4: #{conv_block_attention_forward.3} parent=0 // loop_header_branch
    %13 = sbr.rel (%p11) target = $region8
  $region5: #{conv_block_attention_forward.3} parent=0 // loop_body
    %s15 = ssub.s32 %s10, 1
    %s16 = ssub.s32 %s10, 2
    %s23 = sadd.s32 1, %s18
    %p24 = scmp.ge.s32.totalorder %s23, 1
    %s25 = scalar_select %p24, 0, %s23
    %s26 = sadd.s32 1, %s17
    %s27 = scalar_select %p24, %s26, %s17
    %p28 = scmp.ge.s32.totalorder %s27, 2
    %s29 = scalar_select %p28, 0, %s27
    %s30 = ssub.s32 %s17, %s29
    %p31 = scmp.eq.s32.totalorder %s30, 0
    %s33 = sadd.s32 %s32, 1
    %s34 = scalar_select %p31, %s32, %s33
    %p37 = pneg %p31
    %p38 = scmp.eq.s32.totalorder %s10, 1
    %p39 = por %p37, %p38
    %p40 = scmp.ne.s32.totalorder %s32, %s35
    %p41 = scmp.eq.s32.totalorder %s10, 0
    %p42 = por %p40, %p41
    %p43 = scmp.ne.s32.totalorder %s32, %s35
    %p44 = scmp.eq.s32.totalorder %s15, 1
    %p45 = por %p43, %p44
    %p46 = scmp.ne.s32.totalorder %s35, %s36
    %p47 = scmp.eq.s32.totalorder %s15, 0
    %p48 = por %p46, %p47
    %p49 = scmp.ne.s32.totalorder %s35, %s36
    %p50 = scmp.eq.s32.totalorder %s16, 1
    %p51 = por %p49, %p50
    %p53 = scmp.ne.s32.totalorder %s36, %s52
    %p54 = scmp.eq.s32.totalorder %s16, 0
    %p55 = por %p53, %p54
    %s57 = sadd.s32 %s56, 1
    %p60 = scmp.eq.s32.totalorder %s10, 1
    %p61 = scmp.ne.s32.totalorder %s56, %s58
    %p62 = scmp.eq.s32.totalorder %s10, 0
    %p63 = por %p61, %p62
    %p64 = scmp.ne.s32.totalorder %s56, %s58
    %p65 = scmp.eq.s32.totalorder %s15, 1
    %p66 = por %p64, %p65
    %p67 = scmp.ne.s32.totalorder %s58, %s59
    %p68 = scmp.eq.s32.totalorder %s15, 0
    %p69 = por %p67, %p68
    %p70 = scmp.ne.s32.totalorder %s58, %s59
    %p71 = scmp.eq.s32.totalorder %s16, 1
    %p72 = por %p70, %p71
    %p74 = scmp.ne.s32.totalorder %s59, %s73
    %p75 = scmp.eq.s32.totalorder %s16, 0
    %p76 = por %p74, %p75
    %s78 = sadd.s32 %s77, 1
    %p81 = scmp.eq.s32.totalorder %s10, 1
    %p82 = scmp.ne.s32.totalorder %s77, %s79
    %p83 = scmp.eq.s32.totalorder %s10, 0
    %p84 = por %p82, %p83
    %p85 = scmp.ne.s32.totalorder %s77, %s79
    %p86 = scmp.eq.s32.totalorder %s15, 1
    %p87 = por %p85, %p86
    %p88 = scmp.ne.s32.totalorder %s79, %s80
    %p89 = scmp.eq.s32.totalorder %s15, 0
    %p90 = por %p88, %p89
    %p91 = scmp.ne.s32.totalorder %s79, %s80
    %p92 = scmp.eq.s32.totalorder %s16, 1
    %p93 = por %p91, %p92
    %p95 = scmp.ne.s32.totalorder %s80, %s94
    %p96 = scmp.eq.s32.totalorder %s16, 0
    %p97 = por %p95, %p96
    %s99 = sadd.s32 %s98, 1
    %p102 = scmp.eq.s32.totalorder %s10, 1
    %p103 = scmp.ne.s32.totalorder %s98, %s100
    %p104 = scmp.eq.s32.totalorder %s10, 0
    %p105 = por %p103, %p104
    %p106 = scmp.ne.s32.totalorder %s98, %s100
    %p107 = scmp.eq.s32.totalorder %s15, 1
    %p108 = por %p106, %p107
    %p109 = scmp.ne.s32.totalorder %s100, %s101
    %p110 = scmp.eq.s32.totalorder %s15, 0
    %p111 = por %p109, %p110
    %p112 = scmp.ne.s32.totalorder %s100, %s101
    %p113 = scmp.eq.s32.totalorder %s16, 1
    %p114 = por %p112, %p113
    %p116 = scmp.ne.s32.totalorder %s101, %s115
    %p117 = scmp.eq.s32.totalorder %s16, 0
    %p118 = por %p116, %p117
    %s119 = ssub.s32 %s17, %s29
    %s120 = ssub.s32 %s18, %s25
    %s121 = sor.u32 %s119, %s120
    %p122 = scmp.eq.s32.totalorder %s121, 0
    %s124 = sadd.s32 %s123, 1
    %s125 = scalar_select %p122, %s123, %s124
    %p128 = pneg %p122
    %p129 = scmp.eq.s32.totalorder %s10, 1
    %p130 = por %p128, %p129
    %p131 = scmp.ne.s32.totalorder %s123, %s126
    %p132 = scmp.eq.s32.totalorder %s10, 0
    %p133 = por %p131, %p132
    %p134 = scmp.ne.s32.totalorder %s123, %s126
    %p135 = scmp.eq.s32.totalorder %s15, 1
    %p136 = por %p134, %p135
    %p137 = scmp.ne.s32.totalorder %s126, %s127
    %p138 = scmp.eq.s32.totalorder %s15, 0
    %p139 = por %p137, %p138
    %p140 = scmp.ne.s32.totalorder %s126, %s127
    %p141 = scmp.eq.s32.totalorder %s16, 1
    %p142 = por %p140, %p141
    %p144 = scmp.ne.s32.totalorder %s127, %s143
    %p145 = scmp.eq.s32.totalorder %s16, 0
    %p146 = por %p144, %p145
    %p147 = scmp.le.s32.totalorder 1, %s10
    %p148 = scmp.lt.s32.totalorder %s10, 3
    %p149 = pnand %p147, %p148
    %p150 = pneg %p149
    // Predicated region
    $region9: #{conv_block_attention_forward.3} parent=5 // pred_check
      _
    $region10: #{conv_block_attention_forward.3} parent=5 // pred_check_branch
      %152 = sbr.rel (%p149) target = $region12
    $region11: #{conv_block_attention_forward.3} parent=5 // pred_region
      %s153 = ssub.s32 %s10, 1
      // Predicated region
      $region13: #{conv_block_attention_forward.3} parent=11 // pred_check
        %p154 = pneg %p69
      $region14: #{conv_block_attention_forward.3} parent=11 // pred_check_branch
        %156 = sbr.rel (%p154) target = $region16
      $region15: #{conv_block_attention_forward.3} parent=11 // pred_region
        _
      $region16: #{conv_block_attention_forward.3} parent=11 // pred_fallthru
        _
      // Predicated region
      $region17: #{conv_block_attention_forward.3} parent=11 // pred_check
        %p157 = pneg %p90
      $region18: #{conv_block_attention_forward.3} parent=11 // pred_check_branch
        %159 = sbr.rel (%p157) target = $region20
      $region19: #{conv_block_attention_forward.3} parent=11 // pred_region
        _
      $region20: #{conv_block_attention_forward.3} parent=11 // pred_fallthru
        _
      // Predicated region
      $region21: #{conv_block_attention_forward.3} parent=11 // pred_check
        %p160 = pneg %p111
      $region22: #{conv_block_attention_forward.3} parent=11 // pred_check_branch
        %162 = sbr.rel (%p160) target = $region24
      $region23: #{conv_block_attention_forward.3} parent=11 // pred_region
        _
      $region24: #{conv_block_attention_forward.3} parent=11 // pred_fallthru
        _
    $region12: #{conv_block_attention_forward.3} parent=5 // pred_fallthru
      _
    %p163 = scmp.lt.s32.totalorder %s10, 2
    // Predicated region
    $region25: #{conv_block_attention_forward.3} parent=5 // pred_check
      %p164 = pneg %p163
    $region26: #{conv_block_attention_forward.3} parent=5 // pred_check_branch
      %166 = sbr.rel (%p164) target = $region28
    $region27: #{conv_block_attention_forward.3} parent=5 // pred_region
      // Predicated region
      $region29: #{conv_block_attention_forward.3} parent=27 // pred_check
        %p167 = pneg %p42
      $region30: #{conv_block_attention_forward.3} parent=27 // pred_check_branch
        %169 = sbr.rel (%p167) target = $region32
      $region31: #{conv_block_attention_forward.3} parent=27 // pred_region
        %p170 = scmp.lt.s32.totalorder %s17, 1
        %s171 = scalar_select %p170, %s17, 1
        %s172 = smul.addr %s171, 54
        %s173 = smul.addr %s172, 4
        %s174 = scalar_lea.vmem %s0, %s173
      $region32: #{conv_block_attention_forward.3} parent=27 // pred_fallthru
        _
    $region28: #{conv_block_attention_forward.3} parent=5 // pred_fallthru
      _
    %p175 = scmp.le.s32.totalorder 1, %s10
    %p176 = scmp.lt.s32.totalorder %s10, 3
    %p177 = pnand %p175, %p176
    %p178 = pneg %p177
    // Predicated region
    $region33: #{conv_block_attention_forward.3} parent=5 // pred_check
      _
    $region34: #{conv_block_attention_forward.3} parent=5 // pred_check_branch
      %180 = sbr.rel (%p177) target = $region36
    $region35: #{conv_block_attention_forward.3} parent=5 // pred_region
      %s181 = ssub.s32 %s10, 1
      %p182 = scmp.lt.s32.totalorder %s19, 1
      %s183 = scalar_select %p182, %s19, 1
      %s184 = smul.addr %s183, 54
      %s185 = smul.addr %s184, 4
      %s186 = scalar_lea.vmem %s0, %s185
      %p187 = pneg %p48
      %p188 = pneg %p45
      %p189 = pneg %p69
      %p190 = pneg %p66
      %p191 = pneg %p90
      %p192 = pneg %p87
      %p193 = pneg %p111
      %p194 = pneg %p108
      %p195 = pneg %p139
      %p196 = pneg %p136
      %s197 = smul.u32 32, %s20
      %p198 = scmp.lt.s32.totalorder %s19, 1
      %s199 = scalar_select %p198, %s19, 1
      %p200 = scmp.lt.s32.totalorder %s197, 31
      %s201 = scalar_select %p200, %s197, 31
      %s202 = smul.addr %s199, 32
      %s203 = sadd.s32 %s201, %s202
      %s204 = smul.addr %s203, 4
      %s205 = scalar_lea.vmem %s4, %s204
      %p206 = scmp.lt.s32.totalorder %s19, 1
      %s207 = scalar_select %p206, %s19, 1
      %s208 = smul.addr %s207, 54
      %s209 = smul.addr %s208, 4
      %s210 = scalar_lea.vmem %s0, %s209
      %s211 = smul.u32 32, %s20
      %p212 = scmp.lt.s32.totalorder %s19, 1
      %s213 = scalar_select %p212, %s19, 1
      %p214 = scmp.lt.s32.totalorder %s211, 31
      %s215 = scalar_select %p214, %s211, 31
      %s216 = smul.addr %s213, 32
      %s217 = sadd.s32 %s215, %s216
      %s218 = smul.addr %s217, 4
      %s219 = scalar_lea.vmem %s4, %s218
      %s220 = smul.u32 32, %s20
      %s222 = smul.u32 %s20, 16
      %s223 = smul.u32 %s222, 3
      %s224 = smul.addr %s223, 4
      %s225 = scalar_lea.vmem %s210, %s224
      %v226 = vld [vmem:[%s225] sm:$0xf]
      %v227 = vld [vmem:[%s225 + $0x4] sm:$0xf]
      %v228 = vld [vmem:[%s225 + $0xc] sm:$0xf]
      %v229 = vld [vmem:[%s225 + $0x10] sm:$0xf]
      %v230 = vld [vmem:[%s225 + $0x18] sm:$0xf]
      %v231 = vld [vmem:[%s225 + $0x1c] sm:$0xf]
      %v232 = vld [vmem:[%s225 + $0x24] sm:$0xf]
      %v233 = vld [vmem:[%s225 + $0x28] sm:$0xf]
      %v234 = vld [vmem:[%s225 + $0x30] sm:$0xf]
      %v235 = vld [vmem:[%s225 + $0x34] sm:$0xf]
      %v236 = vld [vmem:[%s225 + $0x3c] sm:$0xf]
      %v237 = vld [vmem:[%s225 + $0x40] sm:$0xf]
      %v238 = vld [vmem:[%s225 + $0x48] sm:$0xf]
      %v239 = vld [vmem:[%s225 + $0x4c] sm:$0xf]
      %v240 = vld [vmem:[%s225 + $0x54] sm:$0xf]
      %v241 = vld [vmem:[%s225 + $0x58] sm:$0xf]
      %v242 = vld [vmem:[%s225 + $0x60] sm:$0xf]
      %v243 = vld [vmem:[%s225 + $0x64] sm:$0xf]
      %v244 = vld [vmem:[%s225 + $0x6c] sm:$0xf]
      %v245 = vld [vmem:[%s225 + $0x70] sm:$0xf]
      %v246 = vld [vmem:[%s225 + $0x78] sm:$0xf]
      %v247 = vld [vmem:[%s225 + $0x7c] sm:$0xf]
      %v248 = vld [vmem:[%s225 + $0x84] sm:$0xf]
      %v249 = vld [vmem:[%s225 + $0x88] sm:$0xf]
      %v250 = vld [vmem:[%s225 + $0x90] sm:$0xf]
      %v251 = vld [vmem:[%s225 + $0x94] sm:$0xf]
      %v252 = vld [vmem:[%s225 + $0x9c] sm:$0xf]
      %v253 = vld [vmem:[%s225 + $0xa0] sm:$0xf]
      %v254 = vld [vmem:[%s225 + $0xa8] sm:$0xf]
      %v255 = vld [vmem:[%s225 + $0xac] sm:$0xf]
      %v256 = vld [vmem:[%s225 + $0xb4] sm:$0xf]
      %v257 = vld [vmem:[%s225 + $0xb8] sm:$0xf]
      %v258 = vld [vmem:[%s1] sm:$0x3]
      %v259 = vld [vmem:[%s225 + $0x8] sm:$0x1]
      %v260 = vld [vmem:[%s225 + $0x14] sm:$0x1]
      %v261 = vld [vmem:[%s225 + $0x20] sm:$0x1]
      %v262 = vld [vmem:[%s225 + $0x2c] sm:$0x1]
      %v263 = vld [vmem:[%s225 + $0x38] sm:$0x1]
      %v264 = vld [vmem:[%s225 + $0x44] sm:$0x1]
      %v265 = vld [vmem:[%s225 + $0x50] sm:$0x1]
      %v266 = vld [vmem:[%s225 + $0x5c] sm:$0x1]
      %v267 = vld [vmem:[%s225 + $0x68] sm:$0x1]
      %v268 = vld [vmem:[%s225 + $0x74] sm:$0x1]
      %v269 = vld [vmem:[%s225 + $0x80] sm:$0x1]
      %v270 = vld [vmem:[%s225 + $0x8c] sm:$0x1]
      %v271 = vld [vmem:[%s225 + $0x98] sm:$0x1]
      %v272 = vld [vmem:[%s225 + $0xa4] sm:$0x1]
      %v273 = vld [vmem:[%s225 + $0xb0] sm:$0x1]
      %v274 = vld [vmem:[%s225 + $0xbc] sm:$0x1]
      %vm275 = vsmask.f32 3328
      %vm276 = vsmask.f32 7440
      %vm277 = vmor %vm275, %vm276
      %v279 = vshrl.u32 %v226, 16
      %v281 = vrot.slane %v279, 4
      %v282 = vshll.u32 %v226, 16
      %v284 = vrot.slane %v282, 5
      %v285 = vor.u32 %v281, %v284
      %v286 = vrot.slane %v285, 4
      %v288 = vshll.u32 %v227, 16
      %v290 = vrot.slane %v288, 5
      %v291 = vsel %vm277, %v286, %v290
      %v292 = vshrl.u32 %v227, 16
      %v294 = vrot.slane %v292, 4
      %v295 = vor.u32 %v294, %v290
      %v296 = vrot.slane %v295, 4
      %v298 = vshll.u32 %v259, 16
      %v300 = vrot.slane %v298, 5
      %v301 = vsel %vm277, %v296, %v300
      %v303 = vshrl.u32 %v228, 16
      %v305 = vrot.slane %v303, 4
      %v306 = vshll.u32 %v228, 16
      %v308 = vrot.slane %v306, 5
      %v309 = vor.u32 %v305, %v308
      %v310 = vrot.slane %v309, 4
      %v312 = vshll.u32 %v229, 16
      %v314 = vrot.slane %v312, 5
      %v315 = vsel %vm277, %v310, %v314
      %v316 = vshrl.u32 %v229, 16
      %v318 = vrot.slane %v316, 4
      %v319 = vor.u32 %v318, %v314
      %v320 = vrot.slane %v319, 4
      %v322 = vshll.u32 %v260, 16
      %v324 = vrot.slane %v322, 5
      %v325 = vsel %vm277, %v320, %v324
      %v327 = vshrl.u32 %v230, 16
      %v329 = vrot.slane %v327, 4
      %v330 = vshll.u32 %v230, 16
      %v332 = vrot.slane %v330, 5
      %v333 = vor.u32 %v329, %v332
      %v334 = vrot.slane %v333, 4
      %v336 = vshll.u32 %v231, 16
      %v338 = vrot.slane %v336, 5
      %v339 = vsel %vm277, %v334, %v338
      %v340 = vshrl.u32 %v231, 16
      %v342 = vrot.slane %v340, 4
      %v343 = vor.u32 %v342, %v338
      %v344 = vrot.slane %v343, 4
      %v346 = vshll.u32 %v261, 16
      %v348 = vrot.slane %v346, 5
      %v349 = vsel %vm277, %v344, %v348
      %v351 = vshrl.u32 %v232, 16
      %v353 = vrot.slane %v351, 4
      %v354 = vshll.u32 %v232, 16
      %v356 = vrot.slane %v354, 5
      %v357 = vor.u32 %v353, %v356
      %v358 = vrot.slane %v357, 4
      %v360 = vshll.u32 %v233, 16
      %v362 = vrot.slane %v360, 5
      %v363 = vsel %vm277, %v358, %v362
      %v364 = vshrl.u32 %v233, 16
      %v366 = vrot.slane %v364, 4
      %v367 = vor.u32 %v366, %v362
      %v368 = vrot.slane %v367, 4
      %v370 = vshll.u32 %v262, 16
      %v372 = vrot.slane %v370, 5
      %v373 = vsel %vm277, %v368, %v372
      %v375 = vshrl.u32 %v234, 16
      %v377 = vrot.slane %v375, 4
      %v378 = vshll.u32 %v234, 16
      %v380 = vrot.slane %v378, 5
      %v381 = vor.u32 %v377, %v380
      %v382 = vrot.slane %v381, 4
      %v384 = vshll.u32 %v235, 16
      %v386 = vrot.slane %v384, 5
      %v387 = vsel %vm277, %v382, %v386
      %v388 = vshrl.u32 %v235, 16
      %v390 = vrot.slane %v388, 4
      %v391 = vor.u32 %v390, %v386
      %v392 = vrot.slane %v391, 4
      %v394 = vshll.u32 %v263, 16
      %v396 = vrot.slane %v394, 5
      %v397 = vsel %vm277, %v392, %v396
      %v399 = vshrl.u32 %v236, 16
      %v401 = vrot.slane %v399, 4
      %v402 = vshll.u32 %v236, 16
      %v404 = vrot.slane %v402, 5
      %v405 = vor.u32 %v401, %v404
      %v406 = vrot.slane %v405, 4
      %v408 = vshll.u32 %v237, 16
      %v410 = vrot.slane %v408, 5
      %v411 = vsel %vm277, %v406, %v410
      %v412 = vshrl.u32 %v237, 16
      %v414 = vrot.slane %v412, 4
      %v415 = vor.u32 %v414, %v410
      %v416 = vrot.slane %v415, 4
      %v418 = vshll.u32 %v264, 16
      %v420 = vrot.slane %v418, 5
      %v421 = vsel %vm277, %v416, %v420
      %v423 = vshrl.u32 %v238, 16
      %v425 = vrot.slane %v423, 4
      %v426 = vshll.u32 %v238, 16
      %v428 = vrot.slane %v426, 5
      %v429 = vor.u32 %v425, %v428
      %v430 = vrot.slane %v429, 4
      %v432 = vshll.u32 %v239, 16
      %v434 = vrot.slane %v432, 5
      %v435 = vsel %vm277, %v430, %v434
      %v436 = vshrl.u32 %v239, 16
      %v438 = vrot.slane %v436, 4
      %v439 = vor.u32 %v438, %v434
      %v440 = vrot.slane %v439, 4
      %v442 = vshll.u32 %v265, 16
      %v444 = vrot.slane %v442, 5
      %v445 = vsel %vm277, %v440, %v444
      %v447 = vshrl.u32 %v240, 16
      %v449 = vrot.slane %v447, 4
      %v450 = vshll.u32 %v240, 16
      %v452 = vrot.slane %v450, 5
      %v453 = vor.u32 %v449, %v452
      %v454 = vrot.slane %v453, 4
      %v456 = vshll.u32 %v241, 16
      %v458 = vrot.slane %v456, 5
      %v459 = vsel %vm277, %v454, %v458
      %v460 = vshrl.u32 %v241, 16
      %v462 = vrot.slane %v460, 4
      %v463 = vor.u32 %v462, %v458
      %v464 = vrot.slane %v463, 4
      %v466 = vshll.u32 %v266, 16
      %v468 = vrot.slane %v466, 5
      %v469 = vsel %vm277, %v464, %v468
      %v471 = vshrl.u32 %v242, 16
      %v473 = vrot.slane %v471, 4
      %v474 = vshll.u32 %v242, 16
      %v476 = vrot.slane %v474, 5
      %v477 = vor.u32 %v473, %v476
      %v478 = vrot.slane %v477, 4
      %v480 = vshll.u32 %v243, 16
      %v482 = vrot.slane %v480, 5
      %v483 = vsel %vm277, %v478, %v482
      %v484 = vshrl.u32 %v243, 16
      %v486 = vrot.slane %v484, 4
      %v487 = vor.u32 %v486, %v482
      %v488 = vrot.slane %v487, 4
      %v490 = vshll.u32 %v267, 16
      %v492 = vrot.slane %v490, 5
      %v493 = vsel %vm277, %v488, %v492
      %v495 = vshrl.u32 %v244, 16
      %v497 = vrot.slane %v495, 4
      %v498 = vshll.u32 %v244, 16
      %v500 = vrot.slane %v498, 5
      %v501 = vor.u32 %v497, %v500
      %v502 = vrot.slane %v501, 4
      %v504 = vshll.u32 %v245, 16
      %v506 = vrot.slane %v504, 5
      %v507 = vsel %vm277, %v502, %v506
      %v508 = vshrl.u32 %v245, 16
      %v510 = vrot.slane %v508, 4
      %v511 = vor.u32 %v510, %v506
      %v512 = vrot.slane %v511, 4
      %v514 = vshll.u32 %v268, 16
      %v516 = vrot.slane %v514, 5
      %v517 = vsel %vm277, %v512, %v516
      %v519 = vshrl.u32 %v246, 16
      %v521 = vrot.slane %v519, 4
      %v522 = vshll.u32 %v246, 16
      %v524 = vrot.slane %v522, 5
      %v525 = vor.u32 %v521, %v524
      %v526 = vrot.slane %v525, 4
      %v528 = vshll.u32 %v247, 16
      %v530 = vrot.slane %v528, 5
      %v531 = vsel %vm277, %v526, %v530
      %v532 = vshrl.u32 %v247, 16
      %v534 = vrot.slane %v532, 4
      %v535 = vor.u32 %v534, %v530
      %v536 = vrot.slane %v535, 4
      %v538 = vshll.u32 %v269, 16
      %v540 = vrot.slane %v538, 5
      %v541 = vsel %vm277, %v536, %v540
      %v543 = vshrl.u32 %v248, 16
      %v545 = vrot.slane %v543, 4
      %v546 = vshll.u32 %v248, 16
      %v548 = vrot.slane %v546, 5
      %v549 = vor.u32 %v545, %v548
      %v550 = vrot.slane %v549, 4
      %v552 = vshll.u32 %v249, 16
      %v554 = vrot.slane %v552, 5
      %v555 = vsel %vm277, %v550, %v554
      %v556 = vshrl.u32 %v249, 16
      %v558 = vrot.slane %v556, 4
      %v559 = vor.u32 %v558, %v554
      %v560 = vrot.slane %v559, 4
      %v562 = vshll.u32 %v270, 16
      %v564 = vrot.slane %v562, 5
      %v565 = vsel %vm277, %v560, %v564
      %v567 = vshrl.u32 %v250, 16
      %v569 = vrot.slane %v567, 4
      %v570 = vshll.u32 %v250, 16
      %v572 = vrot.slane %v570, 5
      %v573 = vor.u32 %v569, %v572
      %v574 = vrot.slane %v573, 4
      %v576 = vshll.u32 %v251, 16
      %v578 = vrot.slane %v576, 5
      %v579 = vsel %vm277, %v574, %v578
      %v580 = vshrl.u32 %v251, 16
      %v582 = vrot.slane %v580, 4
      %v583 = vor.u32 %v582, %v578
      %v584 = vrot.slane %v583, 4
      %v586 = vshll.u32 %v271, 16
      %v588 = vrot.slane %v586, 5
      %v589 = vsel %vm277, %v584, %v588
      %v591 = vshrl.u32 %v252, 16
      %v593 = vrot.slane %v591, 4
      %v594 = vshll.u32 %v252, 16
      %v596 = vrot.slane %v594, 5
      %v597 = vor.u32 %v593, %v596
      %v598 = vrot.slane %v597, 4
      %v600 = vshll.u32 %v253, 16
      %v602 = vrot.slane %v600, 5
      %v603 = vsel %vm277, %v598, %v602
      %v604 = vshrl.u32 %v253, 16
      %v606 = vrot.slane %v604, 4
      %v607 = vor.u32 %v606, %v602
      %v608 = vrot.slane %v607, 4
      %v610 = vshll.u32 %v272, 16
      %v612 = vrot.slane %v610, 5
      %v613 = vsel %vm277, %v608, %v612
      %v615 = vshrl.u32 %v254, 16
      %v617 = vrot.slane %v615, 4
      %v618 = vshll.u32 %v254, 16
      %v620 = vrot.slane %v618, 5
      %v621 = vor.u32 %v617, %v620
      %v622 = vrot.slane %v621, 4
      %v624 = vshll.u32 %v255, 16
      %v626 = vrot.slane %v624, 5
      %v627 = vsel %vm277, %v622, %v626
      %v628 = vshrl.u32 %v255, 16
      %v630 = vrot.slane %v628, 4
      %v631 = vor.u32 %v630, %v626
      %v632 = vrot.slane %v631, 4
      %v634 = vshll.u32 %v273, 16
      %v636 = vrot.slane %v634, 5
      %v637 = vsel %vm277, %v632, %v636
      %v639 = vshrl.u32 %v256, 16
      %v641 = vrot.slane %v639, 4
      %v642 = vshll.u32 %v256, 16
      %v644 = vrot.slane %v642, 5
      %v645 = vor.u32 %v641, %v644
      %v646 = vrot.slane %v645, 4
      %v648 = vshll.u32 %v257, 16
      %v650 = vrot.slane %v648, 5
      %v651 = vsel %vm277, %v646, %v650
      %v652 = vshrl.u32 %v257, 16
      %v654 = vrot.slane %v652, 4
      %v655 = vor.u32 %v654, %v650
      %v656 = vrot.slane %v655, 4
      %v658 = vshll.u32 %v274, 16
      %v660 = vrot.slane %v658, 5
      %v661 = vsel %vm277, %v656, %v660
      %s662 = scalar_lea.vmem %s1, 2
      %v663 = vld [vmem:[%s662] sm:$0x3]
      %v664 = vunpack.c.l.b16 %v291
      %v665 = vunpack.c.l.b16 %v301
      %v666 = vunpack.c.l.b16 %v315
      %v667 = vunpack.c.l.b16 %v325
      %v668 = vunpack.c.l.b16 %v339
      %v669 = vunpack.c.l.b16 %v349
      %v670 = vunpack.c.l.b16 %v363
      %v671 = vunpack.c.l.b16 %v373
      %v672 = vunpack.c.l.b16 %v387
      %v673 = vunpack.c.l.b16 %v397
      %v674 = vunpack.c.l.b16 %v411
      %v675 = vunpack.c.l.b16 %v421
      %v676 = vunpack.c.l.b16 %v435
      %v677 = vunpack.c.l.b16 %v445
      %v678 = vunpack.c.l.b16 %v459
      %v679 = vunpack.c.l.b16 %v469
      %v680 = vunpack.c.l.b16 %v483
      %v681 = vunpack.c.l.b16 %v493
      %v682 = vunpack.c.l.b16 %v507
      %v683 = vunpack.c.l.b16 %v517
      %v684 = vunpack.c.l.b16 %v531
      %v685 = vunpack.c.l.b16 %v541
      %v686 = vunpack.c.l.b16 %v555
      %v687 = vunpack.c.l.b16 %v565
      %v688 = vunpack.c.l.b16 %v579
      %v689 = vunpack.c.l.b16 %v589
      %v690 = vunpack.c.l.b16 %v603
      %v691 = vunpack.c.l.b16 %v613
      %v692 = vunpack.c.l.b16 %v627
      %v693 = vunpack.c.l.b16 %v637
      %v694 = vunpack.c.l.b16 %v651
      %v695 = vunpack.c.l.b16 %v661
      %v696 = vpack.c.b16 %v665, %v664
      %v697 = vpack.c.b16 %v667, %v666
      %v698 = vpack.c.b16 %v669, %v668
      %v699 = vpack.c.b16 %v671, %v670
      %v700 = vpack.c.b16 %v673, %v672
      %v701 = vpack.c.b16 %v675, %v674
      %v702 = vpack.c.b16 %v677, %v676
      %v703 = vpack.c.b16 %v679, %v678
      %v704 = vpack.c.b16 %v681, %v680
      %v705 = vpack.c.b16 %v683, %v682
      %v706 = vpack.c.b16 %v685, %v684
      %v707 = vpack.c.b16 %v687, %v686
      %v708 = vpack.c.b16 %v689, %v688
      %v709 = vpack.c.b16 %v691, %v690
      %v710 = vpack.c.b16 %v693, %v692
      %v711 = vpack.c.b16 %v695, %v694
      %vm712 = vcmask 31744
      %v714 = vsel %vm712, %v696, 0
      %v717 = vsel %vm712, %v697, 0
      %v720 = vsel %vm712, %v698, 0
      %v723 = vsel %vm712, %v699, 0
      %v726 = vsel %vm712, %v700, 0
      %v729 = vsel %vm712, %v701, 0
      %v732 = vsel %vm712, %v702, 0
      %v735 = vsel %vm712, %v703, 0
      %v738 = vsel %vm712, %v704, 0
      %v741 = vsel %vm712, %v705, 0
      %v744 = vsel %vm712, %v706, 0
      %v747 = vsel %vm712, %v707, 0
      %v750 = vsel %vm712, %v708, 0
      %v753 = vsel %vm712, %v709, 0
      %v756 = vsel %vm712, %v710, 0
      %v759 = vsel %vm712, %v711, 0
      %vm761 = vcmask 1041408
      %v763 = vsel %vm761, %v663, 0
      %765 = vmatprep.subr.bf16.mxu0 0
      %766 = vmatpush1.bf16.msra.mxu0 0
      %767 = vmatprep.subr.bf16.mxu0 0
      %768 = vmatpush1.bf16.msra.mxu0 0
      %769 = vmatprep.subr.bf16.mxu0 0
      %770 = vmatpush1.bf16.msra.mxu0 0
      %771 = vmatprep.subr.bf16.mxu0 0
      %772 = vmatpush1.bf16.msra.mxu0 0
      %773 = vmatprep.subr.bf16.mxu0 0
      %774 = vmatpush1.bf16.msra.mxu0 0
      %775 = vmatprep.subr.bf16.mxu0 0
      %776 = vmatpush1.bf16.msra.mxu0 0
      %777 = vmatprep.subr.bf16.mxu0 0
      %778 = vmatpush1.bf16.msra.mxu0 0
      %779 = vmatprep.subr.bf16.mxu0 0
      %780 = vmatpush1.bf16.msra.mxu0 %v763
      %781 = vmatprep.subr.bf16.mxu0 0
      %782 = vmatpush2.bf16.msra.mxu0 0
      %783 = vmatprep.subr.bf16.mxu0 0
      %784 = vmatpush2.bf16.msra.mxu0 0
      %785 = vmatprep.subr.bf16.mxu0 0
      %786 = vmatpush2.bf16.msra.mxu0 0
      %787 = vmatprep.subr.bf16.mxu0 0
      %788 = vmatpush2.bf16.msra.mxu0 0
      %789 = vmatprep.subr.bf16.mxu0 0
      %790 = vmatpush2.bf16.msra.mxu0 0
      %791 = vmatprep.subr.bf16.mxu0 0
      %792 = vmatpush2.bf16.msra.mxu0 0
      %793 = vmatprep.subr.bf16.mxu0 0
      %794 = vmatpush2.bf16.msra.mxu0 0
      %795 = vmatprep.subr.bf16.mxu0 0
      %796 = vmatpush2.bf16.msra.mxu0 0
      %797 = vmatprep.mubr.bf16.mxu0 0
      %798 = vmatmul.mubr.bf16.gmra.mxu0 %v714
      %v799 = vpop.f32.mrf.mxu0
      %v800 = vadd.f32 0.0, %v799
      %v801 = vpop.f32.mrf.mxu0
      %v802 = vpop.f32.mrf.mxu0
      %v803 = vadd.f32 0.0, %v802
      %v804 = vpop.f32.mrf.mxu0
      %805 = vmatprep.mubr.bf16.mxu0 0
      %806 = vmatmul.mubr.bf16.gmra.mxu0 %v717
      %v807 = vpop.f32.mrf.mxu0
      %v808 = vadd.f32 0.0, %v807
      %v809 = vpop.f32.mrf.mxu0
      %v810 = vpop.f32.mrf.mxu0
      %v811 = vadd.f32 0.0, %v810
      %v812 = vpop.f32.mrf.mxu0
      %813 = vmatprep.mubr.bf16.mxu0 0
      %814 = vmatmul.mubr.bf16.gmra.mxu0 %v720
      %v815 = vpop.f32.mrf.mxu0
      %v816 = vadd.f32 0.0, %v815
      %v817 = vpop.f32.mrf.mxu0
      %v818 = vpop.f32.mrf.mxu0
      %v819 = vadd.f32 0.0, %v818
      %v820 = vpop.f32.mrf.mxu0
      %821 = vmatprep.mubr.bf16.mxu0 0
      %822 = vmatmul.mubr.bf16.gmra.mxu0 %v723
      %v823 = vpop.f32.mrf.mxu0
      %v824 = vadd.f32 0.0, %v823
      %v825 = vpop.f32.mrf.mxu0
      %v826 = vpop.f32.mrf.mxu0
      %v827 = vadd.f32 0.0, %v826
      %v828 = vpop.f32.mrf.mxu0
      %829 = vmatprep.mubr.bf16.mxu0 0
      %830 = vmatmul.mubr.bf16.gmra.mxu0 %v726
      %v831 = vpop.f32.mrf.mxu0
      %v832 = vadd.f32 0.0, %v831
      %v833 = vpop.f32.mrf.mxu0
      %v834 = vpop.f32.mrf.mxu0
      %v835 = vadd.f32 0.0, %v834
      %v836 = vpop.f32.mrf.mxu0
      %837 = vmatprep.mubr.bf16.mxu0 0
      %838 = vmatmul.mubr.bf16.gmra.mxu0 %v729
      %v839 = vpop.f32.mrf.mxu0
      %v840 = vadd.f32 0.0, %v839
      %v841 = vpop.f32.mrf.mxu0
      %v842 = vpop.f32.mrf.mxu0
      %v843 = vadd.f32 0.0, %v842
      %v844 = vpop.f32.mrf.mxu0
      %845 = vmatprep.mubr.bf16.mxu0 0
      %846 = vmatmul.mubr.bf16.gmra.mxu0 %v732
      %v847 = vpop.f32.mrf.mxu0
      %v848 = vadd.f32 0.0, %v847
      %v849 = vpop.f32.mrf.mxu0
      %v850 = vpop.f32.mrf.mxu0
      %v851 = vadd.f32 0.0, %v850
      %v852 = vpop.f32.mrf.mxu0
      %853 = vmatprep.mubr.bf16.mxu0 0
      %854 = vmatmul.mubr.bf16.gmra.mxu0 %v735
      %v855 = vpop.f32.mrf.mxu0
      %v856 = vadd.f32 0.0, %v855
      %v857 = vpop.f32.mrf.mxu0
      %v858 = vpop.f32.mrf.mxu0
      %v859 = vadd.f32 0.0, %v858
      %v860 = vpop.f32.mrf.mxu0
      %861 = vmatprep.mubr.bf16.mxu0 0
      %862 = vmatmul.mubr.bf16.gmra.mxu0 %v738
      %v863 = vpop.f32.mrf.mxu0
      %v864 = vadd.f32 0.0, %v863
      %v865 = vpop.f32.mrf.mxu0
      %v866 = vpop.f32.mrf.mxu0
      %v867 = vadd.f32 0.0, %v866
      %v868 = vpop.f32.mrf.mxu0
      %869 = vmatprep.mubr.bf16.mxu0 0
      %870 = vmatmul.mubr.bf16.gmra.mxu0 %v741
      %v871 = vpop.f32.mrf.mxu0
      %v872 = vadd.f32 0.0, %v871
      %v873 = vpop.f32.mrf.mxu0
      %v874 = vpop.f32.mrf.mxu0
      %v875 = vadd.f32 0.0, %v874
      %v876 = vpop.f32.mrf.mxu0
      %877 = vmatprep.mubr.bf16.mxu0 0
      %878 = vmatmul.mubr.bf16.gmra.mxu0 %v744
      %v879 = vpop.f32.mrf.mxu0
      %v880 = vadd.f32 0.0, %v879
      %v881 = vpop.f32.mrf.mxu0
      %v882 = vpop.f32.mrf.mxu0
      %v883 = vadd.f32 0.0, %v882
      %v884 = vpop.f32.mrf.mxu0
      %885 = vmatprep.mubr.bf16.mxu0 0
      %886 = vmatmul.mubr.bf16.gmra.mxu0 %v747
      %v887 = vpop.f32.mrf.mxu0
      %v888 = vadd.f32 0.0, %v887
      %v889 = vpop.f32.mrf.mxu0
      %v890 = vpop.f32.mrf.mxu0
      %v891 = vadd.f32 0.0, %v890
      %v892 = vpop.f32.mrf.mxu0
      %893 = vmatprep.mubr.bf16.mxu0 0
      %894 = vmatmul.mubr.bf16.gmra.mxu0 %v750
      %v895 = vpop.f32.mrf.mxu0
      %v896 = vadd.f32 0.0, %v895
      %v897 = vpop.f32.mrf.mxu0
      %v898 = vpop.f32.mrf.mxu0
      %v899 = vadd.f32 0.0, %v898
      %v900 = vpop.f32.mrf.mxu0
      %901 = vmatprep.mubr.bf16.mxu0 0
      %902 = vmatmul.mubr.bf16.gmra.mxu0 %v753
      %v903 = vpop.f32.mrf.mxu0
      %v904 = vadd.f32 0.0, %v903
      %v905 = vpop.f32.mrf.mxu0
      %v906 = vpop.f32.mrf.mxu0
      %v907 = vadd.f32 0.0, %v906
      %v908 = vpop.f32.mrf.mxu0
      %909 = vmatprep.mubr.bf16.mxu0 0
      %910 = vmatmul.mubr.bf16.gmra.mxu0 %v756
      %v911 = vpop.f32.mrf.mxu0
      %v912 = vadd.f32 0.0, %v911
      %v913 = vpop.f32.mrf.mxu0
      %v914 = vpop.f32.mrf.mxu0
      %v915 = vadd.f32 0.0, %v914
      %v916 = vpop.f32.mrf.mxu0
      %917 = vmatprep.mubr.bf16.mxu0 0
      %918 = vmatmul.mubr.bf16.gmra.mxu0 %v759
      %v919 = vpop.f32.mrf.mxu0
      %v920 = vadd.f32 0.0, %v919
      %v921 = vpop.f32.mrf.mxu0
      %v922 = vpop.f32.mrf.mxu0
      %v923 = vadd.f32 0.0, %v922
      %v924 = vpop.f32.mrf.mxu0
      %925 = vdwg.mxu0
      %v958 = vunpack.c.l.b16 %v226
      %v959 = vunpack.c.l.b16 %v227
      %v960 = vunpack.c.l.b16 %v228
      %v961 = vunpack.c.l.b16 %v229
      %v962 = vunpack.c.l.b16 %v230
      %v963 = vunpack.c.l.b16 %v231
      %v964 = vunpack.c.l.b16 %v232
      %v965 = vunpack.c.l.b16 %v233
      %v966 = vunpack.c.l.b16 %v234
      %v967 = vunpack.c.l.b16 %v235
      %v968 = vunpack.c.l.b16 %v236
      %v969 = vunpack.c.l.b16 %v237
      %v970 = vunpack.c.l.b16 %v238
      %v971 = vunpack.c.l.b16 %v239
      %v972 = vunpack.c.l.b16 %v240
      %v973 = vunpack.c.l.b16 %v241
      %v974 = vunpack.c.l.b16 %v242
      %v975 = vunpack.c.l.b16 %v243
      %v976 = vunpack.c.l.b16 %v244
      %v977 = vunpack.c.l.b16 %v245
      %v978 = vunpack.c.l.b16 %v246
      %v979 = vunpack.c.l.b16 %v247
      %v980 = vunpack.c.l.b16 %v248
      %v981 = vunpack.c.l.b16 %v249
      %v982 = vunpack.c.l.b16 %v250
      %v983 = vunpack.c.l.b16 %v251
      %v984 = vunpack.c.l.b16 %v252
      %v985 = vunpack.c.l.b16 %v253
      %v986 = vunpack.c.l.b16 %v254
      %v987 = vunpack.c.l.b16 %v255
      %v988 = vunpack.c.l.b16 %v256
      %v989 = vunpack.c.l.b16 %v257
      %v990 = vpack.c.b16 %v959, %v958
      %v991 = vpack.c.b16 %v961, %v960
      %v992 = vpack.c.b16 %v963, %v962
      %v993 = vpack.c.b16 %v965, %v964
      %v994 = vpack.c.b16 %v967, %v966
      %v995 = vpack.c.b16 %v969, %v968
      %v996 = vpack.c.b16 %v971, %v970
      %v997 = vpack.c.b16 %v973, %v972
      %v998 = vpack.c.b16 %v975, %v974
      %v999 = vpack.c.b16 %v977, %v976
      %v1000 = vpack.c.b16 %v979, %v978
      %v1001 = vpack.c.b16 %v981, %v980
      %v1002 = vpack.c.b16 %v983, %v982
      %v1003 = vpack.c.b16 %v985, %v984
      %v1004 = vpack.c.b16 %v987, %v986
      %v1005 = vpack.c.b16 %v989, %v988
      %v1007 = vsel %vm712, %v990, 0
      %v1010 = vsel %vm712, %v991, 0
      %v1013 = vsel %vm712, %v992, 0
      %v1016 = vsel %vm712, %v993, 0
      %v1019 = vsel %vm712, %v994, 0
      %v1022 = vsel %vm712, %v995, 0
      %v1025 = vsel %vm712, %v996, 0
      %v1028 = vsel %vm712, %v997, 0
      %v1031 = vsel %vm712, %v998, 0
      %v1034 = vsel %vm712, %v999, 0
      %v1037 = vsel %vm712, %v1000, 0
      %v1040 = vsel %vm712, %v1001, 0
      %v1043 = vsel %vm712, %v1002, 0
      %v1046 = vsel %vm712, %v1003, 0
      %v1049 = vsel %vm712, %v1004, 0
      %v1052 = vsel %vm712, %v1005, 0
      %v1055 = vsel %vm761, %v258, 0
      %1057 = vmatprep.subr.bf16.mxu0 0
      %1058 = vmatpush1.bf16.msra.mxu0 0
      %1059 = vmatprep.subr.bf16.mxu0 0
      %1060 = vmatpush1.bf16.msra.mxu0 0
      %1061 = vmatprep.subr.bf16.mxu0 0
      %1062 = vmatpush1.bf16.msra.mxu0 0
      %1063 = vmatprep.subr.bf16.mxu0 0
      %1064 = vmatpush1.bf16.msra.mxu0 0
      %1065 = vmatprep.subr.bf16.mxu0 0
      %1066 = vmatpush1.bf16.msra.mxu0 0
      %1067 = vmatprep.subr.bf16.mxu0 0
      %1068 = vmatpush1.bf16.msra.mxu0 0
      %1069 = vmatprep.subr.bf16.mxu0 0
      %1070 = vmatpush1.bf16.msra.mxu0 0
      %1071 = vmatprep.subr.bf16.mxu0 0
      %1072 = vmatpush1.bf16.msra.mxu0 %v1055
      %1073 = vmatprep.subr.bf16.mxu0 0
      %1074 = vmatpush2.bf16.msra.mxu0 0
      %1075 = vmatprep.subr.bf16.mxu0 0
      %1076 = vmatpush2.bf16.msra.mxu0 0
      %1077 = vmatprep.subr.bf16.mxu0 0
      %1078 = vmatpush2.bf16.msra.mxu0 0
      %1079 = vmatprep.subr.bf16.mxu0 0
      %1080 = vmatpush2.bf16.msra.mxu0 0
      %1081 = vmatprep.subr.bf16.mxu0 0
      %1082 = vmatpush2.bf16.msra.mxu0 0
      %1083 = vmatprep.subr.bf16.mxu0 0
      %1084 = vmatpush2.bf16.msra.mxu0 0
      %1085 = vmatprep.subr.bf16.mxu0 0
      %1086 = vmatpush2.bf16.msra.mxu0 0
      %1087 = vmatprep.subr.bf16.mxu0 0
      %1088 = vmatpush2.bf16.msra.mxu0 0
      %1089 = vmatprep.mubr.bf16.mxu0 0
      %1090 = vmatmul.mubr.bf16.gmra.mxu0 %v1007
      %v1091 = vpop.f32.mrf.mxu0
      %v1092 = vadd.f32 %v800, %v1091
      %v1093 = vpop.f32.mrf.mxu0
      %v1094 = vpop.f32.mrf.mxu0
      %v1095 = vadd.f32 %v803, %v1094
      %v1096 = vpop.f32.mrf.mxu0
      %1097 = vmatprep.mubr.bf16.mxu0 0
      %1098 = vmatmul.mubr.bf16.gmra.mxu0 %v1010
      %v1099 = vpop.f32.mrf.mxu0
      %v1100 = vadd.f32 %v808, %v1099
      %v1101 = vpop.f32.mrf.mxu0
      %v1102 = vpop.f32.mrf.mxu0
      %v1103 = vadd.f32 %v811, %v1102
      %v1104 = vpop.f32.mrf.mxu0
      %1105 = vmatprep.mubr.bf16.mxu0 0
      %1106 = vmatmul.mubr.bf16.gmra.mxu0 %v1013
      %v1107 = vpop.f32.mrf.mxu0
      %v1108 = vadd.f32 %v816, %v1107
      %v1109 = vpop.f32.mrf.mxu0
      %v1110 = vpop.f32.mrf.mxu0
      %v1111 = vadd.f32 %v819, %v1110
      %v1112 = vpop.f32.mrf.mxu0
      %1113 = vmatprep.mubr.bf16.mxu0 0
      %1114 = vmatmul.mubr.bf16.gmra.mxu0 %v1016
      %v1115 = vpop.f32.mrf.mxu0
      %v1116 = vadd.f32 %v824, %v1115
      %v1117 = vpop.f32.mrf.mxu0
      %v1118 = vpop.f32.mrf.mxu0
      %v1119 = vadd.f32 %v827, %v1118
      %v1120 = vpop.f32.mrf.mxu0
      %1121 = vmatprep.mubr.bf16.mxu0 0
      %1122 = vmatmul.mubr.bf16.gmra.mxu0 %v1019
      %v1123 = vpop.f32.mrf.mxu0
      %v1124 = vadd.f32 %v832, %v1123
      %v1125 = vpop.f32.mrf.mxu0
      %v1126 = vpop.f32.mrf.mxu0
      %v1127 = vadd.f32 %v835, %v1126
      %v1128 = vpop.f32.mrf.mxu0
      %1129 = vmatprep.mubr.bf16.mxu0 0
      %1130 = vmatmul.mubr.bf16.gmra.mxu0 %v1022
      %v1131 = vpop.f32.mrf.mxu0
      %v1132 = vadd.f32 %v840, %v1131
      %v1133 = vpop.f32.mrf.mxu0
      %v1134 = vpop.f32.mrf.mxu0
      %v1135 = vadd.f32 %v843, %v1134
      %v1136 = vpop.f32.mrf.mxu0
      %1137 = vmatprep.mubr.bf16.mxu0 0
      %1138 = vmatmul.mubr.bf16.gmra.mxu0 %v1025
      %v1139 = vpop.f32.mrf.mxu0
      %v1140 = vadd.f32 %v848, %v1139
      %v1141 = vpop.f32.mrf.mxu0
      %v1142 = vpop.f32.mrf.mxu0
      %v1143 = vadd.f32 %v851, %v1142
      %v1144 = vpop.f32.mrf.mxu0
      %1145 = vmatprep.mubr.bf16.mxu0 0
      %1146 = vmatmul.mubr.bf16.gmra.mxu0 %v1028
      %v1147 = vpop.f32.mrf.mxu0
      %v1148 = vadd.f32 %v856, %v1147
      %v1149 = vpop.f32.mrf.mxu0
      %v1150 = vpop.f32.mrf.mxu0
      %v1151 = vadd.f32 %v859, %v1150
      %v1152 = vpop.f32.mrf.mxu0
      %1153 = vmatprep.mubr.bf16.mxu0 0
      %1154 = vmatmul.mubr.bf16.gmra.mxu0 %v1031
      %v1155 = vpop.f32.mrf.mxu0
      %v1156 = vadd.f32 %v864, %v1155
      %v1157 = vpop.f32.mrf.mxu0
      %v1158 = vpop.f32.mrf.mxu0
      %v1159 = vadd.f32 %v867, %v1158
      %v1160 = vpop.f32.mrf.mxu0
      %1161 = vmatprep.mubr.bf16.mxu0 0
      %1162 = vmatmul.mubr.bf16.gmra.mxu0 %v1034
      %v1163 = vpop.f32.mrf.mxu0
      %v1164 = vadd.f32 %v872, %v1163
      %v1165 = vpop.f32.mrf.mxu0
      %v1166 = vpop.f32.mrf.mxu0
      %v1167 = vadd.f32 %v875, %v1166
      %v1168 = vpop.f32.mrf.mxu0
      %1169 = vmatprep.mubr.bf16.mxu0 0
      %1170 = vmatmul.mubr.bf16.gmra.mxu0 %v1037
      %v1171 = vpop.f32.mrf.mxu0
      %v1172 = vadd.f32 %v880, %v1171
      %v1173 = vpop.f32.mrf.mxu0
      %v1174 = vpop.f32.mrf.mxu0
      %v1175 = vadd.f32 %v883, %v1174
      %v1176 = vpop.f32.mrf.mxu0
      %1177 = vmatprep.mubr.bf16.mxu0 0
      %1178 = vmatmul.mubr.bf16.gmra.mxu0 %v1040
      %v1179 = vpop.f32.mrf.mxu0
      %v1180 = vadd.f32 %v888, %v1179
      %v1181 = vpop.f32.mrf.mxu0
      %v1182 = vpop.f32.mrf.mxu0
      %v1183 = vadd.f32 %v891, %v1182
      %v1184 = vpop.f32.mrf.mxu0
      %1185 = vmatprep.mubr.bf16.mxu0 0
      %1186 = vmatmul.mubr.bf16.gmra.mxu0 %v1043
      %v1187 = vpop.f32.mrf.mxu0
      %v1188 = vadd.f32 %v896, %v1187
      %v1189 = vpop.f32.mrf.mxu0
      %v1190 = vpop.f32.mrf.mxu0
      %v1191 = vadd.f32 %v899, %v1190
      %v1192 = vpop.f32.mrf.mxu0
      %1193 = vmatprep.mubr.bf16.mxu0 0
      %1194 = vmatmul.mubr.bf16.gmra.mxu0 %v1046
      %v1195 = vpop.f32.mrf.mxu0
      %v1196 = vadd.f32 %v904, %v1195
      %v1197 = vpop.f32.mrf.mxu0
      %v1198 = vpop.f32.mrf.mxu0
      %v1199 = vadd.f32 %v907, %v1198
      %v1200 = vpop.f32.mrf.mxu0
      %1201 = vmatprep.mubr.bf16.mxu0 0
      %1202 = vmatmul.mubr.bf16.gmra.mxu0 %v1049
      %v1203 = vpop.f32.mrf.mxu0
      %v1204 = vadd.f32 %v912, %v1203
      %v1205 = vpop.f32.mrf.mxu0
      %v1206 = vpop.f32.mrf.mxu0
      %v1207 = vadd.f32 %v915, %v1206
      %v1208 = vpop.f32.mrf.mxu0
      %1209 = vmatprep.mubr.bf16.mxu0 0
      %1210 = vmatmul.mubr.bf16.gmra.mxu0 %v1052
      %v1211 = vpop.f32.mrf.mxu0
      %v1212 = vadd.f32 %v920, %v1211
      %v1213 = vpop.f32.mrf.mxu0
      %v1214 = vpop.f32.mrf.mxu0
      %v1215 = vadd.f32 %v923, %v1214
      %v1216 = vpop.f32.mrf.mxu0
      %1217 = vdwg.mxu0
      %v1218 = vld [vmem:[%s225] sm:$0xe]
      %v1219 = vld [vmem:[%s225 + $0xc] sm:$0xe]
      %v1220 = vld [vmem:[%s225 + $0x18] sm:$0xe]
      %v1221 = vld [vmem:[%s225 + $0x24] sm:$0xe]
      %v1222 = vld [vmem:[%s225 + $0x30] sm:$0xe]
      %v1223 = vld [vmem:[%s225 + $0x3c] sm:$0xe]
      %v1224 = vld [vmem:[%s225 + $0x48] sm:$0xe]
      %v1225 = vld [vmem:[%s225 + $0x54] sm:$0xe]
      %v1226 = vld [vmem:[%s225 + $0x60] sm:$0xe]
      %v1227 = vld [vmem:[%s225 + $0x6c] sm:$0xe]
      %v1228 = vld [vmem:[%s225 + $0x78] sm:$0xe]
      %v1229 = vld [vmem:[%s225 + $0x84] sm:$0xe]
      %v1230 = vld [vmem:[%s225 + $0x90] sm:$0xe]
      %v1231 = vld [vmem:[%s225 + $0x9c] sm:$0xe]
      %v1232 = vld [vmem:[%s225 + $0xa8] sm:$0xe]
      %v1233 = vld [vmem:[%s225 + $0xb4] sm:$0xe]
      %vm1266 = vcmask 1042432
      %vm1267 = vcmask 1046532
      %vm1268 = vmor %vm1266, %vm1267
      %v1269 = vrot.slane %v1218, 5
      %v1270 = vrot.slane %v1269, 4
      %v1271 = vrot.slane %v227, 5
      %v1272 = vsel %vm1268, %v1270, %v1271
      %v1273 = vrot.slane %v1271, 4
      %v1274 = vrot.slane %v259, 5
      %v1275 = vsel %vm1268, %v1273, %v1274
      %v1276 = vrot.slane %v1219, 5
      %v1277 = vrot.slane %v1276, 4
      %v1278 = vrot.slane %v229, 5
      %v1279 = vsel %vm1268, %v1277, %v1278
      %v1280 = vrot.slane %v1278, 4
      %v1281 = vrot.slane %v260, 5
      %v1282 = vsel %vm1268, %v1280, %v1281
      %v1283 = vrot.slane %v1220, 5
      %v1284 = vrot.slane %v1283, 4
      %v1285 = vrot.slane %v231, 5
      %v1286 = vsel %vm1268, %v1284, %v1285
      %v1287 = vrot.slane %v1285, 4
      %v1288 = vrot.slane %v261, 5
      %v1289 = vsel %vm1268, %v1287, %v1288
      %v1290 = vrot.slane %v1221, 5
      %v1291 = vrot.slane %v1290, 4
      %v1292 = vrot.slane %v233, 5
      %v1293 = vsel %vm1268, %v1291, %v1292
      %v1294 = vrot.slane %v1292, 4
      %v1295 = vrot.slane %v262, 5
      %v1296 = vsel %vm1268, %v1294, %v1295
      %v1297 = vrot.slane %v1222, 5
      %v1298 = vrot.slane %v1297, 4
      %v1299 = vrot.slane %v235, 5
      %v1300 = vsel %vm1268, %v1298, %v1299
      %v1301 = vrot.slane %v1299, 4
      %v1302 = vrot.slane %v263, 5
      %v1303 = vsel %vm1268, %v1301, %v1302
      %v1304 = vrot.slane %v1223, 5
      %v1305 = vrot.slane %v1304, 4
      %v1306 = vrot.slane %v237, 5
      %v1307 = vsel %vm1268, %v1305, %v1306
      %v1308 = vrot.slane %v1306, 4
      %v1309 = vrot.slane %v264, 5
      %v1310 = vsel %vm1268, %v1308, %v1309
      %v1311 = vrot.slane %v1224, 5
      %v1312 = vrot.slane %v1311, 4
      %v1313 = vrot.slane %v239, 5
      %v1314 = vsel %vm1268, %v1312, %v1313
      %v1315 = vrot.slane %v1313, 4
      %v1316 = vrot.slane %v265, 5
      %v1317 = vsel %vm1268, %v1315, %v1316
      %v1318 = vrot.slane %v1225, 5
      %v1319 = vrot.slane %v1318, 4
      %v1320 = vrot.slane %v241, 5
      %v1321 = vsel %vm1268, %v1319, %v1320
      %v1322 = vrot.slane %v1320, 4
      %v1323 = vrot.slane %v266, 5
      %v1324 = vsel %vm1268, %v1322, %v1323
      %v1325 = vrot.slane %v1226, 5
      %v1326 = vrot.slane %v1325, 4
      %v1327 = vrot.slane %v243, 5
      %v1328 = vsel %vm1268, %v1326, %v1327
      %v1329 = vrot.slane %v1327, 4
      %v1330 = vrot.slane %v267, 5
      %v1331 = vsel %vm1268, %v1329, %v1330
      %v1332 = vrot.slane %v1227, 5
      %v1333 = vrot.slane %v1332, 4
      %v1334 = vrot.slane %v245, 5
      %v1335 = vsel %vm1268, %v1333, %v1334
      %v1336 = vrot.slane %v1334, 4
      %v1337 = vrot.slane %v268, 5
      %v1338 = vsel %vm1268, %v1336, %v1337
      %v1339 = vrot.slane %v1228, 5
      %v1340 = vrot.slane %v1339, 4
      %v1341 = vrot.slane %v247, 5
      %v1342 = vsel %vm1268, %v1340, %v1341
      %v1343 = vrot.slane %v1341, 4
      %v1344 = vrot.slane %v269, 5
      %v1345 = vsel %vm1268, %v1343, %v1344
      %v1346 = vrot.slane %v1229, 5
      %v1347 = vrot.slane %v1346, 4
      %v1348 = vrot.slane %v249, 5
      %v1349 = vsel %vm1268, %v1347, %v1348
      %v1350 = vrot.slane %v1348, 4
      %v1351 = vrot.slane %v270, 5
      %v1352 = vsel %vm1268, %v1350, %v1351
      %v1353 = vrot.slane %v1230, 5
      %v1354 = vrot.slane %v1353, 4
      %v1355 = vrot.slane %v251, 5
      %v1356 = vsel %vm1268, %v1354, %v1355
      %v1357 = vrot.slane %v1355, 4
      %v1358 = vrot.slane %v271, 5
      %v1359 = vsel %vm1268, %v1357, %v1358
      %v1360 = vrot.slane %v1231, 5
      %v1361 = vrot.slane %v1360, 4
      %v1362 = vrot.slane %v253, 5
      %v1363 = vsel %vm1268, %v1361, %v1362
      %v1364 = vrot.slane %v1362, 4
      %v1365 = vrot.slane %v272, 5
      %v1366 = vsel %vm1268, %v1364, %v1365
      %v1367 = vrot.slane %v1232, 5
      %v1368 = vrot.slane %v1367, 4
      %v1369 = vrot.slane %v255, 5
      %v1370 = vsel %vm1268, %v1368, %v1369
      %v1371 = vrot.slane %v1369, 4
      %v1372 = vrot.slane %v273, 5
      %v1373 = vsel %vm1268, %v1371, %v1372
      %v1374 = vrot.slane %v1233, 5
      %v1375 = vrot.slane %v1374, 4
      %v1376 = vrot.slane %v257, 5
      %v1377 = vsel %vm1268, %v1375, %v1376
      %v1378 = vrot.slane %v1376, 4
      %v1379 = vrot.slane %v274, 5
      %v1380 = vsel %vm1268, %v1378, %v1379
      %s1381 = scalar_lea.vmem %s1, 4
      %v1382 = vld [vmem:[%s1381] sm:$0x3]
      %v1383 = vunpack.c.l.b16 %v1272
      %v1384 = vunpack.c.l.b16 %v1275
      %v1385 = vunpack.c.l.b16 %v1279
      %v1386 = vunpack.c.l.b16 %v1282
      %v1387 = vunpack.c.l.b16 %v1286
      %v1388 = vunpack.c.l.b16 %v1289
      %v1389 = vunpack.c.l.b16 %v1293
      %v1390 = vunpack.c.l.b16 %v1296
      %v1391 = vunpack.c.l.b16 %v1300
      %v1392 = vunpack.c.l.b16 %v1303
      %v1393 = vunpack.c.l.b16 %v1307
      %v1394 = vunpack.c.l.b16 %v1310
      %v1395 = vunpack.c.l.b16 %v1314
      %v1396 = vunpack.c.l.b16 %v1317
      %v1397 = vunpack.c.l.b16 %v1321
      %v1398 = vunpack.c.l.b16 %v1324
      %v1399 = vunpack.c.l.b16 %v1328
      %v1400 = vunpack.c.l.b16 %v1331
      %v1401 = vunpack.c.l.b16 %v1335
      %v1402 = vunpack.c.l.b16 %v1338
      %v1403 = vunpack.c.l.b16 %v1342
      %v1404 = vunpack.c.l.b16 %v1345
      %v1405 = vunpack.c.l.b16 %v1349
      %v1406 = vunpack.c.l.b16 %v1352
      %v1407 = vunpack.c.l.b16 %v1356
      %v1408 = vunpack.c.l.b16 %v1359
      %v1409 = vunpack.c.l.b16 %v1363
      %v1410 = vunpack.c.l.b16 %v1366
      %v1411 = vunpack.c.l.b16 %v1370
      %v1412 = vunpack.c.l.b16 %v1373
      %v1413 = vunpack.c.l.b16 %v1377
      %v1414 = vunpack.c.l.b16 %v1380
      %v1415 = vpack.c.b16 %v1384, %v1383
      %v1416 = vpack.c.b16 %v1386, %v1385
      %v1417 = vpack.c.b16 %v1388, %v1387
      %v1418 = vpack.c.b16 %v1390, %v1389
      %v1419 = vpack.c.b16 %v1392, %v1391
      %v1420 = vpack.c.b16 %v1394, %v1393
      %v1421 = vpack.c.b16 %v1396, %v1395
      %v1422 = vpack.c.b16 %v1398, %v1397
      %v1423 = vpack.c.b16 %v1400, %v1399
      %v1424 = vpack.c.b16 %v1402, %v1401
      %v1425 = vpack.c.b16 %v1404, %v1403
      %v1426 = vpack.c.b16 %v1406, %v1405
      %v1427 = vpack.c.b16 %v1408, %v1407
      %v1428 = vpack.c.b16 %v1410, %v1409
      %v1429 = vpack.c.b16 %v1412, %v1411
      %v1430 = vpack.c.b16 %v1414, %v1413
      %v1432 = vsel %vm712, %v1415, 0
      %v1435 = vsel %vm712, %v1416, 0
      %v1438 = vsel %vm712, %v1417, 0
      %v1441 = vsel %vm712, %v1418, 0
      %v1444 = vsel %vm712, %v1419, 0
      %v1447 = vsel %vm712, %v1420, 0
      %v1450 = vsel %vm712, %v1421, 0
      %v1453 = vsel %vm712, %v1422, 0
      %v1456 = vsel %vm712, %v1423, 0
      %v1459 = vsel %vm712, %v1424, 0
      %v1462 = vsel %vm712, %v1425, 0
      %v1465 = vsel %vm712, %v1426, 0
      %v1468 = vsel %vm712, %v1427, 0
      %v1471 = vsel %vm712, %v1428, 0
      %v1474 = vsel %vm712, %v1429, 0
      %v1477 = vsel %vm712, %v1430, 0
      %v1480 = vsel %vm761, %v1382, 0
      %1482 = vmatprep.subr.bf16.mxu0 0
      %1483 = vmatpush1.bf16.msra.mxu0 0
      %1484 = vmatprep.subr.bf16.mxu0 0
      %1485 = vmatpush1.bf16.msra.mxu0 0
      %1486 = vmatprep.subr.bf16.mxu0 0
      %1487 = vmatpush1.bf16.msra.mxu0 0
      %1488 = vmatprep.subr.bf16.mxu0 0
      %1489 = vmatpush1.bf16.msra.mxu0 0
      %1490 = vmatprep.subr.bf16.mxu0 0
      %1491 = vmatpush1.bf16.msra.mxu0 0
      %1492 = vmatprep.subr.bf16.mxu0 0
      %1493 = vmatpush1.bf16.msra.mxu0 0
      %1494 = vmatprep.subr.bf16.mxu0 0
      %1495 = vmatpush1.bf16.msra.mxu0 0
      %1496 = vmatprep.subr.bf16.mxu0 0
      %1497 = vmatpush1.bf16.msra.mxu0 %v1480
      %1498 = vmatprep.subr.bf16.mxu0 0
      %1499 = vmatpush2.bf16.msra.mxu0 0
      %1500 = vmatprep.subr.bf16.mxu0 0
      %1501 = vmatpush2.bf16.msra.mxu0 0
      %1502 = vmatprep.subr.bf16.mxu0 0
      %1503 = vmatpush2.bf16.msra.mxu0 0
      %1504 = vmatprep.subr.bf16.mxu0 0
      %1505 = vmatpush2.bf16.msra.mxu0 0
      %1506 = vmatprep.subr.bf16.mxu0 0
      %1507 = vmatpush2.bf16.msra.mxu0 0
      %1508 = vmatprep.subr.bf16.mxu0 0
      %1509 = vmatpush2.bf16.msra.mxu0 0
      %1510 = vmatprep.subr.bf16.mxu0 0
      %1511 = vmatpush2.bf16.msra.mxu0 0
      %1512 = vmatprep.subr.bf16.mxu0 0
      %1513 = vmatpush2.bf16.msra.mxu0 0
      %1514 = vmatprep.mubr.bf16.mxu0 0
      %1515 = vmatmul.mubr.bf16.gmra.mxu0 %v1432
      %v1516 = vpop.f32.mrf.mxu0
      %v1517 = vadd.f32 0.0, %v1516
      %v1518 = vpop.f32.mrf.mxu0
      %v1519 = vpop.f32.mrf.mxu0
      %v1520 = vadd.f32 0.0, %v1519
      %v1521 = vpop.f32.mrf.mxu0
      %1522 = vmatprep.mubr.bf16.mxu0 0
      %1523 = vmatmul.mubr.bf16.gmra.mxu0 %v1435
      %v1524 = vpop.f32.mrf.mxu0
      %v1525 = vadd.f32 0.0, %v1524
      %v1526 = vpop.f32.mrf.mxu0
      %v1527 = vpop.f32.mrf.mxu0
      %v1528 = vadd.f32 0.0, %v1527
      %v1529 = vpop.f32.mrf.mxu0
      %1530 = vmatprep.mubr.bf16.mxu0 0
      %1531 = vmatmul.mubr.bf16.gmra.mxu0 %v1438
      %v1532 = vpop.f32.mrf.mxu0
      %v1533 = vadd.f32 0.0, %v1532
      %v1534 = vpop.f32.mrf.mxu0
      %v1535 = vpop.f32.mrf.mxu0
      %v1536 = vadd.f32 0.0, %v1535
      %v1537 = vpop.f32.mrf.mxu0
      %1538 = vmatprep.mubr.bf16.mxu0 0
      %1539 = vmatmul.mubr.bf16.gmra.mxu0 %v1441
      %v1540 = vpop.f32.mrf.mxu0
      %v1541 = vadd.f32 0.0, %v1540
      %v1542 = vpop.f32.mrf.mxu0
      %v1543 = vpop.f32.mrf.mxu0
      %v1544 = vadd.f32 0.0, %v1543
      %v1545 = vpop.f32.mrf.mxu0
      %1546 = vmatprep.mubr.bf16.mxu0 0
      %1547 = vmatmul.mubr.bf16.gmra.mxu0 %v1444
      %v1548 = vpop.f32.mrf.mxu0
      %v1549 = vadd.f32 0.0, %v1548
      %v1550 = vpop.f32.mrf.mxu0
      %v1551 = vpop.f32.mrf.mxu0
      %v1552 = vadd.f32 0.0, %v1551
      %v1553 = vpop.f32.mrf.mxu0
      %1554 = vmatprep.mubr.bf16.mxu0 0
      %1555 = vmatmul.mubr.bf16.gmra.mxu0 %v1447
      %v1556 = vpop.f32.mrf.mxu0
      %v1557 = vadd.f32 0.0, %v1556
      %v1558 = vpop.f32.mrf.mxu0
      %v1559 = vpop.f32.mrf.mxu0
      %v1560 = vadd.f32 0.0, %v1559
      %v1561 = vpop.f32.mrf.mxu0
      %1562 = vmatprep.mubr.bf16.mxu0 0
      %1563 = vmatmul.mubr.bf16.gmra.mxu0 %v1450
      %v1564 = vpop.f32.mrf.mxu0
      %v1565 = vadd.f32 0.0, %v1564
      %v1566 = vpop.f32.mrf.mxu0
      %v1567 = vpop.f32.mrf.mxu0
      %v1568 = vadd.f32 0.0, %v1567
      %v1569 = vpop.f32.mrf.mxu0
      %1570 = vmatprep.mubr.bf16.mxu0 0
      %1571 = vmatmul.mubr.bf16.gmra.mxu0 %v1453
      %v1572 = vpop.f32.mrf.mxu0
      %v1573 = vadd.f32 0.0, %v1572
      %v1574 = vpop.f32.mrf.mxu0
      %v1575 = vpop.f32.mrf.mxu0
      %v1576 = vadd.f32 0.0, %v1575
      %v1577 = vpop.f32.mrf.mxu0
      %1578 = vmatprep.mubr.bf16.mxu0 0
      %1579 = vmatmul.mubr.bf16.gmra.mxu0 %v1456
      %v1580 = vpop.f32.mrf.mxu0
      %v1581 = vadd.f32 0.0, %v1580
      %v1582 = vpop.f32.mrf.mxu0
      %v1583 = vpop.f32.mrf.mxu0
      %v1584 = vadd.f32 0.0, %v1583
      %v1585 = vpop.f32.mrf.mxu0
      %1586 = vmatprep.mubr.bf16.mxu0 0
      %1587 = vmatmul.mubr.bf16.gmra.mxu0 %v1459
      %v1588 = vpop.f32.mrf.mxu0
      %v1589 = vadd.f32 0.0, %v1588
      %v1590 = vpop.f32.mrf.mxu0
      %v1591 = vpop.f32.mrf.mxu0
      %v1592 = vadd.f32 0.0, %v1591
      %v1593 = vpop.f32.mrf.mxu0
      %1594 = vmatprep.mubr.bf16.mxu0 0
      %1595 = vmatmul.mubr.bf16.gmra.mxu0 %v1462
      %v1596 = vpop.f32.mrf.mxu0
      %v1597 = vadd.f32 0.0, %v1596
      %v1598 = vpop.f32.mrf.mxu0
      %v1599 = vpop.f32.mrf.mxu0
      %v1600 = vadd.f32 0.0, %v1599
      %v1601 = vpop.f32.mrf.mxu0
      %1602 = vmatprep.mubr.bf16.mxu0 0
      %1603 = vmatmul.mubr.bf16.gmra.mxu0 %v1465
      %v1604 = vpop.f32.mrf.mxu0
      %v1605 = vadd.f32 0.0, %v1604
      %v1606 = vpop.f32.mrf.mxu0
      %v1607 = vpop.f32.mrf.mxu0
      %v1608 = vadd.f32 0.0, %v1607
      %v1609 = vpop.f32.mrf.mxu0
      %1610 = vmatprep.mubr.bf16.mxu0 0
      %1611 = vmatmul.mubr.bf16.gmra.mxu0 %v1468
      %v1612 = vpop.f32.mrf.mxu0
      %v1613 = vadd.f32 0.0, %v1612
      %v1614 = vpop.f32.mrf.mxu0
      %v1615 = vpop.f32.mrf.mxu0
      %v1616 = vadd.f32 0.0, %v1615
      %v1617 = vpop.f32.mrf.mxu0
      %1618 = vmatprep.mubr.bf16.mxu0 0
      %1619 = vmatmul.mubr.bf16.gmra.mxu0 %v1471
      %v1620 = vpop.f32.mrf.mxu0
      %v1621 = vadd.f32 0.0, %v1620
      %v1622 = vpop.f32.mrf.mxu0
      %v1623 = vpop.f32.mrf.mxu0
      %v1624 = vadd.f32 0.0, %v1623
      %v1625 = vpop.f32.mrf.mxu0
      %1626 = vmatprep.mubr.bf16.mxu0 0
      %1627 = vmatmul.mubr.bf16.gmra.mxu0 %v1474
      %v1628 = vpop.f32.mrf.mxu0
      %v1629 = vadd.f32 0.0, %v1628
      %v1630 = vpop.f32.mrf.mxu0
      %v1631 = vpop.f32.mrf.mxu0
      %v1632 = vadd.f32 0.0, %v1631
      %v1633 = vpop.f32.mrf.mxu0
      %1634 = vmatprep.mubr.bf16.mxu0 0
      %1635 = vmatmul.mubr.bf16.gmra.mxu0 %v1477
      %v1636 = vpop.f32.mrf.mxu0
      %v1637 = vadd.f32 0.0, %v1636
      %v1638 = vpop.f32.mrf.mxu0
      %v1639 = vpop.f32.mrf.mxu0
      %v1640 = vadd.f32 0.0, %v1639
      %v1641 = vpop.f32.mrf.mxu0
      %1642 = vdwg.mxu0
      %v1643 = vadd.f32 %v1092, %v1517
      %v1644 = vadd.f32 %v1095, %v1520
      %v1645 = vadd.f32 %v1100, %v1525
      %v1646 = vadd.f32 %v1103, %v1528
      %v1647 = vadd.f32 %v1108, %v1533
      %v1648 = vadd.f32 %v1111, %v1536
      %v1649 = vadd.f32 %v1116, %v1541
      %v1650 = vadd.f32 %v1119, %v1544
      %v1651 = vadd.f32 %v1124, %v1549
      %v1652 = vadd.f32 %v1127, %v1552
      %v1653 = vadd.f32 %v1132, %v1557
      %v1654 = vadd.f32 %v1135, %v1560
      %v1655 = vadd.f32 %v1140, %v1565
      %v1656 = vadd.f32 %v1143, %v1568
      %v1657 = vadd.f32 %v1148, %v1573
      %v1658 = vadd.f32 %v1151, %v1576
      %v1659 = vadd.f32 %v1156, %v1581
      %v1660 = vadd.f32 %v1159, %v1584
      %v1661 = vadd.f32 %v1164, %v1589
      %v1662 = vadd.f32 %v1167, %v1592
      %v1663 = vadd.f32 %v1172, %v1597
      %v1664 = vadd.f32 %v1175, %v1600
      %v1665 = vadd.f32 %v1180, %v1605
      %v1666 = vadd.f32 %v1183, %v1608
      %v1667 = vadd.f32 %v1188, %v1613
      %v1668 = vadd.f32 %v1191, %v1616
      %v1669 = vadd.f32 %v1196, %v1621
      %v1670 = vadd.f32 %v1199, %v1624
      %v1671 = vadd.f32 %v1204, %v1629
      %v1672 = vadd.f32 %v1207, %v1632
      %v1673 = vadd.f32 %v1212, %v1637
      %v1674 = vadd.f32 %v1215, %v1640
      %s1675 = sadd.s32 %s222, 1
      %s1676 = smul.u32 %s1675, 3
      %s1677 = smul.addr %s1676, 4
      %s1678 = scalar_lea.vmem %s210, %s1677
      %v1679 = vld [vmem:[%s1678] sm:$0xf]
      %v1680 = vld [vmem:[%s1678 + $0x4] sm:$0xf]
      %v1681 = vld [vmem:[%s1678 + $0xc] sm:$0xf]
      %v1682 = vld [vmem:[%s1678 + $0x10] sm:$0xf]
      %v1683 = vld [vmem:[%s1678 + $0x18] sm:$0xf]
      %v1684 = vld [vmem:[%s1678 + $0x1c] sm:$0xf]
      %v1685 = vld [vmem:[%s1678 + $0x24] sm:$0xf]
      %v1686 = vld [vmem:[%s1678 + $0x28] sm:$0xf]
      %v1687 = vld [vmem:[%s1678 + $0x30] sm:$0xf]
      %v1688 = vld [vmem:[%s1678 + $0x34] sm:$0xf]
      %v1689 = vld [vmem:[%s1678 + $0x3c] sm:$0xf]
      %v1690 = vld [vmem:[%s1678 + $0x40] sm:$0xf]
      %v1691 = vld [vmem:[%s1678 + $0x48] sm:$0xf]
      %v1692 = vld [vmem:[%s1678 + $0x4c] sm:$0xf]
      %v1693 = vld [vmem:[%s1678 + $0x54] sm:$0xf]
      %v1694 = vld [vmem:[%s1678 + $0x58] sm:$0xf]
      %v1695 = vld [vmem:[%s1678 + $0x60] sm:$0xf]
      %v1696 = vld [vmem:[%s1678 + $0x64] sm:$0xf]
      %v1697 = vld [vmem:[%s1678 + $0x6c] sm:$0xf]
      %v1698 = vld [vmem:[%s1678 + $0x70] sm:$0xf]
      %v1699 = vld [vmem:[%s1678 + $0x78] sm:$0xf]
      %v1700 = vld [vmem:[%s1678 + $0x7c] sm:$0xf]
      %v1701 = vld [vmem:[%s1678 + $0x84] sm:$0xf]
      %v1702 = vld [vmem:[%s1678 + $0x88] sm:$0xf]
      %v1703 = vld [vmem:[%s1678 + $0x90] sm:$0xf]
      %v1704 = vld [vmem:[%s1678 + $0x94] sm:$0xf]
      %v1705 = vld [vmem:[%s1678 + $0x9c] sm:$0xf]
      %v1706 = vld [vmem:[%s1678 + $0xa0] sm:$0xf]
      %v1707 = vld [vmem:[%s1678 + $0xa8] sm:$0xf]
      %v1708 = vld [vmem:[%s1678 + $0xac] sm:$0xf]
      %v1709 = vld [vmem:[%s1678 + $0xb4] sm:$0xf]
      %v1710 = vld [vmem:[%s1678 + $0xb8] sm:$0xf]
      %s1711 = scalar_lea.vmem %s1, 6
      %v1712 = vld [vmem:[%s1711] sm:$0x3]
      %v1745 = vunpack.c.l.b16 %v1679
      %v1746 = vunpack.c.l.b16 %v1680
      %v1747 = vunpack.c.l.b16 %v1681
      %v1748 = vunpack.c.l.b16 %v1682
      %v1749 = vunpack.c.l.b16 %v1683
      %v1750 = vunpack.c.l.b16 %v1684
      %v1751 = vunpack.c.l.b16 %v1685
      %v1752 = vunpack.c.l.b16 %v1686
      %v1753 = vunpack.c.l.b16 %v1687
      %v1754 = vunpack.c.l.b16 %v1688
      %v1755 = vunpack.c.l.b16 %v1689
      %v1756 = vunpack.c.l.b16 %v1690
      %v1757 = vunpack.c.l.b16 %v1691
      %v1758 = vunpack.c.l.b16 %v1692
      %v1759 = vunpack.c.l.b16 %v1693
      %v1760 = vunpack.c.l.b16 %v1694
      %v1761 = vunpack.c.l.b16 %v1695
      %v1762 = vunpack.c.l.b16 %v1696
      %v1763 = vunpack.c.l.b16 %v1697
      %v1764 = vunpack.c.l.b16 %v1698
      %v1765 = vunpack.c.l.b16 %v1699
      %v1766 = vunpack.c.l.b16 %v1700
      %v1767 = vunpack.c.l.b16 %v1701
      %v1768 = vunpack.c.l.b16 %v1702
      %v1769 = vunpack.c.l.b16 %v1703
      %v1770 = vunpack.c.l.b16 %v1704
      %v1771 = vunpack.c.l.b16 %v1705
      %v1772 = vunpack.c.l.b16 %v1706
      %v1773 = vunpack.c.l.b16 %v1707
      %v1774 = vunpack.c.l.b16 %v1708
      %v1775 = vunpack.c.l.b16 %v1709
      %v1776 = vunpack.c.l.b16 %v1710
      %v1777 = vpack.c.b16 %v1746, %v1745
      %v1778 = vpack.c.b16 %v1748, %v1747
      %v1779 = vpack.c.b16 %v1750, %v1749
      %v1780 = vpack.c.b16 %v1752, %v1751
      %v1781 = vpack.c.b16 %v1754, %v1753
      %v1782 = vpack.c.b16 %v1756, %v1755
      %v1783 = vpack.c.b16 %v1758, %v1757
      %v1784 = vpack.c.b16 %v1760, %v1759
      %v1785 = vpack.c.b16 %v1762, %v1761
      %v1786 = vpack.c.b16 %v1764, %v1763
      %v1787 = vpack.c.b16 %v1766, %v1765
      %v1788 = vpack.c.b16 %v1768, %v1767
      %v1789 = vpack.c.b16 %v1770, %v1769
      %v1790 = vpack.c.b16 %v1772, %v1771
      %v1791 = vpack.c.b16 %v1774, %v1773
      %v1792 = vpack.c.b16 %v1776, %v1775
      %v1794 = vsel %vm712, %v1777, 0
      %v1797 = vsel %vm712, %v1778, 0
      %v1800 = vsel %vm712, %v1779, 0
      %v1803 = vsel %vm712, %v1780, 0
      %v1806 = vsel %vm712, %v1781, 0
      %v1809 = vsel %vm712, %v1782, 0
      %v1812 = vsel %vm712, %v1783, 0
      %v1815 = vsel %vm712, %v1784, 0
      %v1818 = vsel %vm712, %v1785, 0
      %v1821 = vsel %vm712, %v1786, 0
      %v1824 = vsel %vm712, %v1787, 0
      %v1827 = vsel %vm712, %v1788, 0
      %v1830 = vsel %vm712, %v1789, 0
      %v1833 = vsel %vm712, %v1790, 0
      %v1836 = vsel %vm712, %v1791, 0
      %v1839 = vsel %vm712, %v1792, 0
      %v1842 = vsel %vm761, %v1712, 0
      %1844 = vmatprep.subr.bf16.mxu0 0
      %1845 = vmatpush1.bf16.msra.mxu0 0
      %1846 = vmatprep.subr.bf16.mxu0 0
      %1847 = vmatpush1.bf16.msra.mxu0 0
      %1848 = vmatprep.subr.bf16.mxu0 0
      %1849 = vmatpush1.bf16.msra.mxu0 0
      %1850 = vmatprep.subr.bf16.mxu0 0
      %1851 = vmatpush1.bf16.msra.mxu0 0
      %1852 = vmatprep.subr.bf16.mxu0 0
      %1853 = vmatpush1.bf16.msra.mxu0 0
      %1854 = vmatprep.subr.bf16.mxu0 0
      %1855 = vmatpush1.bf16.msra.mxu0 0
      %1856 = vmatprep.subr.bf16.mxu0 0
      %1857 = vmatpush1.bf16.msra.mxu0 0
      %1858 = vmatprep.subr.bf16.mxu0 0
      %1859 = vmatpush1.bf16.msra.mxu0 %v1842
      %1860 = vmatprep.subr.bf16.mxu0 0
      %1861 = vmatpush2.bf16.msra.mxu0 0
      %1862 = vmatprep.subr.bf16.mxu0 0
      %1863 = vmatpush2.bf16.msra.mxu0 0
      %1864 = vmatprep.subr.bf16.mxu0 0
      %1865 = vmatpush2.bf16.msra.mxu0 0
      %1866 = vmatprep.subr.bf16.mxu0 0
      %1867 = vmatpush2.bf16.msra.mxu0 0
      %1868 = vmatprep.subr.bf16.mxu0 0
      %1869 = vmatpush2.bf16.msra.mxu0 0
      %1870 = vmatprep.subr.bf16.mxu0 0
      %1871 = vmatpush2.bf16.msra.mxu0 0
      %1872 = vmatprep.subr.bf16.mxu0 0
      %1873 = vmatpush2.bf16.msra.mxu0 0
      %1874 = vmatprep.subr.bf16.mxu0 0
      %1875 = vmatpush2.bf16.msra.mxu0 0
      %1876 = vmatprep.mubr.bf16.mxu0 0
      %1877 = vmatmul.mubr.bf16.gmra.mxu0 %v1794
      %v1878 = vpop.f32.mrf.mxu0
      %v1879 = vadd.f32 0.0, %v1878
      %v1880 = vpop.f32.mrf.mxu0
      %v1881 = vpop.f32.mrf.mxu0
      %v1882 = vadd.f32 0.0, %v1881
      %v1883 = vpop.f32.mrf.mxu0
      %1884 = vmatprep.mubr.bf16.mxu0 0
      %1885 = vmatmul.mubr.bf16.gmra.mxu0 %v1797
      %v1886 = vpop.f32.mrf.mxu0
      %v1887 = vadd.f32 0.0, %v1886
      %v1888 = vpop.f32.mrf.mxu0
      %v1889 = vpop.f32.mrf.mxu0
      %v1890 = vadd.f32 0.0, %v1889
      %v1891 = vpop.f32.mrf.mxu0
      %1892 = vmatprep.mubr.bf16.mxu0 0
      %1893 = vmatmul.mubr.bf16.gmra.mxu0 %v1800
      %v1894 = vpop.f32.mrf.mxu0
      %v1895 = vadd.f32 0.0, %v1894
      %v1896 = vpop.f32.mrf.mxu0
      %v1897 = vpop.f32.mrf.mxu0
      %v1898 = vadd.f32 0.0, %v1897
      %v1899 = vpop.f32.mrf.mxu0
      %1900 = vmatprep.mubr.bf16.mxu0 0
      %1901 = vmatmul.mubr.bf16.gmra.mxu0 %v1803
      %v1902 = vpop.f32.mrf.mxu0
      %v1903 = vadd.f32 0.0, %v1902
      %v1904 = vpop.f32.mrf.mxu0
      %v1905 = vpop.f32.mrf.mxu0
      %v1906 = vadd.f32 0.0, %v1905
      %v1907 = vpop.f32.mrf.mxu0
      %1908 = vmatprep.mubr.bf16.mxu0 0
      %1909 = vmatmul.mubr.bf16.gmra.mxu0 %v1806
      %v1910 = vpop.f32.mrf.mxu0
      %v1911 = vadd.f32 0.0, %v1910
      %v1912 = vpop.f32.mrf.mxu0
      %v1913 = vpop.f32.mrf.mxu0
      %v1914 = vadd.f32 0.0, %v1913
      %v1915 = vpop.f32.mrf.mxu0
      %1916 = vmatprep.mubr.bf16.mxu0 0
      %1917 = vmatmul.mubr.bf16.gmra.mxu0 %v1809
      %v1918 = vpop.f32.mrf.mxu0
      %v1919 = vadd.f32 0.0, %v1918
      %v1920 = vpop.f32.mrf.mxu0
      %v1921 = vpop.f32.mrf.mxu0
      %v1922 = vadd.f32 0.0, %v1921
      %v1923 = vpop.f32.mrf.mxu0
      %1924 = vmatprep.mubr.bf16.mxu0 0
      %1925 = vmatmul.mubr.bf16.gmra.mxu0 %v1812
      %v1926 = vpop.f32.mrf.mxu0
      %v1927 = vadd.f32 0.0, %v1926
      %v1928 = vpop.f32.mrf.mxu0
      %v1929 = vpop.f32.mrf.mxu0
      %v1930 = vadd.f32 0.0, %v1929
      %v1931 = vpop.f32.mrf.mxu0
      %1932 = vmatprep.mubr.bf16.mxu0 0
      %1933 = vmatmul.mubr.bf16.gmra.mxu0 %v1815
      %v1934 = vpop.f32.mrf.mxu0
      %v1935 = vadd.f32 0.0, %v1934
      %v1936 = vpop.f32.mrf.mxu0
      %v1937 = vpop.f32.mrf.mxu0
      %v1938 = vadd.f32 0.0, %v1937
      %v1939 = vpop.f32.mrf.mxu0
      %1940 = vmatprep.mubr.bf16.mxu0 0
      %1941 = vmatmul.mubr.bf16.gmra.mxu0 %v1818
      %v1942 = vpop.f32.mrf.mxu0
      %v1943 = vadd.f32 0.0, %v1942
      %v1944 = vpop.f32.mrf.mxu0
      %v1945 = vpop.f32.mrf.mxu0
      %v1946 = vadd.f32 0.0, %v1945
      %v1947 = vpop.f32.mrf.mxu0
      %1948 = vmatprep.mubr.bf16.mxu0 0
      %1949 = vmatmul.mubr.bf16.gmra.mxu0 %v1821
      %v1950 = vpop.f32.mrf.mxu0
      %v1951 = vadd.f32 0.0, %v1950
      %v1952 = vpop.f32.mrf.mxu0
      %v1953 = vpop.f32.mrf.mxu0
      %v1954 = vadd.f32 0.0, %v1953
      %v1955 = vpop.f32.mrf.mxu0
      %1956 = vmatprep.mubr.bf16.mxu0 0
      %1957 = vmatmul.mubr.bf16.gmra.mxu0 %v1824
      %v1958 = vpop.f32.mrf.mxu0
      %v1959 = vadd.f32 0.0, %v1958
      %v1960 = vpop.f32.mrf.mxu0
      %v1961 = vpop.f32.mrf.mxu0
      %v1962 = vadd.f32 0.0, %v1961
      %v1963 = vpop.f32.mrf.mxu0
      %1964 = vmatprep.mubr.bf16.mxu0 0
      %1965 = vmatmul.mubr.bf16.gmra.mxu0 %v1827
      %v1966 = vpop.f32.mrf.mxu0
      %v1967 = vadd.f32 0.0, %v1966
      %v1968 = vpop.f32.mrf.mxu0
      %v1969 = vpop.f32.mrf.mxu0
      %v1970 = vadd.f32 0.0, %v1969
      %v1971 = vpop.f32.mrf.mxu0
      %1972 = vmatprep.mubr.bf16.mxu0 0
      %1973 = vmatmul.mubr.bf16.gmra.mxu0 %v1830
      %v1974 = vpop.f32.mrf.mxu0
      %v1975 = vadd.f32 0.0, %v1974
      %v1976 = vpop.f32.mrf.mxu0
      %v1977 = vpop.f32.mrf.mxu0
      %v1978 = vadd.f32 0.0, %v1977
      %v1979 = vpop.f32.mrf.mxu0
      %1980 = vmatprep.mubr.bf16.mxu0 0
      %1981 = vmatmul.mubr.bf16.gmra.mxu0 %v1833
      %v1982 = vpop.f32.mrf.mxu0
      %v1983 = vadd.f32 0.0, %v1982
      %v1984 = vpop.f32.mrf.mxu0
      %v1985 = vpop.f32.mrf.mxu0
      %v1986 = vadd.f32 0.0, %v1985
      %v1987 = vpop.f32.mrf.mxu0
      %1988 = vmatprep.mubr.bf16.mxu0 0
      %1989 = vmatmul.mubr.bf16.gmra.mxu0 %v1836
      %v1990 = vpop.f32.mrf.mxu0
      %v1991 = vadd.f32 0.0, %v1990
      %v1992 = vpop.f32.mrf.mxu0
      %v1993 = vpop.f32.mrf.mxu0
      %v1994 = vadd.f32 0.0, %v1993
      %v1995 = vpop.f32.mrf.mxu0
      %1996 = vmatprep.mubr.bf16.mxu0 0
      %1997 = vmatmul.mubr.bf16.gmra.mxu0 %v1839
      %v1998 = vpop.f32.mrf.mxu0
      %v1999 = vadd.f32 0.0, %v1998
      %v2000 = vpop.f32.mrf.mxu0
      %v2001 = vpop.f32.mrf.mxu0
      %v2002 = vadd.f32 0.0, %v2001
      %v2003 = vpop.f32.mrf.mxu0
      %2004 = vdwg.mxu0
      %v2005 = vadd.f32 %v1643, %v1879
      %v2006 = vadd.f32 %v1644, %v1882
      %v2007 = vadd.f32 %v1645, %v1887
      %v2008 = vadd.f32 %v1646, %v1890
      %v2009 = vadd.f32 %v1647, %v1895
      %v2010 = vadd.f32 %v1648, %v1898
      %v2011 = vadd.f32 %v1649, %v1903
      %v2012 = vadd.f32 %v1650, %v1906
      %v2013 = vadd.f32 %v1651, %v1911
      %v2014 = vadd.f32 %v1652, %v1914
      %v2015 = vadd.f32 %v1653, %v1919
      %v2016 = vadd.f32 %v1654, %v1922
      %v2017 = vadd.f32 %v1655, %v1927
      %v2018 = vadd.f32 %v1656, %v1930
      %v2019 = vadd.f32 %v1657, %v1935
      %v2020 = vadd.f32 %v1658, %v1938
      %v2021 = vadd.f32 %v1659, %v1943
      %v2022 = vadd.f32 %v1660, %v1946
      %v2023 = vadd.f32 %v1661, %v1951
      %v2024 = vadd.f32 %v1662, %v1954
      %v2025 = vadd.f32 %v1663, %v1959
      %v2026 = vadd.f32 %v1664, %v1962
      %v2027 = vadd.f32 %v1665, %v1967
      %v2028 = vadd.f32 %v1666, %v1970
      %v2029 = vadd.f32 %v1667, %v1975
      %v2030 = vadd.f32 %v1668, %v1978
      %v2031 = vadd.f32 %v1669, %v1983
      %v2032 = vadd.f32 %v1670, %v1986
      %v2033 = vadd.f32 %v1671, %v1991
      %v2034 = vadd.f32 %v1672, %v1994
      %v2035 = vadd.f32 %v1673, %v1999
      %v2036 = vadd.f32 %v1674, %v2002
      %v2037 = vld [vmem:[%s1678] sm:$0xf]
      %v2038 = vld [vmem:[%s1678 + $0x4] sm:$0xf]
      %v2039 = vld [vmem:[%s1678 + $0x8] sm:$0x1]
      %v2040 = vld [vmem:[%s1678 + $0xc] sm:$0xf]
      %v2041 = vld [vmem:[%s1678 + $0x10] sm:$0xf]
      %v2042 = vld [vmem:[%s1678 + $0x14] sm:$0x1]
      %v2043 = vld [vmem:[%s1678 + $0x18] sm:$0xf]
      %v2044 = vld [vmem:[%s1678 + $0x1c] sm:$0xf]
      %v2045 = vld [vmem:[%s1678 + $0x20] sm:$0x1]
      %v2046 = vld [vmem:[%s1678 + $0x24] sm:$0xf]
      %v2047 = vld [vmem:[%s1678 + $0x28] sm:$0xf]
      %v2048 = vld [vmem:[%s1678 + $0x2c] sm:$0x1]
      %v2049 = vld [vmem:[%s1678 + $0x30] sm:$0xf]
      %v2050 = vld [vmem:[%s1678 + $0x34] sm:$0xf]
      %v2051 = vld [vmem:[%s1678 + $0x38] sm:$0x1]
      %v2052 = vld [vmem:[%s1678 + $0x3c] sm:$0xf]
      %v2053 = vld [vmem:[%s1678 + $0x40] sm:$0xf]
      %v2054 = vld [vmem:[%s1678 + $0x44] sm:$0x1]
      %v2055 = vld [vmem:[%s1678 + $0x48] sm:$0xf]
      %v2056 = vld [vmem:[%s1678 + $0x4c] sm:$0xf]
      %v2057 = vld [vmem:[%s1678 + $0x50] sm:$0x1]
      %v2058 = vld [vmem:[%s1678 + $0x54] sm:$0xf]
      %v2059 = vld [vmem:[%s1678 + $0x58] sm:$0xf]
      %v2060 = vld [vmem:[%s1678 + $0x5c] sm:$0x1]
      %v2061 = vld [vmem:[%s1678 + $0x60] sm:$0xf]
      %v2062 = vld [vmem:[%s1678 + $0x64] sm:$0xf]
      %v2063 = vld [vmem:[%s1678 + $0x68] sm:$0x1]
      %v2064 = vld [vmem:[%s1678 + $0x6c] sm:$0xf]
      %v2065 = vld [vmem:[%s1678 + $0x70] sm:$0xf]
      %v2066 = vld [vmem:[%s1678 + $0x74] sm:$0x1]
      %v2067 = vld [vmem:[%s1678 + $0x78] sm:$0xf]
      %v2068 = vld [vmem:[%s1678 + $0x7c] sm:$0xf]
      %v2069 = vld [vmem:[%s1678 + $0x80] sm:$0x1]
      %v2070 = vld [vmem:[%s1678 + $0x84] sm:$0xf]
      %v2071 = vld [vmem:[%s1678 + $0x88] sm:$0xf]
      %v2072 = vld [vmem:[%s1678 + $0x8c] sm:$0x1]
      %v2073 = vld [vmem:[%s1678 + $0x90] sm:$0xf]
      %v2074 = vld [vmem:[%s1678 + $0x94] sm:$0xf]
      %v2075 = vld [vmem:[%s1678 + $0x98] sm:$0x1]
      %v2076 = vld [vmem:[%s1678 + $0x9c] sm:$0xf]
      %v2077 = vld [vmem:[%s1678 + $0xa0] sm:$0xf]
      %v2078 = vld [vmem:[%s1678 + $0xa4] sm:$0x1]
      %v2079 = vld [vmem:[%s1678 + $0xa8] sm:$0xf]
      %v2080 = vld [vmem:[%s1678 + $0xac] sm:$0xf]
      %v2081 = vld [vmem:[%s1678 + $0xb0] sm:$0x1]
      %v2082 = vld [vmem:[%s1678 + $0xb4] sm:$0xf]
      %v2083 = vld [vmem:[%s1678 + $0xb8] sm:$0xf]
      %v2084 = vld [vmem:[%s1678 + $0xbc] sm:$0x1]
      %v2086 = vshrl.u32 %v2037, 16
      %v2088 = vrot.slane %v2086, 4
      %v2089 = vshll.u32 %v2037, 16
      %v2091 = vrot.slane %v2089, 5
      %v2092 = vor.u32 %v2088, %v2091
      %v2093 = vrot.slane %v2092, 4
      %v2095 = vshll.u32 %v2038, 16
      %v2097 = vrot.slane %v2095, 5
      %v2098 = vsel %vm277, %v2093, %v2097
      %v2099 = vshrl.u32 %v2038, 16
      %v2101 = vrot.slane %v2099, 4
      %v2102 = vor.u32 %v2101, %v2097
      %v2103 = vrot.slane %v2102, 4
      %v2105 = vshll.u32 %v2039, 16
      %v2107 = vrot.slane %v2105, 5
      %v2108 = vsel %vm277, %v2103, %v2107
      %v2110 = vshrl.u32 %v2040, 16
      %v2112 = vrot.slane %v2110, 4
      %v2113 = vshll.u32 %v2040, 16
      %v2115 = vrot.slane %v2113, 5
      %v2116 = vor.u32 %v2112, %v2115
      %v2117 = vrot.slane %v2116, 4
      %v2119 = vshll.u32 %v2041, 16
      %v2121 = vrot.slane %v2119, 5
      %v2122 = vsel %vm277, %v2117, %v2121
      %v2123 = vshrl.u32 %v2041, 16
      %v2125 = vrot.slane %v2123, 4
      %v2126 = vor.u32 %v2125, %v2121
      %v2127 = vrot.slane %v2126, 4
      %v2129 = vshll.u32 %v2042, 16
      %v2131 = vrot.slane %v2129, 5
      %v2132 = vsel %vm277, %v2127, %v2131
      %v2134 = vshrl.u32 %v2043, 16
      %v2136 = vrot.slane %v2134, 4
      %v2137 = vshll.u32 %v2043, 16
      %v2139 = vrot.slane %v2137, 5
      %v2140 = vor.u32 %v2136, %v2139
      %v2141 = vrot.slane %v2140, 4
      %v2143 = vshll.u32 %v2044, 16
      %v2145 = vrot.slane %v2143, 5
      %v2146 = vsel %vm277, %v2141, %v2145
      %v2147 = vshrl.u32 %v2044, 16
      %v2149 = vrot.slane %v2147, 4
      %v2150 = vor.u32 %v2149, %v2145
      %v2151 = vrot.slane %v2150, 4
      %v2153 = vshll.u32 %v2045, 16
      %v2155 = vrot.slane %v2153, 5
      %v2156 = vsel %vm277, %v2151, %v2155
      %v2158 = vshrl.u32 %v2046, 16
      %v2160 = vrot.slane %v2158, 4
      %v2161 = vshll.u32 %v2046, 16
      %v2163 = vrot.slane %v2161, 5
      %v2164 = vor.u32 %v2160, %v2163
      %v2165 = vrot.slane %v2164, 4
      %v2167 = vshll.u32 %v2047, 16
      %v2169 = vrot.slane %v2167, 5
      %v2170 = vsel %vm277, %v2165, %v2169
      %v2171 = vshrl.u32 %v2047, 16
      %v2173 = vrot.slane %v2171, 4
      %v2174 = vor.u32 %v2173, %v2169
      %v2175 = vrot.slane %v2174, 4
      %v2177 = vshll.u32 %v2048, 16
      %v2179 = vrot.slane %v2177, 5
      %v2180 = vsel %vm277, %v2175, %v2179
      %v2182 = vshrl.u32 %v2049, 16
      %v2184 = vrot.slane %v2182, 4
      %v2185 = vshll.u32 %v2049, 16
      %v2187 = vrot.slane %v2185, 5
      %v2188 = vor.u32 %v2184, %v2187
      %v2189 = vrot.slane %v2188, 4
      %v2191 = vshll.u32 %v2050, 16
      %v2193 = vrot.slane %v2191, 5
      %v2194 = vsel %vm277, %v2189, %v2193
      %v2195 = vshrl.u32 %v2050, 16
      %v2197 = vrot.slane %v2195, 4
      %v2198 = vor.u32 %v2197, %v2193
      %v2199 = vrot.slane %v2198, 4
      %v2201 = vshll.u32 %v2051, 16
      %v2203 = vrot.slane %v2201, 5
      %v2204 = vsel %vm277, %v2199, %v2203
      %v2206 = vshrl.u32 %v2052, 16
      %v2208 = vrot.slane %v2206, 4
      %v2209 = vshll.u32 %v2052, 16
      %v2211 = vrot.slane %v2209, 5
      %v2212 = vor.u32 %v2208, %v2211
      %v2213 = vrot.slane %v2212, 4
      %v2215 = vshll.u32 %v2053, 16
      %v2217 = vrot.slane %v2215, 5
      %v2218 = vsel %vm277, %v2213, %v2217
      %v2219 = vshrl.u32 %v2053, 16
      %v2221 = vrot.slane %v2219, 4
      %v2222 = vor.u32 %v2221, %v2217
      %v2223 = vrot.slane %v2222, 4
      %v2225 = vshll.u32 %v2054, 16
      %v2227 = vrot.slane %v2225, 5
      %v2228 = vsel %vm277, %v2223, %v2227
      %v2230 = vshrl.u32 %v2055, 16
      %v2232 = vrot.slane %v2230, 4
      %v2233 = vshll.u32 %v2055, 16
      %v2235 = vrot.slane %v2233, 5
      %v2236 = vor.u32 %v2232, %v2235
      %v2237 = vrot.slane %v2236, 4
      %v2239 = vshll.u32 %v2056, 16
      %v2241 = vrot.slane %v2239, 5
      %v2242 = vsel %vm277, %v2237, %v2241
      %v2243 = vshrl.u32 %v2056, 16
      %v2245 = vrot.slane %v2243, 4
      %v2246 = vor.u32 %v2245, %v2241
      %v2247 = vrot.slane %v2246, 4
      %v2249 = vshll.u32 %v2057, 16
      %v2251 = vrot.slane %v2249, 5
      %v2252 = vsel %vm277, %v2247, %v2251
      %v2254 = vshrl.u32 %v2058, 16
      %v2256 = vrot.slane %v2254, 4
      %v2257 = vshll.u32 %v2058, 16
      %v2259 = vrot.slane %v2257, 5
      %v2260 = vor.u32 %v2256, %v2259
      %v2261 = vrot.slane %v2260, 4
      %v2263 = vshll.u32 %v2059, 16
      %v2265 = vrot.slane %v2263, 5
      %v2266 = vsel %vm277, %v2261, %v2265
      %v2267 = vshrl.u32 %v2059, 16
      %v2269 = vrot.slane %v2267, 4
      %v2270 = vor.u32 %v2269, %v2265
      %v2271 = vrot.slane %v2270, 4
      %v2273 = vshll.u32 %v2060, 16
      %v2275 = vrot.slane %v2273, 5
      %v2276 = vsel %vm277, %v2271, %v2275
      %v2278 = vshrl.u32 %v2061, 16
      %v2280 = vrot.slane %v2278, 4
      %v2281 = vshll.u32 %v2061, 16
      %v2283 = vrot.slane %v2281, 5
      %v2284 = vor.u32 %v2280, %v2283
      %v2285 = vrot.slane %v2284, 4
      %v2287 = vshll.u32 %v2062, 16
      %v2289 = vrot.slane %v2287, 5
      %v2290 = vsel %vm277, %v2285, %v2289
      %v2291 = vshrl.u32 %v2062, 16
      %v2293 = vrot.slane %v2291, 4
      %v2294 = vor.u32 %v2293, %v2289
      %v2295 = vrot.slane %v2294, 4
      %v2297 = vshll.u32 %v2063, 16
      %v2299 = vrot.slane %v2297, 5
      %v2300 = vsel %vm277, %v2295, %v2299
      %v2302 = vshrl.u32 %v2064, 16
      %v2304 = vrot.slane %v2302, 4
      %v2305 = vshll.u32 %v2064, 16
      %v2307 = vrot.slane %v2305, 5
      %v2308 = vor.u32 %v2304, %v2307
      %v2309 = vrot.slane %v2308, 4
      %v2311 = vshll.u32 %v2065, 16
      %v2313 = vrot.slane %v2311, 5
      %v2314 = vsel %vm277, %v2309, %v2313
      %v2315 = vshrl.u32 %v2065, 16
      %v2317 = vrot.slane %v2315, 4
      %v2318 = vor.u32 %v2317, %v2313
      %v2319 = vrot.slane %v2318, 4
      %v2321 = vshll.u32 %v2066, 16
      %v2323 = vrot.slane %v2321, 5
      %v2324 = vsel %vm277, %v2319, %v2323
      %v2326 = vshrl.u32 %v2067, 16
      %v2328 = vrot.slane %v2326, 4
      %v2329 = vshll.u32 %v2067, 16
      %v2331 = vrot.slane %v2329, 5
      %v2332 = vor.u32 %v2328, %v2331
      %v2333 = vrot.slane %v2332, 4
      %v2335 = vshll.u32 %v2068, 16
      %v2337 = vrot.slane %v2335, 5
      %v2338 = vsel %vm277, %v2333, %v2337
      %v2339 = vshrl.u32 %v2068, 16
      %v2341 = vrot.slane %v2339, 4
      %v2342 = vor.u32 %v2341, %v2337
      %v2343 = vrot.slane %v2342, 4
      %v2345 = vshll.u32 %v2069, 16
      %v2347 = vrot.slane %v2345, 5
      %v2348 = vsel %vm277, %v2343, %v2347
      %v2350 = vshrl.u32 %v2070, 16
      %v2352 = vrot.slane %v2350, 4
      %v2353 = vshll.u32 %v2070, 16
      %v2355 = vrot.slane %v2353, 5
      %v2356 = vor.u32 %v2352, %v2355
      %v2357 = vrot.slane %v2356, 4
      %v2359 = vshll.u32 %v2071, 16
      %v2361 = vrot.slane %v2359, 5
      %v2362 = vsel %vm277, %v2357, %v2361
      %v2363 = vshrl.u32 %v2071, 16
      %v2365 = vrot.slane %v2363, 4
      %v2366 = vor.u32 %v2365, %v2361
      %v2367 = vrot.slane %v2366, 4
      %v2369 = vshll.u32 %v2072, 16
      %v2371 = vrot.slane %v2369, 5
      %v2372 = vsel %vm277, %v2367, %v2371
      %v2374 = vshrl.u32 %v2073, 16
      %v2376 = vrot.slane %v2374, 4
      %v2377 = vshll.u32 %v2073, 16
      %v2379 = vrot.slane %v2377, 5
      %v2380 = vor.u32 %v2376, %v2379
      %v2381 = vrot.slane %v2380, 4
      %v2383 = vshll.u32 %v2074, 16
      %v2385 = vrot.slane %v2383, 5
      %v2386 = vsel %vm277, %v2381, %v2385
      %v2387 = vshrl.u32 %v2074, 16
      %v2389 = vrot.slane %v2387, 4
      %v2390 = vor.u32 %v2389, %v2385
      %v2391 = vrot.slane %v2390, 4
      %v2393 = vshll.u32 %v2075, 16
      %v2395 = vrot.slane %v2393, 5
      %v2396 = vsel %vm277, %v2391, %v2395
      %v2398 = vshrl.u32 %v2076, 16
      %v2400 = vrot.slane %v2398, 4
      %v2401 = vshll.u32 %v2076, 16
      %v2403 = vrot.slane %v2401, 5
      %v2404 = vor.u32 %v2400, %v2403
      %v2405 = vrot.slane %v2404, 4
      %v2407 = vshll.u32 %v2077, 16
      %v2409 = vrot.slane %v2407, 5
      %v2410 = vsel %vm277, %v2405, %v2409
      %v2411 = vshrl.u32 %v2077, 16
      %v2413 = vrot.slane %v2411, 4
      %v2414 = vor.u32 %v2413, %v2409
      %v2415 = vrot.slane %v2414, 4
      %v2417 = vshll.u32 %v2078, 16
      %v2419 = vrot.slane %v2417, 5
      %v2420 = vsel %vm277, %v2415, %v2419
      %v2422 = vshrl.u32 %v2079, 16
      %v2424 = vrot.slane %v2422, 4
      %v2425 = vshll.u32 %v2079, 16
      %v2427 = vrot.slane %v2425, 5
      %v2428 = vor.u32 %v2424, %v2427
      %v2429 = vrot.slane %v2428, 4
      %v2431 = vshll.u32 %v2080, 16
      %v2433 = vrot.slane %v2431, 5
      %v2434 = vsel %vm277, %v2429, %v2433
      %v2435 = vshrl.u32 %v2080, 16
      %v2437 = vrot.slane %v2435, 4
      %v2438 = vor.u32 %v2437, %v2433
      %v2439 = vrot.slane %v2438, 4
      %v2441 = vshll.u32 %v2081, 16
      %v2443 = vrot.slane %v2441, 5
      %v2444 = vsel %vm277, %v2439, %v2443
      %v2446 = vshrl.u32 %v2082, 16
      %v2448 = vrot.slane %v2446, 4
      %v2449 = vshll.u32 %v2082, 16
      %v2451 = vrot.slane %v2449, 5
      %v2452 = vor.u32 %v2448, %v2451
      %v2453 = vrot.slane %v2452, 4
      %v2455 = vshll.u32 %v2083, 16
      %v2457 = vrot.slane %v2455, 5
      %v2458 = vsel %vm277, %v2453, %v2457
      %v2459 = vshrl.u32 %v2083, 16
      %v2461 = vrot.slane %v2459, 4
      %v2462 = vor.u32 %v2461, %v2457
      %v2463 = vrot.slane %v2462, 4
      %v2465 = vshll.u32 %v2084, 16
      %v2467 = vrot.slane %v2465, 5
      %v2468 = vsel %vm277, %v2463, %v2467
      %s2469 = scalar_lea.vmem %s1, 8
      %v2470 = vld [vmem:[%s2469] sm:$0x3]
      %v2471 = vunpack.c.l.b16 %v2098
      %v2472 = vunpack.c.l.b16 %v2108
      %v2473 = vunpack.c.l.b16 %v2122
      %v2474 = vunpack.c.l.b16 %v2132
      %v2475 = vunpack.c.l.b16 %v2146
      %v2476 = vunpack.c.l.b16 %v2156
      %v2477 = vunpack.c.l.b16 %v2170
      %v2478 = vunpack.c.l.b16 %v2180
      %v2479 = vunpack.c.l.b16 %v2194
      %v2480 = vunpack.c.l.b16 %v2204
      %v2481 = vunpack.c.l.b16 %v2218
      %v2482 = vunpack.c.l.b16 %v2228
      %v2483 = vunpack.c.l.b16 %v2242
      %v2484 = vunpack.c.l.b16 %v2252
      %v2485 = vunpack.c.l.b16 %v2266
      %v2486 = vunpack.c.l.b16 %v2276
      %v2487 = vunpack.c.l.b16 %v2290
      %v2488 = vunpack.c.l.b16 %v2300
      %v2489 = vunpack.c.l.b16 %v2314
      %v2490 = vunpack.c.l.b16 %v2324
      %v2491 = vunpack.c.l.b16 %v2338
      %v2492 = vunpack.c.l.b16 %v2348
      %v2493 = vunpack.c.l.b16 %v2362
      %v2494 = vunpack.c.l.b16 %v2372
      %v2495 = vunpack.c.l.b16 %v2386
      %v2496 = vunpack.c.l.b16 %v2396
      %v2497 = vunpack.c.l.b16 %v2410
      %v2498 = vunpack.c.l.b16 %v2420
      %v2499 = vunpack.c.l.b16 %v2434
      %v2500 = vunpack.c.l.b16 %v2444
      %v2501 = vunpack.c.l.b16 %v2458
      %v2502 = vunpack.c.l.b16 %v2468
      %v2503 = vpack.c.b16 %v2472, %v2471
      %v2504 = vpack.c.b16 %v2474, %v2473
      %v2505 = vpack.c.b16 %v2476, %v2475
      %v2506 = vpack.c.b16 %v2478, %v2477
      %v2507 = vpack.c.b16 %v2480, %v2479
      %v2508 = vpack.c.b16 %v2482, %v2481
      %v2509 = vpack.c.b16 %v2484, %v2483
      %v2510 = vpack.c.b16 %v2486, %v2485
      %v2511 = vpack.c.b16 %v2488, %v2487
      %v2512 = vpack.c.b16 %v2490, %v2489
      %v2513 = vpack.c.b16 %v2492, %v2491
      %v2514 = vpack.c.b16 %v2494, %v2493
      %v2515 = vpack.c.b16 %v2496, %v2495
      %v2516 = vpack.c.b16 %v2498, %v2497
      %v2517 = vpack.c.b16 %v2500, %v2499
      %v2518 = vpack.c.b16 %v2502, %v2501
      %v2520 = vsel %vm712, %v2503, 0
      %v2523 = vsel %vm712, %v2504, 0
      %v2526 = vsel %vm712, %v2505, 0
      %v2529 = vsel %vm712, %v2506, 0
      %v2532 = vsel %vm712, %v2507, 0
      %v2535 = vsel %vm712, %v2508, 0
      %v2538 = vsel %vm712, %v2509, 0
      %v2541 = vsel %vm712, %v2510, 0
      %v2544 = vsel %vm712, %v2511, 0
      %v2547 = vsel %vm712, %v2512, 0
      %v2550 = vsel %vm712, %v2513, 0
      %v2553 = vsel %vm712, %v2514, 0
      %v2556 = vsel %vm712, %v2515, 0
      %v2559 = vsel %vm712, %v2516, 0
      %v2562 = vsel %vm712, %v2517, 0
      %v2565 = vsel %vm712, %v2518, 0
      %v2568 = vsel %vm761, %v2470, 0
      %2570 = vmatprep.subr.bf16.mxu0 0
      %2571 = vmatpush1.bf16.msra.mxu0 0
      %2572 = vmatprep.subr.bf16.mxu0 0
      %2573 = vmatpush1.bf16.msra.mxu0 0
      %2574 = vmatprep.subr.bf16.mxu0 0
      %2575 = vmatpush1.bf16.msra.mxu0 0
      %2576 = vmatprep.subr.bf16.mxu0 0
      %2577 = vmatpush1.bf16.msra.mxu0 0
      %2578 = vmatprep.subr.bf16.mxu0 0
      %2579 = vmatpush1.bf16.msra.mxu0 0
      %2580 = vmatprep.subr.bf16.mxu0 0
      %2581 = vmatpush1.bf16.msra.mxu0 0
      %2582 = vmatprep.subr.bf16.mxu0 0
      %2583 = vmatpush1.bf16.msra.mxu0 0
      %2584 = vmatprep.subr.bf16.mxu0 0
      %2585 = vmatpush1.bf16.msra.mxu0 %v2568
      %2586 = vmatprep.subr.bf16.mxu0 0
      %2587 = vmatpush2.bf16.msra.mxu0 0
      %2588 = vmatprep.subr.bf16.mxu0 0
      %2589 = vmatpush2.bf16.msra.mxu0 0
      %2590 = vmatprep.subr.bf16.mxu0 0
      %2591 = vmatpush2.bf16.msra.mxu0 0
      %2592 = vmatprep.subr.bf16.mxu0 0
      %2593 = vmatpush2.bf16.msra.mxu0 0
      %2594 = vmatprep.subr.bf16.mxu0 0
      %2595 = vmatpush2.bf16.msra.mxu0 0
      %2596 = vmatprep.subr.bf16.mxu0 0
      %2597 = vmatpush2.bf16.msra.mxu0 0
      %2598 = vmatprep.subr.bf16.mxu0 0
      %2599 = vmatpush2.bf16.msra.mxu0 0
      %2600 = vmatprep.subr.bf16.mxu0 0
      %2601 = vmatpush2.bf16.msra.mxu0 0
      %2602 = vmatprep.mubr.bf16.mxu0 0
      %2603 = vmatmul.mubr.bf16.gmra.mxu0 %v2520
      %v2604 = vpop.f32.mrf.mxu0
      %v2605 = vadd.f32 0.0, %v2604
      %v2606 = vpop.f32.mrf.mxu0
      %v2607 = vpop.f32.mrf.mxu0
      %v2608 = vadd.f32 0.0, %v2607
      %v2609 = vpop.f32.mrf.mxu0
      %2610 = vmatprep.mubr.bf16.mxu0 0
      %2611 = vmatmul.mubr.bf16.gmra.mxu0 %v2523
      %v2612 = vpop.f32.mrf.mxu0
      %v2613 = vadd.f32 0.0, %v2612
      %v2614 = vpop.f32.mrf.mxu0
      %v2615 = vpop.f32.mrf.mxu0
      %v2616 = vadd.f32 0.0, %v2615
      %v2617 = vpop.f32.mrf.mxu0
      %2618 = vmatprep.mubr.bf16.mxu0 0
      %2619 = vmatmul.mubr.bf16.gmra.mxu0 %v2526
      %v2620 = vpop.f32.mrf.mxu0
      %v2621 = vadd.f32 0.0, %v2620
      %v2622 = vpop.f32.mrf.mxu0
      %v2623 = vpop.f32.mrf.mxu0
      %v2624 = vadd.f32 0.0, %v2623
      %v2625 = vpop.f32.mrf.mxu0
      %2626 = vmatprep.mubr.bf16.mxu0 0
      %2627 = vmatmul.mubr.bf16.gmra.mxu0 %v2529
      %v2628 = vpop.f32.mrf.mxu0
      %v2629 = vadd.f32 0.0, %v2628
      %v2630 = vpop.f32.mrf.mxu0
      %v2631 = vpop.f32.mrf.mxu0
      %v2632 = vadd.f32 0.0, %v2631
      %v2633 = vpop.f32.mrf.mxu0
      %2634 = vmatprep.mubr.bf16.mxu0 0
      %2635 = vmatmul.mubr.bf16.gmra.mxu0 %v2532
      %v2636 = vpop.f32.mrf.mxu0
      %v2637 = vadd.f32 0.0, %v2636
      %v2638 = vpop.f32.mrf.mxu0
      %v2639 = vpop.f32.mrf.mxu0
      %v2640 = vadd.f32 0.0, %v2639
      %v2641 = vpop.f32.mrf.mxu0
      %2642 = vmatprep.mubr.bf16.mxu0 0
      %2643 = vmatmul.mubr.bf16.gmra.mxu0 %v2535
      %v2644 = vpop.f32.mrf.mxu0
      %v2645 = vadd.f32 0.0, %v2644
      %v2646 = vpop.f32.mrf.mxu0
      %v2647 = vpop.f32.mrf.mxu0
      %v2648 = vadd.f32 0.0, %v2647
      %v2649 = vpop.f32.mrf.mxu0
      %2650 = vmatprep.mubr.bf16.mxu0 0
      %2651 = vmatmul.mubr.bf16.gmra.mxu0 %v2538
      %v2652 = vpop.f32.mrf.mxu0
      %v2653 = vadd.f32 0.0, %v2652
      %v2654 = vpop.f32.mrf.mxu0
      %v2655 = vpop.f32.mrf.mxu0
      %v2656 = vadd.f32 0.0, %v2655
      %v2657 = vpop.f32.mrf.mxu0
      %2658 = vmatprep.mubr.bf16.mxu0 0
      %2659 = vmatmul.mubr.bf16.gmra.mxu0 %v2541
      %v2660 = vpop.f32.mrf.mxu0
      %v2661 = vadd.f32 0.0, %v2660
      %v2662 = vpop.f32.mrf.mxu0
      %v2663 = vpop.f32.mrf.mxu0
      %v2664 = vadd.f32 0.0, %v2663
      %v2665 = vpop.f32.mrf.mxu0
      %2666 = vmatprep.mubr.bf16.mxu0 0
      %2667 = vmatmul.mubr.bf16.gmra.mxu0 %v2544
      %v2668 = vpop.f32.mrf.mxu0
      %v2669 = vadd.f32 0.0, %v2668
      %v2670 = vpop.f32.mrf.mxu0
      %v2671 = vpop.f32.mrf.mxu0
      %v2672 = vadd.f32 0.0, %v2671
      %v2673 = vpop.f32.mrf.mxu0
      %2674 = vmatprep.mubr.bf16.mxu0 0
      %2675 = vmatmul.mubr.bf16.gmra.mxu0 %v2547
      %v2676 = vpop.f32.mrf.mxu0
      %v2677 = vadd.f32 0.0, %v2676
      %v2678 = vpop.f32.mrf.mxu0
      %v2679 = vpop.f32.mrf.mxu0
      %v2680 = vadd.f32 0.0, %v2679
      %v2681 = vpop.f32.mrf.mxu0
      %2682 = vmatprep.mubr.bf16.mxu0 0
      %2683 = vmatmul.mubr.bf16.gmra.mxu0 %v2550
      %v2684 = vpop.f32.mrf.mxu0
      %v2685 = vadd.f32 0.0, %v2684
      %v2686 = vpop.f32.mrf.mxu0
      %v2687 = vpop.f32.mrf.mxu0
      %v2688 = vadd.f32 0.0, %v2687
      %v2689 = vpop.f32.mrf.mxu0
      %2690 = vmatprep.mubr.bf16.mxu0 0
      %2691 = vmatmul.mubr.bf16.gmra.mxu0 %v2553
      %v2692 = vpop.f32.mrf.mxu0
      %v2693 = vadd.f32 0.0, %v2692
      %v2694 = vpop.f32.mrf.mxu0
      %v2695 = vpop.f32.mrf.mxu0
      %v2696 = vadd.f32 0.0, %v2695
      %v2697 = vpop.f32.mrf.mxu0
      %2698 = vmatprep.mubr.bf16.mxu0 0
      %2699 = vmatmul.mubr.bf16.gmra.mxu0 %v2556
      %v2700 = vpop.f32.mrf.mxu0
      %v2701 = vadd.f32 0.0, %v2700
      %v2702 = vpop.f32.mrf.mxu0
      %v2703 = vpop.f32.mrf.mxu0
      %v2704 = vadd.f32 0.0, %v2703
      %v2705 = vpop.f32.mrf.mxu0
      %2706 = vmatprep.mubr.bf16.mxu0 0
      %2707 = vmatmul.mubr.bf16.gmra.mxu0 %v2559
      %v2708 = vpop.f32.mrf.mxu0
      %v2709 = vadd.f32 0.0, %v2708
      %v2710 = vpop.f32.mrf.mxu0
      %v2711 = vpop.f32.mrf.mxu0
      %v2712 = vadd.f32 0.0, %v2711
      %v2713 = vpop.f32.mrf.mxu0
      %2714 = vmatprep.mubr.bf16.mxu0 0
      %2715 = vmatmul.mubr.bf16.gmra.mxu0 %v2562
      %v2716 = vpop.f32.mrf.mxu0
      %v2717 = vadd.f32 0.0, %v2716
      %v2718 = vpop.f32.mrf.mxu0
      %v2719 = vpop.f32.mrf.mxu0
      %v2720 = vadd.f32 0.0, %v2719
      %v2721 = vpop.f32.mrf.mxu0
      %2722 = vmatprep.mubr.bf16.mxu0 0
      %2723 = vmatmul.mubr.bf16.gmra.mxu0 %v2565
      %v2724 = vpop.f32.mrf.mxu0
      %v2725 = vadd.f32 0.0, %v2724
      %v2726 = vpop.f32.mrf.mxu0
      %v2727 = vpop.f32.mrf.mxu0
      %v2728 = vadd.f32 0.0, %v2727
      %v2729 = vpop.f32.mrf.mxu0
      %2730 = vdwg.mxu0
      %v2731 = vadd.f32 %v2005, %v2605
      %v2732 = vadd.f32 %v2006, %v2608
      %v2733 = vadd.f32 %v2007, %v2613
      %v2734 = vadd.f32 %v2008, %v2616
      %v2735 = vadd.f32 %v2009, %v2621
      %v2736 = vadd.f32 %v2010, %v2624
      %v2737 = vadd.f32 %v2011, %v2629
      %v2738 = vadd.f32 %v2012, %v2632
      %v2739 = vadd.f32 %v2013, %v2637
      %v2740 = vadd.f32 %v2014, %v2640
      %v2741 = vadd.f32 %v2015, %v2645
      %v2742 = vadd.f32 %v2016, %v2648
      %v2743 = vadd.f32 %v2017, %v2653
      %v2744 = vadd.f32 %v2018, %v2656
      %v2745 = vadd.f32 %v2019, %v2661
      %v2746 = vadd.f32 %v2020, %v2664
      %v2747 = vadd.f32 %v2021, %v2669
      %v2748 = vadd.f32 %v2022, %v2672
      %v2749 = vadd.f32 %v2023, %v2677
      %v2750 = vadd.f32 %v2024, %v2680
      %v2751 = vadd.f32 %v2025, %v2685
      %v2752 = vadd.f32 %v2026, %v2688
      %v2753 = vadd.f32 %v2027, %v2693
      %v2754 = vadd.f32 %v2028, %v2696
      %v2755 = vadd.f32 %v2029, %v2701
      %v2756 = vadd.f32 %v2030, %v2704
      %v2757 = vadd.f32 %v2031, %v2709
      %v2758 = vadd.f32 %v2032, %v2712
      %v2759 = vadd.f32 %v2033, %v2717
      %v2760 = vadd.f32 %v2034, %v2720
      %v2761 = vadd.f32 %v2035, %v2725
      %v2762 = vadd.f32 %v2036, %v2728
      %v2763 = vld [vmem:[%s1678] sm:$0xe]
      %v2764 = vld [vmem:[%s1678 + $0xc] sm:$0xe]
      %v2765 = vld [vmem:[%s1678 + $0x18] sm:$0xe]
      %v2766 = vld [vmem:[%s1678 + $0x24] sm:$0xe]
      %v2767 = vld [vmem:[%s1678 + $0x30] sm:$0xe]
      %v2768 = vld [vmem:[%s1678 + $0x3c] sm:$0xe]
      %v2769 = vld [vmem:[%s1678 + $0x48] sm:$0xe]
      %v2770 = vld [vmem:[%s1678 + $0x54] sm:$0xe]
      %v2771 = vld [vmem:[%s1678 + $0x60] sm:$0xe]
      %v2772 = vld [vmem:[%s1678 + $0x6c] sm:$0xe]
      %v2773 = vld [vmem:[%s1678 + $0x78] sm:$0xe]
      %v2774 = vld [vmem:[%s1678 + $0x84] sm:$0xe]
      %v2775 = vld [vmem:[%s1678 + $0x90] sm:$0xe]
      %v2776 = vld [vmem:[%s1678 + $0x9c] sm:$0xe]
      %v2777 = vld [vmem:[%s1678 + $0xa8] sm:$0xe]
      %v2778 = vld [vmem:[%s1678 + $0xb4] sm:$0xe]
      %v2827 = vrot.slane %v2763, 5
      %v2828 = vrot.slane %v2827, 4
      %v2829 = vrot.slane %v2038, 5
      %v2830 = vsel %vm1268, %v2828, %v2829
      %v2831 = vrot.slane %v2829, 4
      %v2832 = vrot.slane %v2039, 5
      %v2833 = vsel %vm1268, %v2831, %v2832
      %v2834 = vrot.slane %v2764, 5
      %v2835 = vrot.slane %v2834, 4
      %v2836 = vrot.slane %v2041, 5
      %v2837 = vsel %vm1268, %v2835, %v2836
      %v2838 = vrot.slane %v2836, 4
      %v2839 = vrot.slane %v2042, 5
      %v2840 = vsel %vm1268, %v2838, %v2839
      %v2841 = vrot.slane %v2765, 5
      %v2842 = vrot.slane %v2841, 4
      %v2843 = vrot.slane %v2044, 5
      %v2844 = vsel %vm1268, %v2842, %v2843
      %v2845 = vrot.slane %v2843, 4
      %v2846 = vrot.slane %v2045, 5
      %v2847 = vsel %vm1268, %v2845, %v2846
      %v2848 = vrot.slane %v2766, 5
      %v2849 = vrot.slane %v2848, 4
      %v2850 = vrot.slane %v2047, 5
      %v2851 = vsel %vm1268, %v2849, %v2850
      %v2852 = vrot.slane %v2850, 4
      %v2853 = vrot.slane %v2048, 5
      %v2854 = vsel %vm1268, %v2852, %v2853
      %v2855 = vrot.slane %v2767, 5
      %v2856 = vrot.slane %v2855, 4
      %v2857 = vrot.slane %v2050, 5
      %v2858 = vsel %vm1268, %v2856, %v2857
      %v2859 = vrot.slane %v2857, 4
      %v2860 = vrot.slane %v2051, 5
      %v2861 = vsel %vm1268, %v2859, %v2860
      %v2862 = vrot.slane %v2768, 5
      %v2863 = vrot.slane %v2862, 4
      %v2864 = vrot.slane %v2053, 5
      %v2865 = vsel %vm1268, %v2863, %v2864
      %v2866 = vrot.slane %v2864, 4
      %v2867 = vrot.slane %v2054, 5
      %v2868 = vsel %vm1268, %v2866, %v2867
      %v2869 = vrot.slane %v2769, 5
      %v2870 = vrot.slane %v2869, 4
      %v2871 = vrot.slane %v2056, 5
      %v2872 = vsel %vm1268, %v2870, %v2871
      %v2873 = vrot.slane %v2871, 4
      %v2874 = vrot.slane %v2057, 5
      %v2875 = vsel %vm1268, %v2873, %v2874
      %v2876 = vrot.slane %v2770, 5
      %v2877 = vrot.slane %v2876, 4
      %v2878 = vrot.slane %v2059, 5
      %v2879 = vsel %vm1268, %v2877, %v2878
      %v2880 = vrot.slane %v2878, 4
      %v2881 = vrot.slane %v2060, 5
      %v2882 = vsel %vm1268, %v2880, %v2881
      %v2883 = vrot.slane %v2771, 5
      %v2884 = vrot.slane %v2883, 4
      %v2885 = vrot.slane %v2062, 5
      %v2886 = vsel %vm1268, %v2884, %v2885
      %v2887 = vrot.slane %v2885, 4
      %v2888 = vrot.slane %v2063, 5
      %v2889 = vsel %vm1268, %v2887, %v2888
      %v2890 = vrot.slane %v2772, 5
      %v2891 = vrot.slane %v2890, 4
      %v2892 = vrot.slane %v2065, 5
      %v2893 = vsel %vm1268, %v2891, %v2892
      %v2894 = vrot.slane %v2892, 4
      %v2895 = vrot.slane %v2066, 5
      %v2896 = vsel %vm1268, %v2894, %v2895
      %v2897 = vrot.slane %v2773, 5
      %v2898 = vrot.slane %v2897, 4
      %v2899 = vrot.slane %v2068, 5
      %v2900 = vsel %vm1268, %v2898, %v2899
      %v2901 = vrot.slane %v2899, 4
      %v2902 = vrot.slane %v2069, 5
      %v2903 = vsel %vm1268, %v2901, %v2902
      %v2904 = vrot.slane %v2774, 5
      %v2905 = vrot.slane %v2904, 4
      %v2906 = vrot.slane %v2071, 5
      %v2907 = vsel %vm1268, %v2905, %v2906
      %v2908 = vrot.slane %v2906, 4
      %v2909 = vrot.slane %v2072, 5
      %v2910 = vsel %vm1268, %v2908, %v2909
      %v2911 = vrot.slane %v2775, 5
      %v2912 = vrot.slane %v2911, 4
      %v2913 = vrot.slane %v2074, 5
      %v2914 = vsel %vm1268, %v2912, %v2913
      %v2915 = vrot.slane %v2913, 4
      %v2916 = vrot.slane %v2075, 5
      %v2917 = vsel %vm1268, %v2915, %v2916
      %v2918 = vrot.slane %v2776, 5
      %v2919 = vrot.slane %v2918, 4
      %v2920 = vrot.slane %v2077, 5
      %v2921 = vsel %vm1268, %v2919, %v2920
      %v2922 = vrot.slane %v2920, 4
      %v2923 = vrot.slane %v2078, 5
      %v2924 = vsel %vm1268, %v2922, %v2923
      %v2925 = vrot.slane %v2777, 5
      %v2926 = vrot.slane %v2925, 4
      %v2927 = vrot.slane %v2080, 5
      %v2928 = vsel %vm1268, %v2926, %v2927
      %v2929 = vrot.slane %v2927, 4
      %v2930 = vrot.slane %v2081, 5
      %v2931 = vsel %vm1268, %v2929, %v2930
      %v2932 = vrot.slane %v2778, 5
      %v2933 = vrot.slane %v2932, 4
      %v2934 = vrot.slane %v2083, 5
      %v2935 = vsel %vm1268, %v2933, %v2934
      %v2936 = vrot.slane %v2934, 4
      %v2937 = vrot.slane %v2084, 5
      %v2938 = vsel %vm1268, %v2936, %v2937
      %s2939 = scalar_lea.vmem %s1, 10
      %v2940 = vld [vmem:[%s2939] sm:$0x3]
      %v2941 = vunpack.c.l.b16 %v2830
      %v2942 = vunpack.c.l.b16 %v2833
      %v2943 = vunpack.c.l.b16 %v2837
      %v2944 = vunpack.c.l.b16 %v2840
      %v2945 = vunpack.c.l.b16 %v2844
      %v2946 = vunpack.c.l.b16 %v2847
      %v2947 = vunpack.c.l.b16 %v2851
      %v2948 = vunpack.c.l.b16 %v2854
      %v2949 = vunpack.c.l.b16 %v2858
      %v2950 = vunpack.c.l.b16 %v2861
      %v2951 = vunpack.c.l.b16 %v2865
      %v2952 = vunpack.c.l.b16 %v2868
      %v2953 = vunpack.c.l.b16 %v2872
      %v2954 = vunpack.c.l.b16 %v2875
      %v2955 = vunpack.c.l.b16 %v2879
      %v2956 = vunpack.c.l.b16 %v2882
      %v2957 = vunpack.c.l.b16 %v2886
      %v2958 = vunpack.c.l.b16 %v2889
      %v2959 = vunpack.c.l.b16 %v2893
      %v2960 = vunpack.c.l.b16 %v2896
      %v2961 = vunpack.c.l.b16 %v2900
      %v2962 = vunpack.c.l.b16 %v2903
      %v2963 = vunpack.c.l.b16 %v2907
      %v2964 = vunpack.c.l.b16 %v2910
      %v2965 = vunpack.c.l.b16 %v2914
      %v2966 = vunpack.c.l.b16 %v2917
      %v2967 = vunpack.c.l.b16 %v2921
      %v2968 = vunpack.c.l.b16 %v2924
      %v2969 = vunpack.c.l.b16 %v2928
      %v2970 = vunpack.c.l.b16 %v2931
      %v2971 = vunpack.c.l.b16 %v2935
      %v2972 = vunpack.c.l.b16 %v2938
      %v2973 = vpack.c.b16 %v2942, %v2941
      %v2974 = vpack.c.b16 %v2944, %v2943
      %v2975 = vpack.c.b16 %v2946, %v2945
      %v2976 = vpack.c.b16 %v2948, %v2947
      %v2977 = vpack.c.b16 %v2950, %v2949
      %v2978 = vpack.c.b16 %v2952, %v2951
      %v2979 = vpack.c.b16 %v2954, %v2953
      %v2980 = vpack.c.b16 %v2956, %v2955
      %v2981 = vpack.c.b16 %v2958, %v2957
      %v2982 = vpack.c.b16 %v2960, %v2959
      %v2983 = vpack.c.b16 %v2962, %v2961
      %v2984 = vpack.c.b16 %v2964, %v2963
      %v2985 = vpack.c.b16 %v2966, %v2965
      %v2986 = vpack.c.b16 %v2968, %v2967
      %v2987 = vpack.c.b16 %v2970, %v2969
      %v2988 = vpack.c.b16 %v2972, %v2971
      %v2990 = vsel %vm712, %v2973, 0
      %v2993 = vsel %vm712, %v2974, 0
      %v2996 = vsel %vm712, %v2975, 0
      %v2999 = vsel %vm712, %v2976, 0
      %v3002 = vsel %vm712, %v2977, 0
      %v3005 = vsel %vm712, %v2978, 0
      %v3008 = vsel %vm712, %v2979, 0
      %v3011 = vsel %vm712, %v2980, 0
      %v3014 = vsel %vm712, %v2981, 0
      %v3017 = vsel %vm712, %v2982, 0
      %v3020 = vsel %vm712, %v2983, 0
      %v3023 = vsel %vm712, %v2984, 0
      %v3026 = vsel %vm712, %v2985, 0
      %v3029 = vsel %vm712, %v2986, 0
      %v3032 = vsel %vm712, %v2987, 0
      %v3035 = vsel %vm712, %v2988, 0
      %v3038 = vsel %vm761, %v2940, 0
      %3040 = vmatprep.subr.bf16.mxu0 0
      %3041 = vmatpush1.bf16.msra.mxu0 0
      %3042 = vmatprep.subr.bf16.mxu0 0
      %3043 = vmatpush1.bf16.msra.mxu0 0
      %3044 = vmatprep.subr.bf16.mxu0 0
      %3045 = vmatpush1.bf16.msra.mxu0 0
      %3046 = vmatprep.subr.bf16.mxu0 0
      %3047 = vmatpush1.bf16.msra.mxu0 0
      %3048 = vmatprep.subr.bf16.mxu0 0
      %3049 = vmatpush1.bf16.msra.mxu0 0
      %3050 = vmatprep.subr.bf16.mxu0 0
      %3051 = vmatpush1.bf16.msra.mxu0 0
      %3052 = vmatprep.subr.bf16.mxu0 0
      %3053 = vmatpush1.bf16.msra.mxu0 0
      %3054 = vmatprep.subr.bf16.mxu0 0
      %3055 = vmatpush1.bf16.msra.mxu0 %v3038
      %3056 = vmatprep.subr.bf16.mxu0 0
      %3057 = vmatpush2.bf16.msra.mxu0 0
      %3058 = vmatprep.subr.bf16.mxu0 0
      %3059 = vmatpush2.bf16.msra.mxu0 0
      %3060 = vmatprep.subr.bf16.mxu0 0
      %3061 = vmatpush2.bf16.msra.mxu0 0
      %3062 = vmatprep.subr.bf16.mxu0 0
      %3063 = vmatpush2.bf16.msra.mxu0 0
      %3064 = vmatprep.subr.bf16.mxu0 0
      %3065 = vmatpush2.bf16.msra.mxu0 0
      %3066 = vmatprep.subr.bf16.mxu0 0
      %3067 = vmatpush2.bf16.msra.mxu0 0
      %3068 = vmatprep.subr.bf16.mxu0 0
      %3069 = vmatpush2.bf16.msra.mxu0 0
      %3070 = vmatprep.subr.bf16.mxu0 0
      %3071 = vmatpush2.bf16.msra.mxu0 0
      %3072 = vmatprep.mubr.bf16.mxu0 0
      %3073 = vmatmul.mubr.bf16.gmra.mxu0 %v2990
      %v3074 = vpop.f32.mrf.mxu0
      %v3075 = vadd.f32 0.0, %v3074
      %v3076 = vpop.f32.mrf.mxu0
      %v3077 = vpop.f32.mrf.mxu0
      %v3078 = vadd.f32 0.0, %v3077
      %v3079 = vpop.f32.mrf.mxu0
      %3080 = vmatprep.mubr.bf16.mxu0 0
      %3081 = vmatmul.mubr.bf16.gmra.mxu0 %v2993
      %v3082 = vpop.f32.mrf.mxu0
      %v3083 = vadd.f32 0.0, %v3082
      %v3084 = vpop.f32.mrf.mxu0
      %v3085 = vpop.f32.mrf.mxu0
      %v3086 = vadd.f32 0.0, %v3085
      %v3087 = vpop.f32.mrf.mxu0
      %3088 = vmatprep.mubr.bf16.mxu0 0
      %3089 = vmatmul.mubr.bf16.gmra.mxu0 %v2996
      %v3090 = vpop.f32.mrf.mxu0
      %v3091 = vadd.f32 0.0, %v3090
      %v3092 = vpop.f32.mrf.mxu0
      %v3093 = vpop.f32.mrf.mxu0
      %v3094 = vadd.f32 0.0, %v3093
      %v3095 = vpop.f32.mrf.mxu0
      %3096 = vmatprep.mubr.bf16.mxu0 0
      %3097 = vmatmul.mubr.bf16.gmra.mxu0 %v2999
      %v3098 = vpop.f32.mrf.mxu0
      %v3099 = vadd.f32 0.0, %v3098
      %v3100 = vpop.f32.mrf.mxu0
      %v3101 = vpop.f32.mrf.mxu0
      %v3102 = vadd.f32 0.0, %v3101
      %v3103 = vpop.f32.mrf.mxu0
      %3104 = vmatprep.mubr.bf16.mxu0 0
      %3105 = vmatmul.mubr.bf16.gmra.mxu0 %v3002
      %v3106 = vpop.f32.mrf.mxu0
      %v3107 = vadd.f32 0.0, %v3106
      %v3108 = vpop.f32.mrf.mxu0
      %v3109 = vpop.f32.mrf.mxu0
      %v3110 = vadd.f32 0.0, %v3109
      %v3111 = vpop.f32.mrf.mxu0
      %3112 = vmatprep.mubr.bf16.mxu0 0
      %3113 = vmatmul.mubr.bf16.gmra.mxu0 %v3005
      %v3114 = vpop.f32.mrf.mxu0
      %v3115 = vadd.f32 0.0, %v3114
      %v3116 = vpop.f32.mrf.mxu0
      %v3117 = vpop.f32.mrf.mxu0
      %v3118 = vadd.f32 0.0, %v3117
      %v3119 = vpop.f32.mrf.mxu0
      %3120 = vmatprep.mubr.bf16.mxu0 0
      %3121 = vmatmul.mubr.bf16.gmra.mxu0 %v3008
      %v3122 = vpop.f32.mrf.mxu0
      %v3123 = vadd.f32 0.0, %v3122
      %v3124 = vpop.f32.mrf.mxu0
      %v3125 = vpop.f32.mrf.mxu0
      %v3126 = vadd.f32 0.0, %v3125
      %v3127 = vpop.f32.mrf.mxu0
      %3128 = vmatprep.mubr.bf16.mxu0 0
      %3129 = vmatmul.mubr.bf16.gmra.mxu0 %v3011
      %v3130 = vpop.f32.mrf.mxu0
      %v3131 = vadd.f32 0.0, %v3130
      %v3132 = vpop.f32.mrf.mxu0
      %v3133 = vpop.f32.mrf.mxu0
      %v3134 = vadd.f32 0.0, %v3133
      %v3135 = vpop.f32.mrf.mxu0
      %3136 = vmatprep.mubr.bf16.mxu0 0
      %3137 = vmatmul.mubr.bf16.gmra.mxu0 %v3014
      %v3138 = vpop.f32.mrf.mxu0
      %v3139 = vadd.f32 0.0, %v3138
      %v3140 = vpop.f32.mrf.mxu0
      %v3141 = vpop.f32.mrf.mxu0
      %v3142 = vadd.f32 0.0, %v3141
      %v3143 = vpop.f32.mrf.mxu0
      %3144 = vmatprep.mubr.bf16.mxu0 0
      %3145 = vmatmul.mubr.bf16.gmra.mxu0 %v3017
      %v3146 = vpop.f32.mrf.mxu0
      %v3147 = vadd.f32 0.0, %v3146
      %v3148 = vpop.f32.mrf.mxu0
      %v3149 = vpop.f32.mrf.mxu0
      %v3150 = vadd.f32 0.0, %v3149
      %v3151 = vpop.f32.mrf.mxu0
      %3152 = vmatprep.mubr.bf16.mxu0 0
      %3153 = vmatmul.mubr.bf16.gmra.mxu0 %v3020
      %v3154 = vpop.f32.mrf.mxu0
      %v3155 = vadd.f32 0.0, %v3154
      %v3156 = vpop.f32.mrf.mxu0
      %v3157 = vpop.f32.mrf.mxu0
      %v3158 = vadd.f32 0.0, %v3157
      %v3159 = vpop.f32.mrf.mxu0
      %3160 = vmatprep.mubr.bf16.mxu0 0
      %3161 = vmatmul.mubr.bf16.gmra.mxu0 %v3023
      %v3162 = vpop.f32.mrf.mxu0
      %v3163 = vadd.f32 0.0, %v3162
      %v3164 = vpop.f32.mrf.mxu0
      %v3165 = vpop.f32.mrf.mxu0
      %v3166 = vadd.f32 0.0, %v3165
      %v3167 = vpop.f32.mrf.mxu0
      %3168 = vmatprep.mubr.bf16.mxu0 0
      %3169 = vmatmul.mubr.bf16.gmra.mxu0 %v3026
      %v3170 = vpop.f32.mrf.mxu0
      %v3171 = vadd.f32 0.0, %v3170
      %v3172 = vpop.f32.mrf.mxu0
      %v3173 = vpop.f32.mrf.mxu0
      %v3174 = vadd.f32 0.0, %v3173
      %v3175 = vpop.f32.mrf.mxu0
      %3176 = vmatprep.mubr.bf16.mxu0 0
      %3177 = vmatmul.mubr.bf16.gmra.mxu0 %v3029
      %v3178 = vpop.f32.mrf.mxu0
      %v3179 = vadd.f32 0.0, %v3178
      %v3180 = vpop.f32.mrf.mxu0
      %v3181 = vpop.f32.mrf.mxu0
      %v3182 = vadd.f32 0.0, %v3181
      %v3183 = vpop.f32.mrf.mxu0
      %3184 = vmatprep.mubr.bf16.mxu0 0
      %3185 = vmatmul.mubr.bf16.gmra.mxu0 %v3032
      %v3186 = vpop.f32.mrf.mxu0
      %v3187 = vadd.f32 0.0, %v3186
      %v3188 = vpop.f32.mrf.mxu0
      %v3189 = vpop.f32.mrf.mxu0
      %v3190 = vadd.f32 0.0, %v3189
      %v3191 = vpop.f32.mrf.mxu0
      %3192 = vmatprep.mubr.bf16.mxu0 0
      %3193 = vmatmul.mubr.bf16.gmra.mxu0 %v3035
      %v3194 = vpop.f32.mrf.mxu0
      %v3195 = vadd.f32 0.0, %v3194
      %v3196 = vpop.f32.mrf.mxu0
      %v3197 = vpop.f32.mrf.mxu0
      %v3198 = vadd.f32 0.0, %v3197
      %v3199 = vpop.f32.mrf.mxu0
      %3200 = vdwg.mxu0
      %v3201 = vadd.f32 %v2731, %v3075
      %v3202 = vadd.f32 %v2732, %v3078
      %v3203 = vadd.f32 %v2733, %v3083
      %v3204 = vadd.f32 %v2734, %v3086
      %v3205 = vadd.f32 %v2735, %v3091
      %v3206 = vadd.f32 %v2736, %v3094
      %v3207 = vadd.f32 %v2737, %v3099
      %v3208 = vadd.f32 %v2738, %v3102
      %v3209 = vadd.f32 %v2739, %v3107
      %v3210 = vadd.f32 %v2740, %v3110
      %v3211 = vadd.f32 %v2741, %v3115
      %v3212 = vadd.f32 %v2742, %v3118
      %v3213 = vadd.f32 %v2743, %v3123
      %v3214 = vadd.f32 %v2744, %v3126
      %v3215 = vadd.f32 %v2745, %v3131
      %v3216 = vadd.f32 %v2746, %v3134
      %v3217 = vadd.f32 %v2747, %v3139
      %v3218 = vadd.f32 %v2748, %v3142
      %v3219 = vadd.f32 %v2749, %v3147
      %v3220 = vadd.f32 %v2750, %v3150
      %v3221 = vadd.f32 %v2751, %v3155
      %v3222 = vadd.f32 %v2752, %v3158
      %v3223 = vadd.f32 %v2753, %v3163
      %v3224 = vadd.f32 %v2754, %v3166
      %v3225 = vadd.f32 %v2755, %v3171
      %v3226 = vadd.f32 %v2756, %v3174
      %v3227 = vadd.f32 %v2757, %v3179
      %v3228 = vadd.f32 %v2758, %v3182
      %v3229 = vadd.f32 %v2759, %v3187
      %v3230 = vadd.f32 %v2760, %v3190
      %v3231 = vadd.f32 %v2761, %v3195
      %v3232 = vadd.f32 %v2762, %v3198
      %s3233 = sadd.s32 %s222, 2
      %s3234 = smul.u32 %s3233, 3
      %s3235 = smul.addr %s3234, 4
      %s3236 = scalar_lea.vmem %s210, %s3235
      %v3237 = vld [vmem:[%s3236] sm:$0xf]
      %v3238 = vld [vmem:[%s3236 + $0x4] sm:$0xf]
      %v3239 = vld [vmem:[%s3236 + $0xc] sm:$0xf]
      %v3240 = vld [vmem:[%s3236 + $0x10] sm:$0xf]
      %v3241 = vld [vmem:[%s3236 + $0x18] sm:$0xf]
      %v3242 = vld [vmem:[%s3236 + $0x1c] sm:$0xf]
      %v3243 = vld [vmem:[%s3236 + $0x24] sm:$0xf]
      %v3244 = vld [vmem:[%s3236 + $0x28] sm:$0xf]
      %v3245 = vld [vmem:[%s3236 + $0x30] sm:$0xf]
      %v3246 = vld [vmem:[%s3236 + $0x34] sm:$0xf]
      %v3247 = vld [vmem:[%s3236 + $0x3c] sm:$0xf]
      %v3248 = vld [vmem:[%s3236 + $0x40] sm:$0xf]
      %v3249 = vld [vmem:[%s3236 + $0x48] sm:$0xf]
      %v3250 = vld [vmem:[%s3236 + $0x4c] sm:$0xf]
      %v3251 = vld [vmem:[%s3236 + $0x54] sm:$0xf]
      %v3252 = vld [vmem:[%s3236 + $0x58] sm:$0xf]
      %v3253 = vld [vmem:[%s3236 + $0x60] sm:$0xf]
      %v3254 = vld [vmem:[%s3236 + $0x64] sm:$0xf]
      %v3255 = vld [vmem:[%s3236 + $0x6c] sm:$0xf]
      %v3256 = vld [vmem:[%s3236 + $0x70] sm:$0xf]
      %v3257 = vld [vmem:[%s3236 + $0x78] sm:$0xf]
      %v3258 = vld [vmem:[%s3236 + $0x7c] sm:$0xf]
      %v3259 = vld [vmem:[%s3236 + $0x84] sm:$0xf]
      %v3260 = vld [vmem:[%s3236 + $0x88] sm:$0xf]
      %v3261 = vld [vmem:[%s3236 + $0x90] sm:$0xf]
      %v3262 = vld [vmem:[%s3236 + $0x94] sm:$0xf]
      %v3263 = vld [vmem:[%s3236 + $0x9c] sm:$0xf]
      %v3264 = vld [vmem:[%s3236 + $0xa0] sm:$0xf]
      %v3265 = vld [vmem:[%s3236 + $0xa8] sm:$0xf]
      %v3266 = vld [vmem:[%s3236 + $0xac] sm:$0xf]
      %v3267 = vld [vmem:[%s3236 + $0xb4] sm:$0xf]
      %v3268 = vld [vmem:[%s3236 + $0xb8] sm:$0xf]
      %s3269 = scalar_lea.vmem %s1, 12
      %v3270 = vld [vmem:[%s3269] sm:$0x3]
      %v3303 = vunpack.c.l.b16 %v3237
      %v3304 = vunpack.c.l.b16 %v3238
      %v3305 = vunpack.c.l.b16 %v3239
      %v3306 = vunpack.c.l.b16 %v3240
      %v3307 = vunpack.c.l.b16 %v3241
      %v3308 = vunpack.c.l.b16 %v3242
      %v3309 = vunpack.c.l.b16 %v3243
      %v3310 = vunpack.c.l.b16 %v3244
      %v3311 = vunpack.c.l.b16 %v3245
      %v3312 = vunpack.c.l.b16 %v3246
      %v3313 = vunpack.c.l.b16 %v3247
      %v3314 = vunpack.c.l.b16 %v3248
      %v3315 = vunpack.c.l.b16 %v3249
      %v3316 = vunpack.c.l.b16 %v3250
      %v3317 = vunpack.c.l.b16 %v3251
      %v3318 = vunpack.c.l.b16 %v3252
      %v3319 = vunpack.c.l.b16 %v3253
      %v3320 = vunpack.c.l.b16 %v3254
      %v3321 = vunpack.c.l.b16 %v3255
      %v3322 = vunpack.c.l.b16 %v3256
      %v3323 = vunpack.c.l.b16 %v3257
      %v3324 = vunpack.c.l.b16 %v3258
      %v3325 = vunpack.c.l.b16 %v3259
      %v3326 = vunpack.c.l.b16 %v3260
      %v3327 = vunpack.c.l.b16 %v3261
      %v3328 = vunpack.c.l.b16 %v3262
      %v3329 = vunpack.c.l.b16 %v3263
      %v3330 = vunpack.c.l.b16 %v3264
      %v3331 = vunpack.c.l.b16 %v3265
      %v3332 = vunpack.c.l.b16 %v3266
      %v3333 = vunpack.c.l.b16 %v3267
      %v3334 = vunpack.c.l.b16 %v3268
      %v3335 = vpack.c.b16 %v3304, %v3303
      %v3336 = vpack.c.b16 %v3306, %v3305
      %v3337 = vpack.c.b16 %v3308, %v3307
      %v3338 = vpack.c.b16 %v3310, %v3309
      %v3339 = vpack.c.b16 %v3312, %v3311
      %v3340 = vpack.c.b16 %v3314, %v3313
      %v3341 = vpack.c.b16 %v3316, %v3315
      %v3342 = vpack.c.b16 %v3318, %v3317
      %v3343 = vpack.c.b16 %v3320, %v3319
      %v3344 = vpack.c.b16 %v3322, %v3321
      %v3345 = vpack.c.b16 %v3324, %v3323
      %v3346 = vpack.c.b16 %v3326, %v3325
      %v3347 = vpack.c.b16 %v3328, %v3327
      %v3348 = vpack.c.b16 %v3330, %v3329
      %v3349 = vpack.c.b16 %v3332, %v3331
      %v3350 = vpack.c.b16 %v3334, %v3333
      %v3352 = vsel %vm712, %v3335, 0
      %v3355 = vsel %vm712, %v3336, 0
      %v3358 = vsel %vm712, %v3337, 0
      %v3361 = vsel %vm712, %v3338, 0
      %v3364 = vsel %vm712, %v3339, 0
      %v3367 = vsel %vm712, %v3340, 0
      %v3370 = vsel %vm712, %v3341, 0
      %v3373 = vsel %vm712, %v3342, 0
      %v3376 = vsel %vm712, %v3343, 0
      %v3379 = vsel %vm712, %v3344, 0
      %v3382 = vsel %vm712, %v3345, 0
      %v3385 = vsel %vm712, %v3346, 0
      %v3388 = vsel %vm712, %v3347, 0
      %v3391 = vsel %vm712, %v3348, 0
      %v3394 = vsel %vm712, %v3349, 0
      %v3397 = vsel %vm712, %v3350, 0
      %v3400 = vsel %vm761, %v3270, 0
      %3402 = vmatprep.subr.bf16.mxu0 0
      %3403 = vmatpush1.bf16.msra.mxu0 0
      %3404 = vmatprep.subr.bf16.mxu0 0
      %3405 = vmatpush1.bf16.msra.mxu0 0
      %3406 = vmatprep.subr.bf16.mxu0 0
      %3407 = vmatpush1.bf16.msra.mxu0 0
      %3408 = vmatprep.subr.bf16.mxu0 0
      %3409 = vmatpush1.bf16.msra.mxu0 0
      %3410 = vmatprep.subr.bf16.mxu0 0
      %3411 = vmatpush1.bf16.msra.mxu0 0
      %3412 = vmatprep.subr.bf16.mxu0 0
      %3413 = vmatpush1.bf16.msra.mxu0 0
      %3414 = vmatprep.subr.bf16.mxu0 0
      %3415 = vmatpush1.bf16.msra.mxu0 0
      %3416 = vmatprep.subr.bf16.mxu0 0
      %3417 = vmatpush1.bf16.msra.mxu0 %v3400
      %3418 = vmatprep.subr.bf16.mxu0 0
      %3419 = vmatpush2.bf16.msra.mxu0 0
      %3420 = vmatprep.subr.bf16.mxu0 0
      %3421 = vmatpush2.bf16.msra.mxu0 0
      %3422 = vmatprep.subr.bf16.mxu0 0
      %3423 = vmatpush2.bf16.msra.mxu0 0
      %3424 = vmatprep.subr.bf16.mxu0 0
      %3425 = vmatpush2.bf16.msra.mxu0 0
      %3426 = vmatprep.subr.bf16.mxu0 0
      %3427 = vmatpush2.bf16.msra.mxu0 0
      %3428 = vmatprep.subr.bf16.mxu0 0
      %3429 = vmatpush2.bf16.msra.mxu0 0
      %3430 = vmatprep.subr.bf16.mxu0 0
      %3431 = vmatpush2.bf16.msra.mxu0 0
      %3432 = vmatprep.subr.bf16.mxu0 0
      %3433 = vmatpush2.bf16.msra.mxu0 0
      %3434 = vmatprep.mubr.bf16.mxu0 0
      %3435 = vmatmul.mubr.bf16.gmra.mxu0 %v3352
      %v3436 = vpop.f32.mrf.mxu0
      %v3437 = vadd.f32 0.0, %v3436
      %v3438 = vpop.f32.mrf.mxu0
      %v3439 = vpop.f32.mrf.mxu0
      %v3440 = vadd.f32 0.0, %v3439
      %v3441 = vpop.f32.mrf.mxu0
      %3442 = vmatprep.mubr.bf16.mxu0 0
      %3443 = vmatmul.mubr.bf16.gmra.mxu0 %v3355
      %v3444 = vpop.f32.mrf.mxu0
      %v3445 = vadd.f32 0.0, %v3444
      %v3446 = vpop.f32.mrf.mxu0
      %v3447 = vpop.f32.mrf.mxu0
      %v3448 = vadd.f32 0.0, %v3447
      %v3449 = vpop.f32.mrf.mxu0
      %3450 = vmatprep.mubr.bf16.mxu0 0
      %3451 = vmatmul.mubr.bf16.gmra.mxu0 %v3358
      %v3452 = vpop.f32.mrf.mxu0
      %v3453 = vadd.f32 0.0, %v3452
      %v3454 = vpop.f32.mrf.mxu0
      %v3455 = vpop.f32.mrf.mxu0
      %v3456 = vadd.f32 0.0, %v3455
      %v3457 = vpop.f32.mrf.mxu0
      %3458 = vmatprep.mubr.bf16.mxu0 0
      %3459 = vmatmul.mubr.bf16.gmra.mxu0 %v3361
      %v3460 = vpop.f32.mrf.mxu0
      %v3461 = vadd.f32 0.0, %v3460
      %v3462 = vpop.f32.mrf.mxu0
      %v3463 = vpop.f32.mrf.mxu0
      %v3464 = vadd.f32 0.0, %v3463
      %v3465 = vpop.f32.mrf.mxu0
      %3466 = vmatprep.mubr.bf16.mxu0 0
      %3467 = vmatmul.mubr.bf16.gmra.mxu0 %v3364
      %v3468 = vpop.f32.mrf.mxu0
      %v3469 = vadd.f32 0.0, %v3468
      %v3470 = vpop.f32.mrf.mxu0
      %v3471 = vpop.f32.mrf.mxu0
      %v3472 = vadd.f32 0.0, %v3471
      %v3473 = vpop.f32.mrf.mxu0
      %3474 = vmatprep.mubr.bf16.mxu0 0
      %3475 = vmatmul.mubr.bf16.gmra.mxu0 %v3367
      %v3476 = vpop.f32.mrf.mxu0
      %v3477 = vadd.f32 0.0, %v3476
      %v3478 = vpop.f32.mrf.mxu0
      %v3479 = vpop.f32.mrf.mxu0
      %v3480 = vadd.f32 0.0, %v3479
      %v3481 = vpop.f32.mrf.mxu0
      %3482 = vmatprep.mubr.bf16.mxu0 0
      %3483 = vmatmul.mubr.bf16.gmra.mxu0 %v3370
      %v3484 = vpop.f32.mrf.mxu0
      %v3485 = vadd.f32 0.0, %v3484
      %v3486 = vpop.f32.mrf.mxu0
      %v3487 = vpop.f32.mrf.mxu0
      %v3488 = vadd.f32 0.0, %v3487
      %v3489 = vpop.f32.mrf.mxu0
      %3490 = vmatprep.mubr.bf16.mxu0 0
      %3491 = vmatmul.mubr.bf16.gmra.mxu0 %v3373
      %v3492 = vpop.f32.mrf.mxu0
      %v3493 = vadd.f32 0.0, %v3492
      %v3494 = vpop.f32.mrf.mxu0
      %v3495 = vpop.f32.mrf.mxu0
      %v3496 = vadd.f32 0.0, %v3495
      %v3497 = vpop.f32.mrf.mxu0
      %3498 = vmatprep.mubr.bf16.mxu0 0
      %3499 = vmatmul.mubr.bf16.gmra.mxu0 %v3376
      %v3500 = vpop.f32.mrf.mxu0
      %v3501 = vadd.f32 0.0, %v3500
      %v3502 = vpop.f32.mrf.mxu0
      %v3503 = vpop.f32.mrf.mxu0
      %v3504 = vadd.f32 0.0, %v3503
      %v3505 = vpop.f32.mrf.mxu0
      %3506 = vmatprep.mubr.bf16.mxu0 0
      %3507 = vmatmul.mubr.bf16.gmra.mxu0 %v3379
      %v3508 = vpop.f32.mrf.mxu0
      %v3509 = vadd.f32 0.0, %v3508
      %v3510 = vpop.f32.mrf.mxu0
      %v3511 = vpop.f32.mrf.mxu0
      %v3512 = vadd.f32 0.0, %v3511
      %v3513 = vpop.f32.mrf.mxu0
      %3514 = vmatprep.mubr.bf16.mxu0 0
      %3515 = vmatmul.mubr.bf16.gmra.mxu0 %v3382
      %v3516 = vpop.f32.mrf.mxu0
      %v3517 = vadd.f32 0.0, %v3516
      %v3518 = vpop.f32.mrf.mxu0
      %v3519 = vpop.f32.mrf.mxu0
      %v3520 = vadd.f32 0.0, %v3519
      %v3521 = vpop.f32.mrf.mxu0
      %3522 = vmatprep.mubr.bf16.mxu0 0
      %3523 = vmatmul.mubr.bf16.gmra.mxu0 %v3385
      %v3524 = vpop.f32.mrf.mxu0
      %v3525 = vadd.f32 0.0, %v3524
      %v3526 = vpop.f32.mrf.mxu0
      %v3527 = vpop.f32.mrf.mxu0
      %v3528 = vadd.f32 0.0, %v3527
      %v3529 = vpop.f32.mrf.mxu0
      %3530 = vmatprep.mubr.bf16.mxu0 0
      %3531 = vmatmul.mubr.bf16.gmra.mxu0 %v3388
      %v3532 = vpop.f32.mrf.mxu0
      %v3533 = vadd.f32 0.0, %v3532
      %v3534 = vpop.f32.mrf.mxu0
      %v3535 = vpop.f32.mrf.mxu0
      %v3536 = vadd.f32 0.0, %v3535
      %v3537 = vpop.f32.mrf.mxu0
      %3538 = vmatprep.mubr.bf16.mxu0 0
      %3539 = vmatmul.mubr.bf16.gmra.mxu0 %v3391
      %v3540 = vpop.f32.mrf.mxu0
      %v3541 = vadd.f32 0.0, %v3540
      %v3542 = vpop.f32.mrf.mxu0
      %v3543 = vpop.f32.mrf.mxu0
      %v3544 = vadd.f32 0.0, %v3543
      %v3545 = vpop.f32.mrf.mxu0
      %3546 = vmatprep.mubr.bf16.mxu0 0
      %3547 = vmatmul.mubr.bf16.gmra.mxu0 %v3394
      %v3548 = vpop.f32.mrf.mxu0
      %v3549 = vadd.f32 0.0, %v3548
      %v3550 = vpop.f32.mrf.mxu0
      %v3551 = vpop.f32.mrf.mxu0
      %v3552 = vadd.f32 0.0, %v3551
      %v3553 = vpop.f32.mrf.mxu0
      %3554 = vmatprep.mubr.bf16.mxu0 0
      %3555 = vmatmul.mubr.bf16.gmra.mxu0 %v3397
      %v3556 = vpop.f32.mrf.mxu0
      %v3557 = vadd.f32 0.0, %v3556
      %v3558 = vpop.f32.mrf.mxu0
      %v3559 = vpop.f32.mrf.mxu0
      %v3560 = vadd.f32 0.0, %v3559
      %v3561 = vpop.f32.mrf.mxu0
      %3562 = vdwg.mxu0
      %v3563 = vadd.f32 %v3201, %v3437
      %v3564 = vadd.f32 %v3202, %v3440
      %v3565 = vadd.f32 %v3203, %v3445
      %v3566 = vadd.f32 %v3204, %v3448
      %v3567 = vadd.f32 %v3205, %v3453
      %v3568 = vadd.f32 %v3206, %v3456
      %v3569 = vadd.f32 %v3207, %v3461
      %v3570 = vadd.f32 %v3208, %v3464
      %v3571 = vadd.f32 %v3209, %v3469
      %v3572 = vadd.f32 %v3210, %v3472
      %v3573 = vadd.f32 %v3211, %v3477
      %v3574 = vadd.f32 %v3212, %v3480
      %v3575 = vadd.f32 %v3213, %v3485
      %v3576 = vadd.f32 %v3214, %v3488
      %v3577 = vadd.f32 %v3215, %v3493
      %v3578 = vadd.f32 %v3216, %v3496
      %v3579 = vadd.f32 %v3217, %v3501
      %v3580 = vadd.f32 %v3218, %v3504
      %v3581 = vadd.f32 %v3219, %v3509
      %v3582 = vadd.f32 %v3220, %v3512
      %v3583 = vadd.f32 %v3221, %v3517
      %v3584 = vadd.f32 %v3222, %v3520
      %v3585 = vadd.f32 %v3223, %v3525
      %v3586 = vadd.f32 %v3224, %v3528
      %v3587 = vadd.f32 %v3225, %v3533
      %v3588 = vadd.f32 %v3226, %v3536
      %v3589 = vadd.f32 %v3227, %v3541
      %v3590 = vadd.f32 %v3228, %v3544
      %v3591 = vadd.f32 %v3229, %v3549
      %v3592 = vadd.f32 %v3230, %v3552
      %v3593 = vadd.f32 %v3231, %v3557
      %v3594 = vadd.f32 %v3232, %v3560
      %v3595 = vld [vmem:[%s3236] sm:$0xf]
      %v3596 = vld [vmem:[%s3236 + $0x4] sm:$0xf]
      %v3597 = vld [vmem:[%s3236 + $0x8] sm:$0x1]
      %v3598 = vld [vmem:[%s3236 + $0xc] sm:$0xf]
      %v3599 = vld [vmem:[%s3236 + $0x10] sm:$0xf]
      %v3600 = vld [vmem:[%s3236 + $0x14] sm:$0x1]
      %v3601 = vld [vmem:[%s3236 + $0x18] sm:$0xf]
      %v3602 = vld [vmem:[%s3236 + $0x1c] sm:$0xf]
      %v3603 = vld [vmem:[%s3236 + $0x20] sm:$0x1]
      %v3604 = vld [vmem:[%s3236 + $0x24] sm:$0xf]
      %v3605 = vld [vmem:[%s3236 + $0x28] sm:$0xf]
      %v3606 = vld [vmem:[%s3236 + $0x2c] sm:$0x1]
      %v3607 = vld [vmem:[%s3236 + $0x30] sm:$0xf]
      %v3608 = vld [vmem:[%s3236 + $0x34] sm:$0xf]
      %v3609 = vld [vmem:[%s3236 + $0x38] sm:$0x1]
      %v3610 = vld [vmem:[%s3236 + $0x3c] sm:$0xf]
      %v3611 = vld [vmem:[%s3236 + $0x40] sm:$0xf]
      %v3612 = vld [vmem:[%s3236 + $0x44] sm:$0x1]
      %v3613 = vld [vmem:[%s3236 + $0x48] sm:$0xf]
      %v3614 = vld [vmem:[%s3236 + $0x4c] sm:$0xf]
      %v3615 = vld [vmem:[%s3236 + $0x50] sm:$0x1]
      %v3616 = vld [vmem:[%s3236 + $0x54] sm:$0xf]
      %v3617 = vld [vmem:[%s3236 + $0x58] sm:$0xf]
      %v3618 = vld [vmem:[%s3236 + $0x5c] sm:$0x1]
      %v3619 = vld [vmem:[%s3236 + $0x60] sm:$0xf]
      %v3620 = vld [vmem:[%s3236 + $0x64] sm:$0xf]
      %v3621 = vld [vmem:[%s3236 + $0x68] sm:$0x1]
      %v3622 = vld [vmem:[%s3236 + $0x6c] sm:$0xf]
      %v3623 = vld [vmem:[%s3236 + $0x70] sm:$0xf]
      %v3624 = vld [vmem:[%s3236 + $0x74] sm:$0x1]
      %v3625 = vld [vmem:[%s3236 + $0x78] sm:$0xf]
      %v3626 = vld [vmem:[%s3236 + $0x7c] sm:$0xf]
      %v3627 = vld [vmem:[%s3236 + $0x80] sm:$0x1]
      %v3628 = vld [vmem:[%s3236 + $0x84] sm:$0xf]
      %v3629 = vld [vmem:[%s3236 + $0x88] sm:$0xf]
      %v3630 = vld [vmem:[%s3236 + $0x8c] sm:$0x1]
      %v3631 = vld [vmem:[%s3236 + $0x90] sm:$0xf]
      %v3632 = vld [vmem:[%s3236 + $0x94] sm:$0xf]
      %v3633 = vld [vmem:[%s3236 + $0x98] sm:$0x1]
      %v3634 = vld [vmem:[%s3236 + $0x9c] sm:$0xf]
      %v3635 = vld [vmem:[%s3236 + $0xa0] sm:$0xf]
      %v3636 = vld [vmem:[%s3236 + $0xa4] sm:$0x1]
      %v3637 = vld [vmem:[%s3236 + $0xa8] sm:$0xf]
      %v3638 = vld [vmem:[%s3236 + $0xac] sm:$0xf]
      %v3639 = vld [vmem:[%s3236 + $0xb0] sm:$0x1]
      %v3640 = vld [vmem:[%s3236 + $0xb4] sm:$0xf]
      %v3641 = vld [vmem:[%s3236 + $0xb8] sm:$0xf]
      %v3642 = vld [vmem:[%s3236 + $0xbc] sm:$0x1]
      %v3644 = vshrl.u32 %v3595, 16
      %v3646 = vrot.slane %v3644, 4
      %v3647 = vshll.u32 %v3595, 16
      %v3649 = vrot.slane %v3647, 5
      %v3650 = vor.u32 %v3646, %v3649
      %v3651 = vrot.slane %v3650, 4
      %v3653 = vshll.u32 %v3596, 16
      %v3655 = vrot.slane %v3653, 5
      %v3656 = vsel %vm277, %v3651, %v3655
      %v3657 = vshrl.u32 %v3596, 16
      %v3659 = vrot.slane %v3657, 4
      %v3660 = vor.u32 %v3659, %v3655
      %v3661 = vrot.slane %v3660, 4
      %v3663 = vshll.u32 %v3597, 16
      %v3665 = vrot.slane %v3663, 5
      %v3666 = vsel %vm277, %v3661, %v3665
      %v3668 = vshrl.u32 %v3598, 16
      %v3670 = vrot.slane %v3668, 4
      %v3671 = vshll.u32 %v3598, 16
      %v3673 = vrot.slane %v3671, 5
      %v3674 = vor.u32 %v3670, %v3673
      %v3675 = vrot.slane %v3674, 4
      %v3677 = vshll.u32 %v3599, 16
      %v3679 = vrot.slane %v3677, 5
      %v3680 = vsel %vm277, %v3675, %v3679
      %v3681 = vshrl.u32 %v3599, 16
      %v3683 = vrot.slane %v3681, 4
      %v3684 = vor.u32 %v3683, %v3679
      %v3685 = vrot.slane %v3684, 4
      %v3687 = vshll.u32 %v3600, 16
      %v3689 = vrot.slane %v3687, 5
      %v3690 = vsel %vm277, %v3685, %v3689
      %v3692 = vshrl.u32 %v3601, 16
      %v3694 = vrot.slane %v3692, 4
      %v3695 = vshll.u32 %v3601, 16
      %v3697 = vrot.slane %v3695, 5
      %v3698 = vor.u32 %v3694, %v3697
      %v3699 = vrot.slane %v3698, 4
      %v3701 = vshll.u32 %v3602, 16
      %v3703 = vrot.slane %v3701, 5
      %v3704 = vsel %vm277, %v3699, %v3703
      %v3705 = vshrl.u32 %v3602, 16
      %v3707 = vrot.slane %v3705, 4
      %v3708 = vor.u32 %v3707, %v3703
      %v3709 = vrot.slane %v3708, 4
      %v3711 = vshll.u32 %v3603, 16
      %v3713 = vrot.slane %v3711, 5
      %v3714 = vsel %vm277, %v3709, %v3713
      %v3716 = vshrl.u32 %v3604, 16
      %v3718 = vrot.slane %v3716, 4
      %v3719 = vshll.u32 %v3604, 16
      %v3721 = vrot.slane %v3719, 5
      %v3722 = vor.u32 %v3718, %v3721
      %v3723 = vrot.slane %v3722, 4
      %v3725 = vshll.u32 %v3605, 16
      %v3727 = vrot.slane %v3725, 5
      %v3728 = vsel %vm277, %v3723, %v3727
      %v3729 = vshrl.u32 %v3605, 16
      %v3731 = vrot.slane %v3729, 4
      %v3732 = vor.u32 %v3731, %v3727
      %v3733 = vrot.slane %v3732, 4
      %v3735 = vshll.u32 %v3606, 16
      %v3737 = vrot.slane %v3735, 5
      %v3738 = vsel %vm277, %v3733, %v3737
      %v3740 = vshrl.u32 %v3607, 16
      %v3742 = vrot.slane %v3740, 4
      %v3743 = vshll.u32 %v3607, 16
      %v3745 = vrot.slane %v3743, 5
      %v3746 = vor.u32 %v3742, %v3745
      %v3747 = vrot.slane %v3746, 4
      %v3749 = vshll.u32 %v3608, 16
      %v3751 = vrot.slane %v3749, 5
      %v3752 = vsel %vm277, %v3747, %v3751
      %v3753 = vshrl.u32 %v3608, 16
      %v3755 = vrot.slane %v3753, 4
      %v3756 = vor.u32 %v3755, %v3751
      %v3757 = vrot.slane %v3756, 4
      %v3759 = vshll.u32 %v3609, 16
      %v3761 = vrot.slane %v3759, 5
      %v3762 = vsel %vm277, %v3757, %v3761
      %v3764 = vshrl.u32 %v3610, 16
      %v3766 = vrot.slane %v3764, 4
      %v3767 = vshll.u32 %v3610, 16
      %v3769 = vrot.slane %v3767, 5
      %v3770 = vor.u32 %v3766, %v3769
      %v3771 = vrot.slane %v3770, 4
      %v3773 = vshll.u32 %v3611, 16
      %v3775 = vrot.slane %v3773, 5
      %v3776 = vsel %vm277, %v3771, %v3775
      %v3777 = vshrl.u32 %v3611, 16
      %v3779 = vrot.slane %v3777, 4
      %v3780 = vor.u32 %v3779, %v3775
      %v3781 = vrot.slane %v3780, 4
      %v3783 = vshll.u32 %v3612, 16
      %v3785 = vrot.slane %v3783, 5
      %v3786 = vsel %vm277, %v3781, %v3785
      %v3788 = vshrl.u32 %v3613, 16
      %v3790 = vrot.slane %v3788, 4
      %v3791 = vshll.u32 %v3613, 16
      %v3793 = vrot.slane %v3791, 5
      %v3794 = vor.u32 %v3790, %v3793
      %v3795 = vrot.slane %v3794, 4
      %v3797 = vshll.u32 %v3614, 16
      %v3799 = vrot.slane %v3797, 5
      %v3800 = vsel %vm277, %v3795, %v3799
      %v3801 = vshrl.u32 %v3614, 16
      %v3803 = vrot.slane %v3801, 4
      %v3804 = vor.u32 %v3803, %v3799
      %v3805 = vrot.slane %v3804, 4
      %v3807 = vshll.u32 %v3615, 16
      %v3809 = vrot.slane %v3807, 5
      %v3810 = vsel %vm277, %v3805, %v3809
      %v3812 = vshrl.u32 %v3616, 16
      %v3814 = vrot.slane %v3812, 4
      %v3815 = vshll.u32 %v3616, 16
      %v3817 = vrot.slane %v3815, 5
      %v3818 = vor.u32 %v3814, %v3817
      %v3819 = vrot.slane %v3818, 4
      %v3821 = vshll.u32 %v3617, 16
      %v3823 = vrot.slane %v3821, 5
      %v3824 = vsel %vm277, %v3819, %v3823
      %v3825 = vshrl.u32 %v3617, 16
      %v3827 = vrot.slane %v3825, 4
      %v3828 = vor.u32 %v3827, %v3823
      %v3829 = vrot.slane %v3828, 4
      %v3831 = vshll.u32 %v3618, 16
      %v3833 = vrot.slane %v3831, 5
      %v3834 = vsel %vm277, %v3829, %v3833
      %v3836 = vshrl.u32 %v3619, 16
      %v3838 = vrot.slane %v3836, 4
      %v3839 = vshll.u32 %v3619, 16
      %v3841 = vrot.slane %v3839, 5
      %v3842 = vor.u32 %v3838, %v3841
      %v3843 = vrot.slane %v3842, 4
      %v3845 = vshll.u32 %v3620, 16
      %v3847 = vrot.slane %v3845, 5
      %v3848 = vsel %vm277, %v3843, %v3847
      %v3849 = vshrl.u32 %v3620, 16
      %v3851 = vrot.slane %v3849, 4
      %v3852 = vor.u32 %v3851, %v3847
      %v3853 = vrot.slane %v3852, 4
      %v3855 = vshll.u32 %v3621, 16
      %v3857 = vrot.slane %v3855, 5
      %v3858 = vsel %vm277, %v3853, %v3857
      %v3860 = vshrl.u32 %v3622, 16
      %v3862 = vrot.slane %v3860, 4
      %v3863 = vshll.u32 %v3622, 16
      %v3865 = vrot.slane %v3863, 5
      %v3866 = vor.u32 %v3862, %v3865
      %v3867 = vrot.slane %v3866, 4
      %v3869 = vshll.u32 %v3623, 16
      %v3871 = vrot.slane %v3869, 5
      %v3872 = vsel %vm277, %v3867, %v3871
      %v3873 = vshrl.u32 %v3623, 16
      %v3875 = vrot.slane %v3873, 4
      %v3876 = vor.u32 %v3875, %v3871
      %v3877 = vrot.slane %v3876, 4
      %v3879 = vshll.u32 %v3624, 16
      %v3881 = vrot.slane %v3879, 5
      %v3882 = vsel %vm277, %v3877, %v3881
      %v3884 = vshrl.u32 %v3625, 16
      %v3886 = vrot.slane %v3884, 4
      %v3887 = vshll.u32 %v3625, 16
      %v3889 = vrot.slane %v3887, 5
      %v3890 = vor.u32 %v3886, %v3889
      %v3891 = vrot.slane %v3890, 4
      %v3893 = vshll.u32 %v3626, 16
      %v3895 = vrot.slane %v3893, 5
      %v3896 = vsel %vm277, %v3891, %v3895
      %v3897 = vshrl.u32 %v3626, 16
      %v3899 = vrot.slane %v3897, 4
      %v3900 = vor.u32 %v3899, %v3895
      %v3901 = vrot.slane %v3900, 4
      %v3903 = vshll.u32 %v3627, 16
      %v3905 = vrot.slane %v3903, 5
      %v3906 = vsel %vm277, %v3901, %v3905
      %v3908 = vshrl.u32 %v3628, 16
      %v3910 = vrot.slane %v3908, 4
      %v3911 = vshll.u32 %v3628, 16
      %v3913 = vrot.slane %v3911, 5
      %v3914 = vor.u32 %v3910, %v3913
      %v3915 = vrot.slane %v3914, 4
      %v3917 = vshll.u32 %v3629, 16
      %v3919 = vrot.slane %v3917, 5
      %v3920 = vsel %vm277, %v3915, %v3919
      %v3921 = vshrl.u32 %v3629, 16
      %v3923 = vrot.slane %v3921, 4
      %v3924 = vor.u32 %v3923, %v3919
      %v3925 = vrot.slane %v3924, 4
      %v3927 = vshll.u32 %v3630, 16
      %v3929 = vrot.slane %v3927, 5
      %v3930 = vsel %vm277, %v3925, %v3929
      %v3932 = vshrl.u32 %v3631, 16
      %v3934 = vrot.slane %v3932, 4
      %v3935 = vshll.u32 %v3631, 16
      %v3937 = vrot.slane %v3935, 5
      %v3938 = vor.u32 %v3934, %v3937
      %v3939 = vrot.slane %v3938, 4
      %v3941 = vshll.u32 %v3632, 16
      %v3943 = vrot.slane %v3941, 5
      %v3944 = vsel %vm277, %v3939, %v3943
      %v3945 = vshrl.u32 %v3632, 16
      %v3947 = vrot.slane %v3945, 4
      %v3948 = vor.u32 %v3947, %v3943
      %v3949 = vrot.slane %v3948, 4
      %v3951 = vshll.u32 %v3633, 16
      %v3953 = vrot.slane %v3951, 5
      %v3954 = vsel %vm277, %v3949, %v3953
      %v3956 = vshrl.u32 %v3634, 16
      %v3958 = vrot.slane %v3956, 4
      %v3959 = vshll.u32 %v3634, 16
      %v3961 = vrot.slane %v3959, 5
      %v3962 = vor.u32 %v3958, %v3961
      %v3963 = vrot.slane %v3962, 4
      %v3965 = vshll.u32 %v3635, 16
      %v3967 = vrot.slane %v3965, 5
      %v3968 = vsel %vm277, %v3963, %v3967
      %v3969 = vshrl.u32 %v3635, 16
      %v3971 = vrot.slane %v3969, 4
      %v3972 = vor.u32 %v3971, %v3967
      %v3973 = vrot.slane %v3972, 4
      %v3975 = vshll.u32 %v3636, 16
      %v3977 = vrot.slane %v3975, 5
      %v3978 = vsel %vm277, %v3973, %v3977
      %v3980 = vshrl.u32 %v3637, 16
      %v3982 = vrot.slane %v3980, 4
      %v3983 = vshll.u32 %v3637, 16
      %v3985 = vrot.slane %v3983, 5
      %v3986 = vor.u32 %v3982, %v3985
      %v3987 = vrot.slane %v3986, 4
      %v3989 = vshll.u32 %v3638, 16
      %v3991 = vrot.slane %v3989, 5
      %v3992 = vsel %vm277, %v3987, %v3991
      %v3993 = vshrl.u32 %v3638, 16
      %v3995 = vrot.slane %v3993, 4
      %v3996 = vor.u32 %v3995, %v3991
      %v3997 = vrot.slane %v3996, 4
      %v3999 = vshll.u32 %v3639, 16
      %v4001 = vrot.slane %v3999, 5
      %v4002 = vsel %vm277, %v3997, %v4001
      %v4004 = vshrl.u32 %v3640, 16
      %v4006 = vrot.slane %v4004, 4
      %v4007 = vshll.u32 %v3640, 16
      %v4009 = vrot.slane %v4007, 5
      %v4010 = vor.u32 %v4006, %v4009
      %v4011 = vrot.slane %v4010, 4
      %v4013 = vshll.u32 %v3641, 16
      %v4015 = vrot.slane %v4013, 5
      %v4016 = vsel %vm277, %v4011, %v4015
      %v4017 = vshrl.u32 %v3641, 16
      %v4019 = vrot.slane %v4017, 4
      %v4020 = vor.u32 %v4019, %v4015
      %v4021 = vrot.slane %v4020, 4
      %v4023 = vshll.u32 %v3642, 16
      %v4025 = vrot.slane %v4023, 5
      %v4026 = vsel %vm277, %v4021, %v4025
      %s4027 = scalar_lea.vmem %s1, 14
      %v4028 = vld [vmem:[%s4027] sm:$0x3]
      %v4029 = vunpack.c.l.b16 %v3656
      %v4030 = vunpack.c.l.b16 %v3666
      %v4031 = vunpack.c.l.b16 %v3680
      %v4032 = vunpack.c.l.b16 %v3690
      %v4033 = vunpack.c.l.b16 %v3704
      %v4034 = vunpack.c.l.b16 %v3714
      %v4035 = vunpack.c.l.b16 %v3728
      %v4036 = vunpack.c.l.b16 %v3738
      %v4037 = vunpack.c.l.b16 %v3752
      %v4038 = vunpack.c.l.b16 %v3762
      %v4039 = vunpack.c.l.b16 %v3776
      %v4040 = vunpack.c.l.b16 %v3786
      %v4041 = vunpack.c.l.b16 %v3800
      %v4042 = vunpack.c.l.b16 %v3810
      %v4043 = vunpack.c.l.b16 %v3824
      %v4044 = vunpack.c.l.b16 %v3834
      %v4045 = vunpack.c.l.b16 %v3848
      %v4046 = vunpack.c.l.b16 %v3858
      %v4047 = vunpack.c.l.b16 %v3872
      %v4048 = vunpack.c.l.b16 %v3882
      %v4049 = vunpack.c.l.b16 %v3896
      %v4050 = vunpack.c.l.b16 %v3906
      %v4051 = vunpack.c.l.b16 %v3920
      %v4052 = vunpack.c.l.b16 %v3930
      %v4053 = vunpack.c.l.b16 %v3944
      %v4054 = vunpack.c.l.b16 %v3954
      %v4055 = vunpack.c.l.b16 %v3968
      %v4056 = vunpack.c.l.b16 %v3978
      %v4057 = vunpack.c.l.b16 %v3992
      %v4058 = vunpack.c.l.b16 %v4002
      %v4059 = vunpack.c.l.b16 %v4016
      %v4060 = vunpack.c.l.b16 %v4026
      %v4061 = vpack.c.b16 %v4030, %v4029
      %v4062 = vpack.c.b16 %v4032, %v4031
      %v4063 = vpack.c.b16 %v4034, %v4033
      %v4064 = vpack.c.b16 %v4036, %v4035
      %v4065 = vpack.c.b16 %v4038, %v4037
      %v4066 = vpack.c.b16 %v4040, %v4039
      %v4067 = vpack.c.b16 %v4042, %v4041
      %v4068 = vpack.c.b16 %v4044, %v4043
      %v4069 = vpack.c.b16 %v4046, %v4045
      %v4070 = vpack.c.b16 %v4048, %v4047
      %v4071 = vpack.c.b16 %v4050, %v4049
      %v4072 = vpack.c.b16 %v4052, %v4051
      %v4073 = vpack.c.b16 %v4054, %v4053
      %v4074 = vpack.c.b16 %v4056, %v4055
      %v4075 = vpack.c.b16 %v4058, %v4057
      %v4076 = vpack.c.b16 %v4060, %v4059
      %v4078 = vsel %vm712, %v4061, 0
      %v4081 = vsel %vm712, %v4062, 0
      %v4084 = vsel %vm712, %v4063, 0
      %v4087 = vsel %vm712, %v4064, 0
      %v4090 = vsel %vm712, %v4065, 0
      %v4093 = vsel %vm712, %v4066, 0
      %v4096 = vsel %vm712, %v4067, 0
      %v4099 = vsel %vm712, %v4068, 0
      %v4102 = vsel %vm712, %v4069, 0
      %v4105 = vsel %vm712, %v4070, 0
      %v4108 = vsel %vm712, %v4071, 0
      %v4111 = vsel %vm712, %v4072, 0
      %v4114 = vsel %vm712, %v4073, 0
      %v4117 = vsel %vm712, %v4074, 0
      %v4120 = vsel %vm712, %v4075, 0
      %v4123 = vsel %vm712, %v4076, 0
      %v4126 = vsel %vm761, %v4028, 0
      %4128 = vmatprep.subr.bf16.mxu0 0
      %4129 = vmatpush1.bf16.msra.mxu0 0
      %4130 = vmatprep.subr.bf16.mxu0 0
      %4131 = vmatpush1.bf16.msra.mxu0 0
      %4132 = vmatprep.subr.bf16.mxu0 0
      %4133 = vmatpush1.bf16.msra.mxu0 0
      %4134 = vmatprep.subr.bf16.mxu0 0
      %4135 = vmatpush1.bf16.msra.mxu0 0
      %4136 = vmatprep.subr.bf16.mxu0 0
      %4137 = vmatpush1.bf16.msra.mxu0 0
      %4138 = vmatprep.subr.bf16.mxu0 0
      %4139 = vmatpush1.bf16.msra.mxu0 0
      %4140 = vmatprep.subr.bf16.mxu0 0
      %4141 = vmatpush1.bf16.msra.mxu0 0
      %4142 = vmatprep.subr.bf16.mxu0 0
      %4143 = vmatpush1.bf16.msra.mxu0 %v4126
      %4144 = vmatprep.subr.bf16.mxu0 0
      %4145 = vmatpush2.bf16.msra.mxu0 0
      %4146 = vmatprep.subr.bf16.mxu0 0
      %4147 = vmatpush2.bf16.msra.mxu0 0
      %4148 = vmatprep.subr.bf16.mxu0 0
      %4149 = vmatpush2.bf16.msra.mxu0 0
      %4150 = vmatprep.subr.bf16.mxu0 0
      %4151 = vmatpush2.bf16.msra.mxu0 0
      %4152 = vmatprep.subr.bf16.mxu0 0
      %4153 = vmatpush2.bf16.msra.mxu0 0
      %4154 = vmatprep.subr.bf16.mxu0 0
      %4155 = vmatpush2.bf16.msra.mxu0 0
      %4156 = vmatprep.subr.bf16.mxu0 0
      %4157 = vmatpush2.bf16.msra.mxu0 0
      %4158 = vmatprep.subr.bf16.mxu0 0
      %4159 = vmatpush2.bf16.msra.mxu0 0
      %4160 = vmatprep.mubr.bf16.mxu0 0
      %4161 = vmatmul.mubr.bf16.gmra.mxu0 %v4078
      %v4162 = vpop.f32.mrf.mxu0
      %v4163 = vadd.f32 0.0, %v4162
      %v4164 = vpop.f32.mrf.mxu0
      %v4165 = vpop.f32.mrf.mxu0
      %v4166 = vadd.f32 0.0, %v4165
      %v4167 = vpop.f32.mrf.mxu0
      %4168 = vmatprep.mubr.bf16.mxu0 0
      %4169 = vmatmul.mubr.bf16.gmra.mxu0 %v4081
      %v4170 = vpop.f32.mrf.mxu0
      %v4171 = vadd.f32 0.0, %v4170
      %v4172 = vpop.f32.mrf.mxu0
      %v4173 = vpop.f32.mrf.mxu0
      %v4174 = vadd.f32 0.0, %v4173
      %v4175 = vpop.f32.mrf.mxu0
      %4176 = vmatprep.mubr.bf16.mxu0 0
      %4177 = vmatmul.mubr.bf16.gmra.mxu0 %v4084
      %v4178 = vpop.f32.mrf.mxu0
      %v4179 = vadd.f32 0.0, %v4178
      %v4180 = vpop.f32.mrf.mxu0
      %v4181 = vpop.f32.mrf.mxu0
      %v4182 = vadd.f32 0.0, %v4181
      %v4183 = vpop.f32.mrf.mxu0
      %4184 = vmatprep.mubr.bf16.mxu0 0
      %4185 = vmatmul.mubr.bf16.gmra.mxu0 %v4087
      %v4186 = vpop.f32.mrf.mxu0
      %v4187 = vadd.f32 0.0, %v4186
      %v4188 = vpop.f32.mrf.mxu0
      %v4189 = vpop.f32.mrf.mxu0
      %v4190 = vadd.f32 0.0, %v4189
      %v4191 = vpop.f32.mrf.mxu0
      %4192 = vmatprep.mubr.bf16.mxu0 0
      %4193 = vmatmul.mubr.bf16.gmra.mxu0 %v4090
      %v4194 = vpop.f32.mrf.mxu0
      %v4195 = vadd.f32 0.0, %v4194
      %v4196 = vpop.f32.mrf.mxu0
      %v4197 = vpop.f32.mrf.mxu0
      %v4198 = vadd.f32 0.0, %v4197
      %v4199 = vpop.f32.mrf.mxu0
      %4200 = vmatprep.mubr.bf16.mxu0 0
      %4201 = vmatmul.mubr.bf16.gmra.mxu0 %v4093
      %v4202 = vpop.f32.mrf.mxu0
      %v4203 = vadd.f32 0.0, %v4202
      %v4204 = vpop.f32.mrf.mxu0
      %v4205 = vpop.f32.mrf.mxu0
      %v4206 = vadd.f32 0.0, %v4205
      %v4207 = vpop.f32.mrf.mxu0
      %4208 = vmatprep.mubr.bf16.mxu0 0
      %4209 = vmatmul.mubr.bf16.gmra.mxu0 %v4096
      %v4210 = vpop.f32.mrf.mxu0
      %v4211 = vadd.f32 0.0, %v4210
      %v4212 = vpop.f32.mrf.mxu0
      %v4213 = vpop.f32.mrf.mxu0
      %v4214 = vadd.f32 0.0, %v4213
      %v4215 = vpop.f32.mrf.mxu0
      %4216 = vmatprep.mubr.bf16.mxu0 0
      %4217 = vmatmul.mubr.bf16.gmra.mxu0 %v4099
      %v4218 = vpop.f32.mrf.mxu0
      %v4219 = vadd.f32 0.0, %v4218
      %v4220 = vpop.f32.mrf.mxu0
      %v4221 = vpop.f32.mrf.mxu0
      %v4222 = vadd.f32 0.0, %v4221
      %v4223 = vpop.f32.mrf.mxu0
      %4224 = vmatprep.mubr.bf16.mxu0 0
      %4225 = vmatmul.mubr.bf16.gmra.mxu0 %v4102
      %v4226 = vpop.f32.mrf.mxu0
      %v4227 = vadd.f32 0.0, %v4226
      %v4228 = vpop.f32.mrf.mxu0
      %v4229 = vpop.f32.mrf.mxu0
      %v4230 = vadd.f32 0.0, %v4229
      %v4231 = vpop.f32.mrf.mxu0
      %4232 = vmatprep.mubr.bf16.mxu0 0
      %4233 = vmatmul.mubr.bf16.gmra.mxu0 %v4105
      %v4234 = vpop.f32.mrf.mxu0
      %v4235 = vadd.f32 0.0, %v4234
      %v4236 = vpop.f32.mrf.mxu0
      %v4237 = vpop.f32.mrf.mxu0
      %v4238 = vadd.f32 0.0, %v4237
      %v4239 = vpop.f32.mrf.mxu0
      %4240 = vmatprep.mubr.bf16.mxu0 0
      %4241 = vmatmul.mubr.bf16.gmra.mxu0 %v4108
      %v4242 = vpop.f32.mrf.mxu0
      %v4243 = vadd.f32 0.0, %v4242
      %v4244 = vpop.f32.mrf.mxu0
      %v4245 = vpop.f32.mrf.mxu0
      %v4246 = vadd.f32 0.0, %v4245
      %v4247 = vpop.f32.mrf.mxu0
      %4248 = vmatprep.mubr.bf16.mxu0 0
      %4249 = vmatmul.mubr.bf16.gmra.mxu0 %v4111
      %v4250 = vpop.f32.mrf.mxu0
      %v4251 = vadd.f32 0.0, %v4250
      %v4252 = vpop.f32.mrf.mxu0
      %v4253 = vpop.f32.mrf.mxu0
      %v4254 = vadd.f32 0.0, %v4253
      %v4255 = vpop.f32.mrf.mxu0
      %4256 = vmatprep.mubr.bf16.mxu0 0
      %4257 = vmatmul.mubr.bf16.gmra.mxu0 %v4114
      %v4258 = vpop.f32.mrf.mxu0
      %v4259 = vadd.f32 0.0, %v4258
      %v4260 = vpop.f32.mrf.mxu0
      %v4261 = vpop.f32.mrf.mxu0
      %v4262 = vadd.f32 0.0, %v4261
      %v4263 = vpop.f32.mrf.mxu0
      %4264 = vmatprep.mubr.bf16.mxu0 0
      %4265 = vmatmul.mubr.bf16.gmra.mxu0 %v4117
      %v4266 = vpop.f32.mrf.mxu0
      %v4267 = vadd.f32 0.0, %v4266
      %v4268 = vpop.f32.mrf.mxu0
      %v4269 = vpop.f32.mrf.mxu0
      %v4270 = vadd.f32 0.0, %v4269
      %v4271 = vpop.f32.mrf.mxu0
      %4272 = vmatprep.mubr.bf16.mxu0 0
      %4273 = vmatmul.mubr.bf16.gmra.mxu0 %v4120
      %v4274 = vpop.f32.mrf.mxu0
      %v4275 = vadd.f32 0.0, %v4274
      %v4276 = vpop.f32.mrf.mxu0
      %v4277 = vpop.f32.mrf.mxu0
      %v4278 = vadd.f32 0.0, %v4277
      %v4279 = vpop.f32.mrf.mxu0
      %4280 = vmatprep.mubr.bf16.mxu0 0
      %4281 = vmatmul.mubr.bf16.gmra.mxu0 %v4123
      %v4282 = vpop.f32.mrf.mxu0
      %v4283 = vadd.f32 0.0, %v4282
      %v4284 = vpop.f32.mrf.mxu0
      %v4285 = vpop.f32.mrf.mxu0
      %v4286 = vadd.f32 0.0, %v4285
      %v4287 = vpop.f32.mrf.mxu0
      %4288 = vdwg.mxu0
      %v4289 = vadd.f32 %v3563, %v4163
      %v4290 = vadd.f32 %v3564, %v4166
      %v4291 = vadd.f32 %v3565, %v4171
      %v4292 = vadd.f32 %v3566, %v4174
      %v4293 = vadd.f32 %v3567, %v4179
      %v4294 = vadd.f32 %v3568, %v4182
      %v4295 = vadd.f32 %v3569, %v4187
      %v4296 = vadd.f32 %v3570, %v4190
      %v4297 = vadd.f32 %v3571, %v4195
      %v4298 = vadd.f32 %v3572, %v4198
      %v4299 = vadd.f32 %v3573, %v4203
      %v4300 = vadd.f32 %v3574, %v4206
      %v4301 = vadd.f32 %v3575, %v4211
      %v4302 = vadd.f32 %v3576, %v4214
      %v4303 = vadd.f32 %v3577, %v4219
      %v4304 = vadd.f32 %v3578, %v4222
      %v4305 = vadd.f32 %v3579, %v4227
      %v4306 = vadd.f32 %v3580, %v4230
      %v4307 = vadd.f32 %v3581, %v4235
      %v4308 = vadd.f32 %v3582, %v4238
      %v4309 = vadd.f32 %v3583, %v4243
      %v4310 = vadd.f32 %v3584, %v4246
      %v4311 = vadd.f32 %v3585, %v4251
      %v4312 = vadd.f32 %v3586, %v4254
      %v4313 = vadd.f32 %v3587, %v4259
      %v4314 = vadd.f32 %v3588, %v4262
      %v4315 = vadd.f32 %v3589, %v4267
      %v4316 = vadd.f32 %v3590, %v4270
      %v4317 = vadd.f32 %v3591, %v4275
      %v4318 = vadd.f32 %v3592, %v4278
      %v4319 = vadd.f32 %v3593, %v4283
      %v4320 = vadd.f32 %v3594, %v4286
      %v4321 = vld [vmem:[%s3236] sm:$0xe]
      %v4322 = vld [vmem:[%s3236 + $0xc] sm:$0xe]
      %v4323 = vld [vmem:[%s3236 + $0x18] sm:$0xe]
      %v4324 = vld [vmem:[%s3236 + $0x24] sm:$0xe]
      %v4325 = vld [vmem:[%s3236 + $0x30] sm:$0xe]
      %v4326 = vld [vmem:[%s3236 + $0x3c] sm:$0xe]
      %v4327 = vld [vmem:[%s3236 + $0x48] sm:$0xe]
      %v4328 = vld [vmem:[%s3236 + $0x54] sm:$0xe]
      %v4329 = vld [vmem:[%s3236 + $0x60] sm:$0xe]
      %v4330 = vld [vmem:[%s3236 + $0x6c] sm:$0xe]
      %v4331 = vld [vmem:[%s3236 + $0x78] sm:$0xe]
      %v4332 = vld [vmem:[%s3236 + $0x84] sm:$0xe]
      %v4333 = vld [vmem:[%s3236 + $0x90] sm:$0xe]
      %v4334 = vld [vmem:[%s3236 + $0x9c] sm:$0xe]
      %v4335 = vld [vmem:[%s3236 + $0xa8] sm:$0xe]
      %v4336 = vld [vmem:[%s3236 + $0xb4] sm:$0xe]
      %v4385 = vrot.slane %v4321, 5
      %v4386 = vrot.slane %v4385, 4
      %v4387 = vrot.slane %v3596, 5
      %v4388 = vsel %vm1268, %v4386, %v4387
      %v4389 = vrot.slane %v4387, 4
      %v4390 = vrot.slane %v3597, 5
      %v4391 = vsel %vm1268, %v4389, %v4390
      %v4392 = vrot.slane %v4322, 5
      %v4393 = vrot.slane %v4392, 4
      %v4394 = vrot.slane %v3599, 5
      %v4395 = vsel %vm1268, %v4393, %v4394
      %v4396 = vrot.slane %v4394, 4
      %v4397 = vrot.slane %v3600, 5
      %v4398 = vsel %vm1268, %v4396, %v4397
      %v4399 = vrot.slane %v4323, 5
      %v4400 = vrot.slane %v4399, 4
      %v4401 = vrot.slane %v3602, 5
      %v4402 = vsel %vm1268, %v4400, %v4401
      %v4403 = vrot.slane %v4401, 4
      %v4404 = vrot.slane %v3603, 5
      %v4405 = vsel %vm1268, %v4403, %v4404
      %v4406 = vrot.slane %v4324, 5
      %v4407 = vrot.slane %v4406, 4
      %v4408 = vrot.slane %v3605, 5
      %v4409 = vsel %vm1268, %v4407, %v4408
      %v4410 = vrot.slane %v4408, 4
      %v4411 = vrot.slane %v3606, 5
      %v4412 = vsel %vm1268, %v4410, %v4411
      %v4413 = vrot.slane %v4325, 5
      %v4414 = vrot.slane %v4413, 4
      %v4415 = vrot.slane %v3608, 5
      %v4416 = vsel %vm1268, %v4414, %v4415
      %v4417 = vrot.slane %v4415, 4
      %v4418 = vrot.slane %v3609, 5
      %v4419 = vsel %vm1268, %v4417, %v4418
      %v4420 = vrot.slane %v4326, 5
      %v4421 = vrot.slane %v4420, 4
      %v4422 = vrot.slane %v3611, 5
      %v4423 = vsel %vm1268, %v4421, %v4422
      %v4424 = vrot.slane %v4422, 4
      %v4425 = vrot.slane %v3612, 5
      %v4426 = vsel %vm1268, %v4424, %v4425
      %v4427 = vrot.slane %v4327, 5
      %v4428 = vrot.slane %v4427, 4
      %v4429 = vrot.slane %v3614, 5
      %v4430 = vsel %vm1268, %v4428, %v4429
      %v4431 = vrot.slane %v4429, 4
      %v4432 = vrot.slane %v3615, 5
      %v4433 = vsel %vm1268, %v4431, %v4432
      %v4434 = vrot.slane %v4328, 5
      %v4435 = vrot.slane %v4434, 4
      %v4436 = vrot.slane %v3617, 5
      %v4437 = vsel %vm1268, %v4435, %v4436
      %v4438 = vrot.slane %v4436, 4
      %v4439 = vrot.slane %v3618, 5
      %v4440 = vsel %vm1268, %v4438, %v4439
      %v4441 = vrot.slane %v4329, 5
      %v4442 = vrot.slane %v4441, 4
      %v4443 = vrot.slane %v3620, 5
      %v4444 = vsel %vm1268, %v4442, %v4443
      %v4445 = vrot.slane %v4443, 4
      %v4446 = vrot.slane %v3621, 5
      %v4447 = vsel %vm1268, %v4445, %v4446
      %v4448 = vrot.slane %v4330, 5
      %v4449 = vrot.slane %v4448, 4
      %v4450 = vrot.slane %v3623, 5
      %v4451 = vsel %vm1268, %v4449, %v4450
      %v4452 = vrot.slane %v4450, 4
      %v4453 = vrot.slane %v3624, 5
      %v4454 = vsel %vm1268, %v4452, %v4453
      %v4455 = vrot.slane %v4331, 5
      %v4456 = vrot.slane %v4455, 4
      %v4457 = vrot.slane %v3626, 5
      %v4458 = vsel %vm1268, %v4456, %v4457
      %v4459 = vrot.slane %v4457, 4
      %v4460 = vrot.slane %v3627, 5
      %v4461 = vsel %vm1268, %v4459, %v4460
      %v4462 = vrot.slane %v4332, 5
      %v4463 = vrot.slane %v4462, 4
      %v4464 = vrot.slane %v3629, 5
      %v4465 = vsel %vm1268, %v4463, %v4464
      %v4466 = vrot.slane %v4464, 4
      %v4467 = vrot.slane %v3630, 5
      %v4468 = vsel %vm1268, %v4466, %v4467
      %v4469 = vrot.slane %v4333, 5
      %v4470 = vrot.slane %v4469, 4
      %v4471 = vrot.slane %v3632, 5
      %v4472 = vsel %vm1268, %v4470, %v4471
      %v4473 = vrot.slane %v4471, 4
      %v4474 = vrot.slane %v3633, 5
      %v4475 = vsel %vm1268, %v4473, %v4474
      %v4476 = vrot.slane %v4334, 5
      %v4477 = vrot.slane %v4476, 4
      %v4478 = vrot.slane %v3635, 5
      %v4479 = vsel %vm1268, %v4477, %v4478
      %v4480 = vrot.slane %v4478, 4
      %v4481 = vrot.slane %v3636, 5
      %v4482 = vsel %vm1268, %v4480, %v4481
      %v4483 = vrot.slane %v4335, 5
      %v4484 = vrot.slane %v4483, 4
      %v4485 = vrot.slane %v3638, 5
      %v4486 = vsel %vm1268, %v4484, %v4485
      %v4487 = vrot.slane %v4485, 4
      %v4488 = vrot.slane %v3639, 5
      %v4489 = vsel %vm1268, %v4487, %v4488
      %v4490 = vrot.slane %v4336, 5
      %v4491 = vrot.slane %v4490, 4
      %v4492 = vrot.slane %v3641, 5
      %v4493 = vsel %vm1268, %v4491, %v4492
      %v4494 = vrot.slane %v4492, 4
      %v4495 = vrot.slane %v3642, 5
      %v4496 = vsel %vm1268, %v4494, %v4495
      %s4497 = scalar_lea.vmem %s1, 16
      %v4498 = vld [vmem:[%s4497] sm:$0x3]
      %v4499 = vunpack.c.l.b16 %v4388
      %v4500 = vunpack.c.l.b16 %v4391
      %v4501 = vunpack.c.l.b16 %v4395
      %v4502 = vunpack.c.l.b16 %v4398
      %v4503 = vunpack.c.l.b16 %v4402
      %v4504 = vunpack.c.l.b16 %v4405
      %v4505 = vunpack.c.l.b16 %v4409
      %v4506 = vunpack.c.l.b16 %v4412
      %v4507 = vunpack.c.l.b16 %v4416
      %v4508 = vunpack.c.l.b16 %v4419
      %v4509 = vunpack.c.l.b16 %v4423
      %v4510 = vunpack.c.l.b16 %v4426
      %v4511 = vunpack.c.l.b16 %v4430
      %v4512 = vunpack.c.l.b16 %v4433
      %v4513 = vunpack.c.l.b16 %v4437
      %v4514 = vunpack.c.l.b16 %v4440
      %v4515 = vunpack.c.l.b16 %v4444
      %v4516 = vunpack.c.l.b16 %v4447
      %v4517 = vunpack.c.l.b16 %v4451
      %v4518 = vunpack.c.l.b16 %v4454
      %v4519 = vunpack.c.l.b16 %v4458
      %v4520 = vunpack.c.l.b16 %v4461
      %v4521 = vunpack.c.l.b16 %v4465
      %v4522 = vunpack.c.l.b16 %v4468
      %v4523 = vunpack.c.l.b16 %v4472
      %v4524 = vunpack.c.l.b16 %v4475
      %v4525 = vunpack.c.l.b16 %v4479
      %v4526 = vunpack.c.l.b16 %v4482
      %v4527 = vunpack.c.l.b16 %v4486
      %v4528 = vunpack.c.l.b16 %v4489
      %v4529 = vunpack.c.l.b16 %v4493
      %v4530 = vunpack.c.l.b16 %v4496
      %v4531 = vpack.c.b16 %v4500, %v4499
      %v4532 = vpack.c.b16 %v4502, %v4501
      %v4533 = vpack.c.b16 %v4504, %v4503
      %v4534 = vpack.c.b16 %v4506, %v4505
      %v4535 = vpack.c.b16 %v4508, %v4507
      %v4536 = vpack.c.b16 %v4510, %v4509
      %v4537 = vpack.c.b16 %v4512, %v4511
      %v4538 = vpack.c.b16 %v4514, %v4513
      %v4539 = vpack.c.b16 %v4516, %v4515
      %v4540 = vpack.c.b16 %v4518, %v4517
      %v4541 = vpack.c.b16 %v4520, %v4519
      %v4542 = vpack.c.b16 %v4522, %v4521
      %v4543 = vpack.c.b16 %v4524, %v4523
      %v4544 = vpack.c.b16 %v4526, %v4525
      %v4545 = vpack.c.b16 %v4528, %v4527
      %v4546 = vpack.c.b16 %v4530, %v4529
      %v4548 = vsel %vm712, %v4531, 0
      %v4551 = vsel %vm712, %v4532, 0
      %v4554 = vsel %vm712, %v4533, 0
      %v4557 = vsel %vm712, %v4534, 0
      %v4560 = vsel %vm712, %v4535, 0
      %v4563 = vsel %vm712, %v4536, 0
      %v4566 = vsel %vm712, %v4537, 0
      %v4569 = vsel %vm712, %v4538, 0
      %v4572 = vsel %vm712, %v4539, 0
      %v4575 = vsel %vm712, %v4540, 0
      %v4578 = vsel %vm712, %v4541, 0
      %v4581 = vsel %vm712, %v4542, 0
      %v4584 = vsel %vm712, %v4543, 0
      %v4587 = vsel %vm712, %v4544, 0
      %v4590 = vsel %vm712, %v4545, 0
      %v4593 = vsel %vm712, %v4546, 0
      %v4596 = vsel %vm761, %v4498, 0
      %4598 = vmatprep.subr.bf16.mxu0 0
      %4599 = vmatpush1.bf16.msra.mxu0 0
      %4600 = vmatprep.subr.bf16.mxu0 0
      %4601 = vmatpush1.bf16.msra.mxu0 0
      %4602 = vmatprep.subr.bf16.mxu0 0
      %4603 = vmatpush1.bf16.msra.mxu0 0
      %4604 = vmatprep.subr.bf16.mxu0 0
      %4605 = vmatpush1.bf16.msra.mxu0 0
      %4606 = vmatprep.subr.bf16.mxu0 0
      %4607 = vmatpush1.bf16.msra.mxu0 0
      %4608 = vmatprep.subr.bf16.mxu0 0
      %4609 = vmatpush1.bf16.msra.mxu0 0
      %4610 = vmatprep.subr.bf16.mxu0 0
      %4611 = vmatpush1.bf16.msra.mxu0 0
      %4612 = vmatprep.subr.bf16.mxu0 0
      %4613 = vmatpush1.bf16.msra.mxu0 %v4596
      %4614 = vmatprep.subr.bf16.mxu0 0
      %4615 = vmatpush2.bf16.msra.mxu0 0
      %4616 = vmatprep.subr.bf16.mxu0 0
      %4617 = vmatpush2.bf16.msra.mxu0 0
      %4618 = vmatprep.subr.bf16.mxu0 0
      %4619 = vmatpush2.bf16.msra.mxu0 0
      %4620 = vmatprep.subr.bf16.mxu0 0
      %4621 = vmatpush2.bf16.msra.mxu0 0
      %4622 = vmatprep.subr.bf16.mxu0 0
      %4623 = vmatpush2.bf16.msra.mxu0 0
      %4624 = vmatprep.subr.bf16.mxu0 0
      %4625 = vmatpush2.bf16.msra.mxu0 0
      %4626 = vmatprep.subr.bf16.mxu0 0
      %4627 = vmatpush2.bf16.msra.mxu0 0
      %4628 = vmatprep.subr.bf16.mxu0 0
      %4629 = vmatpush2.bf16.msra.mxu0 0
      %4630 = vmatprep.mubr.bf16.mxu0 0
      %4631 = vmatmul.mubr.bf16.gmra.mxu0 %v4548
      %v4632 = vpop.f32.mrf.mxu0
      %v4633 = vadd.f32 0.0, %v4632
      %v4634 = vpop.f32.mrf.mxu0
      %v4635 = vpop.f32.mrf.mxu0
      %v4636 = vadd.f32 0.0, %v4635
      %v4637 = vpop.f32.mrf.mxu0
      %4638 = vmatprep.mubr.bf16.mxu0 0
      %4639 = vmatmul.mubr.bf16.gmra.mxu0 %v4551
      %v4640 = vpop.f32.mrf.mxu0
      %v4641 = vadd.f32 0.0, %v4640
      %v4642 = vpop.f32.mrf.mxu0
      %v4643 = vpop.f32.mrf.mxu0
      %v4644 = vadd.f32 0.0, %v4643
      %v4645 = vpop.f32.mrf.mxu0
      %4646 = vmatprep.mubr.bf16.mxu0 0
      %4647 = vmatmul.mubr.bf16.gmra.mxu0 %v4554
      %v4648 = vpop.f32.mrf.mxu0
      %v4649 = vadd.f32 0.0, %v4648
      %v4650 = vpop.f32.mrf.mxu0
      %v4651 = vpop.f32.mrf.mxu0
      %v4652 = vadd.f32 0.0, %v4651
      %v4653 = vpop.f32.mrf.mxu0
      %4654 = vmatprep.mubr.bf16.mxu0 0
      %4655 = vmatmul.mubr.bf16.gmra.mxu0 %v4557
      %v4656 = vpop.f32.mrf.mxu0
      %v4657 = vadd.f32 0.0, %v4656
      %v4658 = vpop.f32.mrf.mxu0
      %v4659 = vpop.f32.mrf.mxu0
      %v4660 = vadd.f32 0.0, %v4659
      %v4661 = vpop.f32.mrf.mxu0
      %4662 = vmatprep.mubr.bf16.mxu0 0
      %4663 = vmatmul.mubr.bf16.gmra.mxu0 %v4560
      %v4664 = vpop.f32.mrf.mxu0
      %v4665 = vadd.f32 0.0, %v4664
      %v4666 = vpop.f32.mrf.mxu0
      %v4667 = vpop.f32.mrf.mxu0
      %v4668 = vadd.f32 0.0, %v4667
      %v4669 = vpop.f32.mrf.mxu0
      %4670 = vmatprep.mubr.bf16.mxu0 0
      %4671 = vmatmul.mubr.bf16.gmra.mxu0 %v4563
      %v4672 = vpop.f32.mrf.mxu0
      %v4673 = vadd.f32 0.0, %v4672
      %v4674 = vpop.f32.mrf.mxu0
      %v4675 = vpop.f32.mrf.mxu0
      %v4676 = vadd.f32 0.0, %v4675
      %v4677 = vpop.f32.mrf.mxu0
      %4678 = vmatprep.mubr.bf16.mxu0 0
      %4679 = vmatmul.mubr.bf16.gmra.mxu0 %v4566
      %v4680 = vpop.f32.mrf.mxu0
      %v4681 = vadd.f32 0.0, %v4680
      %v4682 = vpop.f32.mrf.mxu0
      %v4683 = vpop.f32.mrf.mxu0
      %v4684 = vadd.f32 0.0, %v4683
      %v4685 = vpop.f32.mrf.mxu0
      %4686 = vmatprep.mubr.bf16.mxu0 0
      %4687 = vmatmul.mubr.bf16.gmra.mxu0 %v4569
      %v4688 = vpop.f32.mrf.mxu0
      %v4689 = vadd.f32 0.0, %v4688
      %v4690 = vpop.f32.mrf.mxu0
      %v4691 = vpop.f32.mrf.mxu0
      %v4692 = vadd.f32 0.0, %v4691
      %v4693 = vpop.f32.mrf.mxu0
      %4694 = vmatprep.mubr.bf16.mxu0 0
      %4695 = vmatmul.mubr.bf16.gmra.mxu0 %v4572
      %v4696 = vpop.f32.mrf.mxu0
      %v4697 = vadd.f32 0.0, %v4696
      %v4698 = vpop.f32.mrf.mxu0
      %v4699 = vpop.f32.mrf.mxu0
      %v4700 = vadd.f32 0.0, %v4699
      %v4701 = vpop.f32.mrf.mxu0
      %4702 = vmatprep.mubr.bf16.mxu0 0
      %4703 = vmatmul.mubr.bf16.gmra.mxu0 %v4575
      %v4704 = vpop.f32.mrf.mxu0
      %v4705 = vadd.f32 0.0, %v4704
      %v4706 = vpop.f32.mrf.mxu0
      %v4707 = vpop.f32.mrf.mxu0
      %v4708 = vadd.f32 0.0, %v4707
      %v4709 = vpop.f32.mrf.mxu0
      %4710 = vmatprep.mubr.bf16.mxu0 0
      %4711 = vmatmul.mubr.bf16.gmra.mxu0 %v4578
      %v4712 = vpop.f32.mrf.mxu0
      %v4713 = vadd.f32 0.0, %v4712
      %v4714 = vpop.f32.mrf.mxu0
      %v4715 = vpop.f32.mrf.mxu0
      %v4716 = vadd.f32 0.0, %v4715
      %v4717 = vpop.f32.mrf.mxu0
      %4718 = vmatprep.mubr.bf16.mxu0 0
      %4719 = vmatmul.mubr.bf16.gmra.mxu0 %v4581
      %v4720 = vpop.f32.mrf.mxu0
      %v4721 = vadd.f32 0.0, %v4720
      %v4722 = vpop.f32.mrf.mxu0
      %v4723 = vpop.f32.mrf.mxu0
      %v4724 = vadd.f32 0.0, %v4723
      %v4725 = vpop.f32.mrf.mxu0
      %4726 = vmatprep.mubr.bf16.mxu0 0
      %4727 = vmatmul.mubr.bf16.gmra.mxu0 %v4584
      %v4728 = vpop.f32.mrf.mxu0
      %v4729 = vadd.f32 0.0, %v4728
      %v4730 = vpop.f32.mrf.mxu0
      %v4731 = vpop.f32.mrf.mxu0
      %v4732 = vadd.f32 0.0, %v4731
      %v4733 = vpop.f32.mrf.mxu0
      %4734 = vmatprep.mubr.bf16.mxu0 0
      %4735 = vmatmul.mubr.bf16.gmra.mxu0 %v4587
      %v4736 = vpop.f32.mrf.mxu0
      %v4737 = vadd.f32 0.0, %v4736
      %v4738 = vpop.f32.mrf.mxu0
      %v4739 = vpop.f32.mrf.mxu0
      %v4740 = vadd.f32 0.0, %v4739
      %v4741 = vpop.f32.mrf.mxu0
      %4742 = vmatprep.mubr.bf16.mxu0 0
      %4743 = vmatmul.mubr.bf16.gmra.mxu0 %v4590
      %v4744 = vpop.f32.mrf.mxu0
      %v4745 = vadd.f32 0.0, %v4744
      %v4746 = vpop.f32.mrf.mxu0
      %v4747 = vpop.f32.mrf.mxu0
      %v4748 = vadd.f32 0.0, %v4747
      %v4749 = vpop.f32.mrf.mxu0
      %4750 = vmatprep.mubr.bf16.mxu0 0
      %4751 = vmatmul.mubr.bf16.gmra.mxu0 %v4593
      %v4752 = vpop.f32.mrf.mxu0
      %v4753 = vadd.f32 0.0, %v4752
      %v4754 = vpop.f32.mrf.mxu0
      %v4755 = vpop.f32.mrf.mxu0
      %v4756 = vadd.f32 0.0, %v4755
      %v4757 = vpop.f32.mrf.mxu0
      %4758 = vdwg.mxu0
      %v4759 = vadd.f32 %v4289, %v4633
      %v4760 = vadd.f32 %v4290, %v4636
      %v4761 = vadd.f32 %v4291, %v4641
      %v4762 = vadd.f32 %v4292, %v4644
      %v4763 = vadd.f32 %v4293, %v4649
      %v4764 = vadd.f32 %v4294, %v4652
      %v4765 = vadd.f32 %v4295, %v4657
      %v4766 = vadd.f32 %v4296, %v4660
      %v4767 = vadd.f32 %v4297, %v4665
      %v4768 = vadd.f32 %v4298, %v4668
      %v4769 = vadd.f32 %v4299, %v4673
      %v4770 = vadd.f32 %v4300, %v4676
      %v4771 = vadd.f32 %v4301, %v4681
      %v4772 = vadd.f32 %v4302, %v4684
      %v4773 = vadd.f32 %v4303, %v4689
      %v4774 = vadd.f32 %v4304, %v4692
      %v4775 = vadd.f32 %v4305, %v4697
      %v4776 = vadd.f32 %v4306, %v4700
      %v4777 = vadd.f32 %v4307, %v4705
      %v4778 = vadd.f32 %v4308, %v4708
      %v4779 = vadd.f32 %v4309, %v4713
      %v4780 = vadd.f32 %v4310, %v4716
      %v4781 = vadd.f32 %v4311, %v4721
      %v4782 = vadd.f32 %v4312, %v4724
      %v4783 = vadd.f32 %v4313, %v4729
      %v4784 = vadd.f32 %v4314, %v4732
      %v4785 = vadd.f32 %v4315, %v4737
      %v4786 = vadd.f32 %v4316, %v4740
      %v4787 = vadd.f32 %v4317, %v4745
      %v4788 = vadd.f32 %v4318, %v4748
      %v4789 = vadd.f32 %v4319, %v4753
      %v4790 = vadd.f32 %v4320, %v4756
      %v4791 = vld [vmem:[%s2] sm:$0x1]
      %v4793 = vlaneseq
      %v4794 = vshrl.u32 %v4793, 7
      %v4795 = vsub.s32 0, %v4794
      %v4796 = vrot.slane %v4791, %v4795
      %v4798 = vmul.f32 %v4759, %v4796
      %v4799 = vmul.f32 %v4760, %v4796
      %v4800 = vmul.f32 %v4761, %v4796
      %v4801 = vmul.f32 %v4762, %v4796
      %v4802 = vmul.f32 %v4763, %v4796
      %v4803 = vmul.f32 %v4764, %v4796
      %v4804 = vmul.f32 %v4765, %v4796
      %v4805 = vmul.f32 %v4766, %v4796
      %v4806 = vmul.f32 %v4767, %v4796
      %v4807 = vmul.f32 %v4768, %v4796
      %v4808 = vmul.f32 %v4769, %v4796
      %v4809 = vmul.f32 %v4770, %v4796
      %v4810 = vmul.f32 %v4771, %v4796
      %v4811 = vmul.f32 %v4772, %v4796
      %v4812 = vmul.f32 %v4773, %v4796
      %v4813 = vmul.f32 %v4774, %v4796
      %v4814 = vmul.f32 %v4775, %v4796
      %v4815 = vmul.f32 %v4776, %v4796
      %v4816 = vmul.f32 %v4777, %v4796
      %v4817 = vmul.f32 %v4778, %v4796
      %v4818 = vmul.f32 %v4779, %v4796
      %v4819 = vmul.f32 %v4780, %v4796
      %v4820 = vmul.f32 %v4781, %v4796
      %v4821 = vmul.f32 %v4782, %v4796
      %v4822 = vmul.f32 %v4783, %v4796
      %v4823 = vmul.f32 %v4784, %v4796
      %v4824 = vmul.f32 %v4785, %v4796
      %v4825 = vmul.f32 %v4786, %v4796
      %v4826 = vmul.f32 %v4787, %v4796
      %v4827 = vmul.f32 %v4788, %v4796
      %v4828 = vmul.f32 %v4789, %v4796
      %v4829 = vmul.f32 %v4790, %v4796
      %v4830 = vld [vmem:[%s3] sm:$0x1]
      %v4832 = vlaneseq
      %v4833 = vshrl.u32 %v4832, 7
      %v4834 = vsub.s32 0, %v4833
      %v4835 = vrot.slane %v4830, %v4834
      %v4837 = vadd.f32 %v4798, %v4835
      %v4838 = vadd.f32 %v4799, %v4835
      %v4839 = vadd.f32 %v4800, %v4835
      %v4840 = vadd.f32 %v4801, %v4835
      %v4841 = vadd.f32 %v4802, %v4835
      %v4842 = vadd.f32 %v4803, %v4835
      %v4843 = vadd.f32 %v4804, %v4835
      %v4844 = vadd.f32 %v4805, %v4835
      %v4845 = vadd.f32 %v4806, %v4835
      %v4846 = vadd.f32 %v4807, %v4835
      %v4847 = vadd.f32 %v4808, %v4835
      %v4848 = vadd.f32 %v4809, %v4835
      %v4849 = vadd.f32 %v4810, %v4835
      %v4850 = vadd.f32 %v4811, %v4835
      %v4851 = vadd.f32 %v4812, %v4835
      %v4852 = vadd.f32 %v4813, %v4835
      %v4853 = vadd.f32 %v4814, %v4835
      %v4854 = vadd.f32 %v4815, %v4835
      %v4855 = vadd.f32 %v4816, %v4835
      %v4856 = vadd.f32 %v4817, %v4835
      %v4857 = vadd.f32 %v4818, %v4835
      %v4858 = vadd.f32 %v4819, %v4835
      %v4859 = vadd.f32 %v4820, %v4835
      %v4860 = vadd.f32 %v4821, %v4835
      %v4861 = vadd.f32 %v4822, %v4835
      %v4862 = vadd.f32 %v4823, %v4835
      %v4863 = vadd.f32 %v4824, %v4835
      %v4864 = vadd.f32 %v4825, %v4835
      %v4865 = vadd.f32 %v4826, %v4835
      %v4866 = vadd.f32 %v4827, %v4835
      %v4867 = vadd.f32 %v4828, %v4835
      %v4868 = vadd.f32 %v4829, %v4835
      %v4869 = vmax.f32 %v4837, 0.0
      %v4870 = vmax.f32 %v4838, 0.0
      %v4871 = vmax.f32 %v4839, 0.0
      %v4872 = vmax.f32 %v4840, 0.0
      %v4873 = vmax.f32 %v4841, 0.0
      %v4874 = vmax.f32 %v4842, 0.0
      %v4875 = vmax.f32 %v4843, 0.0
      %v4876 = vmax.f32 %v4844, 0.0
      %v4877 = vmax.f32 %v4845, 0.0
      %v4878 = vmax.f32 %v4846, 0.0
      %v4879 = vmax.f32 %v4847, 0.0
      %v4880 = vmax.f32 %v4848, 0.0
      %v4881 = vmax.f32 %v4849, 0.0
      %v4882 = vmax.f32 %v4850, 0.0
      %v4883 = vmax.f32 %v4851, 0.0
      %v4884 = vmax.f32 %v4852, 0.0
      %v4885 = vmax.f32 %v4853, 0.0
      %v4886 = vmax.f32 %v4854, 0.0
      %v4887 = vmax.f32 %v4855, 0.0
      %v4888 = vmax.f32 %v4856, 0.0
      %v4889 = vmax.f32 %v4857, 0.0
      %v4890 = vmax.f32 %v4858, 0.0
      %v4891 = vmax.f32 %v4859, 0.0
      %v4892 = vmax.f32 %v4860, 0.0
      %v4893 = vmax.f32 %v4861, 0.0
      %v4894 = vmax.f32 %v4862, 0.0
      %v4895 = vmax.f32 %v4863, 0.0
      %v4896 = vmax.f32 %v4864, 0.0
      %v4897 = vmax.f32 %v4865, 0.0
      %v4898 = vmax.f32 %v4866, 0.0
      %v4899 = vmax.f32 %v4867, 0.0
      %v4900 = vmax.f32 %v4868, 0.0
      %v4901 = vpack.c.bf16 %v4870, %v4869
      %v4902 = vpack.c.bf16 %v4872, %v4871
      %v4903 = vpack.c.bf16 %v4874, %v4873
      %v4904 = vpack.c.bf16 %v4876, %v4875
      %v4905 = vpack.c.bf16 %v4878, %v4877
      %v4906 = vpack.c.bf16 %v4880, %v4879
      %v4907 = vpack.c.bf16 %v4882, %v4881
      %v4908 = vpack.c.bf16 %v4884, %v4883
      %v4909 = vpack.c.bf16 %v4886, %v4885
      %v4910 = vpack.c.bf16 %v4888, %v4887
      %v4911 = vpack.c.bf16 %v4890, %v4889
      %v4912 = vpack.c.bf16 %v4892, %v4891
      %v4913 = vpack.c.bf16 %v4894, %v4893
      %v4914 = vpack.c.bf16 %v4896, %v4895
      %v4915 = vpack.c.bf16 %v4898, %v4897
      %v4916 = vpack.c.bf16 %v4900, %v4899
      %v4933 = vunpack.c.l.b16 %v4901
      %v4934 = vunpack.c.h.b16 %v4901
      %v4935 = vunpack.c.l.b16 %v4902
      %v4936 = vunpack.c.h.b16 %v4902
      %v4937 = vunpack.c.l.b16 %v4903
      %v4938 = vunpack.c.h.b16 %v4903
      %v4939 = vunpack.c.l.b16 %v4904
      %v4940 = vunpack.c.h.b16 %v4904
      %v4941 = vunpack.c.l.b16 %v4905
      %v4942 = vunpack.c.h.b16 %v4905
      %v4943 = vunpack.c.l.b16 %v4906
      %v4944 = vunpack.c.h.b16 %v4906
      %v4945 = vunpack.c.l.b16 %v4907
      %v4946 = vunpack.c.h.b16 %v4907
      %v4947 = vunpack.c.l.b16 %v4908
      %v4948 = vunpack.c.h.b16 %v4908
      %v4949 = vunpack.c.l.b16 %v4909
      %v4950 = vunpack.c.h.b16 %v4909
      %v4951 = vunpack.c.l.b16 %v4910
      %v4952 = vunpack.c.h.b16 %v4910
      %v4953 = vunpack.c.l.b16 %v4911
      %v4954 = vunpack.c.h.b16 %v4911
      %v4955 = vunpack.c.l.b16 %v4912
      %v4956 = vunpack.c.h.b16 %v4912
      %v4957 = vunpack.c.l.b16 %v4913
      %v4958 = vunpack.c.h.b16 %v4913
      %v4959 = vunpack.c.l.b16 %v4914
      %v4960 = vunpack.c.h.b16 %v4914
      %v4961 = vunpack.c.l.b16 %v4915
      %v4962 = vunpack.c.h.b16 %v4915
      %v4963 = vunpack.c.l.b16 %v4916
      %v4964 = vunpack.c.h.b16 %v4916
      %v4965 = vpack.c.b16 %v4933, %v4933
      %v4966 = vpack.c.b16 %v4934, %v4934
      %v4967 = vpack.c.b16 %v4935, %v4935
      %v4968 = vpack.c.b16 %v4936, %v4936
      %v4969 = vpack.c.b16 %v4937, %v4937
      %v4970 = vpack.c.b16 %v4938, %v4938
      %v4971 = vpack.c.b16 %v4939, %v4939
      %v4972 = vpack.c.b16 %v4940, %v4940
      %v4973 = vpack.c.b16 %v4941, %v4941
      %v4974 = vpack.c.b16 %v4942, %v4942
      %v4975 = vpack.c.b16 %v4943, %v4943
      %v4976 = vpack.c.b16 %v4944, %v4944
      %v4977 = vpack.c.b16 %v4945, %v4945
      %v4978 = vpack.c.b16 %v4946, %v4946
      %v4979 = vpack.c.b16 %v4947, %v4947
      %v4980 = vpack.c.b16 %v4948, %v4948
      %v4981 = vpack.c.b16 %v4949, %v4949
      %v4982 = vpack.c.b16 %v4950, %v4950
      %v4983 = vpack.c.b16 %v4951, %v4951
      %v4984 = vpack.c.b16 %v4952, %v4952
      %v4985 = vpack.c.b16 %v4953, %v4953
      %v4986 = vpack.c.b16 %v4954, %v4954
      %v4987 = vpack.c.b16 %v4955, %v4955
      %v4988 = vpack.c.b16 %v4956, %v4956
      %v4989 = vpack.c.b16 %v4957, %v4957
      %v4990 = vpack.c.b16 %v4958, %v4958
      %v4991 = vpack.c.b16 %v4959, %v4959
      %v4992 = vpack.c.b16 %v4960, %v4960
      %v4993 = vpack.c.b16 %v4961, %v4961
      %v4994 = vpack.c.b16 %v4962, %v4962
      %v4995 = vpack.c.b16 %v4963, %v4963
      %v4996 = vpack.c.b16 %v4964, %v4964
      %vm5029 = vcmask 519168
      %5030 = vst.msk [vmem:[%s219] sm:$0xf] %vm5029, %v4965
      %5031 = vst.msk [vmem:[%s219 + $0x4] sm:$0xf] %vm5029, %v4966
      %5032 = vst.msk [vmem:[%s219 + $0x8] sm:$0xf] %vm5029, %v4967
      %5033 = vst.msk [vmem:[%s219 + $0xc] sm:$0xf] %vm5029, %v4968
      %5034 = vst.msk [vmem:[%s219 + $0x10] sm:$0xf] %vm5029, %v4969
      %5035 = vst.msk [vmem:[%s219 + $0x14] sm:$0xf] %vm5029, %v4970
      %5036 = vst.msk [vmem:[%s219 + $0x18] sm:$0xf] %vm5029, %v4971
      %5037 = vst.msk [vmem:[%s219 + $0x1c] sm:$0xf] %vm5029, %v4972
      %5038 = vst.msk [vmem:[%s219 + $0x20] sm:$0xf] %vm5029, %v4973
      %5039 = vst.msk [vmem:[%s219 + $0x24] sm:$0xf] %vm5029, %v4974
      %5040 = vst.msk [vmem:[%s219 + $0x28] sm:$0xf] %vm5029, %v4975
      %5041 = vst.msk [vmem:[%s219 + $0x2c] sm:$0xf] %vm5029, %v4976
      %5042 = vst.msk [vmem:[%s219 + $0x30] sm:$0xf] %vm5029, %v4977
      %5043 = vst.msk [vmem:[%s219 + $0x34] sm:$0xf] %vm5029, %v4978
      %5044 = vst.msk [vmem:[%s219 + $0x38] sm:$0xf] %vm5029, %v4979
      %5045 = vst.msk [vmem:[%s219 + $0x3c] sm:$0xf] %vm5029, %v4980
      %5046 = vst.msk [vmem:[%s219 + $0x40] sm:$0xf] %vm5029, %v4981
      %5047 = vst.msk [vmem:[%s219 + $0x44] sm:$0xf] %vm5029, %v4982
      %5048 = vst.msk [vmem:[%s219 + $0x48] sm:$0xf] %vm5029, %v4983
      %5049 = vst.msk [vmem:[%s219 + $0x4c] sm:$0xf] %vm5029, %v4984
      %5050 = vst.msk [vmem:[%s219 + $0x50] sm:$0xf] %vm5029, %v4985
      %5051 = vst.msk [vmem:[%s219 + $0x54] sm:$0xf] %vm5029, %v4986
      %5052 = vst.msk [vmem:[%s219 + $0x58] sm:$0xf] %vm5029, %v4987
      %5053 = vst.msk [vmem:[%s219 + $0x5c] sm:$0xf] %vm5029, %v4988
      %5054 = vst.msk [vmem:[%s219 + $0x60] sm:$0xf] %vm5029, %v4989
      %5055 = vst.msk [vmem:[%s219 + $0x64] sm:$0xf] %vm5029, %v4990
      %5056 = vst.msk [vmem:[%s219 + $0x68] sm:$0xf] %vm5029, %v4991
      %5057 = vst.msk [vmem:[%s219 + $0x6c] sm:$0xf] %vm5029, %v4992
      %5058 = vst.msk [vmem:[%s219 + $0x70] sm:$0xf] %vm5029, %v4993
      %5059 = vst.msk [vmem:[%s219 + $0x74] sm:$0xf] %vm5029, %v4994
      %5060 = vst.msk [vmem:[%s219 + $0x78] sm:$0xf] %vm5029, %v4995
      %5061 = vst.msk [vmem:[%s219 + $0x7c] sm:$0xf] %vm5029, %v4996
      %s5062 = smul.u32 32, %s20
      %p5063 = scmp.lt.s32.totalorder %s19, 1
      %s5064 = scalar_select %p5063, %s19, 1
      %p5065 = scmp.lt.s32.totalorder %s5062, 31
      %s5066 = scalar_select %p5065, %s5062, 31
      %s5067 = smul.addr %s5064, 32
      %s5068 = sadd.s32 %s5066, %s5067
      %s5069 = smul.addr %s5068, 4
      %s5070 = scalar_lea.vmem %s4, %s5069
      // Predicated region
      $region37: #{conv_block_attention_forward.3} parent=35 // pred_check
        %p5071 = pneg %p136
      $region38: #{conv_block_attention_forward.3} parent=35 // pred_check_branch
        %5073 = sbr.rel (%p5071) target = $region40
      $region39: #{conv_block_attention_forward.3} parent=35 // pred_region
        %s5074 = smul.u32 32, %s20
      $region40: #{conv_block_attention_forward.3} parent=35 // pred_fallthru
        _
    $region36: #{conv_block_attention_forward.3} parent=5 // pred_fallthru
      _
    %p5075 = scmp.le.s32.totalorder 2, %s10
    // Predicated region
    $region41: #{conv_block_attention_forward.3} parent=5 // pred_check
      %p5076 = pneg %p5075
    $region42: #{conv_block_attention_forward.3} parent=5 // pred_check_branch
      %5078 = sbr.rel (%p5076) target = $region44
    $region43: #{conv_block_attention_forward.3} parent=5 // pred_region
      %s5079 = ssub.s32 %s10, 2
      // Predicated region
      $region45: #{conv_block_attention_forward.3} parent=43 // pred_check
        %p5080 = pneg %p142
      $region46: #{conv_block_attention_forward.3} parent=43 // pred_check_branch
        %5082 = sbr.rel (%p5080) target = $region48
      $region47: #{conv_block_attention_forward.3} parent=43 // pred_region
        %s5083 = smul.u32 32, %s22
        %p5084 = scmp.lt.s32.totalorder %s21, 1
        %s5085 = scalar_select %p5084, %s21, 1
        %p5086 = scmp.lt.s32.totalorder %s5083, 31
        %s5087 = scalar_select %p5086, %s5083, 31
        %s5088 = smul.addr %s5085, 32
        %s5089 = sadd.s32 %s5087, %s5088
        %s5090 = smul.addr %s5089, 4
        %s5091 = scalar_lea.vmem %s4, %s5090
      $region48: #{conv_block_attention_forward.3} parent=43 // pred_fallthru
        _
    $region44: #{conv_block_attention_forward.3} parent=5 // pred_fallthru
      _
  $region6: #{conv_block_attention_forward.3} parent=0 // loop_footer
    %s14 = sadd.s32 1, %s10
  $region7: #{conv_block_attention_forward.3} parent=0 // loop_footer_branch
    %9 = sbr.rel target = $region3
  $region8: #{conv_block_attention_forward.3} parent=0 // loop_exit
    _

// kernel: conv_block_attention_forward.4
$region0: #{conv_block_attention_forward.4}
  #allocation0 [shape = 'u32[]', space=smem, size = 0x4, offset = 0x4, fixed_abs, tag = 'smem constant byte address 0x4 - core index']
  #allocation1 [shape = 'u32[144,128]{1,0:T(1,128)}', space=vmem, size = 0x12000, scoped, tag = 'internal scratch']
  %s0 = inlined_call_operand.vmem [shape: bf16[2,18,18,64], index: 0, kind: input, shape index: {}]
  %s1 = inlined_call_operand.vmem [shape: bf16[9,64,64], index: 1, kind: input, shape index: {}]
  %s2 = inlined_call_operand.vmem [shape: f32[1,64], index: 2, kind: input, shape index: {}]
  %s3 = inlined_call_operand.vmem [shape: f32[1,64], index: 3, kind: input, shape index: {}]
  %s4 = inlined_call_operand.vmem [shape: bf16[2,256,64], index: 4, kind: output, shape index: {}]
  %s5 = sld [smem:[#allocation0]]
  $region49: #{conv_block_attention_forward.4} parent=0
    _
  %s7 = ssub.s32 1, %s5
  %s8 = scalar_select 0, %s7, %s5
  loop: start=0, step=1, limit=4
  $region2: #{conv_block_attention_forward.4} parent=0 // loop_pre_header
    _
  $region3: #{conv_block_attention_forward.4} parent=0 // loop_header
    %s10 = sphi 0, %s14
    %p11 = scmp.ge.s32.totalorder %s10, 4
    %s17 = sphi 0, %s29
    %s18 = sphi 0, %s25
    %s19 = sphi 0, %s17
    %s20 = sphi 0, %s18
    %s21 = sphi 0, %s19
    %s22 = sphi 0, %s20
    %s32 = sphi 0, %s34
    %s35 = sphi 0, %s32
    %s36 = sphi 0, %s35
    %s52 = sphi 0, %s36
    %s56 = sphi 0, %s56
    %s58 = sphi 0, %s56
    %s59 = sphi 0, %s58
    %s73 = sphi 0, %s59
    %s77 = sphi 0, %s77
    %s79 = sphi 0, %s77
    %s80 = sphi 0, %s79
    %s94 = sphi 0, %s80
    %s98 = sphi 0, %s98
    %s100 = sphi 0, %s98
    %s101 = sphi 0, %s100
    %s115 = sphi 0, %s101
    %s123 = sphi 0, %s125
    %s126 = sphi 0, %s123
    %s127 = sphi 0, %s126
    %s143 = sphi 0, %s127
  $region4: #{conv_block_attention_forward.4} parent=0 // loop_header_branch
    %13 = sbr.rel (%p11) target = $region8
  $region5: #{conv_block_attention_forward.4} parent=0 // loop_body
    %s15 = ssub.s32 %s10, 1
    %s16 = ssub.s32 %s10, 2
    %s23 = sadd.s32 1, %s18
    %p24 = scmp.ge.s32.totalorder %s23, 1
    %s25 = scalar_select %p24, 0, %s23
    %s26 = sadd.s32 1, %s17
    %s27 = scalar_select %p24, %s26, %s17
    %p28 = scmp.ge.s32.totalorder %s27, 2
    %s29 = scalar_select %p28, 0, %s27
    %s30 = ssub.s32 %s17, %s29
    %p31 = scmp.eq.s32.totalorder %s30, 0
    %s33 = sadd.s32 %s32, 1
    %s34 = scalar_select %p31, %s32, %s33
    %p37 = pneg %p31
    %p38 = scmp.eq.s32.totalorder %s10, 1
    %p39 = por %p37, %p38
    %p40 = scmp.ne.s32.totalorder %s32, %s35
    %p41 = scmp.eq.s32.totalorder %s10, 0
    %p42 = por %p40, %p41
    %p43 = scmp.ne.s32.totalorder %s32, %s35
    %p44 = scmp.eq.s32.totalorder %s15, 1
    %p45 = por %p43, %p44
    %p46 = scmp.ne.s32.totalorder %s35, %s36
    %p47 = scmp.eq.s32.totalorder %s15, 0
    %p48 = por %p46, %p47
    %p49 = scmp.ne.s32.totalorder %s35, %s36
    %p50 = scmp.eq.s32.totalorder %s16, 1
    %p51 = por %p49, %p50
    %p53 = scmp.ne.s32.totalorder %s36, %s52
    %p54 = scmp.eq.s32.totalorder %s16, 0
    %p55 = por %p53, %p54
    %s57 = sadd.s32 %s56, 1
    %p60 = scmp.eq.s32.totalorder %s10, 1
    %p61 = scmp.ne.s32.totalorder %s56, %s58
    %p62 = scmp.eq.s32.totalorder %s10, 0
    %p63 = por %p61, %p62
    %p64 = scmp.ne.s32.totalorder %s56, %s58
    %p65 = scmp.eq.s32.totalorder %s15, 1
    %p66 = por %p64, %p65
    %p67 = scmp.ne.s32.totalorder %s58, %s59
    %p68 = scmp.eq.s32.totalorder %s15, 0
    %p69 = por %p67, %p68
    %p70 = scmp.ne.s32.totalorder %s58, %s59
    %p71 = scmp.eq.s32.totalorder %s16, 1
    %p72 = por %p70, %p71
    %p74 = scmp.ne.s32.totalorder %s59, %s73
    %p75 = scmp.eq.s32.totalorder %s16, 0
    %p76 = por %p74, %p75
    %s78 = sadd.s32 %s77, 1
    %p81 = scmp.eq.s32.totalorder %s10, 1
    %p82 = scmp.ne.s32.totalorder %s77, %s79
    %p83 = scmp.eq.s32.totalorder %s10, 0
    %p84 = por %p82, %p83
    %p85 = scmp.ne.s32.totalorder %s77, %s79
    %p86 = scmp.eq.s32.totalorder %s15, 1
    %p87 = por %p85, %p86
    %p88 = scmp.ne.s32.totalorder %s79, %s80
    %p89 = scmp.eq.s32.totalorder %s15, 0
    %p90 = por %p88, %p89
    %p91 = scmp.ne.s32.totalorder %s79, %s80
    %p92 = scmp.eq.s32.totalorder %s16, 1
    %p93 = por %p91, %p92
    %p95 = scmp.ne.s32.totalorder %s80, %s94
    %p96 = scmp.eq.s32.totalorder %s16, 0
    %p97 = por %p95, %p96
    %s99 = sadd.s32 %s98, 1
    %p102 = scmp.eq.s32.totalorder %s10, 1
    %p103 = scmp.ne.s32.totalorder %s98, %s100
    %p104 = scmp.eq.s32.totalorder %s10, 0
    %p105 = por %p103, %p104
    %p106 = scmp.ne.s32.totalorder %s98, %s100
    %p107 = scmp.eq.s32.totalorder %s15, 1
    %p108 = por %p106, %p107
    %p109 = scmp.ne.s32.totalorder %s100, %s101
    %p110 = scmp.eq.s32.totalorder %s15, 0
    %p111 = por %p109, %p110
    %p112 = scmp.ne.s32.totalorder %s100, %s101
    %p113 = scmp.eq.s32.totalorder %s16, 1
    %p114 = por %p112, %p113
    %p116 = scmp.ne.s32.totalorder %s101, %s115
    %p117 = scmp.eq.s32.totalorder %s16, 0
    %p118 = por %p116, %p117
    %s119 = ssub.s32 %s17, %s29
    %s120 = ssub.s32 %s18, %s25
    %s121 = sor.u32 %s119, %s120
    %p122 = scmp.eq.s32.totalorder %s121, 0
    %s124 = sadd.s32 %s123, 1
    %s125 = scalar_select %p122, %s123, %s124
    %p128 = pneg %p122
    %p129 = scmp.eq.s32.totalorder %s10, 1
    %p130 = por %p128, %p129
    %p131 = scmp.ne.s32.totalorder %s123, %s126
    %p132 = scmp.eq.s32.totalorder %s10, 0
    %p133 = por %p131, %p132
    %p134 = scmp.ne.s32.totalorder %s123, %s126
    %p135 = scmp.eq.s32.totalorder %s15, 1
    %p136 = por %p134, %p135
    %p137 = scmp.ne.s32.totalorder %s126, %s127
    %p138 = scmp.eq.s32.totalorder %s15, 0
    %p139 = por %p137, %p138
    %p140 = scmp.ne.s32.totalorder %s126, %s127
    %p141 = scmp.eq.s32.totalorder %s16, 1
    %p142 = por %p140, %p141
    %p144 = scmp.ne.s32.totalorder %s127, %s143
    %p145 = scmp.eq.s32.totalorder %s16, 0
    %p146 = por %p144, %p145
    %p147 = scmp.le.s32.totalorder 1, %s10
    %p148 = scmp.lt.s32.totalorder %s10, 3
    %p149 = pnand %p147, %p148
    %p150 = pneg %p149
    // Predicated region
    $region9: #{conv_block_attention_forward.4} parent=5 // pred_check
      _
    $region10: #{conv_block_attention_forward.4} parent=5 // pred_check_branch
      %152 = sbr.rel (%p149) target = $region12
    $region11: #{conv_block_attention_forward.4} parent=5 // pred_region
      %s153 = ssub.s32 %s10, 1
      // Predicated region
      $region13: #{conv_block_attention_forward.4} parent=11 // pred_check
        %p154 = pneg %p69
      $region14: #{conv_block_attention_forward.4} parent=11 // pred_check_branch
        %156 = sbr.rel (%p154) target = $region16
      $region15: #{conv_block_attention_forward.4} parent=11 // pred_region
        _
      $region16: #{conv_block_attention_forward.4} parent=11 // pred_fallthru
        _
      // Predicated region
      $region17: #{conv_block_attention_forward.4} parent=11 // pred_check
        %p157 = pneg %p90
      $region18: #{conv_block_attention_forward.4} parent=11 // pred_check_branch
        %159 = sbr.rel (%p157) target = $region20
      $region19: #{conv_block_attention_forward.4} parent=11 // pred_region
        _
      $region20: #{conv_block_attention_forward.4} parent=11 // pred_fallthru
        _
      // Predicated region
      $region21: #{conv_block_attention_forward.4} parent=11 // pred_check
        %p160 = pneg %p111
      $region22: #{conv_block_attention_forward.4} parent=11 // pred_check_branch
        %162 = sbr.rel (%p160) target = $region24
      $region23: #{conv_block_attention_forward.4} parent=11 // pred_region
        _
      $region24: #{conv_block_attention_forward.4} parent=11 // pred_fallthru
        _
    $region12: #{conv_block_attention_forward.4} parent=5 // pred_fallthru
      _
    %p163 = scmp.lt.s32.totalorder %s10, 2
    // Predicated region
    $region25: #{conv_block_attention_forward.4} parent=5 // pred_check
      %p164 = pneg %p163
    $region26: #{conv_block_attention_forward.4} parent=5 // pred_check_branch
      %166 = sbr.rel (%p164) target = $region28
    $region27: #{conv_block_attention_forward.4} parent=5 // pred_region
      // Predicated region
      $region29: #{conv_block_attention_forward.4} parent=27 // pred_check
        %p167 = pneg %p42
      $region30: #{conv_block_attention_forward.4} parent=27 // pred_check_branch
        %169 = sbr.rel (%p167) target = $region32
      $region31: #{conv_block_attention_forward.4} parent=27 // pred_region
        %p170 = scmp.lt.s32.totalorder %s17, 1
        %s171 = scalar_select %p170, %s17, 1
        %s172 = smul.addr %s171, 54
        %s173 = smul.addr %s172, 4
        %s174 = scalar_lea.vmem %s0, %s173
      $region32: #{conv_block_attention_forward.4} parent=27 // pred_fallthru
        _
    $region28: #{conv_block_attention_forward.4} parent=5 // pred_fallthru
      _
    %p175 = scmp.le.s32.totalorder 1, %s10
    %p176 = scmp.lt.s32.totalorder %s10, 3
    %p177 = pnand %p175, %p176
    %p178 = pneg %p177
    // Predicated region
    $region33: #{conv_block_attention_forward.4} parent=5 // pred_check
      _
    $region34: #{conv_block_attention_forward.4} parent=5 // pred_check_branch
      %180 = sbr.rel (%p177) target = $region36
    $region35: #{conv_block_attention_forward.4} parent=5 // pred_region
      %s181 = ssub.s32 %s10, 1
      %p182 = scmp.lt.s32.totalorder %s19, 1
      %s183 = scalar_select %p182, %s19, 1
      %s184 = smul.addr %s183, 54
      %s185 = smul.addr %s184, 4
      %s186 = scalar_lea.vmem %s0, %s185
      %p187 = pneg %p48
      %p188 = pneg %p45
      %p189 = pneg %p69
      %p190 = pneg %p66
      %p191 = pneg %p90
      %p192 = pneg %p87
      %p193 = pneg %p111
      %p194 = pneg %p108
      %p195 = pneg %p139
      %p196 = pneg %p136
      %s197 = smul.u32 32, %s20
      %p198 = scmp.lt.s32.totalorder %s19, 1
      %s199 = scalar_select %p198, %s19, 1
      %p200 = scmp.lt.s32.totalorder %s197, 31
      %s201 = scalar_select %p200, %s197, 31
      %s202 = smul.addr %s199, 32
      %s203 = sadd.s32 %s201, %s202
      %s204 = smul.addr %s203, 4
      %s205 = scalar_lea.vmem %s4, %s204
      %p206 = scmp.lt.s32.totalorder %s19, 1
      %s207 = scalar_select %p206, %s19, 1
      %s208 = smul.addr %s207, 54
      %s209 = smul.addr %s208, 4
      %s210 = scalar_lea.vmem %s0, %s209
      %s211 = smul.u32 32, %s20
      %p212 = scmp.lt.s32.totalorder %s19, 1
      %s213 = scalar_select %p212, %s19, 1
      %p214 = scmp.lt.s32.totalorder %s211, 31
      %s215 = scalar_select %p214, %s211, 31
      %s216 = smul.addr %s213, 32
      %s217 = sadd.s32 %s215, %s216
      %s218 = smul.addr %s217, 4
      %s219 = scalar_lea.vmem %s4, %s218
      %s220 = smul.u32 32, %s20
      %s222 = smul.u32 %s20, 16
      %s223 = smul.u32 %s222, 3
      %s224 = smul.addr %s223, 4
      %s225 = scalar_lea.vmem %s210, %s224
      %v226 = vld [vmem:[%s225] sm:$0xf]
      %v227 = vld [vmem:[%s225 + $0x4] sm:$0xf]
      %v228 = vld [vmem:[%s225 + $0xc] sm:$0xf]
      %v229 = vld [vmem:[%s225 + $0x10] sm:$0xf]
      %v230 = vld [vmem:[%s225 + $0x18] sm:$0xf]
      %v231 = vld [vmem:[%s225 + $0x1c] sm:$0xf]
      %v232 = vld [vmem:[%s225 + $0x24] sm:$0xf]
      %v233 = vld [vmem:[%s225 + $0x28] sm:$0xf]
      %v234 = vld [vmem:[%s225 + $0x30] sm:$0xf]
      %v235 = vld [vmem:[%s225 + $0x34] sm:$0xf]
      %v236 = vld [vmem:[%s225 + $0x3c] sm:$0xf]
      %v237 = vld [vmem:[%s225 + $0x40] sm:$0xf]
      %v238 = vld [vmem:[%s225 + $0x48] sm:$0xf]
      %v239 = vld [vmem:[%s225 + $0x4c] sm:$0xf]
      %v240 = vld [vmem:[%s225 + $0x54] sm:$0xf]
      %v241 = vld [vmem:[%s225 + $0x58] sm:$0xf]
      %v242 = vld [vmem:[%s225 + $0x60] sm:$0xf]
      %v243 = vld [vmem:[%s225 + $0x64] sm:$0xf]
      %v244 = vld [vmem:[%s225 + $0x6c] sm:$0xf]
      %v245 = vld [vmem:[%s225 + $0x70] sm:$0xf]
      %v246 = vld [vmem:[%s225 + $0x78] sm:$0xf]
      %v247 = vld [vmem:[%s225 + $0x7c] sm:$0xf]
      %v248 = vld [vmem:[%s225 + $0x84] sm:$0xf]
      %v249 = vld [vmem:[%s225 + $0x88] sm:$0xf]
      %v250 = vld [vmem:[%s225 + $0x90] sm:$0xf]
      %v251 = vld [vmem:[%s225 + $0x94] sm:$0xf]
      %v252 = vld [vmem:[%s225 + $0x9c] sm:$0xf]
      %v253 = vld [vmem:[%s225 + $0xa0] sm:$0xf]
      %v254 = vld [vmem:[%s225 + $0xa8] sm:$0xf]
      %v255 = vld [vmem:[%s225 + $0xac] sm:$0xf]
      %v256 = vld [vmem:[%s225 + $0xb4] sm:$0xf]
      %v257 = vld [vmem:[%s225 + $0xb8] sm:$0xf]
      %v258 = vld [vmem:[%s1] sm:$0xf]
      %v259 = vld [vmem:[%s1 + $0x4] sm:$0xf]
      %v260 = vld [vmem:[%s1 + $0x8] sm:$0xf]
      %v261 = vld [vmem:[%s1 + $0xc] sm:$0xf]
      %v262 = vld [vmem:[%s1 + $0x10] sm:$0xf]
      %v263 = vld [vmem:[%s1 + $0x14] sm:$0xf]
      %v264 = vld [vmem:[%s1 + $0x18] sm:$0xf]
      %v265 = vld [vmem:[%s1 + $0x1c] sm:$0xf]
      %v266 = vld [vmem:[%s225 + $0x8] sm:$0x1]
      %v267 = vld [vmem:[%s225 + $0x14] sm:$0x1]
      %v268 = vld [vmem:[%s225 + $0x20] sm:$0x1]
      %v269 = vld [vmem:[%s225 + $0x2c] sm:$0x1]
      %v270 = vld [vmem:[%s225 + $0x38] sm:$0x1]
      %v271 = vld [vmem:[%s225 + $0x44] sm:$0x1]
      %v272 = vld [vmem:[%s225 + $0x50] sm:$0x1]
      %v273 = vld [vmem:[%s225 + $0x5c] sm:$0x1]
      %v274 = vld [vmem:[%s225 + $0x68] sm:$0x1]
      %v275 = vld [vmem:[%s225 + $0x74] sm:$0x1]
      %v276 = vld [vmem:[%s225 + $0x80] sm:$0x1]
      %v277 = vld [vmem:[%s225 + $0x8c] sm:$0x1]
      %v278 = vld [vmem:[%s225 + $0x98] sm:$0x1]
      %v279 = vld [vmem:[%s225 + $0xa4] sm:$0x1]
      %v280 = vld [vmem:[%s225 + $0xb0] sm:$0x1]
      %v281 = vld [vmem:[%s225 + $0xbc] sm:$0x1]
      %vm282 = vsmask.f32 3328
      %vm283 = vsmask.f32 7440
      %vm284 = vmor %vm282, %vm283
      %v286 = vshrl.u32 %v226, 16
      %v288 = vrot.slane %v286, 4
      %v289 = vshll.u32 %v226, 16
      %v291 = vrot.slane %v289, 5
      %v292 = vor.u32 %v288, %v291
      %v293 = vrot.slane %v292, 4
      %v295 = vshll.u32 %v227, 16
      %v297 = vrot.slane %v295, 5
      %v298 = vsel %vm284, %v293, %v297
      %v299 = vshrl.u32 %v227, 16
      %v301 = vrot.slane %v299, 4
      %v302 = vor.u32 %v301, %v297
      %v303 = vrot.slane %v302, 4
      %v305 = vshll.u32 %v266, 16
      %v307 = vrot.slane %v305, 5
      %v308 = vsel %vm284, %v303, %v307
      %v310 = vshrl.u32 %v228, 16
      %v312 = vrot.slane %v310, 4
      %v313 = vshll.u32 %v228, 16
      %v315 = vrot.slane %v313, 5
      %v316 = vor.u32 %v312, %v315
      %v317 = vrot.slane %v316, 4
      %v319 = vshll.u32 %v229, 16
      %v321 = vrot.slane %v319, 5
      %v322 = vsel %vm284, %v317, %v321
      %v323 = vshrl.u32 %v229, 16
      %v325 = vrot.slane %v323, 4
      %v326 = vor.u32 %v325, %v321
      %v327 = vrot.slane %v326, 4
      %v329 = vshll.u32 %v267, 16
      %v331 = vrot.slane %v329, 5
      %v332 = vsel %vm284, %v327, %v331
      %v334 = vshrl.u32 %v230, 16
      %v336 = vrot.slane %v334, 4
      %v337 = vshll.u32 %v230, 16
      %v339 = vrot.slane %v337, 5
      %v340 = vor.u32 %v336, %v339
      %v341 = vrot.slane %v340, 4
      %v343 = vshll.u32 %v231, 16
      %v345 = vrot.slane %v343, 5
      %v346 = vsel %vm284, %v341, %v345
      %v347 = vshrl.u32 %v231, 16
      %v349 = vrot.slane %v347, 4
      %v350 = vor.u32 %v349, %v345
      %v351 = vrot.slane %v350, 4
      %v353 = vshll.u32 %v268, 16
      %v355 = vrot.slane %v353, 5
      %v356 = vsel %vm284, %v351, %v355
      %v358 = vshrl.u32 %v232, 16
      %v360 = vrot.slane %v358, 4
      %v361 = vshll.u32 %v232, 16
      %v363 = vrot.slane %v361, 5
      %v364 = vor.u32 %v360, %v363
      %v365 = vrot.slane %v364, 4
      %v367 = vshll.u32 %v233, 16
      %v369 = vrot.slane %v367, 5
      %v370 = vsel %vm284, %v365, %v369
      %v371 = vshrl.u32 %v233, 16
      %v373 = vrot.slane %v371, 4
      %v374 = vor.u32 %v373, %v369
      %v375 = vrot.slane %v374, 4
      %v377 = vshll.u32 %v269, 16
      %v379 = vrot.slane %v377, 5
      %v380 = vsel %vm284, %v375, %v379
      %v382 = vshrl.u32 %v234, 16
      %v384 = vrot.slane %v382, 4
      %v385 = vshll.u32 %v234, 16
      %v387 = vrot.slane %v385, 5
      %v388 = vor.u32 %v384, %v387
      %v389 = vrot.slane %v388, 4
      %v391 = vshll.u32 %v235, 16
      %v393 = vrot.slane %v391, 5
      %v394 = vsel %vm284, %v389, %v393
      %v395 = vshrl.u32 %v235, 16
      %v397 = vrot.slane %v395, 4
      %v398 = vor.u32 %v397, %v393
      %v399 = vrot.slane %v398, 4
      %v401 = vshll.u32 %v270, 16
      %v403 = vrot.slane %v401, 5
      %v404 = vsel %vm284, %v399, %v403
      %v406 = vshrl.u32 %v236, 16
      %v408 = vrot.slane %v406, 4
      %v409 = vshll.u32 %v236, 16
      %v411 = vrot.slane %v409, 5
      %v412 = vor.u32 %v408, %v411
      %v413 = vrot.slane %v412, 4
      %v415 = vshll.u32 %v237, 16
      %v417 = vrot.slane %v415, 5
      %v418 = vsel %vm284, %v413, %v417
      %v419 = vshrl.u32 %v237, 16
      %v421 = vrot.slane %v419, 4
      %v422 = vor.u32 %v421, %v417
      %v423 = vrot.slane %v422, 4
      %v425 = vshll.u32 %v271, 16
      %v427 = vrot.slane %v425, 5
      %v428 = vsel %vm284, %v423, %v427
      %v430 = vshrl.u32 %v238, 16
      %v432 = vrot.slane %v430, 4
      %v433 = vshll.u32 %v238, 16
      %v435 = vrot.slane %v433, 5
      %v436 = vor.u32 %v432, %v435
      %v437 = vrot.slane %v436, 4
      %v439 = vshll.u32 %v239, 16
      %v441 = vrot.slane %v439, 5
      %v442 = vsel %vm284, %v437, %v441
      %v443 = vshrl.u32 %v239, 16
      %v445 = vrot.slane %v443, 4
      %v446 = vor.u32 %v445, %v441
      %v447 = vrot.slane %v446, 4
      %v449 = vshll.u32 %v272, 16
      %v451 = vrot.slane %v449, 5
      %v452 = vsel %vm284, %v447, %v451
      %v454 = vshrl.u32 %v240, 16
      %v456 = vrot.slane %v454, 4
      %v457 = vshll.u32 %v240, 16
      %v459 = vrot.slane %v457, 5
      %v460 = vor.u32 %v456, %v459
      %v461 = vrot.slane %v460, 4
      %v463 = vshll.u32 %v241, 16
      %v465 = vrot.slane %v463, 5
      %v466 = vsel %vm284, %v461, %v465
      %v467 = vshrl.u32 %v241, 16
      %v469 = vrot.slane %v467, 4
      %v470 = vor.u32 %v469, %v465
      %v471 = vrot.slane %v470, 4
      %v473 = vshll.u32 %v273, 16
      %v475 = vrot.slane %v473, 5
      %v476 = vsel %vm284, %v471, %v475
      %v478 = vshrl.u32 %v242, 16
      %v480 = vrot.slane %v478, 4
      %v481 = vshll.u32 %v242, 16
      %v483 = vrot.slane %v481, 5
      %v484 = vor.u32 %v480, %v483
      %v485 = vrot.slane %v484, 4
      %v487 = vshll.u32 %v243, 16
      %v489 = vrot.slane %v487, 5
      %v490 = vsel %vm284, %v485, %v489
      %v491 = vshrl.u32 %v243, 16
      %v493 = vrot.slane %v491, 4
      %v494 = vor.u32 %v493, %v489
      %v495 = vrot.slane %v494, 4
      %v497 = vshll.u32 %v274, 16
      %v499 = vrot.slane %v497, 5
      %v500 = vsel %vm284, %v495, %v499
      %v502 = vshrl.u32 %v244, 16
      %v504 = vrot.slane %v502, 4
      %v505 = vshll.u32 %v244, 16
      %v507 = vrot.slane %v505, 5
      %v508 = vor.u32 %v504, %v507
      %v509 = vrot.slane %v508, 4
      %v511 = vshll.u32 %v245, 16
      %v513 = vrot.slane %v511, 5
      %v514 = vsel %vm284, %v509, %v513
      %v515 = vshrl.u32 %v245, 16
      %v517 = vrot.slane %v515, 4
      %v518 = vor.u32 %v517, %v513
      %v519 = vrot.slane %v518, 4
      %v521 = vshll.u32 %v275, 16
      %v523 = vrot.slane %v521, 5
      %v524 = vsel %vm284, %v519, %v523
      %v526 = vshrl.u32 %v246, 16
      %v528 = vrot.slane %v526, 4
      %v529 = vshll.u32 %v246, 16
      %v531 = vrot.slane %v529, 5
      %v532 = vor.u32 %v528, %v531
      %v533 = vrot.slane %v532, 4
      %v535 = vshll.u32 %v247, 16
      %v537 = vrot.slane %v535, 5
      %v538 = vsel %vm284, %v533, %v537
      %v539 = vshrl.u32 %v247, 16
      %v541 = vrot.slane %v539, 4
      %v542 = vor.u32 %v541, %v537
      %v543 = vrot.slane %v542, 4
      %v545 = vshll.u32 %v276, 16
      %v547 = vrot.slane %v545, 5
      %v548 = vsel %vm284, %v543, %v547
      %v550 = vshrl.u32 %v248, 16
      %v552 = vrot.slane %v550, 4
      %v553 = vshll.u32 %v248, 16
      %v555 = vrot.slane %v553, 5
      %v556 = vor.u32 %v552, %v555
      %v557 = vrot.slane %v556, 4
      %v559 = vshll.u32 %v249, 16
      %v561 = vrot.slane %v559, 5
      %v562 = vsel %vm284, %v557, %v561
      %v563 = vshrl.u32 %v249, 16
      %v565 = vrot.slane %v563, 4
      %v566 = vor.u32 %v565, %v561
      %v567 = vrot.slane %v566, 4
      %v569 = vshll.u32 %v277, 16
      %v571 = vrot.slane %v569, 5
      %v572 = vsel %vm284, %v567, %v571
      %v574 = vshrl.u32 %v250, 16
      %v576 = vrot.slane %v574, 4
      %v577 = vshll.u32 %v250, 16
      %v579 = vrot.slane %v577, 5
      %v580 = vor.u32 %v576, %v579
      %v581 = vrot.slane %v580, 4
      %v583 = vshll.u32 %v251, 16
      %v585 = vrot.slane %v583, 5
      %v586 = vsel %vm284, %v581, %v585
      %v587 = vshrl.u32 %v251, 16
      %v589 = vrot.slane %v587, 4
      %v590 = vor.u32 %v589, %v585
      %v591 = vrot.slane %v590, 4
      %v593 = vshll.u32 %v278, 16
      %v595 = vrot.slane %v593, 5
      %v596 = vsel %vm284, %v591, %v595
      %v598 = vshrl.u32 %v252, 16
      %v600 = vrot.slane %v598, 4
      %v601 = vshll.u32 %v252, 16
      %v603 = vrot.slane %v601, 5
      %v604 = vor.u32 %v600, %v603
      %v605 = vrot.slane %v604, 4
      %v607 = vshll.u32 %v253, 16
      %v609 = vrot.slane %v607, 5
      %v610 = vsel %vm284, %v605, %v609
      %v611 = vshrl.u32 %v253, 16
      %v613 = vrot.slane %v611, 4
      %v614 = vor.u32 %v613, %v609
      %v615 = vrot.slane %v614, 4
      %v617 = vshll.u32 %v279, 16
      %v619 = vrot.slane %v617, 5
      %v620 = vsel %vm284, %v615, %v619
      %v622 = vshrl.u32 %v254, 16
      %v624 = vrot.slane %v622, 4
      %v625 = vshll.u32 %v254, 16
      %v627 = vrot.slane %v625, 5
      %v628 = vor.u32 %v624, %v627
      %v629 = vrot.slane %v628, 4
      %v631 = vshll.u32 %v255, 16
      %v633 = vrot.slane %v631, 5
      %v634 = vsel %vm284, %v629, %v633
      %v635 = vshrl.u32 %v255, 16
      %v637 = vrot.slane %v635, 4
      %v638 = vor.u32 %v637, %v633
      %v639 = vrot.slane %v638, 4
      %v641 = vshll.u32 %v280, 16
      %v643 = vrot.slane %v641, 5
      %v644 = vsel %vm284, %v639, %v643
      %v646 = vshrl.u32 %v256, 16
      %v648 = vrot.slane %v646, 4
      %v649 = vshll.u32 %v256, 16
      %v651 = vrot.slane %v649, 5
      %v652 = vor.u32 %v648, %v651
      %v653 = vrot.slane %v652, 4
      %v655 = vshll.u32 %v257, 16
      %v657 = vrot.slane %v655, 5
      %v658 = vsel %vm284, %v653, %v657
      %v659 = vshrl.u32 %v257, 16
      %v661 = vrot.slane %v659, 4
      %v662 = vor.u32 %v661, %v657
      %v663 = vrot.slane %v662, 4
      %v665 = vshll.u32 %v281, 16
      %v667 = vrot.slane %v665, 5
      %v668 = vsel %vm284, %v663, %v667
      %s669 = scalar_lea.vmem %s1, 32
      %v670 = vld [vmem:[%s669] sm:$0xf]
      %v671 = vld [vmem:[%s669 + $0x4] sm:$0xf]
      %v672 = vld [vmem:[%s669 + $0x8] sm:$0xf]
      %v673 = vld [vmem:[%s669 + $0xc] sm:$0xf]
      %v674 = vld [vmem:[%s669 + $0x10] sm:$0xf]
      %v675 = vld [vmem:[%s669 + $0x14] sm:$0xf]
      %v676 = vld [vmem:[%s669 + $0x18] sm:$0xf]
      %v677 = vld [vmem:[%s669 + $0x1c] sm:$0xf]
      %v678 = vunpack.c.l.b16 %v298
      %v679 = vunpack.c.l.b16 %v308
      %v680 = vunpack.c.l.b16 %v322
      %v681 = vunpack.c.l.b16 %v332
      %v682 = vunpack.c.l.b16 %v346
      %v683 = vunpack.c.l.b16 %v356
      %v684 = vunpack.c.l.b16 %v370
      %v685 = vunpack.c.l.b16 %v380
      %v686 = vunpack.c.l.b16 %v394
      %v687 = vunpack.c.l.b16 %v404
      %v688 = vunpack.c.l.b16 %v418
      %v689 = vunpack.c.l.b16 %v428
      %v690 = vunpack.c.l.b16 %v442
      %v691 = vunpack.c.l.b16 %v452
      %v692 = vunpack.c.l.b16 %v466
      %v693 = vunpack.c.l.b16 %v476
      %v694 = vunpack.c.l.b16 %v490
      %v695 = vunpack.c.l.b16 %v500
      %v696 = vunpack.c.l.b16 %v514
      %v697 = vunpack.c.l.b16 %v524
      %v698 = vunpack.c.l.b16 %v538
      %v699 = vunpack.c.l.b16 %v548
      %v700 = vunpack.c.l.b16 %v562
      %v701 = vunpack.c.l.b16 %v572
      %v702 = vunpack.c.l.b16 %v586
      %v703 = vunpack.c.l.b16 %v596
      %v704 = vunpack.c.l.b16 %v610
      %v705 = vunpack.c.l.b16 %v620
      %v706 = vunpack.c.l.b16 %v634
      %v707 = vunpack.c.l.b16 %v644
      %v708 = vunpack.c.l.b16 %v658
      %v709 = vunpack.c.l.b16 %v668
      %v710 = vpack.c.b16 %v679, %v678
      %v711 = vpack.c.b16 %v681, %v680
      %v712 = vpack.c.b16 %v683, %v682
      %v713 = vpack.c.b16 %v685, %v684
      %v714 = vpack.c.b16 %v687, %v686
      %v715 = vpack.c.b16 %v689, %v688
      %v716 = vpack.c.b16 %v691, %v690
      %v717 = vpack.c.b16 %v693, %v692
      %v718 = vpack.c.b16 %v695, %v694
      %v719 = vpack.c.b16 %v697, %v696
      %v720 = vpack.c.b16 %v699, %v698
      %v721 = vpack.c.b16 %v701, %v700
      %v722 = vpack.c.b16 %v703, %v702
      %v723 = vpack.c.b16 %v705, %v704
      %v724 = vpack.c.b16 %v707, %v706
      %v725 = vpack.c.b16 %v709, %v708
      %v734 = vunpack.c.l.b16 %v670
      %v735 = vunpack.c.l.b16 %v671
      %v736 = vunpack.c.l.b16 %v672
      %v737 = vunpack.c.l.b16 %v673
      %v738 = vunpack.c.l.b16 %v674
      %v739 = vunpack.c.l.b16 %v675
      %v740 = vunpack.c.l.b16 %v676
      %v741 = vunpack.c.l.b16 %v677
      %v742 = vpack.c.b16 %v735, %v734
      %v743 = vpack.c.b16 %v737, %v736
      %v744 = vpack.c.b16 %v739, %v738
      %v745 = vpack.c.b16 %v741, %v740
      %vm750 = vcmask 523264
      %v752 = vsel %vm750, %v710, 0
      %v755 = vsel %vm750, %v711, 0
      %v758 = vsel %vm750, %v712, 0
      %v761 = vsel %vm750, %v713, 0
      %v764 = vsel %vm750, %v714, 0
      %v767 = vsel %vm750, %v715, 0
      %v770 = vsel %vm750, %v716, 0
      %v773 = vsel %vm750, %v717, 0
      %v776 = vsel %vm750, %v718, 0
      %v779 = vsel %vm750, %v719, 0
      %v782 = vsel %vm750, %v720, 0
      %v785 = vsel %vm750, %v721, 0
      %v788 = vsel %vm750, %v722, 0
      %v791 = vsel %vm750, %v723, 0
      %v794 = vsel %vm750, %v724, 0
      %v797 = vsel %vm750, %v725, 0
      %799 = vmatprep.subr.bf16.mxu0 0
      %800 = vmatpush1.bf16.msra.mxu0 0
      %801 = vmatprep.subr.bf16.mxu0 0
      %802 = vmatpush1.bf16.msra.mxu0 0
      %803 = vmatprep.subr.bf16.mxu0 0
      %804 = vmatpush1.bf16.msra.mxu0 0
      %805 = vmatprep.subr.bf16.mxu0 0
      %806 = vmatpush1.bf16.msra.mxu0 0
      %807 = vmatprep.subr.bf16.mxu0 0
      %808 = vmatpush1.bf16.msra.mxu0 %v745
      %809 = vmatprep.subr.bf16.mxu0 0
      %810 = vmatpush1.bf16.msra.mxu0 %v744
      %811 = vmatprep.subr.bf16.mxu0 0
      %812 = vmatpush1.bf16.msra.mxu0 %v743
      %813 = vmatprep.subr.bf16.mxu0 0
      %814 = vmatpush1.bf16.msra.mxu0 %v742
      %815 = vmatprep.subr.bf16.mxu0 0
      %816 = vmatpush2.bf16.msra.mxu0 0
      %817 = vmatprep.subr.bf16.mxu0 0
      %818 = vmatpush2.bf16.msra.mxu0 0
      %819 = vmatprep.subr.bf16.mxu0 0
      %820 = vmatpush2.bf16.msra.mxu0 0
      %821 = vmatprep.subr.bf16.mxu0 0
      %822 = vmatpush2.bf16.msra.mxu0 0
      %823 = vmatprep.subr.bf16.mxu0 0
      %824 = vmatpush2.bf16.msra.mxu0 0
      %825 = vmatprep.subr.bf16.mxu0 0
      %826 = vmatpush2.bf16.msra.mxu0 0
      %827 = vmatprep.subr.bf16.mxu0 0
      %828 = vmatpush2.bf16.msra.mxu0 0
      %829 = vmatprep.subr.bf16.mxu0 0
      %830 = vmatpush2.bf16.msra.mxu0 0
      %831 = vmatprep.mubr.bf16.mxu0 0
      %832 = vmatmul.mubr.bf16.gmra.mxu0 %v752
      %v833 = vpop.f32.mrf.mxu0
      %v834 = vadd.f32 0.0, %v833
      %v835 = vpop.f32.mrf.mxu0
      %v836 = vpop.f32.mrf.mxu0
      %v837 = vadd.f32 0.0, %v836
      %v838 = vpop.f32.mrf.mxu0
      %839 = vmatprep.mubr.bf16.mxu0 0
      %840 = vmatmul.mubr.bf16.gmra.mxu0 %v755
      %v841 = vpop.f32.mrf.mxu0
      %v842 = vadd.f32 0.0, %v841
      %v843 = vpop.f32.mrf.mxu0
      %v844 = vpop.f32.mrf.mxu0
      %v845 = vadd.f32 0.0, %v844
      %v846 = vpop.f32.mrf.mxu0
      %847 = vmatprep.mubr.bf16.mxu0 0
      %848 = vmatmul.mubr.bf16.gmra.mxu0 %v758
      %v849 = vpop.f32.mrf.mxu0
      %v850 = vadd.f32 0.0, %v849
      %v851 = vpop.f32.mrf.mxu0
      %v852 = vpop.f32.mrf.mxu0
      %v853 = vadd.f32 0.0, %v852
      %v854 = vpop.f32.mrf.mxu0
      %855 = vmatprep.mubr.bf16.mxu0 0
      %856 = vmatmul.mubr.bf16.gmra.mxu0 %v761
      %v857 = vpop.f32.mrf.mxu0
      %v858 = vadd.f32 0.0, %v857
      %v859 = vpop.f32.mrf.mxu0
      %v860 = vpop.f32.mrf.mxu0
      %v861 = vadd.f32 0.0, %v860
      %v862 = vpop.f32.mrf.mxu0
      %863 = vmatprep.mubr.bf16.mxu0 0
      %864 = vmatmul.mubr.bf16.gmra.mxu0 %v764
      %v865 = vpop.f32.mrf.mxu0
      %v866 = vadd.f32 0.0, %v865
      %v867 = vpop.f32.mrf.mxu0
      %v868 = vpop.f32.mrf.mxu0
      %v869 = vadd.f32 0.0, %v868
      %v870 = vpop.f32.mrf.mxu0
      %871 = vmatprep.mubr.bf16.mxu0 0
      %872 = vmatmul.mubr.bf16.gmra.mxu0 %v767
      %v873 = vpop.f32.mrf.mxu0
      %v874 = vadd.f32 0.0, %v873
      %v875 = vpop.f32.mrf.mxu0
      %v876 = vpop.f32.mrf.mxu0
      %v877 = vadd.f32 0.0, %v876
      %v878 = vpop.f32.mrf.mxu0
      %879 = vmatprep.mubr.bf16.mxu0 0
      %880 = vmatmul.mubr.bf16.gmra.mxu0 %v770
      %v881 = vpop.f32.mrf.mxu0
      %v882 = vadd.f32 0.0, %v881
      %v883 = vpop.f32.mrf.mxu0
      %v884 = vpop.f32.mrf.mxu0
      %v885 = vadd.f32 0.0, %v884
      %v886 = vpop.f32.mrf.mxu0
      %887 = vmatprep.mubr.bf16.mxu0 0
      %888 = vmatmul.mubr.bf16.gmra.mxu0 %v773
      %v889 = vpop.f32.mrf.mxu0
      %v890 = vadd.f32 0.0, %v889
      %v891 = vpop.f32.mrf.mxu0
      %v892 = vpop.f32.mrf.mxu0
      %v893 = vadd.f32 0.0, %v892
      %v894 = vpop.f32.mrf.mxu0
      %895 = vmatprep.mubr.bf16.mxu0 0
      %896 = vmatmul.mubr.bf16.gmra.mxu0 %v776
      %v897 = vpop.f32.mrf.mxu0
      %v898 = vadd.f32 0.0, %v897
      %v899 = vpop.f32.mrf.mxu0
      %v900 = vpop.f32.mrf.mxu0
      %v901 = vadd.f32 0.0, %v900
      %v902 = vpop.f32.mrf.mxu0
      %903 = vmatprep.mubr.bf16.mxu0 0
      %904 = vmatmul.mubr.bf16.gmra.mxu0 %v779
      %v905 = vpop.f32.mrf.mxu0
      %v906 = vadd.f32 0.0, %v905
      %v907 = vpop.f32.mrf.mxu0
      %v908 = vpop.f32.mrf.mxu0
      %v909 = vadd.f32 0.0, %v908
      %v910 = vpop.f32.mrf.mxu0
      %911 = vmatprep.mubr.bf16.mxu0 0
      %912 = vmatmul.mubr.bf16.gmra.mxu0 %v782
      %v913 = vpop.f32.mrf.mxu0
      %v914 = vadd.f32 0.0, %v913
      %v915 = vpop.f32.mrf.mxu0
      %v916 = vpop.f32.mrf.mxu0
      %v917 = vadd.f32 0.0, %v916
      %v918 = vpop.f32.mrf.mxu0
      %919 = vmatprep.mubr.bf16.mxu0 0
      %920 = vmatmul.mubr.bf16.gmra.mxu0 %v785
      %v921 = vpop.f32.mrf.mxu0
      %v922 = vadd.f32 0.0, %v921
      %v923 = vpop.f32.mrf.mxu0
      %v924 = vpop.f32.mrf.mxu0
      %v925 = vadd.f32 0.0, %v924
      %v926 = vpop.f32.mrf.mxu0
      %927 = vmatprep.mubr.bf16.mxu0 0
      %928 = vmatmul.mubr.bf16.gmra.mxu0 %v788
      %v929 = vpop.f32.mrf.mxu0
      %v930 = vadd.f32 0.0, %v929
      %v931 = vpop.f32.mrf.mxu0
      %v932 = vpop.f32.mrf.mxu0
      %v933 = vadd.f32 0.0, %v932
      %v934 = vpop.f32.mrf.mxu0
      %935 = vmatprep.mubr.bf16.mxu0 0
      %936 = vmatmul.mubr.bf16.gmra.mxu0 %v791
      %v937 = vpop.f32.mrf.mxu0
      %v938 = vadd.f32 0.0, %v937
      %v939 = vpop.f32.mrf.mxu0
      %v940 = vpop.f32.mrf.mxu0
      %v941 = vadd.f32 0.0, %v940
      %v942 = vpop.f32.mrf.mxu0
      %943 = vmatprep.mubr.bf16.mxu0 0
      %944 = vmatmul.mubr.bf16.gmra.mxu0 %v794
      %v945 = vpop.f32.mrf.mxu0
      %v946 = vadd.f32 0.0, %v945
      %v947 = vpop.f32.mrf.mxu0
      %v948 = vpop.f32.mrf.mxu0
      %v949 = vadd.f32 0.0, %v948
      %v950 = vpop.f32.mrf.mxu0
      %951 = vmatprep.mubr.bf16.mxu0 0
      %952 = vmatmul.mubr.bf16.gmra.mxu0 %v797
      %v953 = vpop.f32.mrf.mxu0
      %v954 = vadd.f32 0.0, %v953
      %v955 = vpop.f32.mrf.mxu0
      %v956 = vpop.f32.mrf.mxu0
      %v957 = vadd.f32 0.0, %v956
      %v958 = vpop.f32.mrf.mxu0
      %959 = vdwg.mxu0
      %v992 = vunpack.c.l.b16 %v226
      %v993 = vunpack.c.l.b16 %v227
      %v994 = vunpack.c.l.b16 %v228
      %v995 = vunpack.c.l.b16 %v229
      %v996 = vunpack.c.l.b16 %v230
      %v997 = vunpack.c.l.b16 %v231
      %v998 = vunpack.c.l.b16 %v232
      %v999 = vunpack.c.l.b16 %v233
      %v1000 = vunpack.c.l.b16 %v234
      %v1001 = vunpack.c.l.b16 %v235
      %v1002 = vunpack.c.l.b16 %v236
      %v1003 = vunpack.c.l.b16 %v237
      %v1004 = vunpack.c.l.b16 %v238
      %v1005 = vunpack.c.l.b16 %v239
      %v1006 = vunpack.c.l.b16 %v240
      %v1007 = vunpack.c.l.b16 %v241
      %v1008 = vunpack.c.l.b16 %v242
      %v1009 = vunpack.c.l.b16 %v243
      %v1010 = vunpack.c.l.b16 %v244
      %v1011 = vunpack.c.l.b16 %v245
      %v1012 = vunpack.c.l.b16 %v246
      %v1013 = vunpack.c.l.b16 %v247
      %v1014 = vunpack.c.l.b16 %v248
      %v1015 = vunpack.c.l.b16 %v249
      %v1016 = vunpack.c.l.b16 %v250
      %v1017 = vunpack.c.l.b16 %v251
      %v1018 = vunpack.c.l.b16 %v252
      %v1019 = vunpack.c.l.b16 %v253
      %v1020 = vunpack.c.l.b16 %v254
      %v1021 = vunpack.c.l.b16 %v255
      %v1022 = vunpack.c.l.b16 %v256
      %v1023 = vunpack.c.l.b16 %v257
      %v1024 = vpack.c.b16 %v993, %v992
      %v1025 = vpack.c.b16 %v995, %v994
      %v1026 = vpack.c.b16 %v997, %v996
      %v1027 = vpack.c.b16 %v999, %v998
      %v1028 = vpack.c.b16 %v1001, %v1000
      %v1029 = vpack.c.b16 %v1003, %v1002
      %v1030 = vpack.c.b16 %v1005, %v1004
      %v1031 = vpack.c.b16 %v1007, %v1006
      %v1032 = vpack.c.b16 %v1009, %v1008
      %v1033 = vpack.c.b16 %v1011, %v1010
      %v1034 = vpack.c.b16 %v1013, %v1012
      %v1035 = vpack.c.b16 %v1015, %v1014
      %v1036 = vpack.c.b16 %v1017, %v1016
      %v1037 = vpack.c.b16 %v1019, %v1018
      %v1038 = vpack.c.b16 %v1021, %v1020
      %v1039 = vpack.c.b16 %v1023, %v1022
      %v1048 = vunpack.c.l.b16 %v258
      %v1049 = vunpack.c.l.b16 %v259
      %v1050 = vunpack.c.l.b16 %v260
      %v1051 = vunpack.c.l.b16 %v261
      %v1052 = vunpack.c.l.b16 %v262
      %v1053 = vunpack.c.l.b16 %v263
      %v1054 = vunpack.c.l.b16 %v264
      %v1055 = vunpack.c.l.b16 %v265
      %v1056 = vpack.c.b16 %v1049, %v1048
      %v1057 = vpack.c.b16 %v1051, %v1050
      %v1058 = vpack.c.b16 %v1053, %v1052
      %v1059 = vpack.c.b16 %v1055, %v1054
      %v1065 = vsel %vm750, %v1024, 0
      %v1068 = vsel %vm750, %v1025, 0
      %v1071 = vsel %vm750, %v1026, 0
      %v1074 = vsel %vm750, %v1027, 0
      %v1077 = vsel %vm750, %v1028, 0
      %v1080 = vsel %vm750, %v1029, 0
      %v1083 = vsel %vm750, %v1030, 0
      %v1086 = vsel %vm750, %v1031, 0
      %v1089 = vsel %vm750, %v1032, 0
      %v1092 = vsel %vm750, %v1033, 0
      %v1095 = vsel %vm750, %v1034, 0
      %v1098 = vsel %vm750, %v1035, 0
      %v1101 = vsel %vm750, %v1036, 0
      %v1104 = vsel %vm750, %v1037, 0
      %v1107 = vsel %vm750, %v1038, 0
      %v1110 = vsel %vm750, %v1039, 0
      %1112 = vmatprep.subr.bf16.mxu0 0
      %1113 = vmatpush1.bf16.msra.mxu0 0
      %1114 = vmatprep.subr.bf16.mxu0 0
      %1115 = vmatpush1.bf16.msra.mxu0 0
      %1116 = vmatprep.subr.bf16.mxu0 0
      %1117 = vmatpush1.bf16.msra.mxu0 0
      %1118 = vmatprep.subr.bf16.mxu0 0
      %1119 = vmatpush1.bf16.msra.mxu0 0
      %1120 = vmatprep.subr.bf16.mxu0 0
      %1121 = vmatpush1.bf16.msra.mxu0 %v1059
      %1122 = vmatprep.subr.bf16.mxu0 0
      %1123 = vmatpush1.bf16.msra.mxu0 %v1058
      %1124 = vmatprep.subr.bf16.mxu0 0
      %1125 = vmatpush1.bf16.msra.mxu0 %v1057
      %1126 = vmatprep.subr.bf16.mxu0 0
      %1127 = vmatpush1.bf16.msra.mxu0 %v1056
      %1128 = vmatprep.subr.bf16.mxu0 0
      %1129 = vmatpush2.bf16.msra.mxu0 0
      %1130 = vmatprep.subr.bf16.mxu0 0
      %1131 = vmatpush2.bf16.msra.mxu0 0
      %1132 = vmatprep.subr.bf16.mxu0 0
      %1133 = vmatpush2.bf16.msra.mxu0 0
      %1134 = vmatprep.subr.bf16.mxu0 0
      %1135 = vmatpush2.bf16.msra.mxu0 0
      %1136 = vmatprep.subr.bf16.mxu0 0
      %1137 = vmatpush2.bf16.msra.mxu0 0
      %1138 = vmatprep.subr.bf16.mxu0 0
      %1139 = vmatpush2.bf16.msra.mxu0 0
      %1140 = vmatprep.subr.bf16.mxu0 0
      %1141 = vmatpush2.bf16.msra.mxu0 0
      %1142 = vmatprep.subr.bf16.mxu0 0
      %1143 = vmatpush2.bf16.msra.mxu0 0
      %1144 = vmatprep.mubr.bf16.mxu0 0
      %1145 = vmatmul.mubr.bf16.gmra.mxu0 %v1065
      %v1146 = vpop.f32.mrf.mxu0
      %v1147 = vadd.f32 %v834, %v1146
      %v1148 = vpop.f32.mrf.mxu0
      %v1149 = vpop.f32.mrf.mxu0
      %v1150 = vadd.f32 %v837, %v1149
      %v1151 = vpop.f32.mrf.mxu0
      %1152 = vmatprep.mubr.bf16.mxu0 0
      %1153 = vmatmul.mubr.bf16.gmra.mxu0 %v1068
      %v1154 = vpop.f32.mrf.mxu0
      %v1155 = vadd.f32 %v842, %v1154
      %v1156 = vpop.f32.mrf.mxu0
      %v1157 = vpop.f32.mrf.mxu0
      %v1158 = vadd.f32 %v845, %v1157
      %v1159 = vpop.f32.mrf.mxu0
      %1160 = vmatprep.mubr.bf16.mxu0 0
      %1161 = vmatmul.mubr.bf16.gmra.mxu0 %v1071
      %v1162 = vpop.f32.mrf.mxu0
      %v1163 = vadd.f32 %v850, %v1162
      %v1164 = vpop.f32.mrf.mxu0
      %v1165 = vpop.f32.mrf.mxu0
      %v1166 = vadd.f32 %v853, %v1165
      %v1167 = vpop.f32.mrf.mxu0
      %1168 = vmatprep.mubr.bf16.mxu0 0
      %1169 = vmatmul.mubr.bf16.gmra.mxu0 %v1074
      %v1170 = vpop.f32.mrf.mxu0
      %v1171 = vadd.f32 %v858, %v1170
      %v1172 = vpop.f32.mrf.mxu0
      %v1173 = vpop.f32.mrf.mxu0
      %v1174 = vadd.f32 %v861, %v1173
      %v1175 = vpop.f32.mrf.mxu0
      %1176 = vmatprep.mubr.bf16.mxu0 0
      %1177 = vmatmul.mubr.bf16.gmra.mxu0 %v1077
      %v1178 = vpop.f32.mrf.mxu0
      %v1179 = vadd.f32 %v866, %v1178
      %v1180 = vpop.f32.mrf.mxu0
      %v1181 = vpop.f32.mrf.mxu0
      %v1182 = vadd.f32 %v869, %v1181
      %v1183 = vpop.f32.mrf.mxu0
      %1184 = vmatprep.mubr.bf16.mxu0 0
      %1185 = vmatmul.mubr.bf16.gmra.mxu0 %v1080
      %v1186 = vpop.f32.mrf.mxu0
      %v1187 = vadd.f32 %v874, %v1186
      %v1188 = vpop.f32.mrf.mxu0
      %v1189 = vpop.f32.mrf.mxu0
      %v1190 = vadd.f32 %v877, %v1189
      %v1191 = vpop.f32.mrf.mxu0
      %1192 = vmatprep.mubr.bf16.mxu0 0
      %1193 = vmatmul.mubr.bf16.gmra.mxu0 %v1083
      %v1194 = vpop.f32.mrf.mxu0
      %v1195 = vadd.f32 %v882, %v1194
      %v1196 = vpop.f32.mrf.mxu0
      %v1197 = vpop.f32.mrf.mxu0
      %v1198 = vadd.f32 %v885, %v1197
      %v1199 = vpop.f32.mrf.mxu0
      %1200 = vmatprep.mubr.bf16.mxu0 0
      %1201 = vmatmul.mubr.bf16.gmra.mxu0 %v1086
      %v1202 = vpop.f32.mrf.mxu0
      %v1203 = vadd.f32 %v890, %v1202
      %v1204 = vpop.f32.mrf.mxu0
      %v1205 = vpop.f32.mrf.mxu0
      %v1206 = vadd.f32 %v893, %v1205
      %v1207 = vpop.f32.mrf.mxu0
      %1208 = vmatprep.mubr.bf16.mxu0 0
      %1209 = vmatmul.mubr.bf16.gmra.mxu0 %v1089
      %v1210 = vpop.f32.mrf.mxu0
      %v1211 = vadd.f32 %v898, %v1210
      %v1212 = vpop.f32.mrf.mxu0
      %v1213 = vpop.f32.mrf.mxu0
      %v1214 = vadd.f32 %v901, %v1213
      %v1215 = vpop.f32.mrf.mxu0
      %1216 = vmatprep.mubr.bf16.mxu0 0
      %1217 = vmatmul.mubr.bf16.gmra.mxu0 %v1092
      %v1218 = vpop.f32.mrf.mxu0
      %v1219 = vadd.f32 %v906, %v1218
      %v1220 = vpop.f32.mrf.mxu0
      %v1221 = vpop.f32.mrf.mxu0
      %v1222 = vadd.f32 %v909, %v1221
      %v1223 = vpop.f32.mrf.mxu0
      %1224 = vmatprep.mubr.bf16.mxu0 0
      %1225 = vmatmul.mubr.bf16.gmra.mxu0 %v1095
      %v1226 = vpop.f32.mrf.mxu0
      %v1227 = vadd.f32 %v914, %v1226
      %v1228 = vpop.f32.mrf.mxu0
      %v1229 = vpop.f32.mrf.mxu0
      %v1230 = vadd.f32 %v917, %v1229
      %v1231 = vpop.f32.mrf.mxu0
      %1232 = vmatprep.mubr.bf16.mxu0 0
      %1233 = vmatmul.mubr.bf16.gmra.mxu0 %v1098
      %v1234 = vpop.f32.mrf.mxu0
      %v1235 = vadd.f32 %v922, %v1234
      %v1236 = vpop.f32.mrf.mxu0
      %v1237 = vpop.f32.mrf.mxu0
      %v1238 = vadd.f32 %v925, %v1237
      %v1239 = vpop.f32.mrf.mxu0
      %1240 = vmatprep.mubr.bf16.mxu0 0
      %1241 = vmatmul.mubr.bf16.gmra.mxu0 %v1101
      %v1242 = vpop.f32.mrf.mxu0
      %v1243 = vadd.f32 %v930, %v1242
      %v1244 = vpop.f32.mrf.mxu0
      %v1245 = vpop.f32.mrf.mxu0
      %v1246 = vadd.f32 %v933, %v1245
      %v1247 = vpop.f32.mrf.mxu0
      %1248 = vmatprep.mubr.bf16.mxu0 0
      %1249 = vmatmul.mubr.bf16.gmra.mxu0 %v1104
      %v1250 = vpop.f32.mrf.mxu0
      %v1251 = vadd.f32 %v938, %v1250
      %v1252 = vpop.f32.mrf.mxu0
      %v1253 = vpop.f32.mrf.mxu0
      %v1254 = vadd.f32 %v941, %v1253
      %v1255 = vpop.f32.mrf.mxu0
      %1256 = vmatprep.mubr.bf16.mxu0 0
      %1257 = vmatmul.mubr.bf16.gmra.mxu0 %v1107
      %v1258 = vpop.f32.mrf.mxu0
      %v1259 = vadd.f32 %v946, %v1258
      %v1260 = vpop.f32.mrf.mxu0
      %v1261 = vpop.f32.mrf.mxu0
      %v1262 = vadd.f32 %v949, %v1261
      %v1263 = vpop.f32.mrf.mxu0
      %1264 = vmatprep.mubr.bf16.mxu0 0
      %1265 = vmatmul.mubr.bf16.gmra.mxu0 %v1110
      %v1266 = vpop.f32.mrf.mxu0
      %v1267 = vadd.f32 %v954, %v1266
      %v1268 = vpop.f32.mrf.mxu0
      %v1269 = vpop.f32.mrf.mxu0
      %v1270 = vadd.f32 %v957, %v1269
      %v1271 = vpop.f32.mrf.mxu0
      %1272 = vdwg.mxu0
      %v1273 = vld [vmem:[%s225] sm:$0xe]
      %v1274 = vld [vmem:[%s225 + $0xc] sm:$0xe]
      %v1275 = vld [vmem:[%s225 + $0x18] sm:$0xe]
      %v1276 = vld [vmem:[%s225 + $0x24] sm:$0xe]
      %v1277 = vld [vmem:[%s225 + $0x30] sm:$0xe]
      %v1278 = vld [vmem:[%s225 + $0x3c] sm:$0xe]
      %v1279 = vld [vmem:[%s225 + $0x48] sm:$0xe]
      %v1280 = vld [vmem:[%s225 + $0x54] sm:$0xe]
      %v1281 = vld [vmem:[%s225 + $0x60] sm:$0xe]
      %v1282 = vld [vmem:[%s225 + $0x6c] sm:$0xe]
      %v1283 = vld [vmem:[%s225 + $0x78] sm:$0xe]
      %v1284 = vld [vmem:[%s225 + $0x84] sm:$0xe]
      %v1285 = vld [vmem:[%s225 + $0x90] sm:$0xe]
      %v1286 = vld [vmem:[%s225 + $0x9c] sm:$0xe]
      %v1287 = vld [vmem:[%s225 + $0xa8] sm:$0xe]
      %v1288 = vld [vmem:[%s225 + $0xb4] sm:$0xe]
      %vm1321 = vcmask 1042432
      %vm1322 = vcmask 1046532
      %vm1323 = vmor %vm1321, %vm1322
      %v1324 = vrot.slane %v1273, 5
      %v1325 = vrot.slane %v1324, 4
      %v1326 = vrot.slane %v227, 5
      %v1327 = vsel %vm1323, %v1325, %v1326
      %v1328 = vrot.slane %v1326, 4
      %v1329 = vrot.slane %v266, 5
      %v1330 = vsel %vm1323, %v1328, %v1329
      %v1331 = vrot.slane %v1274, 5
      %v1332 = vrot.slane %v1331, 4
      %v1333 = vrot.slane %v229, 5
      %v1334 = vsel %vm1323, %v1332, %v1333
      %v1335 = vrot.slane %v1333, 4
      %v1336 = vrot.slane %v267, 5
      %v1337 = vsel %vm1323, %v1335, %v1336
      %v1338 = vrot.slane %v1275, 5
      %v1339 = vrot.slane %v1338, 4
      %v1340 = vrot.slane %v231, 5
      %v1341 = vsel %vm1323, %v1339, %v1340
      %v1342 = vrot.slane %v1340, 4
      %v1343 = vrot.slane %v268, 5
      %v1344 = vsel %vm1323, %v1342, %v1343
      %v1345 = vrot.slane %v1276, 5
      %v1346 = vrot.slane %v1345, 4
      %v1347 = vrot.slane %v233, 5
      %v1348 = vsel %vm1323, %v1346, %v1347
      %v1349 = vrot.slane %v1347, 4
      %v1350 = vrot.slane %v269, 5
      %v1351 = vsel %vm1323, %v1349, %v1350
      %v1352 = vrot.slane %v1277, 5
      %v1353 = vrot.slane %v1352, 4
      %v1354 = vrot.slane %v235, 5
      %v1355 = vsel %vm1323, %v1353, %v1354
      %v1356 = vrot.slane %v1354, 4
      %v1357 = vrot.slane %v270, 5
      %v1358 = vsel %vm1323, %v1356, %v1357
      %v1359 = vrot.slane %v1278, 5
      %v1360 = vrot.slane %v1359, 4
      %v1361 = vrot.slane %v237, 5
      %v1362 = vsel %vm1323, %v1360, %v1361
      %v1363 = vrot.slane %v1361, 4
      %v1364 = vrot.slane %v271, 5
      %v1365 = vsel %vm1323, %v1363, %v1364
      %v1366 = vrot.slane %v1279, 5
      %v1367 = vrot.slane %v1366, 4
      %v1368 = vrot.slane %v239, 5
      %v1369 = vsel %vm1323, %v1367, %v1368
      %v1370 = vrot.slane %v1368, 4
      %v1371 = vrot.slane %v272, 5
      %v1372 = vsel %vm1323, %v1370, %v1371
      %v1373 = vrot.slane %v1280, 5
      %v1374 = vrot.slane %v1373, 4
      %v1375 = vrot.slane %v241, 5
      %v1376 = vsel %vm1323, %v1374, %v1375
      %v1377 = vrot.slane %v1375, 4
      %v1378 = vrot.slane %v273, 5
      %v1379 = vsel %vm1323, %v1377, %v1378
      %v1380 = vrot.slane %v1281, 5
      %v1381 = vrot.slane %v1380, 4
      %v1382 = vrot.slane %v243, 5
      %v1383 = vsel %vm1323, %v1381, %v1382
      %v1384 = vrot.slane %v1382, 4
      %v1385 = vrot.slane %v274, 5
      %v1386 = vsel %vm1323, %v1384, %v1385
      %v1387 = vrot.slane %v1282, 5
      %v1388 = vrot.slane %v1387, 4
      %v1389 = vrot.slane %v245, 5
      %v1390 = vsel %vm1323, %v1388, %v1389
      %v1391 = vrot.slane %v1389, 4
      %v1392 = vrot.slane %v275, 5
      %v1393 = vsel %vm1323, %v1391, %v1392
      %v1394 = vrot.slane %v1283, 5
      %v1395 = vrot.slane %v1394, 4
      %v1396 = vrot.slane %v247, 5
      %v1397 = vsel %vm1323, %v1395, %v1396
      %v1398 = vrot.slane %v1396, 4
      %v1399 = vrot.slane %v276, 5
      %v1400 = vsel %vm1323, %v1398, %v1399
      %v1401 = vrot.slane %v1284, 5
      %v1402 = vrot.slane %v1401, 4
      %v1403 = vrot.slane %v249, 5
      %v1404 = vsel %vm1323, %v1402, %v1403
      %v1405 = vrot.slane %v1403, 4
      %v1406 = vrot.slane %v277, 5
      %v1407 = vsel %vm1323, %v1405, %v1406
      %v1408 = vrot.slane %v1285, 5
      %v1409 = vrot.slane %v1408, 4
      %v1410 = vrot.slane %v251, 5
      %v1411 = vsel %vm1323, %v1409, %v1410
      %v1412 = vrot.slane %v1410, 4
      %v1413 = vrot.slane %v278, 5
      %v1414 = vsel %vm1323, %v1412, %v1413
      %v1415 = vrot.slane %v1286, 5
      %v1416 = vrot.slane %v1415, 4
      %v1417 = vrot.slane %v253, 5
      %v1418 = vsel %vm1323, %v1416, %v1417
      %v1419 = vrot.slane %v1417, 4
      %v1420 = vrot.slane %v279, 5
      %v1421 = vsel %vm1323, %v1419, %v1420
      %v1422 = vrot.slane %v1287, 5
      %v1423 = vrot.slane %v1422, 4
      %v1424 = vrot.slane %v255, 5
      %v1425 = vsel %vm1323, %v1423, %v1424
      %v1426 = vrot.slane %v1424, 4
      %v1427 = vrot.slane %v280, 5
      %v1428 = vsel %vm1323, %v1426, %v1427
      %v1429 = vrot.slane %v1288, 5
      %v1430 = vrot.slane %v1429, 4
      %v1431 = vrot.slane %v257, 5
      %v1432 = vsel %vm1323, %v1430, %v1431
      %v1433 = vrot.slane %v1431, 4
      %v1434 = vrot.slane %v281, 5
      %v1435 = vsel %vm1323, %v1433, %v1434
      %s1436 = scalar_lea.vmem %s1, 64
      %v1437 = vld [vmem:[%s1436] sm:$0xf]
      %v1438 = vld [vmem:[%s1436 + $0x4] sm:$0xf]
      %v1439 = vld [vmem:[%s1436 + $0x8] sm:$0xf]
      %v1440 = vld [vmem:[%s1436 + $0xc] sm:$0xf]
      %v1441 = vld [vmem:[%s1436 + $0x10] sm:$0xf]
      %v1442 = vld [vmem:[%s1436 + $0x14] sm:$0xf]
      %v1443 = vld [vmem:[%s1436 + $0x18] sm:$0xf]
      %v1444 = vld [vmem:[%s1436 + $0x1c] sm:$0xf]
      %v1445 = vunpack.c.l.b16 %v1327
      %v1446 = vunpack.c.l.b16 %v1330
      %v1447 = vunpack.c.l.b16 %v1334
      %v1448 = vunpack.c.l.b16 %v1337
      %v1449 = vunpack.c.l.b16 %v1341
      %v1450 = vunpack.c.l.b16 %v1344
      %v1451 = vunpack.c.l.b16 %v1348
      %v1452 = vunpack.c.l.b16 %v1351
      %v1453 = vunpack.c.l.b16 %v1355
      %v1454 = vunpack.c.l.b16 %v1358
      %v1455 = vunpack.c.l.b16 %v1362
      %v1456 = vunpack.c.l.b16 %v1365
      %v1457 = vunpack.c.l.b16 %v1369
      %v1458 = vunpack.c.l.b16 %v1372
      %v1459 = vunpack.c.l.b16 %v1376
      %v1460 = vunpack.c.l.b16 %v1379
      %v1461 = vunpack.c.l.b16 %v1383
      %v1462 = vunpack.c.l.b16 %v1386
      %v1463 = vunpack.c.l.b16 %v1390
      %v1464 = vunpack.c.l.b16 %v1393
      %v1465 = vunpack.c.l.b16 %v1397
      %v1466 = vunpack.c.l.b16 %v1400
      %v1467 = vunpack.c.l.b16 %v1404
      %v1468 = vunpack.c.l.b16 %v1407
      %v1469 = vunpack.c.l.b16 %v1411
      %v1470 = vunpack.c.l.b16 %v1414
      %v1471 = vunpack.c.l.b16 %v1418
      %v1472 = vunpack.c.l.b16 %v1421
      %v1473 = vunpack.c.l.b16 %v1425
      %v1474 = vunpack.c.l.b16 %v1428
      %v1475 = vunpack.c.l.b16 %v1432
      %v1476 = vunpack.c.l.b16 %v1435
      %v1477 = vpack.c.b16 %v1446, %v1445
      %v1478 = vpack.c.b16 %v1448, %v1447
      %v1479 = vpack.c.b16 %v1450, %v1449
      %v1480 = vpack.c.b16 %v1452, %v1451
      %v1481 = vpack.c.b16 %v1454, %v1453
      %v1482 = vpack.c.b16 %v1456, %v1455
      %v1483 = vpack.c.b16 %v1458, %v1457
      %v1484 = vpack.c.b16 %v1460, %v1459
      %v1485 = vpack.c.b16 %v1462, %v1461
      %v1486 = vpack.c.b16 %v1464, %v1463
      %v1487 = vpack.c.b16 %v1466, %v1465
      %v1488 = vpack.c.b16 %v1468, %v1467
      %v1489 = vpack.c.b16 %v1470, %v1469
      %v1490 = vpack.c.b16 %v1472, %v1471
      %v1491 = vpack.c.b16 %v1474, %v1473
      %v1492 = vpack.c.b16 %v1476, %v1475
      %v1501 = vunpack.c.l.b16 %v1437
      %v1502 = vunpack.c.l.b16 %v1438
      %v1503 = vunpack.c.l.b16 %v1439
      %v1504 = vunpack.c.l.b16 %v1440
      %v1505 = vunpack.c.l.b16 %v1441
      %v1506 = vunpack.c.l.b16 %v1442
      %v1507 = vunpack.c.l.b16 %v1443
      %v1508 = vunpack.c.l.b16 %v1444
      %v1509 = vpack.c.b16 %v1502, %v1501
      %v1510 = vpack.c.b16 %v1504, %v1503
      %v1511 = vpack.c.b16 %v1506, %v1505
      %v1512 = vpack.c.b16 %v1508, %v1507
      %v1518 = vsel %vm750, %v1477, 0
      %v1521 = vsel %vm750, %v1478, 0
      %v1524 = vsel %vm750, %v1479, 0
      %v1527 = vsel %vm750, %v1480, 0
      %v1530 = vsel %vm750, %v1481, 0
      %v1533 = vsel %vm750, %v1482, 0
      %v1536 = vsel %vm750, %v1483, 0
      %v1539 = vsel %vm750, %v1484, 0
      %v1542 = vsel %vm750, %v1485, 0
      %v1545 = vsel %vm750, %v1486, 0
      %v1548 = vsel %vm750, %v1487, 0
      %v1551 = vsel %vm750, %v1488, 0
      %v1554 = vsel %vm750, %v1489, 0
      %v1557 = vsel %vm750, %v1490, 0
      %v1560 = vsel %vm750, %v1491, 0
      %v1563 = vsel %vm750, %v1492, 0
      %1565 = vmatprep.subr.bf16.mxu0 0
      %1566 = vmatpush1.bf16.msra.mxu0 0
      %1567 = vmatprep.subr.bf16.mxu0 0
      %1568 = vmatpush1.bf16.msra.mxu0 0
      %1569 = vmatprep.subr.bf16.mxu0 0
      %1570 = vmatpush1.bf16.msra.mxu0 0
      %1571 = vmatprep.subr.bf16.mxu0 0
      %1572 = vmatpush1.bf16.msra.mxu0 0
      %1573 = vmatprep.subr.bf16.mxu0 0
      %1574 = vmatpush1.bf16.msra.mxu0 %v1512
      %1575 = vmatprep.subr.bf16.mxu0 0
      %1576 = vmatpush1.bf16.msra.mxu0 %v1511
      %1577 = vmatprep.subr.bf16.mxu0 0
      %1578 = vmatpush1.bf16.msra.mxu0 %v1510
      %1579 = vmatprep.subr.bf16.mxu0 0
      %1580 = vmatpush1.bf16.msra.mxu0 %v1509
      %1581 = vmatprep.subr.bf16.mxu0 0
      %1582 = vmatpush2.bf16.msra.mxu0 0
      %1583 = vmatprep.subr.bf16.mxu0 0
      %1584 = vmatpush2.bf16.msra.mxu0 0
      %1585 = vmatprep.subr.bf16.mxu0 0
      %1586 = vmatpush2.bf16.msra.mxu0 0
      %1587 = vmatprep.subr.bf16.mxu0 0
      %1588 = vmatpush2.bf16.msra.mxu0 0
      %1589 = vmatprep.subr.bf16.mxu0 0
      %1590 = vmatpush2.bf16.msra.mxu0 0
      %1591 = vmatprep.subr.bf16.mxu0 0
      %1592 = vmatpush2.bf16.msra.mxu0 0
      %1593 = vmatprep.subr.bf16.mxu0 0
      %1594 = vmatpush2.bf16.msra.mxu0 0
      %1595 = vmatprep.subr.bf16.mxu0 0
      %1596 = vmatpush2.bf16.msra.mxu0 0
      %1597 = vmatprep.mubr.bf16.mxu0 0
      %1598 = vmatmul.mubr.bf16.gmra.mxu0 %v1518
      %v1599 = vpop.f32.mrf.mxu0
      %v1600 = vadd.f32 0.0, %v1599
      %v1601 = vpop.f32.mrf.mxu0
      %v1602 = vpop.f32.mrf.mxu0
      %v1603 = vadd.f32 0.0, %v1602
      %v1604 = vpop.f32.mrf.mxu0
      %1605 = vmatprep.mubr.bf16.mxu0 0
      %1606 = vmatmul.mubr.bf16.gmra.mxu0 %v1521
      %v1607 = vpop.f32.mrf.mxu0
      %v1608 = vadd.f32 0.0, %v1607
      %v1609 = vpop.f32.mrf.mxu0
      %v1610 = vpop.f32.mrf.mxu0
      %v1611 = vadd.f32 0.0, %v1610
      %v1612 = vpop.f32.mrf.mxu0
      %1613 = vmatprep.mubr.bf16.mxu0 0
      %1614 = vmatmul.mubr.bf16.gmra.mxu0 %v1524
      %v1615 = vpop.f32.mrf.mxu0
      %v1616 = vadd.f32 0.0, %v1615
      %v1617 = vpop.f32.mrf.mxu0
      %v1618 = vpop.f32.mrf.mxu0
      %v1619 = vadd.f32 0.0, %v1618
      %v1620 = vpop.f32.mrf.mxu0
      %1621 = vmatprep.mubr.bf16.mxu0 0
      %1622 = vmatmul.mubr.bf16.gmra.mxu0 %v1527
      %v1623 = vpop.f32.mrf.mxu0
      %v1624 = vadd.f32 0.0, %v1623
      %v1625 = vpop.f32.mrf.mxu0
      %v1626 = vpop.f32.mrf.mxu0
      %v1627 = vadd.f32 0.0, %v1626
      %v1628 = vpop.f32.mrf.mxu0
      %1629 = vmatprep.mubr.bf16.mxu0 0
      %1630 = vmatmul.mubr.bf16.gmra.mxu0 %v1530
      %v1631 = vpop.f32.mrf.mxu0
      %v1632 = vadd.f32 0.0, %v1631
      %v1633 = vpop.f32.mrf.mxu0
      %v1634 = vpop.f32.mrf.mxu0
      %v1635 = vadd.f32 0.0, %v1634
      %v1636 = vpop.f32.mrf.mxu0
      %1637 = vmatprep.mubr.bf16.mxu0 0
      %1638 = vmatmul.mubr.bf16.gmra.mxu0 %v1533
      %v1639 = vpop.f32.mrf.mxu0
      %v1640 = vadd.f32 0.0, %v1639
      %v1641 = vpop.f32.mrf.mxu0
      %v1642 = vpop.f32.mrf.mxu0
      %v1643 = vadd.f32 0.0, %v1642
      %v1644 = vpop.f32.mrf.mxu0
      %1645 = vmatprep.mubr.bf16.mxu0 0
      %1646 = vmatmul.mubr.bf16.gmra.mxu0 %v1536
      %v1647 = vpop.f32.mrf.mxu0
      %v1648 = vadd.f32 0.0, %v1647
      %v1649 = vpop.f32.mrf.mxu0
      %v1650 = vpop.f32.mrf.mxu0
      %v1651 = vadd.f32 0.0, %v1650
      %v1652 = vpop.f32.mrf.mxu0
      %1653 = vmatprep.mubr.bf16.mxu0 0
      %1654 = vmatmul.mubr.bf16.gmra.mxu0 %v1539
      %v1655 = vpop.f32.mrf.mxu0
      %v1656 = vadd.f32 0.0, %v1655
      %v1657 = vpop.f32.mrf.mxu0
      %v1658 = vpop.f32.mrf.mxu0
      %v1659 = vadd.f32 0.0, %v1658
      %v1660 = vpop.f32.mrf.mxu0
      %1661 = vmatprep.mubr.bf16.mxu0 0
      %1662 = vmatmul.mubr.bf16.gmra.mxu0 %v1542
      %v1663 = vpop.f32.mrf.mxu0
      %v1664 = vadd.f32 0.0, %v1663
      %v1665 = vpop.f32.mrf.mxu0
      %v1666 = vpop.f32.mrf.mxu0
      %v1667 = vadd.f32 0.0, %v1666
      %v1668 = vpop.f32.mrf.mxu0
      %1669 = vmatprep.mubr.bf16.mxu0 0
      %1670 = vmatmul.mubr.bf16.gmra.mxu0 %v1545
      %v1671 = vpop.f32.mrf.mxu0
      %v1672 = vadd.f32 0.0, %v1671
      %v1673 = vpop.f32.mrf.mxu0
      %v1674 = vpop.f32.mrf.mxu0
      %v1675 = vadd.f32 0.0, %v1674
      %v1676 = vpop.f32.mrf.mxu0
      %1677 = vmatprep.mubr.bf16.mxu0 0
      %1678 = vmatmul.mubr.bf16.gmra.mxu0 %v1548
      %v1679 = vpop.f32.mrf.mxu0
      %v1680 = vadd.f32 0.0, %v1679
      %v1681 = vpop.f32.mrf.mxu0
      %v1682 = vpop.f32.mrf.mxu0
      %v1683 = vadd.f32 0.0, %v1682
      %v1684 = vpop.f32.mrf.mxu0
      %1685 = vmatprep.mubr.bf16.mxu0 0
      %1686 = vmatmul.mubr.bf16.gmra.mxu0 %v1551
      %v1687 = vpop.f32.mrf.mxu0
      %v1688 = vadd.f32 0.0, %v1687
      %v1689 = vpop.f32.mrf.mxu0
      %v1690 = vpop.f32.mrf.mxu0
      %v1691 = vadd.f32 0.0, %v1690
      %v1692 = vpop.f32.mrf.mxu0
      %1693 = vmatprep.mubr.bf16.mxu0 0
      %1694 = vmatmul.mubr.bf16.gmra.mxu0 %v1554
      %v1695 = vpop.f32.mrf.mxu0
      %v1696 = vadd.f32 0.0, %v1695
      %v1697 = vpop.f32.mrf.mxu0
      %v1698 = vpop.f32.mrf.mxu0
      %v1699 = vadd.f32 0.0, %v1698
      %v1700 = vpop.f32.mrf.mxu0
      %1701 = vmatprep.mubr.bf16.mxu0 0
      %1702 = vmatmul.mubr.bf16.gmra.mxu0 %v1557
      %v1703 = vpop.f32.mrf.mxu0
      %v1704 = vadd.f32 0.0, %v1703
      %v1705 = vpop.f32.mrf.mxu0
      %v1706 = vpop.f32.mrf.mxu0
      %v1707 = vadd.f32 0.0, %v1706
      %v1708 = vpop.f32.mrf.mxu0
      %1709 = vmatprep.mubr.bf16.mxu0 0
      %1710 = vmatmul.mubr.bf16.gmra.mxu0 %v1560
      %v1711 = vpop.f32.mrf.mxu0
      %v1712 = vadd.f32 0.0, %v1711
      %v1713 = vpop.f32.mrf.mxu0
      %v1714 = vpop.f32.mrf.mxu0
      %v1715 = vadd.f32 0.0, %v1714
      %v1716 = vpop.f32.mrf.mxu0
      %1717 = vmatprep.mubr.bf16.mxu0 0
      %1718 = vmatmul.mubr.bf16.gmra.mxu0 %v1563
      %v1719 = vpop.f32.mrf.mxu0
      %v1720 = vadd.f32 0.0, %v1719
      %v1721 = vpop.f32.mrf.mxu0
      %v1722 = vpop.f32.mrf.mxu0
      %v1723 = vadd.f32 0.0, %v1722
      %v1724 = vpop.f32.mrf.mxu0
      %1725 = vdwg.mxu0
      %v1726 = vadd.f32 %v1147, %v1600
      %v1727 = vadd.f32 %v1150, %v1603
      %v1728 = vadd.f32 %v1155, %v1608
      %v1729 = vadd.f32 %v1158, %v1611
      %v1730 = vadd.f32 %v1163, %v1616
      %v1731 = vadd.f32 %v1166, %v1619
      %v1732 = vadd.f32 %v1171, %v1624
      %v1733 = vadd.f32 %v1174, %v1627
      %v1734 = vadd.f32 %v1179, %v1632
      %v1735 = vadd.f32 %v1182, %v1635
      %v1736 = vadd.f32 %v1187, %v1640
      %v1737 = vadd.f32 %v1190, %v1643
      %v1738 = vadd.f32 %v1195, %v1648
      %v1739 = vadd.f32 %v1198, %v1651
      %v1740 = vadd.f32 %v1203, %v1656
      %v1741 = vadd.f32 %v1206, %v1659
      %v1742 = vadd.f32 %v1211, %v1664
      %v1743 = vadd.f32 %v1214, %v1667
      %v1744 = vadd.f32 %v1219, %v1672
      %v1745 = vadd.f32 %v1222, %v1675
      %v1746 = vadd.f32 %v1227, %v1680
      %v1747 = vadd.f32 %v1230, %v1683
      %v1748 = vadd.f32 %v1235, %v1688
      %v1749 = vadd.f32 %v1238, %v1691
      %v1750 = vadd.f32 %v1243, %v1696
      %v1751 = vadd.f32 %v1246, %v1699
      %v1752 = vadd.f32 %v1251, %v1704
      %v1753 = vadd.f32 %v1254, %v1707
      %v1754 = vadd.f32 %v1259, %v1712
      %v1755 = vadd.f32 %v1262, %v1715
      %v1756 = vadd.f32 %v1267, %v1720
      %v1757 = vadd.f32 %v1270, %v1723
      %s1758 = sadd.s32 %s222, 1
      %s1759 = smul.u32 %s1758, 3
      %s1760 = smul.addr %s1759, 4
      %s1761 = scalar_lea.vmem %s210, %s1760
      %v1762 = vld [vmem:[%s1761] sm:$0xf]
      %v1763 = vld [vmem:[%s1761 + $0x4] sm:$0xf]
      %v1764 = vld [vmem:[%s1761 + $0xc] sm:$0xf]
      %v1765 = vld [vmem:[%s1761 + $0x10] sm:$0xf]
      %v1766 = vld [vmem:[%s1761 + $0x18] sm:$0xf]
      %v1767 = vld [vmem:[%s1761 + $0x1c] sm:$0xf]
      %v1768 = vld [vmem:[%s1761 + $0x24] sm:$0xf]
      %v1769 = vld [vmem:[%s1761 + $0x28] sm:$0xf]
      %v1770 = vld [vmem:[%s1761 + $0x30] sm:$0xf]
      %v1771 = vld [vmem:[%s1761 + $0x34] sm:$0xf]
      %v1772 = vld [vmem:[%s1761 + $0x3c] sm:$0xf]
      %v1773 = vld [vmem:[%s1761 + $0x40] sm:$0xf]
      %v1774 = vld [vmem:[%s1761 + $0x48] sm:$0xf]
      %v1775 = vld [vmem:[%s1761 + $0x4c] sm:$0xf]
      %v1776 = vld [vmem:[%s1761 + $0x54] sm:$0xf]
      %v1777 = vld [vmem:[%s1761 + $0x58] sm:$0xf]
      %v1778 = vld [vmem:[%s1761 + $0x60] sm:$0xf]
      %v1779 = vld [vmem:[%s1761 + $0x64] sm:$0xf]
      %v1780 = vld [vmem:[%s1761 + $0x6c] sm:$0xf]
      %v1781 = vld [vmem:[%s1761 + $0x70] sm:$0xf]
      %v1782 = vld [vmem:[%s1761 + $0x78] sm:$0xf]
      %v1783 = vld [vmem:[%s1761 + $0x7c] sm:$0xf]
      %v1784 = vld [vmem:[%s1761 + $0x84] sm:$0xf]
      %v1785 = vld [vmem:[%s1761 + $0x88] sm:$0xf]
      %v1786 = vld [vmem:[%s1761 + $0x90] sm:$0xf]
      %v1787 = vld [vmem:[%s1761 + $0x94] sm:$0xf]
      %v1788 = vld [vmem:[%s1761 + $0x9c] sm:$0xf]
      %v1789 = vld [vmem:[%s1761 + $0xa0] sm:$0xf]
      %v1790 = vld [vmem:[%s1761 + $0xa8] sm:$0xf]
      %v1791 = vld [vmem:[%s1761 + $0xac] sm:$0xf]
      %v1792 = vld [vmem:[%s1761 + $0xb4] sm:$0xf]
      %v1793 = vld [vmem:[%s1761 + $0xb8] sm:$0xf]
      %s1794 = scalar_lea.vmem %s1, 96
      %v1795 = vld [vmem:[%s1794] sm:$0xf]
      %v1796 = vld [vmem:[%s1794 + $0x4] sm:$0xf]
      %v1797 = vld [vmem:[%s1794 + $0x8] sm:$0xf]
      %v1798 = vld [vmem:[%s1794 + $0xc] sm:$0xf]
      %v1799 = vld [vmem:[%s1794 + $0x10] sm:$0xf]
      %v1800 = vld [vmem:[%s1794 + $0x14] sm:$0xf]
      %v1801 = vld [vmem:[%s1794 + $0x18] sm:$0xf]
      %v1802 = vld [vmem:[%s1794 + $0x1c] sm:$0xf]
      %v1835 = vunpack.c.l.b16 %v1762
      %v1836 = vunpack.c.l.b16 %v1763
      %v1837 = vunpack.c.l.b16 %v1764
      %v1838 = vunpack.c.l.b16 %v1765
      %v1839 = vunpack.c.l.b16 %v1766
      %v1840 = vunpack.c.l.b16 %v1767
      %v1841 = vunpack.c.l.b16 %v1768
      %v1842 = vunpack.c.l.b16 %v1769
      %v1843 = vunpack.c.l.b16 %v1770
      %v1844 = vunpack.c.l.b16 %v1771
      %v1845 = vunpack.c.l.b16 %v1772
      %v1846 = vunpack.c.l.b16 %v1773
      %v1847 = vunpack.c.l.b16 %v1774
      %v1848 = vunpack.c.l.b16 %v1775
      %v1849 = vunpack.c.l.b16 %v1776
      %v1850 = vunpack.c.l.b16 %v1777
      %v1851 = vunpack.c.l.b16 %v1778
      %v1852 = vunpack.c.l.b16 %v1779
      %v1853 = vunpack.c.l.b16 %v1780
      %v1854 = vunpack.c.l.b16 %v1781
      %v1855 = vunpack.c.l.b16 %v1782
      %v1856 = vunpack.c.l.b16 %v1783
      %v1857 = vunpack.c.l.b16 %v1784
      %v1858 = vunpack.c.l.b16 %v1785
      %v1859 = vunpack.c.l.b16 %v1786
      %v1860 = vunpack.c.l.b16 %v1787
      %v1861 = vunpack.c.l.b16 %v1788
      %v1862 = vunpack.c.l.b16 %v1789
      %v1863 = vunpack.c.l.b16 %v1790
      %v1864 = vunpack.c.l.b16 %v1791
      %v1865 = vunpack.c.l.b16 %v1792
      %v1866 = vunpack.c.l.b16 %v1793
      %v1867 = vpack.c.b16 %v1836, %v1835
      %v1868 = vpack.c.b16 %v1838, %v1837
      %v1869 = vpack.c.b16 %v1840, %v1839
      %v1870 = vpack.c.b16 %v1842, %v1841
      %v1871 = vpack.c.b16 %v1844, %v1843
      %v1872 = vpack.c.b16 %v1846, %v1845
      %v1873 = vpack.c.b16 %v1848, %v1847
      %v1874 = vpack.c.b16 %v1850, %v1849
      %v1875 = vpack.c.b16 %v1852, %v1851
      %v1876 = vpack.c.b16 %v1854, %v1853
      %v1877 = vpack.c.b16 %v1856, %v1855
      %v1878 = vpack.c.b16 %v1858, %v1857
      %v1879 = vpack.c.b16 %v1860, %v1859
      %v1880 = vpack.c.b16 %v1862, %v1861
      %v1881 = vpack.c.b16 %v1864, %v1863
      %v1882 = vpack.c.b16 %v1866, %v1865
      %v1891 = vunpack.c.l.b16 %v1795
      %v1892 = vunpack.c.l.b16 %v1796
      %v1893 = vunpack.c.l.b16 %v1797
      %v1894 = vunpack.c.l.b16 %v1798
      %v1895 = vunpack.c.l.b16 %v1799
      %v1896 = vunpack.c.l.b16 %v1800
      %v1897 = vunpack.c.l.b16 %v1801
      %v1898 = vunpack.c.l.b16 %v1802
      %v1899 = vpack.c.b16 %v1892, %v1891
      %v1900 = vpack.c.b16 %v1894, %v1893
      %v1901 = vpack.c.b16 %v1896, %v1895
      %v1902 = vpack.c.b16 %v1898, %v1897
      %v1908 = vsel %vm750, %v1867, 0
      %v1911 = vsel %vm750, %v1868, 0
      %v1914 = vsel %vm750, %v1869, 0
      %v1917 = vsel %vm750, %v1870, 0
      %v1920 = vsel %vm750, %v1871, 0
      %v1923 = vsel %vm750, %v1872, 0
      %v1926 = vsel %vm750, %v1873, 0
      %v1929 = vsel %vm750, %v1874, 0
      %v1932 = vsel %vm750, %v1875, 0
      %v1935 = vsel %vm750, %v1876, 0
      %v1938 = vsel %vm750, %v1877, 0
      %v1941 = vsel %vm750, %v1878, 0
      %v1944 = vsel %vm750, %v1879, 0
      %v1947 = vsel %vm750, %v1880, 0
      %v1950 = vsel %vm750, %v1881, 0
      %v1953 = vsel %vm750, %v1882, 0
      %1955 = vmatprep.subr.bf16.mxu0 0
      %1956 = vmatpush1.bf16.msra.mxu0 0
      %1957 = vmatprep.subr.bf16.mxu0 0
      %1958 = vmatpush1.bf16.msra.mxu0 0
      %1959 = vmatprep.subr.bf16.mxu0 0
      %1960 = vmatpush1.bf16.msra.mxu0 0
      %1961 = vmatprep.subr.bf16.mxu0 0
      %1962 = vmatpush1.bf16.msra.mxu0 0
      %1963 = vmatprep.subr.bf16.mxu0 0
      %1964 = vmatpush1.bf16.msra.mxu0 %v1902
      %1965 = vmatprep.subr.bf16.mxu0 0
      %1966 = vmatpush1.bf16.msra.mxu0 %v1901
      %1967 = vmatprep.subr.bf16.mxu0 0
      %1968 = vmatpush1.bf16.msra.mxu0 %v1900
      %1969 = vmatprep.subr.bf16.mxu0 0
      %1970 = vmatpush1.bf16.msra.mxu0 %v1899
      %1971 = vmatprep.subr.bf16.mxu0 0
      %1972 = vmatpush2.bf16.msra.mxu0 0
      %1973 = vmatprep.subr.bf16.mxu0 0
      %1974 = vmatpush2.bf16.msra.mxu0 0
      %1975 = vmatprep.subr.bf16.mxu0 0
      %1976 = vmatpush2.bf16.msra.mxu0 0
      %1977 = vmatprep.subr.bf16.mxu0 0
      %1978 = vmatpush2.bf16.msra.mxu0 0
      %1979 = vmatprep.subr.bf16.mxu0 0
      %1980 = vmatpush2.bf16.msra.mxu0 0
      %1981 = vmatprep.subr.bf16.mxu0 0
      %1982 = vmatpush2.bf16.msra.mxu0 0
      %1983 = vmatprep.subr.bf16.mxu0 0
      %1984 = vmatpush2.bf16.msra.mxu0 0
      %1985 = vmatprep.subr.bf16.mxu0 0
      %1986 = vmatpush2.bf16.msra.mxu0 0
      %1987 = vmatprep.mubr.bf16.mxu0 0
      %1988 = vmatmul.mubr.bf16.gmra.mxu0 %v1908
      %v1989 = vpop.f32.mrf.mxu0
      %v1990 = vadd.f32 0.0, %v1989
      %v1991 = vpop.f32.mrf.mxu0
      %v1992 = vpop.f32.mrf.mxu0
      %v1993 = vadd.f32 0.0, %v1992
      %v1994 = vpop.f32.mrf.mxu0
      %1995 = vmatprep.mubr.bf16.mxu0 0
      %1996 = vmatmul.mubr.bf16.gmra.mxu0 %v1911
      %v1997 = vpop.f32.mrf.mxu0
      %v1998 = vadd.f32 0.0, %v1997
      %v1999 = vpop.f32.mrf.mxu0
      %v2000 = vpop.f32.mrf.mxu0
      %v2001 = vadd.f32 0.0, %v2000
      %v2002 = vpop.f32.mrf.mxu0
      %2003 = vmatprep.mubr.bf16.mxu0 0
      %2004 = vmatmul.mubr.bf16.gmra.mxu0 %v1914
      %v2005 = vpop.f32.mrf.mxu0
      %v2006 = vadd.f32 0.0, %v2005
      %v2007 = vpop.f32.mrf.mxu0
      %v2008 = vpop.f32.mrf.mxu0
      %v2009 = vadd.f32 0.0, %v2008
      %v2010 = vpop.f32.mrf.mxu0
      %2011 = vmatprep.mubr.bf16.mxu0 0
      %2012 = vmatmul.mubr.bf16.gmra.mxu0 %v1917
      %v2013 = vpop.f32.mrf.mxu0
      %v2014 = vadd.f32 0.0, %v2013
      %v2015 = vpop.f32.mrf.mxu0
      %v2016 = vpop.f32.mrf.mxu0
      %v2017 = vadd.f32 0.0, %v2016
      %v2018 = vpop.f32.mrf.mxu0
      %2019 = vmatprep.mubr.bf16.mxu0 0
      %2020 = vmatmul.mubr.bf16.gmra.mxu0 %v1920
      %v2021 = vpop.f32.mrf.mxu0
      %v2022 = vadd.f32 0.0, %v2021
      %v2023 = vpop.f32.mrf.mxu0
      %v2024 = vpop.f32.mrf.mxu0
      %v2025 = vadd.f32 0.0, %v2024
      %v2026 = vpop.f32.mrf.mxu0
      %2027 = vmatprep.mubr.bf16.mxu0 0
      %2028 = vmatmul.mubr.bf16.gmra.mxu0 %v1923
      %v2029 = vpop.f32.mrf.mxu0
      %v2030 = vadd.f32 0.0, %v2029
      %v2031 = vpop.f32.mrf.mxu0
      %v2032 = vpop.f32.mrf.mxu0
      %v2033 = vadd.f32 0.0, %v2032
      %v2034 = vpop.f32.mrf.mxu0
      %2035 = vmatprep.mubr.bf16.mxu0 0
      %2036 = vmatmul.mubr.bf16.gmra.mxu0 %v1926
      %v2037 = vpop.f32.mrf.mxu0
      %v2038 = vadd.f32 0.0, %v2037
      %v2039 = vpop.f32.mrf.mxu0
      %v2040 = vpop.f32.mrf.mxu0
      %v2041 = vadd.f32 0.0, %v2040
      %v2042 = vpop.f32.mrf.mxu0
      %2043 = vmatprep.mubr.bf16.mxu0 0
      %2044 = vmatmul.mubr.bf16.gmra.mxu0 %v1929
      %v2045 = vpop.f32.mrf.mxu0
      %v2046 = vadd.f32 0.0, %v2045
      %v2047 = vpop.f32.mrf.mxu0
      %v2048 = vpop.f32.mrf.mxu0
      %v2049 = vadd.f32 0.0, %v2048
      %v2050 = vpop.f32.mrf.mxu0
      %2051 = vmatprep.mubr.bf16.mxu0 0
      %2052 = vmatmul.mubr.bf16.gmra.mxu0 %v1932
      %v2053 = vpop.f32.mrf.mxu0
      %v2054 = vadd.f32 0.0, %v2053
      %v2055 = vpop.f32.mrf.mxu0
      %v2056 = vpop.f32.mrf.mxu0
      %v2057 = vadd.f32 0.0, %v2056
      %v2058 = vpop.f32.mrf.mxu0
      %2059 = vmatprep.mubr.bf16.mxu0 0
      %2060 = vmatmul.mubr.bf16.gmra.mxu0 %v1935
      %v2061 = vpop.f32.mrf.mxu0
      %v2062 = vadd.f32 0.0, %v2061
      %v2063 = vpop.f32.mrf.mxu0
      %v2064 = vpop.f32.mrf.mxu0
      %v2065 = vadd.f32 0.0, %v2064
      %v2066 = vpop.f32.mrf.mxu0
      %2067 = vmatprep.mubr.bf16.mxu0 0
      %2068 = vmatmul.mubr.bf16.gmra.mxu0 %v1938
      %v2069 = vpop.f32.mrf.mxu0
      %v2070 = vadd.f32 0.0, %v2069
      %v2071 = vpop.f32.mrf.mxu0
      %v2072 = vpop.f32.mrf.mxu0
      %v2073 = vadd.f32 0.0, %v2072
      %v2074 = vpop.f32.mrf.mxu0
      %2075 = vmatprep.mubr.bf16.mxu0 0
      %2076 = vmatmul.mubr.bf16.gmra.mxu0 %v1941
      %v2077 = vpop.f32.mrf.mxu0
      %v2078 = vadd.f32 0.0, %v2077
      %v2079 = vpop.f32.mrf.mxu0
      %v2080 = vpop.f32.mrf.mxu0
      %v2081 = vadd.f32 0.0, %v2080
      %v2082 = vpop.f32.mrf.mxu0
      %2083 = vmatprep.mubr.bf16.mxu0 0
      %2084 = vmatmul.mubr.bf16.gmra.mxu0 %v1944
      %v2085 = vpop.f32.mrf.mxu0
      %v2086 = vadd.f32 0.0, %v2085
      %v2087 = vpop.f32.mrf.mxu0
      %v2088 = vpop.f32.mrf.mxu0
      %v2089 = vadd.f32 0.0, %v2088
      %v2090 = vpop.f32.mrf.mxu0
      %2091 = vmatprep.mubr.bf16.mxu0 0
      %2092 = vmatmul.mubr.bf16.gmra.mxu0 %v1947
      %v2093 = vpop.f32.mrf.mxu0
      %v2094 = vadd.f32 0.0, %v2093
      %v2095 = vpop.f32.mrf.mxu0
      %v2096 = vpop.f32.mrf.mxu0
      %v2097 = vadd.f32 0.0, %v2096
      %v2098 = vpop.f32.mrf.mxu0
      %2099 = vmatprep.mubr.bf16.mxu0 0
      %2100 = vmatmul.mubr.bf16.gmra.mxu0 %v1950
      %v2101 = vpop.f32.mrf.mxu0
      %v2102 = vadd.f32 0.0, %v2101
      %v2103 = vpop.f32.mrf.mxu0
      %v2104 = vpop.f32.mrf.mxu0
      %v2105 = vadd.f32 0.0, %v2104
      %v2106 = vpop.f32.mrf.mxu0
      %2107 = vmatprep.mubr.bf16.mxu0 0
      %2108 = vmatmul.mubr.bf16.gmra.mxu0 %v1953
      %v2109 = vpop.f32.mrf.mxu0
      %v2110 = vadd.f32 0.0, %v2109
      %v2111 = vpop.f32.mrf.mxu0
      %v2112 = vpop.f32.mrf.mxu0
      %v2113 = vadd.f32 0.0, %v2112
      %v2114 = vpop.f32.mrf.mxu0
      %2115 = vdwg.mxu0
      %v2116 = vadd.f32 %v1726, %v1990
      %v2117 = vadd.f32 %v1727, %v1993
      %v2118 = vadd.f32 %v1728, %v1998
      %v2119 = vadd.f32 %v1729, %v2001
      %v2120 = vadd.f32 %v1730, %v2006
      %v2121 = vadd.f32 %v1731, %v2009
      %v2122 = vadd.f32 %v1732, %v2014
      %v2123 = vadd.f32 %v1733, %v2017
      %v2124 = vadd.f32 %v1734, %v2022
      %v2125 = vadd.f32 %v1735, %v2025
      %v2126 = vadd.f32 %v1736, %v2030
      %v2127 = vadd.f32 %v1737, %v2033
      %v2128 = vadd.f32 %v1738, %v2038
      %v2129 = vadd.f32 %v1739, %v2041
      %v2130 = vadd.f32 %v1740, %v2046
      %v2131 = vadd.f32 %v1741, %v2049
      %v2132 = vadd.f32 %v1742, %v2054
      %v2133 = vadd.f32 %v1743, %v2057
      %v2134 = vadd.f32 %v1744, %v2062
      %v2135 = vadd.f32 %v1745, %v2065
      %v2136 = vadd.f32 %v1746, %v2070
      %v2137 = vadd.f32 %v1747, %v2073
      %v2138 = vadd.f32 %v1748, %v2078
      %v2139 = vadd.f32 %v1749, %v2081
      %v2140 = vadd.f32 %v1750, %v2086
      %v2141 = vadd.f32 %v1751, %v2089
      %v2142 = vadd.f32 %v1752, %v2094
      %v2143 = vadd.f32 %v1753, %v2097
      %v2144 = vadd.f32 %v1754, %v2102
      %v2145 = vadd.f32 %v1755, %v2105
      %v2146 = vadd.f32 %v1756, %v2110
      %v2147 = vadd.f32 %v1757, %v2113
      %v2148 = vld [vmem:[%s1761] sm:$0xf]
      %v2149 = vld [vmem:[%s1761 + $0x4] sm:$0xf]
      %v2150 = vld [vmem:[%s1761 + $0x8] sm:$0x1]
      %v2151 = vld [vmem:[%s1761 + $0xc] sm:$0xf]
      %v2152 = vld [vmem:[%s1761 + $0x10] sm:$0xf]
      %v2153 = vld [vmem:[%s1761 + $0x14] sm:$0x1]
      %v2154 = vld [vmem:[%s1761 + $0x18] sm:$0xf]
      %v2155 = vld [vmem:[%s1761 + $0x1c] sm:$0xf]
      %v2156 = vld [vmem:[%s1761 + $0x20] sm:$0x1]
      %v2157 = vld [vmem:[%s1761 + $0x24] sm:$0xf]
      %v2158 = vld [vmem:[%s1761 + $0x28] sm:$0xf]
      %v2159 = vld [vmem:[%s1761 + $0x2c] sm:$0x1]
      %v2160 = vld [vmem:[%s1761 + $0x30] sm:$0xf]
      %v2161 = vld [vmem:[%s1761 + $0x34] sm:$0xf]
      %v2162 = vld [vmem:[%s1761 + $0x38] sm:$0x1]
      %v2163 = vld [vmem:[%s1761 + $0x3c] sm:$0xf]
      %v2164 = vld [vmem:[%s1761 + $0x40] sm:$0xf]
      %v2165 = vld [vmem:[%s1761 + $0x44] sm:$0x1]
      %v2166 = vld [vmem:[%s1761 + $0x48] sm:$0xf]
      %v2167 = vld [vmem:[%s1761 + $0x4c] sm:$0xf]
      %v2168 = vld [vmem:[%s1761 + $0x50] sm:$0x1]
      %v2169 = vld [vmem:[%s1761 + $0x54] sm:$0xf]
      %v2170 = vld [vmem:[%s1761 + $0x58] sm:$0xf]
      %v2171 = vld [vmem:[%s1761 + $0x5c] sm:$0x1]
      %v2172 = vld [vmem:[%s1761 + $0x60] sm:$0xf]
      %v2173 = vld [vmem:[%s1761 + $0x64] sm:$0xf]
      %v2174 = vld [vmem:[%s1761 + $0x68] sm:$0x1]
      %v2175 = vld [vmem:[%s1761 + $0x6c] sm:$0xf]
      %v2176 = vld [vmem:[%s1761 + $0x70] sm:$0xf]
      %v2177 = vld [vmem:[%s1761 + $0x74] sm:$0x1]
      %v2178 = vld [vmem:[%s1761 + $0x78] sm:$0xf]
      %v2179 = vld [vmem:[%s1761 + $0x7c] sm:$0xf]
      %v2180 = vld [vmem:[%s1761 + $0x80] sm:$0x1]
      %v2181 = vld [vmem:[%s1761 + $0x84] sm:$0xf]
      %v2182 = vld [vmem:[%s1761 + $0x88] sm:$0xf]
      %v2183 = vld [vmem:[%s1761 + $0x8c] sm:$0x1]
      %v2184 = vld [vmem:[%s1761 + $0x90] sm:$0xf]
      %v2185 = vld [vmem:[%s1761 + $0x94] sm:$0xf]
      %v2186 = vld [vmem:[%s1761 + $0x98] sm:$0x1]
      %v2187 = vld [vmem:[%s1761 + $0x9c] sm:$0xf]
      %v2188 = vld [vmem:[%s1761 + $0xa0] sm:$0xf]
      %v2189 = vld [vmem:[%s1761 + $0xa4] sm:$0x1]
      %v2190 = vld [vmem:[%s1761 + $0xa8] sm:$0xf]
      %v2191 = vld [vmem:[%s1761 + $0xac] sm:$0xf]
      %v2192 = vld [vmem:[%s1761 + $0xb0] sm:$0x1]
      %v2193 = vld [vmem:[%s1761 + $0xb4] sm:$0xf]
      %v2194 = vld [vmem:[%s1761 + $0xb8] sm:$0xf]
      %v2195 = vld [vmem:[%s1761 + $0xbc] sm:$0x1]
      %v2197 = vshrl.u32 %v2148, 16
      %v2199 = vrot.slane %v2197, 4
      %v2200 = vshll.u32 %v2148, 16
      %v2202 = vrot.slane %v2200, 5
      %v2203 = vor.u32 %v2199, %v2202
      %v2204 = vrot.slane %v2203, 4
      %v2206 = vshll.u32 %v2149, 16
      %v2208 = vrot.slane %v2206, 5
      %v2209 = vsel %vm284, %v2204, %v2208
      %v2210 = vshrl.u32 %v2149, 16
      %v2212 = vrot.slane %v2210, 4
      %v2213 = vor.u32 %v2212, %v2208
      %v2214 = vrot.slane %v2213, 4
      %v2216 = vshll.u32 %v2150, 16
      %v2218 = vrot.slane %v2216, 5
      %v2219 = vsel %vm284, %v2214, %v2218
      %v2221 = vshrl.u32 %v2151, 16
      %v2223 = vrot.slane %v2221, 4
      %v2224 = vshll.u32 %v2151, 16
      %v2226 = vrot.slane %v2224, 5
      %v2227 = vor.u32 %v2223, %v2226
      %v2228 = vrot.slane %v2227, 4
      %v2230 = vshll.u32 %v2152, 16
      %v2232 = vrot.slane %v2230, 5
      %v2233 = vsel %vm284, %v2228, %v2232
      %v2234 = vshrl.u32 %v2152, 16
      %v2236 = vrot.slane %v2234, 4
      %v2237 = vor.u32 %v2236, %v2232
      %v2238 = vrot.slane %v2237, 4
      %v2240 = vshll.u32 %v2153, 16
      %v2242 = vrot.slane %v2240, 5
      %v2243 = vsel %vm284, %v2238, %v2242
      %v2245 = vshrl.u32 %v2154, 16
      %v2247 = vrot.slane %v2245, 4
      %v2248 = vshll.u32 %v2154, 16
      %v2250 = vrot.slane %v2248, 5
      %v2251 = vor.u32 %v2247, %v2250
      %v2252 = vrot.slane %v2251, 4
      %v2254 = vshll.u32 %v2155, 16
      %v2256 = vrot.slane %v2254, 5
      %v2257 = vsel %vm284, %v2252, %v2256
      %v2258 = vshrl.u32 %v2155, 16
      %v2260 = vrot.slane %v2258, 4
      %v2261 = vor.u32 %v2260, %v2256
      %v2262 = vrot.slane %v2261, 4
      %v2264 = vshll.u32 %v2156, 16
      %v2266 = vrot.slane %v2264, 5
      %v2267 = vsel %vm284, %v2262, %v2266
      %v2269 = vshrl.u32 %v2157, 16
      %v2271 = vrot.slane %v2269, 4
      %v2272 = vshll.u32 %v2157, 16
      %v2274 = vrot.slane %v2272, 5
      %v2275 = vor.u32 %v2271, %v2274
      %v2276 = vrot.slane %v2275, 4
      %v2278 = vshll.u32 %v2158, 16
      %v2280 = vrot.slane %v2278, 5
      %v2281 = vsel %vm284, %v2276, %v2280
      %v2282 = vshrl.u32 %v2158, 16
      %v2284 = vrot.slane %v2282, 4
      %v2285 = vor.u32 %v2284, %v2280
      %v2286 = vrot.slane %v2285, 4
      %v2288 = vshll.u32 %v2159, 16
      %v2290 = vrot.slane %v2288, 5
      %v2291 = vsel %vm284, %v2286, %v2290
      %v2293 = vshrl.u32 %v2160, 16
      %v2295 = vrot.slane %v2293, 4
      %v2296 = vshll.u32 %v2160, 16
      %v2298 = vrot.slane %v2296, 5
      %v2299 = vor.u32 %v2295, %v2298
      %v2300 = vrot.slane %v2299, 4
      %v2302 = vshll.u32 %v2161, 16
      %v2304 = vrot.slane %v2302, 5
      %v2305 = vsel %vm284, %v2300, %v2304
      %v2306 = vshrl.u32 %v2161, 16
      %v2308 = vrot.slane %v2306, 4
      %v2309 = vor.u32 %v2308, %v2304
      %v2310 = vrot.slane %v2309, 4
      %v2312 = vshll.u32 %v2162, 16
      %v2314 = vrot.slane %v2312, 5
      %v2315 = vsel %vm284, %v2310, %v2314
      %v2317 = vshrl.u32 %v2163, 16
      %v2319 = vrot.slane %v2317, 4
      %v2320 = vshll.u32 %v2163, 16
      %v2322 = vrot.slane %v2320, 5
      %v2323 = vor.u32 %v2319, %v2322
      %v2324 = vrot.slane %v2323, 4
      %v2326 = vshll.u32 %v2164, 16
      %v2328 = vrot.slane %v2326, 5
      %v2329 = vsel %vm284, %v2324, %v2328
      %v2330 = vshrl.u32 %v2164, 16
      %v2332 = vrot.slane %v2330, 4
      %v2333 = vor.u32 %v2332, %v2328
      %v2334 = vrot.slane %v2333, 4
      %v2336 = vshll.u32 %v2165, 16
      %v2338 = vrot.slane %v2336, 5
      %v2339 = vsel %vm284, %v2334, %v2338
      %v2341 = vshrl.u32 %v2166, 16
      %v2343 = vrot.slane %v2341, 4
      %v2344 = vshll.u32 %v2166, 16
      %v2346 = vrot.slane %v2344, 5
      %v2347 = vor.u32 %v2343, %v2346
      %v2348 = vrot.slane %v2347, 4
      %v2350 = vshll.u32 %v2167, 16
      %v2352 = vrot.slane %v2350, 5
      %v2353 = vsel %vm284, %v2348, %v2352
      %v2354 = vshrl.u32 %v2167, 16
      %v2356 = vrot.slane %v2354, 4
      %v2357 = vor.u32 %v2356, %v2352
      %v2358 = vrot.slane %v2357, 4
      %v2360 = vshll.u32 %v2168, 16
      %v2362 = vrot.slane %v2360, 5
      %v2363 = vsel %vm284, %v2358, %v2362
      %v2365 = vshrl.u32 %v2169, 16
      %v2367 = vrot.slane %v2365, 4
      %v2368 = vshll.u32 %v2169, 16
      %v2370 = vrot.slane %v2368, 5
      %v2371 = vor.u32 %v2367, %v2370
      %v2372 = vrot.slane %v2371, 4
      %v2374 = vshll.u32 %v2170, 16
      %v2376 = vrot.slane %v2374, 5
      %v2377 = vsel %vm284, %v2372, %v2376
      %v2378 = vshrl.u32 %v2170, 16
      %v2380 = vrot.slane %v2378, 4
      %v2381 = vor.u32 %v2380, %v2376
      %v2382 = vrot.slane %v2381, 4
      %v2384 = vshll.u32 %v2171, 16
      %v2386 = vrot.slane %v2384, 5
      %v2387 = vsel %vm284, %v2382, %v2386
      %v2389 = vshrl.u32 %v2172, 16
      %v2391 = vrot.slane %v2389, 4
      %v2392 = vshll.u32 %v2172, 16
      %v2394 = vrot.slane %v2392, 5
      %v2395 = vor.u32 %v2391, %v2394
      %v2396 = vrot.slane %v2395, 4
      %v2398 = vshll.u32 %v2173, 16
      %v2400 = vrot.slane %v2398, 5
      %v2401 = vsel %vm284, %v2396, %v2400
      %v2402 = vshrl.u32 %v2173, 16
      %v2404 = vrot.slane %v2402, 4
      %v2405 = vor.u32 %v2404, %v2400
      %v2406 = vrot.slane %v2405, 4
      %v2408 = vshll.u32 %v2174, 16
      %v2410 = vrot.slane %v2408, 5
      %v2411 = vsel %vm284, %v2406, %v2410
      %v2413 = vshrl.u32 %v2175, 16
      %v2415 = vrot.slane %v2413, 4
      %v2416 = vshll.u32 %v2175, 16
      %v2418 = vrot.slane %v2416, 5
      %v2419 = vor.u32 %v2415, %v2418
      %v2420 = vrot.slane %v2419, 4
      %v2422 = vshll.u32 %v2176, 16
      %v2424 = vrot.slane %v2422, 5
      %v2425 = vsel %vm284, %v2420, %v2424
      %v2426 = vshrl.u32 %v2176, 16
      %v2428 = vrot.slane %v2426, 4
      %v2429 = vor.u32 %v2428, %v2424
      %v2430 = vrot.slane %v2429, 4
      %v2432 = vshll.u32 %v2177, 16
      %v2434 = vrot.slane %v2432, 5
      %v2435 = vsel %vm284, %v2430, %v2434
      %v2437 = vshrl.u32 %v2178, 16
      %v2439 = vrot.slane %v2437, 4
      %v2440 = vshll.u32 %v2178, 16
      %v2442 = vrot.slane %v2440, 5
      %v2443 = vor.u32 %v2439, %v2442
      %v2444 = vrot.slane %v2443, 4
      %v2446 = vshll.u32 %v2179, 16
      %v2448 = vrot.slane %v2446, 5
      %v2449 = vsel %vm284, %v2444, %v2448
      %v2450 = vshrl.u32 %v2179, 16
      %v2452 = vrot.slane %v2450, 4
      %v2453 = vor.u32 %v2452, %v2448
      %v2454 = vrot.slane %v2453, 4
      %v2456 = vshll.u32 %v2180, 16
      %v2458 = vrot.slane %v2456, 5
      %v2459 = vsel %vm284, %v2454, %v2458
      %v2461 = vshrl.u32 %v2181, 16
      %v2463 = vrot.slane %v2461, 4
      %v2464 = vshll.u32 %v2181, 16
      %v2466 = vrot.slane %v2464, 5
      %v2467 = vor.u32 %v2463, %v2466
      %v2468 = vrot.slane %v2467, 4
      %v2470 = vshll.u32 %v2182, 16
      %v2472 = vrot.slane %v2470, 5
      %v2473 = vsel %vm284, %v2468, %v2472
      %v2474 = vshrl.u32 %v2182, 16
      %v2476 = vrot.slane %v2474, 4
      %v2477 = vor.u32 %v2476, %v2472
      %v2478 = vrot.slane %v2477, 4
      %v2480 = vshll.u32 %v2183, 16
      %v2482 = vrot.slane %v2480, 5
      %v2483 = vsel %vm284, %v2478, %v2482
      %v2485 = vshrl.u32 %v2184, 16
      %v2487 = vrot.slane %v2485, 4
      %v2488 = vshll.u32 %v2184, 16
      %v2490 = vrot.slane %v2488, 5
      %v2491 = vor.u32 %v2487, %v2490
      %v2492 = vrot.slane %v2491, 4
      %v2494 = vshll.u32 %v2185, 16
      %v2496 = vrot.slane %v2494, 5
      %v2497 = vsel %vm284, %v2492, %v2496
      %v2498 = vshrl.u32 %v2185, 16
      %v2500 = vrot.slane %v2498, 4
      %v2501 = vor.u32 %v2500, %v2496
      %v2502 = vrot.slane %v2501, 4
      %v2504 = vshll.u32 %v2186, 16
      %v2506 = vrot.slane %v2504, 5
      %v2507 = vsel %vm284, %v2502, %v2506
      %v2509 = vshrl.u32 %v2187, 16
      %v2511 = vrot.slane %v2509, 4
      %v2512 = vshll.u32 %v2187, 16
      %v2514 = vrot.slane %v2512, 5
      %v2515 = vor.u32 %v2511, %v2514
      %v2516 = vrot.slane %v2515, 4
      %v2518 = vshll.u32 %v2188, 16
      %v2520 = vrot.slane %v2518, 5
      %v2521 = vsel %vm284, %v2516, %v2520
      %v2522 = vshrl.u32 %v2188, 16
      %v2524 = vrot.slane %v2522, 4
      %v2525 = vor.u32 %v2524, %v2520
      %v2526 = vrot.slane %v2525, 4
      %v2528 = vshll.u32 %v2189, 16
      %v2530 = vrot.slane %v2528, 5
      %v2531 = vsel %vm284, %v2526, %v2530
      %v2533 = vshrl.u32 %v2190, 16
      %v2535 = vrot.slane %v2533, 4
      %v2536 = vshll.u32 %v2190, 16
      %v2538 = vrot.slane %v2536, 5
      %v2539 = vor.u32 %v2535, %v2538
      %v2540 = vrot.slane %v2539, 4
      %v2542 = vshll.u32 %v2191, 16
      %v2544 = vrot.slane %v2542, 5
      %v2545 = vsel %vm284, %v2540, %v2544
      %v2546 = vshrl.u32 %v2191, 16
      %v2548 = vrot.slane %v2546, 4
      %v2549 = vor.u32 %v2548, %v2544
      %v2550 = vrot.slane %v2549, 4
      %v2552 = vshll.u32 %v2192, 16
      %v2554 = vrot.slane %v2552, 5
      %v2555 = vsel %vm284, %v2550, %v2554
      %v2557 = vshrl.u32 %v2193, 16
      %v2559 = vrot.slane %v2557, 4
      %v2560 = vshll.u32 %v2193, 16
      %v2562 = vrot.slane %v2560, 5
      %v2563 = vor.u32 %v2559, %v2562
      %v2564 = vrot.slane %v2563, 4
      %v2566 = vshll.u32 %v2194, 16
      %v2568 = vrot.slane %v2566, 5
      %v2569 = vsel %vm284, %v2564, %v2568
      %v2570 = vshrl.u32 %v2194, 16
      %v2572 = vrot.slane %v2570, 4
      %v2573 = vor.u32 %v2572, %v2568
      %v2574 = vrot.slane %v2573, 4
      %v2576 = vshll.u32 %v2195, 16
      %v2578 = vrot.slane %v2576, 5
      %v2579 = vsel %vm284, %v2574, %v2578
      %s2580 = scalar_lea.vmem %s1, 128
      %v2581 = vld [vmem:[%s2580] sm:$0xf]
      %v2582 = vld [vmem:[%s2580 + $0x4] sm:$0xf]
      %v2583 = vld [vmem:[%s2580 + $0x8] sm:$0xf]
      %v2584 = vld [vmem:[%s2580 + $0xc] sm:$0xf]
      %v2585 = vld [vmem:[%s2580 + $0x10] sm:$0xf]
      %v2586 = vld [vmem:[%s2580 + $0x14] sm:$0xf]
      %v2587 = vld [vmem:[%s2580 + $0x18] sm:$0xf]
      %v2588 = vld [vmem:[%s2580 + $0x1c] sm:$0xf]
      %v2589 = vunpack.c.l.b16 %v2209
      %v2590 = vunpack.c.l.b16 %v2219
      %v2591 = vunpack.c.l.b16 %v2233
      %v2592 = vunpack.c.l.b16 %v2243
      %v2593 = vunpack.c.l.b16 %v2257
      %v2594 = vunpack.c.l.b16 %v2267
      %v2595 = vunpack.c.l.b16 %v2281
      %v2596 = vunpack.c.l.b16 %v2291
      %v2597 = vunpack.c.l.b16 %v2305
      %v2598 = vunpack.c.l.b16 %v2315
      %v2599 = vunpack.c.l.b16 %v2329
      %v2600 = vunpack.c.l.b16 %v2339
      %v2601 = vunpack.c.l.b16 %v2353
      %v2602 = vunpack.c.l.b16 %v2363
      %v2603 = vunpack.c.l.b16 %v2377
      %v2604 = vunpack.c.l.b16 %v2387
      %v2605 = vunpack.c.l.b16 %v2401
      %v2606 = vunpack.c.l.b16 %v2411
      %v2607 = vunpack.c.l.b16 %v2425
      %v2608 = vunpack.c.l.b16 %v2435
      %v2609 = vunpack.c.l.b16 %v2449
      %v2610 = vunpack.c.l.b16 %v2459
      %v2611 = vunpack.c.l.b16 %v2473
      %v2612 = vunpack.c.l.b16 %v2483
      %v2613 = vunpack.c.l.b16 %v2497
      %v2614 = vunpack.c.l.b16 %v2507
      %v2615 = vunpack.c.l.b16 %v2521
      %v2616 = vunpack.c.l.b16 %v2531
      %v2617 = vunpack.c.l.b16 %v2545
      %v2618 = vunpack.c.l.b16 %v2555
      %v2619 = vunpack.c.l.b16 %v2569
      %v2620 = vunpack.c.l.b16 %v2579
      %v2621 = vpack.c.b16 %v2590, %v2589
      %v2622 = vpack.c.b16 %v2592, %v2591
      %v2623 = vpack.c.b16 %v2594, %v2593
      %v2624 = vpack.c.b16 %v2596, %v2595
      %v2625 = vpack.c.b16 %v2598, %v2597
      %v2626 = vpack.c.b16 %v2600, %v2599
      %v2627 = vpack.c.b16 %v2602, %v2601
      %v2628 = vpack.c.b16 %v2604, %v2603
      %v2629 = vpack.c.b16 %v2606, %v2605
      %v2630 = vpack.c.b16 %v2608, %v2607
      %v2631 = vpack.c.b16 %v2610, %v2609
      %v2632 = vpack.c.b16 %v2612, %v2611
      %v2633 = vpack.c.b16 %v2614, %v2613
      %v2634 = vpack.c.b16 %v2616, %v2615
      %v2635 = vpack.c.b16 %v2618, %v2617
      %v2636 = vpack.c.b16 %v2620, %v2619
      %v2645 = vunpack.c.l.b16 %v2581
      %v2646 = vunpack.c.l.b16 %v2582
      %v2647 = vunpack.c.l.b16 %v2583
      %v2648 = vunpack.c.l.b16 %v2584
      %v2649 = vunpack.c.l.b16 %v2585
      %v2650 = vunpack.c.l.b16 %v2586
      %v2651 = vunpack.c.l.b16 %v2587
      %v2652 = vunpack.c.l.b16 %v2588
      %v2653 = vpack.c.b16 %v2646, %v2645
      %v2654 = vpack.c.b16 %v2648, %v2647
      %v2655 = vpack.c.b16 %v2650, %v2649
      %v2656 = vpack.c.b16 %v2652, %v2651
      %v2662 = vsel %vm750, %v2621, 0
      %v2665 = vsel %vm750, %v2622, 0
      %v2668 = vsel %vm750, %v2623, 0
      %v2671 = vsel %vm750, %v2624, 0
      %v2674 = vsel %vm750, %v2625, 0
      %v2677 = vsel %vm750, %v2626, 0
      %v2680 = vsel %vm750, %v2627, 0
      %v2683 = vsel %vm750, %v2628, 0
      %v2686 = vsel %vm750, %v2629, 0
      %v2689 = vsel %vm750, %v2630, 0
      %v2692 = vsel %vm750, %v2631, 0
      %v2695 = vsel %vm750, %v2632, 0
      %v2698 = vsel %vm750, %v2633, 0
      %v2701 = vsel %vm750, %v2634, 0
      %v2704 = vsel %vm750, %v2635, 0
      %v2707 = vsel %vm750, %v2636, 0
      %2709 = vmatprep.subr.bf16.mxu0 0
      %2710 = vmatpush1.bf16.msra.mxu0 0
      %2711 = vmatprep.subr.bf16.mxu0 0
      %2712 = vmatpush1.bf16.msra.mxu0 0
      %2713 = vmatprep.subr.bf16.mxu0 0
      %2714 = vmatpush1.bf16.msra.mxu0 0
      %2715 = vmatprep.subr.bf16.mxu0 0
      %2716 = vmatpush1.bf16.msra.mxu0 0
      %2717 = vmatprep.subr.bf16.mxu0 0
      %2718 = vmatpush1.bf16.msra.mxu0 %v2656
      %2719 = vmatprep.subr.bf16.mxu0 0
      %2720 = vmatpush1.bf16.msra.mxu0 %v2655
      %2721 = vmatprep.subr.bf16.mxu0 0
      %2722 = vmatpush1.bf16.msra.mxu0 %v2654
      %2723 = vmatprep.subr.bf16.mxu0 0
      %2724 = vmatpush1.bf16.msra.mxu0 %v2653
      %2725 = vmatprep.subr.bf16.mxu0 0
      %2726 = vmatpush2.bf16.msra.mxu0 0
      %2727 = vmatprep.subr.bf16.mxu0 0
      %2728 = vmatpush2.bf16.msra.mxu0 0
      %2729 = vmatprep.subr.bf16.mxu0 0
      %2730 = vmatpush2.bf16.msra.mxu0 0
      %2731 = vmatprep.subr.bf16.mxu0 0
      %2732 = vmatpush2.bf16.msra.mxu0 0
      %2733 = vmatprep.subr.bf16.mxu0 0
      %2734 = vmatpush2.bf16.msra.mxu0 0
      %2735 = vmatprep.subr.bf16.mxu0 0
      %2736 = vmatpush2.bf16.msra.mxu0 0
      %2737 = vmatprep.subr.bf16.mxu0 0
      %2738 = vmatpush2.bf16.msra.mxu0 0
      %2739 = vmatprep.subr.bf16.mxu0 0
      %2740 = vmatpush2.bf16.msra.mxu0 0
      %2741 = vmatprep.mubr.bf16.mxu0 0
      %2742 = vmatmul.mubr.bf16.gmra.mxu0 %v2662
      %v2743 = vpop.f32.mrf.mxu0
      %v2744 = vadd.f32 0.0, %v2743
      %v2745 = vpop.f32.mrf.mxu0
      %v2746 = vpop.f32.mrf.mxu0
      %v2747 = vadd.f32 0.0, %v2746
      %v2748 = vpop.f32.mrf.mxu0
      %2749 = vmatprep.mubr.bf16.mxu0 0
      %2750 = vmatmul.mubr.bf16.gmra.mxu0 %v2665
      %v2751 = vpop.f32.mrf.mxu0
      %v2752 = vadd.f32 0.0, %v2751
      %v2753 = vpop.f32.mrf.mxu0
      %v2754 = vpop.f32.mrf.mxu0
      %v2755 = vadd.f32 0.0, %v2754
      %v2756 = vpop.f32.mrf.mxu0
      %2757 = vmatprep.mubr.bf16.mxu0 0
      %2758 = vmatmul.mubr.bf16.gmra.mxu0 %v2668
      %v2759 = vpop.f32.mrf.mxu0
      %v2760 = vadd.f32 0.0, %v2759
      %v2761 = vpop.f32.mrf.mxu0
      %v2762 = vpop.f32.mrf.mxu0
      %v2763 = vadd.f32 0.0, %v2762
      %v2764 = vpop.f32.mrf.mxu0
      %2765 = vmatprep.mubr.bf16.mxu0 0
      %2766 = vmatmul.mubr.bf16.gmra.mxu0 %v2671
      %v2767 = vpop.f32.mrf.mxu0
      %v2768 = vadd.f32 0.0, %v2767
      %v2769 = vpop.f32.mrf.mxu0
      %v2770 = vpop.f32.mrf.mxu0
      %v2771 = vadd.f32 0.0, %v2770
      %v2772 = vpop.f32.mrf.mxu0
      %2773 = vmatprep.mubr.bf16.mxu0 0
      %2774 = vmatmul.mubr.bf16.gmra.mxu0 %v2674
      %v2775 = vpop.f32.mrf.mxu0
      %v2776 = vadd.f32 0.0, %v2775
      %v2777 = vpop.f32.mrf.mxu0
      %v2778 = vpop.f32.mrf.mxu0
      %v2779 = vadd.f32 0.0, %v2778
      %v2780 = vpop.f32.mrf.mxu0
      %2781 = vmatprep.mubr.bf16.mxu0 0
      %2782 = vmatmul.mubr.bf16.gmra.mxu0 %v2677
      %v2783 = vpop.f32.mrf.mxu0
      %v2784 = vadd.f32 0.0, %v2783
      %v2785 = vpop.f32.mrf.mxu0
      %v2786 = vpop.f32.mrf.mxu0
      %v2787 = vadd.f32 0.0, %v2786
      %v2788 = vpop.f32.mrf.mxu0
      %2789 = vmatprep.mubr.bf16.mxu0 0
      %2790 = vmatmul.mubr.bf16.gmra.mxu0 %v2680
      %v2791 = vpop.f32.mrf.mxu0
      %v2792 = vadd.f32 0.0, %v2791
      %v2793 = vpop.f32.mrf.mxu0
      %v2794 = vpop.f32.mrf.mxu0
      %v2795 = vadd.f32 0.0, %v2794
      %v2796 = vpop.f32.mrf.mxu0
      %2797 = vmatprep.mubr.bf16.mxu0 0
      %2798 = vmatmul.mubr.bf16.gmra.mxu0 %v2683
      %v2799 = vpop.f32.mrf.mxu0
      %v2800 = vadd.f32 0.0, %v2799
      %v2801 = vpop.f32.mrf.mxu0
      %v2802 = vpop.f32.mrf.mxu0
      %v2803 = vadd.f32 0.0, %v2802
      %v2804 = vpop.f32.mrf.mxu0
      %2805 = vmatprep.mubr.bf16.mxu0 0
      %2806 = vmatmul.mubr.bf16.gmra.mxu0 %v2686
      %v2807 = vpop.f32.mrf.mxu0
      %v2808 = vadd.f32 0.0, %v2807
      %v2809 = vpop.f32.mrf.mxu0
      %v2810 = vpop.f32.mrf.mxu0
      %v2811 = vadd.f32 0.0, %v2810
      %v2812 = vpop.f32.mrf.mxu0
      %2813 = vmatprep.mubr.bf16.mxu0 0
      %2814 = vmatmul.mubr.bf16.gmra.mxu0 %v2689
      %v2815 = vpop.f32.mrf.mxu0
      %v2816 = vadd.f32 0.0, %v2815
      %v2817 = vpop.f32.mrf.mxu0
      %v2818 = vpop.f32.mrf.mxu0
      %v2819 = vadd.f32 0.0, %v2818
      %v2820 = vpop.f32.mrf.mxu0
      %2821 = vmatprep.mubr.bf16.mxu0 0
      %2822 = vmatmul.mubr.bf16.gmra.mxu0 %v2692
      %v2823 = vpop.f32.mrf.mxu0
      %v2824 = vadd.f32 0.0, %v2823
      %v2825 = vpop.f32.mrf.mxu0
      %v2826 = vpop.f32.mrf.mxu0
      %v2827 = vadd.f32 0.0, %v2826
      %v2828 = vpop.f32.mrf.mxu0
      %2829 = vmatprep.mubr.bf16.mxu0 0
      %2830 = vmatmul.mubr.bf16.gmra.mxu0 %v2695
      %v2831 = vpop.f32.mrf.mxu0
      %v2832 = vadd.f32 0.0, %v2831
      %v2833 = vpop.f32.mrf.mxu0
      %v2834 = vpop.f32.mrf.mxu0
      %v2835 = vadd.f32 0.0, %v2834
      %v2836 = vpop.f32.mrf.mxu0
      %2837 = vmatprep.mubr.bf16.mxu0 0
      %2838 = vmatmul.mubr.bf16.gmra.mxu0 %v2698
      %v2839 = vpop.f32.mrf.mxu0
      %v2840 = vadd.f32 0.0, %v2839
      %v2841 = vpop.f32.mrf.mxu0
      %v2842 = vpop.f32.mrf.mxu0
      %v2843 = vadd.f32 0.0, %v2842
      %v2844 = vpop.f32.mrf.mxu0
      %2845 = vmatprep.mubr.bf16.mxu0 0
      %2846 = vmatmul.mubr.bf16.gmra.mxu0 %v2701
      %v2847 = vpop.f32.mrf.mxu0
      %v2848 = vadd.f32 0.0, %v2847
      %v2849 = vpop.f32.mrf.mxu0
      %v2850 = vpop.f32.mrf.mxu0
      %v2851 = vadd.f32 0.0, %v2850
      %v2852 = vpop.f32.mrf.mxu0
      %2853 = vmatprep.mubr.bf16.mxu0 0
      %2854 = vmatmul.mubr.bf16.gmra.mxu0 %v2704
      %v2855 = vpop.f32.mrf.mxu0
      %v2856 = vadd.f32 0.0, %v2855
      %v2857 = vpop.f32.mrf.mxu0
      %v2858 = vpop.f32.mrf.mxu0
      %v2859 = vadd.f32 0.0, %v2858
      %v2860 = vpop.f32.mrf.mxu0
      %2861 = vmatprep.mubr.bf16.mxu0 0
      %2862 = vmatmul.mubr.bf16.gmra.mxu0 %v2707
      %v2863 = vpop.f32.mrf.mxu0
      %v2864 = vadd.f32 0.0, %v2863
      %v2865 = vpop.f32.mrf.mxu0
      %v2866 = vpop.f32.mrf.mxu0
      %v2867 = vadd.f32 0.0, %v2866
      %v2868 = vpop.f32.mrf.mxu0
      %2869 = vdwg.mxu0
      %v2870 = vadd.f32 %v2116, %v2744
      %v2871 = vadd.f32 %v2117, %v2747
      %v2872 = vadd.f32 %v2118, %v2752
      %v2873 = vadd.f32 %v2119, %v2755
      %v2874 = vadd.f32 %v2120, %v2760
      %v2875 = vadd.f32 %v2121, %v2763
      %v2876 = vadd.f32 %v2122, %v2768
      %v2877 = vadd.f32 %v2123, %v2771
      %v2878 = vadd.f32 %v2124, %v2776
      %v2879 = vadd.f32 %v2125, %v2779
      %v2880 = vadd.f32 %v2126, %v2784
      %v2881 = vadd.f32 %v2127, %v2787
      %v2882 = vadd.f32 %v2128, %v2792
      %v2883 = vadd.f32 %v2129, %v2795
      %v2884 = vadd.f32 %v2130, %v2800
      %v2885 = vadd.f32 %v2131, %v2803
      %v2886 = vadd.f32 %v2132, %v2808
      %v2887 = vadd.f32 %v2133, %v2811
      %v2888 = vadd.f32 %v2134, %v2816
      %v2889 = vadd.f32 %v2135, %v2819
      %v2890 = vadd.f32 %v2136, %v2824
      %v2891 = vadd.f32 %v2137, %v2827
      %v2892 = vadd.f32 %v2138, %v2832
      %v2893 = vadd.f32 %v2139, %v2835
      %v2894 = vadd.f32 %v2140, %v2840
      %v2895 = vadd.f32 %v2141, %v2843
      %v2896 = vadd.f32 %v2142, %v2848
      %v2897 = vadd.f32 %v2143, %v2851
      %v2898 = vadd.f32 %v2144, %v2856
      %v2899 = vadd.f32 %v2145, %v2859
      %v2900 = vadd.f32 %v2146, %v2864
      %v2901 = vadd.f32 %v2147, %v2867
      %v2902 = vld [vmem:[%s1761] sm:$0xe]
      %v2903 = vld [vmem:[%s1761 + $0xc] sm:$0xe]
      %v2904 = vld [vmem:[%s1761 + $0x18] sm:$0xe]
      %v2905 = vld [vmem:[%s1761 + $0x24] sm:$0xe]
      %v2906 = vld [vmem:[%s1761 + $0x30] sm:$0xe]
      %v2907 = vld [vmem:[%s1761 + $0x3c] sm:$0xe]
      %v2908 = vld [vmem:[%s1761 + $0x48] sm:$0xe]
      %v2909 = vld [vmem:[%s1761 + $0x54] sm:$0xe]
      %v2910 = vld [vmem:[%s1761 + $0x60] sm:$0xe]
      %v2911 = vld [vmem:[%s1761 + $0x6c] sm:$0xe]
      %v2912 = vld [vmem:[%s1761 + $0x78] sm:$0xe]
      %v2913 = vld [vmem:[%s1761 + $0x84] sm:$0xe]
      %v2914 = vld [vmem:[%s1761 + $0x90] sm:$0xe]
      %v2915 = vld [vmem:[%s1761 + $0x9c] sm:$0xe]
      %v2916 = vld [vmem:[%s1761 + $0xa8] sm:$0xe]
      %v2917 = vld [vmem:[%s1761 + $0xb4] sm:$0xe]
      %v2966 = vrot.slane %v2902, 5
      %v2967 = vrot.slane %v2966, 4
      %v2968 = vrot.slane %v2149, 5
      %v2969 = vsel %vm1323, %v2967, %v2968
      %v2970 = vrot.slane %v2968, 4
      %v2971 = vrot.slane %v2150, 5
      %v2972 = vsel %vm1323, %v2970, %v2971
      %v2973 = vrot.slane %v2903, 5
      %v2974 = vrot.slane %v2973, 4
      %v2975 = vrot.slane %v2152, 5
      %v2976 = vsel %vm1323, %v2974, %v2975
      %v2977 = vrot.slane %v2975, 4
      %v2978 = vrot.slane %v2153, 5
      %v2979 = vsel %vm1323, %v2977, %v2978
      %v2980 = vrot.slane %v2904, 5
      %v2981 = vrot.slane %v2980, 4
      %v2982 = vrot.slane %v2155, 5
      %v2983 = vsel %vm1323, %v2981, %v2982
      %v2984 = vrot.slane %v2982, 4
      %v2985 = vrot.slane %v2156, 5
      %v2986 = vsel %vm1323, %v2984, %v2985
      %v2987 = vrot.slane %v2905, 5
      %v2988 = vrot.slane %v2987, 4
      %v2989 = vrot.slane %v2158, 5
      %v2990 = vsel %vm1323, %v2988, %v2989
      %v2991 = vrot.slane %v2989, 4
      %v2992 = vrot.slane %v2159, 5
      %v2993 = vsel %vm1323, %v2991, %v2992
      %v2994 = vrot.slane %v2906, 5
      %v2995 = vrot.slane %v2994, 4
      %v2996 = vrot.slane %v2161, 5
      %v2997 = vsel %vm1323, %v2995, %v2996
      %v2998 = vrot.slane %v2996, 4
      %v2999 = vrot.slane %v2162, 5
      %v3000 = vsel %vm1323, %v2998, %v2999
      %v3001 = vrot.slane %v2907, 5
      %v3002 = vrot.slane %v3001, 4
      %v3003 = vrot.slane %v2164, 5
      %v3004 = vsel %vm1323, %v3002, %v3003
      %v3005 = vrot.slane %v3003, 4
      %v3006 = vrot.slane %v2165, 5
      %v3007 = vsel %vm1323, %v3005, %v3006
      %v3008 = vrot.slane %v2908, 5
      %v3009 = vrot.slane %v3008, 4
      %v3010 = vrot.slane %v2167, 5
      %v3011 = vsel %vm1323, %v3009, %v3010
      %v3012 = vrot.slane %v3010, 4
      %v3013 = vrot.slane %v2168, 5
      %v3014 = vsel %vm1323, %v3012, %v3013
      %v3015 = vrot.slane %v2909, 5
      %v3016 = vrot.slane %v3015, 4
      %v3017 = vrot.slane %v2170, 5
      %v3018 = vsel %vm1323, %v3016, %v3017
      %v3019 = vrot.slane %v3017, 4
      %v3020 = vrot.slane %v2171, 5
      %v3021 = vsel %vm1323, %v3019, %v3020
      %v3022 = vrot.slane %v2910, 5
      %v3023 = vrot.slane %v3022, 4
      %v3024 = vrot.slane %v2173, 5
      %v3025 = vsel %vm1323, %v3023, %v3024
      %v3026 = vrot.slane %v3024, 4
      %v3027 = vrot.slane %v2174, 5
      %v3028 = vsel %vm1323, %v3026, %v3027
      %v3029 = vrot.slane %v2911, 5
      %v3030 = vrot.slane %v3029, 4
      %v3031 = vrot.slane %v2176, 5
      %v3032 = vsel %vm1323, %v3030, %v3031
      %v3033 = vrot.slane %v3031, 4
      %v3034 = vrot.slane %v2177, 5
      %v3035 = vsel %vm1323, %v3033, %v3034
      %v3036 = vrot.slane %v2912, 5
      %v3037 = vrot.slane %v3036, 4
      %v3038 = vrot.slane %v2179, 5
      %v3039 = vsel %vm1323, %v3037, %v3038
      %v3040 = vrot.slane %v3038, 4
      %v3041 = vrot.slane %v2180, 5
      %v3042 = vsel %vm1323, %v3040, %v3041
      %v3043 = vrot.slane %v2913, 5
      %v3044 = vrot.slane %v3043, 4
      %v3045 = vrot.slane %v2182, 5
      %v3046 = vsel %vm1323, %v3044, %v3045
      %v3047 = vrot.slane %v3045, 4
      %v3048 = vrot.slane %v2183, 5
      %v3049 = vsel %vm1323, %v3047, %v3048
      %v3050 = vrot.slane %v2914, 5
      %v3051 = vrot.slane %v3050, 4
      %v3052 = vrot.slane %v2185, 5
      %v3053 = vsel %vm1323, %v3051, %v3052
      %v3054 = vrot.slane %v3052, 4
      %v3055 = vrot.slane %v2186, 5
      %v3056 = vsel %vm1323, %v3054, %v3055
      %v3057 = vrot.slane %v2915, 5
      %v3058 = vrot.slane %v3057, 4
      %v3059 = vrot.slane %v2188, 5
      %v3060 = vsel %vm1323, %v3058, %v3059
      %v3061 = vrot.slane %v3059, 4
      %v3062 = vrot.slane %v2189, 5
      %v3063 = vsel %vm1323, %v3061, %v3062
      %v3064 = vrot.slane %v2916, 5
      %v3065 = vrot.slane %v3064, 4
      %v3066 = vrot.slane %v2191, 5
      %v3067 = vsel %vm1323, %v3065, %v3066
      %v3068 = vrot.slane %v3066, 4
      %v3069 = vrot.slane %v2192, 5
      %v3070 = vsel %vm1323, %v3068, %v3069
      %v3071 = vrot.slane %v2917, 5
      %v3072 = vrot.slane %v3071, 4
      %v3073 = vrot.slane %v2194, 5
      %v3074 = vsel %vm1323, %v3072, %v3073
      %v3075 = vrot.slane %v3073, 4
      %v3076 = vrot.slane %v2195, 5
      %v3077 = vsel %vm1323, %v3075, %v3076
      %s3078 = scalar_lea.vmem %s1, 160
      %v3079 = vld [vmem:[%s3078] sm:$0xf]
      %v3080 = vld [vmem:[%s3078 + $0x4] sm:$0xf]
      %v3081 = vld [vmem:[%s3078 + $0x8] sm:$0xf]
      %v3082 = vld [vmem:[%s3078 + $0xc] sm:$0xf]
      %v3083 = vld [vmem:[%s3078 + $0x10] sm:$0xf]
      %v3084 = vld [vmem:[%s3078 + $0x14] sm:$0xf]
      %v3085 = vld [vmem:[%s3078 + $0x18] sm:$0xf]
      %v3086 = vld [vmem:[%s3078 + $0x1c] sm:$0xf]
      %v3087 = vunpack.c.l.b16 %v2969
      %v3088 = vunpack.c.l.b16 %v2972
      %v3089 = vunpack.c.l.b16 %v2976
      %v3090 = vunpack.c.l.b16 %v2979
      %v3091 = vunpack.c.l.b16 %v2983
      %v3092 = vunpack.c.l.b16 %v2986
      %v3093 = vunpack.c.l.b16 %v2990
      %v3094 = vunpack.c.l.b16 %v2993
      %v3095 = vunpack.c.l.b16 %v2997
      %v3096 = vunpack.c.l.b16 %v3000
      %v3097 = vunpack.c.l.b16 %v3004
      %v3098 = vunpack.c.l.b16 %v3007
      %v3099 = vunpack.c.l.b16 %v3011
      %v3100 = vunpack.c.l.b16 %v3014
      %v3101 = vunpack.c.l.b16 %v3018
      %v3102 = vunpack.c.l.b16 %v3021
      %v3103 = vunpack.c.l.b16 %v3025
      %v3104 = vunpack.c.l.b16 %v3028
      %v3105 = vunpack.c.l.b16 %v3032
      %v3106 = vunpack.c.l.b16 %v3035
      %v3107 = vunpack.c.l.b16 %v3039
      %v3108 = vunpack.c.l.b16 %v3042
      %v3109 = vunpack.c.l.b16 %v3046
      %v3110 = vunpack.c.l.b16 %v3049
      %v3111 = vunpack.c.l.b16 %v3053
      %v3112 = vunpack.c.l.b16 %v3056
      %v3113 = vunpack.c.l.b16 %v3060
      %v3114 = vunpack.c.l.b16 %v3063
      %v3115 = vunpack.c.l.b16 %v3067
      %v3116 = vunpack.c.l.b16 %v3070
      %v3117 = vunpack.c.l.b16 %v3074
      %v3118 = vunpack.c.l.b16 %v3077
      %v3119 = vpack.c.b16 %v3088, %v3087
      %v3120 = vpack.c.b16 %v3090, %v3089
      %v3121 = vpack.c.b16 %v3092, %v3091
      %v3122 = vpack.c.b16 %v3094, %v3093
      %v3123 = vpack.c.b16 %v3096, %v3095
      %v3124 = vpack.c.b16 %v3098, %v3097
      %v3125 = vpack.c.b16 %v3100, %v3099
      %v3126 = vpack.c.b16 %v3102, %v3101
      %v3127 = vpack.c.b16 %v3104, %v3103
      %v3128 = vpack.c.b16 %v3106, %v3105
      %v3129 = vpack.c.b16 %v3108, %v3107
      %v3130 = vpack.c.b16 %v3110, %v3109
      %v3131 = vpack.c.b16 %v3112, %v3111
      %v3132 = vpack.c.b16 %v3114, %v3113
      %v3133 = vpack.c.b16 %v3116, %v3115
      %v3134 = vpack.c.b16 %v3118, %v3117
      %v3143 = vunpack.c.l.b16 %v3079
      %v3144 = vunpack.c.l.b16 %v3080
      %v3145 = vunpack.c.l.b16 %v3081
      %v3146 = vunpack.c.l.b16 %v3082
      %v3147 = vunpack.c.l.b16 %v3083
      %v3148 = vunpack.c.l.b16 %v3084
      %v3149 = vunpack.c.l.b16 %v3085
      %v3150 = vunpack.c.l.b16 %v3086
      %v3151 = vpack.c.b16 %v3144, %v3143
      %v3152 = vpack.c.b16 %v3146, %v3145
      %v3153 = vpack.c.b16 %v3148, %v3147
      %v3154 = vpack.c.b16 %v3150, %v3149
      %v3160 = vsel %vm750, %v3119, 0
      %v3163 = vsel %vm750, %v3120, 0
      %v3166 = vsel %vm750, %v3121, 0
      %v3169 = vsel %vm750, %v3122, 0
      %v3172 = vsel %vm750, %v3123, 0
      %v3175 = vsel %vm750, %v3124, 0
      %v3178 = vsel %vm750, %v3125, 0
      %v3181 = vsel %vm750, %v3126, 0
      %v3184 = vsel %vm750, %v3127, 0
      %v3187 = vsel %vm750, %v3128, 0
      %v3190 = vsel %vm750, %v3129, 0
      %v3193 = vsel %vm750, %v3130, 0
      %v3196 = vsel %vm750, %v3131, 0
      %v3199 = vsel %vm750, %v3132, 0
      %v3202 = vsel %vm750, %v3133, 0
      %v3205 = vsel %vm750, %v3134, 0
      %3207 = vmatprep.subr.bf16.mxu0 0
      %3208 = vmatpush1.bf16.msra.mxu0 0
      %3209 = vmatprep.subr.bf16.mxu0 0
      %3210 = vmatpush1.bf16.msra.mxu0 0
      %3211 = vmatprep.subr.bf16.mxu0 0
      %3212 = vmatpush1.bf16.msra.mxu0 0
      %3213 = vmatprep.subr.bf16.mxu0 0
      %3214 = vmatpush1.bf16.msra.mxu0 0
      %3215 = vmatprep.subr.bf16.mxu0 0
      %3216 = vmatpush1.bf16.msra.mxu0 %v3154
      %3217 = vmatprep.subr.bf16.mxu0 0
      %3218 = vmatpush1.bf16.msra.mxu0 %v3153
      %3219 = vmatprep.subr.bf16.mxu0 0
      %3220 = vmatpush1.bf16.msra.mxu0 %v3152
      %3221 = vmatprep.subr.bf16.mxu0 0
      %3222 = vmatpush1.bf16.msra.mxu0 %v3151
      %3223 = vmatprep.subr.bf16.mxu0 0
      %3224 = vmatpush2.bf16.msra.mxu0 0
      %3225 = vmatprep.subr.bf16.mxu0 0
      %3226 = vmatpush2.bf16.msra.mxu0 0
      %3227 = vmatprep.subr.bf16.mxu0 0
      %3228 = vmatpush2.bf16.msra.mxu0 0
      %3229 = vmatprep.subr.bf16.mxu0 0
      %3230 = vmatpush2.bf16.msra.mxu0 0
      %3231 = vmatprep.subr.bf16.mxu0 0
      %3232 = vmatpush2.bf16.msra.mxu0 0
      %3233 = vmatprep.subr.bf16.mxu0 0
      %3234 = vmatpush2.bf16.msra.mxu0 0
      %3235 = vmatprep.subr.bf16.mxu0 0
      %3236 = vmatpush2.bf16.msra.mxu0 0
      %3237 = vmatprep.subr.bf16.mxu0 0
      %3238 = vmatpush2.bf16.msra.mxu0 0
      %3239 = vmatprep.mubr.bf16.mxu0 0
      %3240 = vmatmul.mubr.bf16.gmra.mxu0 %v3160
      %v3241 = vpop.f32.mrf.mxu0
      %v3242 = vadd.f32 0.0, %v3241
      %v3243 = vpop.f32.mrf.mxu0
      %v3244 = vpop.f32.mrf.mxu0
      %v3245 = vadd.f32 0.0, %v3244
      %v3246 = vpop.f32.mrf.mxu0
      %3247 = vmatprep.mubr.bf16.mxu0 0
      %3248 = vmatmul.mubr.bf16.gmra.mxu0 %v3163
      %v3249 = vpop.f32.mrf.mxu0
      %v3250 = vadd.f32 0.0, %v3249
      %v3251 = vpop.f32.mrf.mxu0
      %v3252 = vpop.f32.mrf.mxu0
      %v3253 = vadd.f32 0.0, %v3252
      %v3254 = vpop.f32.mrf.mxu0
      %3255 = vmatprep.mubr.bf16.mxu0 0
      %3256 = vmatmul.mubr.bf16.gmra.mxu0 %v3166
      %v3257 = vpop.f32.mrf.mxu0
      %v3258 = vadd.f32 0.0, %v3257
      %v3259 = vpop.f32.mrf.mxu0
      %v3260 = vpop.f32.mrf.mxu0
      %v3261 = vadd.f32 0.0, %v3260
      %v3262 = vpop.f32.mrf.mxu0
      %3263 = vmatprep.mubr.bf16.mxu0 0
      %3264 = vmatmul.mubr.bf16.gmra.mxu0 %v3169
      %v3265 = vpop.f32.mrf.mxu0
      %v3266 = vadd.f32 0.0, %v3265
      %v3267 = vpop.f32.mrf.mxu0
      %v3268 = vpop.f32.mrf.mxu0
      %v3269 = vadd.f32 0.0, %v3268
      %v3270 = vpop.f32.mrf.mxu0
      %3271 = vmatprep.mubr.bf16.mxu0 0
      %3272 = vmatmul.mubr.bf16.gmra.mxu0 %v3172
      %v3273 = vpop.f32.mrf.mxu0
      %v3274 = vadd.f32 0.0, %v3273
      %v3275 = vpop.f32.mrf.mxu0
      %v3276 = vpop.f32.mrf.mxu0
      %v3277 = vadd.f32 0.0, %v3276
      %v3278 = vpop.f32.mrf.mxu0
      %3279 = vmatprep.mubr.bf16.mxu0 0
      %3280 = vmatmul.mubr.bf16.gmra.mxu0 %v3175
      %v3281 = vpop.f32.mrf.mxu0
      %v3282 = vadd.f32 0.0, %v3281
      %v3283 = vpop.f32.mrf.mxu0
      %v3284 = vpop.f32.mrf.mxu0
      %v3285 = vadd.f32 0.0, %v3284
      %v3286 = vpop.f32.mrf.mxu0
      %3287 = vmatprep.mubr.bf16.mxu0 0
      %3288 = vmatmul.mubr.bf16.gmra.mxu0 %v3178
      %v3289 = vpop.f32.mrf.mxu0
      %v3290 = vadd.f32 0.0, %v3289
      %v3291 = vpop.f32.mrf.mxu0
      %v3292 = vpop.f32.mrf.mxu0
      %v3293 = vadd.f32 0.0, %v3292
      %v3294 = vpop.f32.mrf.mxu0
      %3295 = vmatprep.mubr.bf16.mxu0 0
      %3296 = vmatmul.mubr.bf16.gmra.mxu0 %v3181
      %v3297 = vpop.f32.mrf.mxu0
      %v3298 = vadd.f32 0.0, %v3297
      %v3299 = vpop.f32.mrf.mxu0
      %v3300 = vpop.f32.mrf.mxu0
      %v3301 = vadd.f32 0.0, %v3300
      %v3302 = vpop.f32.mrf.mxu0
      %3303 = vmatprep.mubr.bf16.mxu0 0
      %3304 = vmatmul.mubr.bf16.gmra.mxu0 %v3184
      %v3305 = vpop.f32.mrf.mxu0
      %v3306 = vadd.f32 0.0, %v3305
      %v3307 = vpop.f32.mrf.mxu0
      %v3308 = vpop.f32.mrf.mxu0
      %v3309 = vadd.f32 0.0, %v3308
      %v3310 = vpop.f32.mrf.mxu0
      %3311 = vmatprep.mubr.bf16.mxu0 0
      %3312 = vmatmul.mubr.bf16.gmra.mxu0 %v3187
      %v3313 = vpop.f32.mrf.mxu0
      %v3314 = vadd.f32 0.0, %v3313
      %v3315 = vpop.f32.mrf.mxu0
      %v3316 = vpop.f32.mrf.mxu0
      %v3317 = vadd.f32 0.0, %v3316
      %v3318 = vpop.f32.mrf.mxu0
      %3319 = vmatprep.mubr.bf16.mxu0 0
      %3320 = vmatmul.mubr.bf16.gmra.mxu0 %v3190
      %v3321 = vpop.f32.mrf.mxu0
      %v3322 = vadd.f32 0.0, %v3321
      %v3323 = vpop.f32.mrf.mxu0
      %v3324 = vpop.f32.mrf.mxu0
      %v3325 = vadd.f32 0.0, %v3324
      %v3326 = vpop.f32.mrf.mxu0
      %3327 = vmatprep.mubr.bf16.mxu0 0
      %3328 = vmatmul.mubr.bf16.gmra.mxu0 %v3193
      %v3329 = vpop.f32.mrf.mxu0
      %v3330 = vadd.f32 0.0, %v3329
      %v3331 = vpop.f32.mrf.mxu0
      %v3332 = vpop.f32.mrf.mxu0
      %v3333 = vadd.f32 0.0, %v3332
      %v3334 = vpop.f32.mrf.mxu0
      %3335 = vmatprep.mubr.bf16.mxu0 0
      %3336 = vmatmul.mubr.bf16.gmra.mxu0 %v3196
      %v3337 = vpop.f32.mrf.mxu0
      %v3338 = vadd.f32 0.0, %v3337
      %v3339 = vpop.f32.mrf.mxu0
      %v3340 = vpop.f32.mrf.mxu0
      %v3341 = vadd.f32 0.0, %v3340
      %v3342 = vpop.f32.mrf.mxu0
      %3343 = vmatprep.mubr.bf16.mxu0 0
      %3344 = vmatmul.mubr.bf16.gmra.mxu0 %v3199
      %v3345 = vpop.f32.mrf.mxu0
      %v3346 = vadd.f32 0.0, %v3345
      %v3347 = vpop.f32.mrf.mxu0
      %v3348 = vpop.f32.mrf.mxu0
      %v3349 = vadd.f32 0.0, %v3348
      %v3350 = vpop.f32.mrf.mxu0
      %3351 = vmatprep.mubr.bf16.mxu0 0
      %3352 = vmatmul.mubr.bf16.gmra.mxu0 %v3202
      %v3353 = vpop.f32.mrf.mxu0
      %v3354 = vadd.f32 0.0, %v3353
      %v3355 = vpop.f32.mrf.mxu0
      %v3356 = vpop.f32.mrf.mxu0
      %v3357 = vadd.f32 0.0, %v3356
      %v3358 = vpop.f32.mrf.mxu0
      %3359 = vmatprep.mubr.bf16.mxu0 0
      %3360 = vmatmul.mubr.bf16.gmra.mxu0 %v3205
      %v3361 = vpop.f32.mrf.mxu0
      %v3362 = vadd.f32 0.0, %v3361
      %v3363 = vpop.f32.mrf.mxu0
      %v3364 = vpop.f32.mrf.mxu0
      %v3365 = vadd.f32 0.0, %v3364
      %v3366 = vpop.f32.mrf.mxu0
      %3367 = vdwg.mxu0
      %v3368 = vadd.f32 %v2870, %v3242
      %v3369 = vadd.f32 %v2871, %v3245
      %v3370 = vadd.f32 %v2872, %v3250
      %v3371 = vadd.f32 %v2873, %v3253
      %v3372 = vadd.f32 %v2874, %v3258
      %v3373 = vadd.f32 %v2875, %v3261
      %v3374 = vadd.f32 %v2876, %v3266
      %v3375 = vadd.f32 %v2877, %v3269
      %v3376 = vadd.f32 %v2878, %v3274
      %v3377 = vadd.f32 %v2879, %v3277
      %v3378 = vadd.f32 %v2880, %v3282
      %v3379 = vadd.f32 %v2881, %v3285
      %v3380 = vadd.f32 %v2882, %v3290
      %v3381 = vadd.f32 %v2883, %v3293
      %v3382 = vadd.f32 %v2884, %v3298
      %v3383 = vadd.f32 %v2885, %v3301
      %v3384 = vadd.f32 %v2886, %v3306
      %v3385 = vadd.f32 %v2887, %v3309
      %v3386 = vadd.f32 %v2888, %v3314
      %v3387 = vadd.f32 %v2889, %v3317
      %v3388 = vadd.f32 %v2890, %v3322
      %v3389 = vadd.f32 %v2891, %v3325
      %v3390 = vadd.f32 %v2892, %v3330
      %v3391 = vadd.f32 %v2893, %v3333
      %v3392 = vadd.f32 %v2894, %v3338
      %v3393 = vadd.f32 %v2895, %v3341
      %v3394 = vadd.f32 %v2896, %v3346
      %v3395 = vadd.f32 %v2897, %v3349
      %v3396 = vadd.f32 %v2898, %v3354
      %v3397 = vadd.f32 %v2899, %v3357
      %v3398 = vadd.f32 %v2900, %v3362
      %v3399 = vadd.f32 %v2901, %v3365
      %s3400 = sadd.s32 %s222, 2
      %s3401 = smul.u32 %s3400, 3
      %s3402 = smul.addr %s3401, 4
      %s3403 = scalar_lea.vmem %s210, %s3402
      %v3404 = vld [vmem:[%s3403] sm:$0xf]
      %v3405 = vld [vmem:[%s3403 + $0x4] sm:$0xf]
      %v3406 = vld [vmem:[%s3403 + $0xc] sm:$0xf]
      %v3407 = vld [vmem:[%s3403 + $0x10] sm:$0xf]
      %v3408 = vld [vmem:[%s3403 + $0x18] sm:$0xf]
      %v3409 = vld [vmem:[%s3403 + $0x1c] sm:$0xf]
      %v3410 = vld [vmem:[%s3403 + $0x24] sm:$0xf]
      %v3411 = vld [vmem:[%s3403 + $0x28] sm:$0xf]
      %v3412 = vld [vmem:[%s3403 + $0x30] sm:$0xf]
      %v3413 = vld [vmem:[%s3403 + $0x34] sm:$0xf]
      %v3414 = vld [vmem:[%s3403 + $0x3c] sm:$0xf]
      %v3415 = vld [vmem:[%s3403 + $0x40] sm:$0xf]
      %v3416 = vld [vmem:[%s3403 + $0x48] sm:$0xf]
      %v3417 = vld [vmem:[%s3403 + $0x4c] sm:$0xf]
      %v3418 = vld [vmem:[%s3403 + $0x54] sm:$0xf]
      %v3419 = vld [vmem:[%s3403 + $0x58] sm:$0xf]
      %v3420 = vld [vmem:[%s3403 + $0x60] sm:$0xf]
      %v3421 = vld [vmem:[%s3403 + $0x64] sm:$0xf]
      %v3422 = vld [vmem:[%s3403 + $0x6c] sm:$0xf]
      %v3423 = vld [vmem:[%s3403 + $0x70] sm:$0xf]
      %v3424 = vld [vmem:[%s3403 + $0x78] sm:$0xf]
      %v3425 = vld [vmem:[%s3403 + $0x7c] sm:$0xf]
      %v3426 = vld [vmem:[%s3403 + $0x84] sm:$0xf]
      %v3427 = vld [vmem:[%s3403 + $0x88] sm:$0xf]
      %v3428 = vld [vmem:[%s3403 + $0x90] sm:$0xf]
      %v3429 = vld [vmem:[%s3403 + $0x94] sm:$0xf]
      %v3430 = vld [vmem:[%s3403 + $0x9c] sm:$0xf]
      %v3431 = vld [vmem:[%s3403 + $0xa0] sm:$0xf]
      %v3432 = vld [vmem:[%s3403 + $0xa8] sm:$0xf]
      %v3433 = vld [vmem:[%s3403 + $0xac] sm:$0xf]
      %v3434 = vld [vmem:[%s3403 + $0xb4] sm:$0xf]
      %v3435 = vld [vmem:[%s3403 + $0xb8] sm:$0xf]
      %s3436 = scalar_lea.vmem %s1, 192
      %v3437 = vld [vmem:[%s3436] sm:$0xf]
      %v3438 = vld [vmem:[%s3436 + $0x4] sm:$0xf]
      %v3439 = vld [vmem:[%s3436 + $0x8] sm:$0xf]
      %v3440 = vld [vmem:[%s3436 + $0xc] sm:$0xf]
      %v3441 = vld [vmem:[%s3436 + $0x10] sm:$0xf]
      %v3442 = vld [vmem:[%s3436 + $0x14] sm:$0xf]
      %v3443 = vld [vmem:[%s3436 + $0x18] sm:$0xf]
      %v3444 = vld [vmem:[%s3436 + $0x1c] sm:$0xf]
      %v3477 = vunpack.c.l.b16 %v3404
      %v3478 = vunpack.c.l.b16 %v3405
      %v3479 = vunpack.c.l.b16 %v3406
      %v3480 = vunpack.c.l.b16 %v3407
      %v3481 = vunpack.c.l.b16 %v3408
      %v3482 = vunpack.c.l.b16 %v3409
      %v3483 = vunpack.c.l.b16 %v3410
      %v3484 = vunpack.c.l.b16 %v3411
      %v3485 = vunpack.c.l.b16 %v3412
      %v3486 = vunpack.c.l.b16 %v3413
      %v3487 = vunpack.c.l.b16 %v3414
      %v3488 = vunpack.c.l.b16 %v3415
      %v3489 = vunpack.c.l.b16 %v3416
      %v3490 = vunpack.c.l.b16 %v3417
      %v3491 = vunpack.c.l.b16 %v3418
      %v3492 = vunpack.c.l.b16 %v3419
      %v3493 = vunpack.c.l.b16 %v3420
      %v3494 = vunpack.c.l.b16 %v3421
      %v3495 = vunpack.c.l.b16 %v3422
      %v3496 = vunpack.c.l.b16 %v3423
      %v3497 = vunpack.c.l.b16 %v3424
      %v3498 = vunpack.c.l.b16 %v3425
      %v3499 = vunpack.c.l.b16 %v3426
      %v3500 = vunpack.c.l.b16 %v3427
      %v3501 = vunpack.c.l.b16 %v3428
      %v3502 = vunpack.c.l.b16 %v3429
      %v3503 = vunpack.c.l.b16 %v3430
      %v3504 = vunpack.c.l.b16 %v3431
      %v3505 = vunpack.c.l.b16 %v3432
      %v3506 = vunpack.c.l.b16 %v3433
      %v3507 = vunpack.c.l.b16 %v3434
      %v3508 = vunpack.c.l.b16 %v3435
      %v3509 = vpack.c.b16 %v3478, %v3477
      %v3510 = vpack.c.b16 %v3480, %v3479
      %v3511 = vpack.c.b16 %v3482, %v3481
      %v3512 = vpack.c.b16 %v3484, %v3483
      %v3513 = vpack.c.b16 %v3486, %v3485
      %v3514 = vpack.c.b16 %v3488, %v3487
      %v3515 = vpack.c.b16 %v3490, %v3489
      %v3516 = vpack.c.b16 %v3492, %v3491
      %v3517 = vpack.c.b16 %v3494, %v3493
      %v3518 = vpack.c.b16 %v3496, %v3495
      %v3519 = vpack.c.b16 %v3498, %v3497
      %v3520 = vpack.c.b16 %v3500, %v3499
      %v3521 = vpack.c.b16 %v3502, %v3501
      %v3522 = vpack.c.b16 %v3504, %v3503
      %v3523 = vpack.c.b16 %v3506, %v3505
      %v3524 = vpack.c.b16 %v3508, %v3507
      %v3533 = vunpack.c.l.b16 %v3437
      %v3534 = vunpack.c.l.b16 %v3438
      %v3535 = vunpack.c.l.b16 %v3439
      %v3536 = vunpack.c.l.b16 %v3440
      %v3537 = vunpack.c.l.b16 %v3441
      %v3538 = vunpack.c.l.b16 %v3442
      %v3539 = vunpack.c.l.b16 %v3443
      %v3540 = vunpack.c.l.b16 %v3444
      %v3541 = vpack.c.b16 %v3534, %v3533
      %v3542 = vpack.c.b16 %v3536, %v3535
      %v3543 = vpack.c.b16 %v3538, %v3537
      %v3544 = vpack.c.b16 %v3540, %v3539
      %v3550 = vsel %vm750, %v3509, 0
      %v3553 = vsel %vm750, %v3510, 0
      %v3556 = vsel %vm750, %v3511, 0
      %v3559 = vsel %vm750, %v3512, 0
      %v3562 = vsel %vm750, %v3513, 0
      %v3565 = vsel %vm750, %v3514, 0
      %v3568 = vsel %vm750, %v3515, 0
      %v3571 = vsel %vm750, %v3516, 0
      %v3574 = vsel %vm750, %v3517, 0
      %v3577 = vsel %vm750, %v3518, 0
      %v3580 = vsel %vm750, %v3519, 0
      %v3583 = vsel %vm750, %v3520, 0
      %v3586 = vsel %vm750, %v3521, 0
      %v3589 = vsel %vm750, %v3522, 0
      %v3592 = vsel %vm750, %v3523, 0
      %v3595 = vsel %vm750, %v3524, 0
      %3597 = vmatprep.subr.bf16.mxu0 0
      %3598 = vmatpush1.bf16.msra.mxu0 0
      %3599 = vmatprep.subr.bf16.mxu0 0
      %3600 = vmatpush1.bf16.msra.mxu0 0
      %3601 = vmatprep.subr.bf16.mxu0 0
      %3602 = vmatpush1.bf16.msra.mxu0 0
      %3603 = vmatprep.subr.bf16.mxu0 0
      %3604 = vmatpush1.bf16.msra.mxu0 0
      %3605 = vmatprep.subr.bf16.mxu0 0
      %3606 = vmatpush1.bf16.msra.mxu0 %v3544
      %3607 = vmatprep.subr.bf16.mxu0 0
      %3608 = vmatpush1.bf16.msra.mxu0 %v3543
      %3609 = vmatprep.subr.bf16.mxu0 0
      %3610 = vmatpush1.bf16.msra.mxu0 %v3542
      %3611 = vmatprep.subr.bf16.mxu0 0
      %3612 = vmatpush1.bf16.msra.mxu0 %v3541
      %3613 = vmatprep.subr.bf16.mxu0 0
      %3614 = vmatpush2.bf16.msra.mxu0 0
      %3615 = vmatprep.subr.bf16.mxu0 0
      %3616 = vmatpush2.bf16.msra.mxu0 0
      %3617 = vmatprep.subr.bf16.mxu0 0
      %3618 = vmatpush2.bf16.msra.mxu0 0
      %3619 = vmatprep.subr.bf16.mxu0 0
      %3620 = vmatpush2.bf16.msra.mxu0 0
      %3621 = vmatprep.subr.bf16.mxu0 0
      %3622 = vmatpush2.bf16.msra.mxu0 0
      %3623 = vmatprep.subr.bf16.mxu0 0
      %3624 = vmatpush2.bf16.msra.mxu0 0
      %3625 = vmatprep.subr.bf16.mxu0 0
      %3626 = vmatpush2.bf16.msra.mxu0 0
      %3627 = vmatprep.subr.bf16.mxu0 0
      %3628 = vmatpush2.bf16.msra.mxu0 0
      %3629 = vmatprep.mubr.bf16.mxu0 0
      %3630 = vmatmul.mubr.bf16.gmra.mxu0 %v3550
      %v3631 = vpop.f32.mrf.mxu0
      %v3632 = vadd.f32 0.0, %v3631
      %v3633 = vpop.f32.mrf.mxu0
      %v3634 = vpop.f32.mrf.mxu0
      %v3635 = vadd.f32 0.0, %v3634
      %v3636 = vpop.f32.mrf.mxu0
      %3637 = vmatprep.mubr.bf16.mxu0 0
      %3638 = vmatmul.mubr.bf16.gmra.mxu0 %v3553
      %v3639 = vpop.f32.mrf.mxu0
      %v3640 = vadd.f32 0.0, %v3639
      %v3641 = vpop.f32.mrf.mxu0
      %v3642 = vpop.f32.mrf.mxu0
      %v3643 = vadd.f32 0.0, %v3642
      %v3644 = vpop.f32.mrf.mxu0
      %3645 = vmatprep.mubr.bf16.mxu0 0
      %3646 = vmatmul.mubr.bf16.gmra.mxu0 %v3556
      %v3647 = vpop.f32.mrf.mxu0
      %v3648 = vadd.f32 0.0, %v3647
      %v3649 = vpop.f32.mrf.mxu0
      %v3650 = vpop.f32.mrf.mxu0
      %v3651 = vadd.f32 0.0, %v3650
      %v3652 = vpop.f32.mrf.mxu0
      %3653 = vmatprep.mubr.bf16.mxu0 0
      %3654 = vmatmul.mubr.bf16.gmra.mxu0 %v3559
      %v3655 = vpop.f32.mrf.mxu0
      %v3656 = vadd.f32 0.0, %v3655
      %v3657 = vpop.f32.mrf.mxu0
      %v3658 = vpop.f32.mrf.mxu0
      %v3659 = vadd.f32 0.0, %v3658
      %v3660 = vpop.f32.mrf.mxu0
      %3661 = vmatprep.mubr.bf16.mxu0 0
      %3662 = vmatmul.mubr.bf16.gmra.mxu0 %v3562
      %v3663 = vpop.f32.mrf.mxu0
      %v3664 = vadd.f32 0.0, %v3663
      %v3665 = vpop.f32.mrf.mxu0
      %v3666 = vpop.f32.mrf.mxu0
      %v3667 = vadd.f32 0.0, %v3666
      %v3668 = vpop.f32.mrf.mxu0
      %3669 = vmatprep.mubr.bf16.mxu0 0
      %3670 = vmatmul.mubr.bf16.gmra.mxu0 %v3565
      %v3671 = vpop.f32.mrf.mxu0
      %v3672 = vadd.f32 0.0, %v3671
      %v3673 = vpop.f32.mrf.mxu0
      %v3674 = vpop.f32.mrf.mxu0
      %v3675 = vadd.f32 0.0, %v3674
      %v3676 = vpop.f32.mrf.mxu0
      %3677 = vmatprep.mubr.bf16.mxu0 0
      %3678 = vmatmul.mubr.bf16.gmra.mxu0 %v3568
      %v3679 = vpop.f32.mrf.mxu0
      %v3680 = vadd.f32 0.0, %v3679
      %v3681 = vpop.f32.mrf.mxu0
      %v3682 = vpop.f32.mrf.mxu0
      %v3683 = vadd.f32 0.0, %v3682
      %v3684 = vpop.f32.mrf.mxu0
      %3685 = vmatprep.mubr.bf16.mxu0 0
      %3686 = vmatmul.mubr.bf16.gmra.mxu0 %v3571
      %v3687 = vpop.f32.mrf.mxu0
      %v3688 = vadd.f32 0.0, %v3687
      %v3689 = vpop.f32.mrf.mxu0
      %v3690 = vpop.f32.mrf.mxu0
      %v3691 = vadd.f32 0.0, %v3690
      %v3692 = vpop.f32.mrf.mxu0
      %3693 = vmatprep.mubr.bf16.mxu0 0
      %3694 = vmatmul.mubr.bf16.gmra.mxu0 %v3574
      %v3695 = vpop.f32.mrf.mxu0
      %v3696 = vadd.f32 0.0, %v3695
      %v3697 = vpop.f32.mrf.mxu0
      %v3698 = vpop.f32.mrf.mxu0
      %v3699 = vadd.f32 0.0, %v3698
      %v3700 = vpop.f32.mrf.mxu0
      %3701 = vmatprep.mubr.bf16.mxu0 0
      %3702 = vmatmul.mubr.bf16.gmra.mxu0 %v3577
      %v3703 = vpop.f32.mrf.mxu0
      %v3704 = vadd.f32 0.0, %v3703
      %v3705 = vpop.f32.mrf.mxu0
      %v3706 = vpop.f32.mrf.mxu0
      %v3707 = vadd.f32 0.0, %v3706
      %v3708 = vpop.f32.mrf.mxu0
      %3709 = vmatprep.mubr.bf16.mxu0 0
      %3710 = vmatmul.mubr.bf16.gmra.mxu0 %v3580
      %v3711 = vpop.f32.mrf.mxu0
      %v3712 = vadd.f32 0.0, %v3711
      %v3713 = vpop.f32.mrf.mxu0
      %v3714 = vpop.f32.mrf.mxu0
      %v3715 = vadd.f32 0.0, %v3714
      %v3716 = vpop.f32.mrf.mxu0
      %3717 = vmatprep.mubr.bf16.mxu0 0
      %3718 = vmatmul.mubr.bf16.gmra.mxu0 %v3583
      %v3719 = vpop.f32.mrf.mxu0
      %v3720 = vadd.f32 0.0, %v3719
      %v3721 = vpop.f32.mrf.mxu0
      %v3722 = vpop.f32.mrf.mxu0
      %v3723 = vadd.f32 0.0, %v3722
      %v3724 = vpop.f32.mrf.mxu0
      %3725 = vmatprep.mubr.bf16.mxu0 0
      %3726 = vmatmul.mubr.bf16.gmra.mxu0 %v3586
      %v3727 = vpop.f32.mrf.mxu0
      %v3728 = vadd.f32 0.0, %v3727
      %v3729 = vpop.f32.mrf.mxu0
      %v3730 = vpop.f32.mrf.mxu0
      %v3731 = vadd.f32 0.0, %v3730
      %v3732 = vpop.f32.mrf.mxu0
      %3733 = vmatprep.mubr.bf16.mxu0 0
      %3734 = vmatmul.mubr.bf16.gmra.mxu0 %v3589
      %v3735 = vpop.f32.mrf.mxu0
      %v3736 = vadd.f32 0.0, %v3735
      %v3737 = vpop.f32.mrf.mxu0
      %v3738 = vpop.f32.mrf.mxu0
      %v3739 = vadd.f32 0.0, %v3738
      %v3740 = vpop.f32.mrf.mxu0
      %3741 = vmatprep.mubr.bf16.mxu0 0
      %3742 = vmatmul.mubr.bf16.gmra.mxu0 %v3592
      %v3743 = vpop.f32.mrf.mxu0
      %v3744 = vadd.f32 0.0, %v3743
      %v3745 = vpop.f32.mrf.mxu0
      %v3746 = vpop.f32.mrf.mxu0
      %v3747 = vadd.f32 0.0, %v3746
      %v3748 = vpop.f32.mrf.mxu0
      %3749 = vmatprep.mubr.bf16.mxu0 0
      %3750 = vmatmul.mubr.bf16.gmra.mxu0 %v3595
      %v3751 = vpop.f32.mrf.mxu0
      %v3752 = vadd.f32 0.0, %v3751
      %v3753 = vpop.f32.mrf.mxu0
      %v3754 = vpop.f32.mrf.mxu0
      %v3755 = vadd.f32 0.0, %v3754
      %v3756 = vpop.f32.mrf.mxu0
      %3757 = vdwg.mxu0
      %v3758 = vadd.f32 %v3368, %v3632
      %v3759 = vadd.f32 %v3369, %v3635
      %v3760 = vadd.f32 %v3370, %v3640
      %v3761 = vadd.f32 %v3371, %v3643
      %v3762 = vadd.f32 %v3372, %v3648
      %v3763 = vadd.f32 %v3373, %v3651
      %v3764 = vadd.f32 %v3374, %v3656
      %v3765 = vadd.f32 %v3375, %v3659
      %v3766 = vadd.f32 %v3376, %v3664
      %v3767 = vadd.f32 %v3377, %v3667
      %v3768 = vadd.f32 %v3378, %v3672
      %v3769 = vadd.f32 %v3379, %v3675
      %v3770 = vadd.f32 %v3380, %v3680
      %v3771 = vadd.f32 %v3381, %v3683
      %v3772 = vadd.f32 %v3382, %v3688
      %v3773 = vadd.f32 %v3383, %v3691
      %v3774 = vadd.f32 %v3384, %v3696
      %v3775 = vadd.f32 %v3385, %v3699
      %v3776 = vadd.f32 %v3386, %v3704
      %v3777 = vadd.f32 %v3387, %v3707
      %v3778 = vadd.f32 %v3388, %v3712
      %v3779 = vadd.f32 %v3389, %v3715
      %v3780 = vadd.f32 %v3390, %v3720
      %v3781 = vadd.f32 %v3391, %v3723
      %v3782 = vadd.f32 %v3392, %v3728
      %v3783 = vadd.f32 %v3393, %v3731
      %v3784 = vadd.f32 %v3394, %v3736
      %v3785 = vadd.f32 %v3395, %v3739
      %v3786 = vadd.f32 %v3396, %v3744
      %v3787 = vadd.f32 %v3397, %v3747
      %v3788 = vadd.f32 %v3398, %v3752
      %v3789 = vadd.f32 %v3399, %v3755
      %v3790 = vld [vmem:[%s3403] sm:$0xf]
      %v3791 = vld [vmem:[%s3403 + $0x4] sm:$0xf]
      %v3792 = vld [vmem:[%s3403 + $0x8] sm:$0x1]
      %v3793 = vld [vmem:[%s3403 + $0xc] sm:$0xf]
      %v3794 = vld [vmem:[%s3403 + $0x10] sm:$0xf]
      %v3795 = vld [vmem:[%s3403 + $0x14] sm:$0x1]
      %v3796 = vld [vmem:[%s3403 + $0x18] sm:$0xf]
      %v3797 = vld [vmem:[%s3403 + $0x1c] sm:$0xf]
      %v3798 = vld [vmem:[%s3403 + $0x20] sm:$0x1]
      %v3799 = vld [vmem:[%s3403 + $0x24] sm:$0xf]
      %v3800 = vld [vmem:[%s3403 + $0x28] sm:$0xf]
      %v3801 = vld [vmem:[%s3403 + $0x2c] sm:$0x1]
      %v3802 = vld [vmem:[%s3403 + $0x30] sm:$0xf]
      %v3803 = vld [vmem:[%s3403 + $0x34] sm:$0xf]
      %v3804 = vld [vmem:[%s3403 + $0x38] sm:$0x1]
      %v3805 = vld [vmem:[%s3403 + $0x3c] sm:$0xf]
      %v3806 = vld [vmem:[%s3403 + $0x40] sm:$0xf]
      %v3807 = vld [vmem:[%s3403 + $0x44] sm:$0x1]
      %v3808 = vld [vmem:[%s3403 + $0x48] sm:$0xf]
      %v3809 = vld [vmem:[%s3403 + $0x4c] sm:$0xf]
      %v3810 = vld [vmem:[%s3403 + $0x50] sm:$0x1]
      %v3811 = vld [vmem:[%s3403 + $0x54] sm:$0xf]
      %v3812 = vld [vmem:[%s3403 + $0x58] sm:$0xf]
      %v3813 = vld [vmem:[%s3403 + $0x5c] sm:$0x1]
      %v3814 = vld [vmem:[%s3403 + $0x60] sm:$0xf]
      %v3815 = vld [vmem:[%s3403 + $0x64] sm:$0xf]
      %v3816 = vld [vmem:[%s3403 + $0x68] sm:$0x1]
      %v3817 = vld [vmem:[%s3403 + $0x6c] sm:$0xf]
      %v3818 = vld [vmem:[%s3403 + $0x70] sm:$0xf]
      %v3819 = vld [vmem:[%s3403 + $0x74] sm:$0x1]
      %v3820 = vld [vmem:[%s3403 + $0x78] sm:$0xf]
      %v3821 = vld [vmem:[%s3403 + $0x7c] sm:$0xf]
      %v3822 = vld [vmem:[%s3403 + $0x80] sm:$0x1]
      %v3823 = vld [vmem:[%s3403 + $0x84] sm:$0xf]
      %v3824 = vld [vmem:[%s3403 + $0x88] sm:$0xf]
      %v3825 = vld [vmem:[%s3403 + $0x8c] sm:$0x1]
      %v3826 = vld [vmem:[%s3403 + $0x90] sm:$0xf]
      %v3827 = vld [vmem:[%s3403 + $0x94] sm:$0xf]
      %v3828 = vld [vmem:[%s3403 + $0x98] sm:$0x1]
      %v3829 = vld [vmem:[%s3403 + $0x9c] sm:$0xf]
      %v3830 = vld [vmem:[%s3403 + $0xa0] sm:$0xf]
      %v3831 = vld [vmem:[%s3403 + $0xa4] sm:$0x1]
      %v3832 = vld [vmem:[%s3403 + $0xa8] sm:$0xf]
      %v3833 = vld [vmem:[%s3403 + $0xac] sm:$0xf]
      %v3834 = vld [vmem:[%s3403 + $0xb0] sm:$0x1]
      %v3835 = vld [vmem:[%s3403 + $0xb4] sm:$0xf]
      %v3836 = vld [vmem:[%s3403 + $0xb8] sm:$0xf]
      %v3837 = vld [vmem:[%s3403 + $0xbc] sm:$0x1]
      %v3839 = vshrl.u32 %v3790, 16
      %v3841 = vrot.slane %v3839, 4
      %v3842 = vshll.u32 %v3790, 16
      %v3844 = vrot.slane %v3842, 5
      %v3845 = vor.u32 %v3841, %v3844
      %v3846 = vrot.slane %v3845, 4
      %v3848 = vshll.u32 %v3791, 16
      %v3850 = vrot.slane %v3848, 5
      %v3851 = vsel %vm284, %v3846, %v3850
      %v3852 = vshrl.u32 %v3791, 16
      %v3854 = vrot.slane %v3852, 4
      %v3855 = vor.u32 %v3854, %v3850
      %v3856 = vrot.slane %v3855, 4
      %v3858 = vshll.u32 %v3792, 16
      %v3860 = vrot.slane %v3858, 5
      %v3861 = vsel %vm284, %v3856, %v3860
      %v3863 = vshrl.u32 %v3793, 16
      %v3865 = vrot.slane %v3863, 4
      %v3866 = vshll.u32 %v3793, 16
      %v3868 = vrot.slane %v3866, 5
      %v3869 = vor.u32 %v3865, %v3868
      %v3870 = vrot.slane %v3869, 4
      %v3872 = vshll.u32 %v3794, 16
      %v3874 = vrot.slane %v3872, 5
      %v3875 = vsel %vm284, %v3870, %v3874
      %v3876 = vshrl.u32 %v3794, 16
      %v3878 = vrot.slane %v3876, 4
      %v3879 = vor.u32 %v3878, %v3874
      %v3880 = vrot.slane %v3879, 4
      %v3882 = vshll.u32 %v3795, 16
      %v3884 = vrot.slane %v3882, 5
      %v3885 = vsel %vm284, %v3880, %v3884
      %v3887 = vshrl.u32 %v3796, 16
      %v3889 = vrot.slane %v3887, 4
      %v3890 = vshll.u32 %v3796, 16
      %v3892 = vrot.slane %v3890, 5
      %v3893 = vor.u32 %v3889, %v3892
      %v3894 = vrot.slane %v3893, 4
      %v3896 = vshll.u32 %v3797, 16
      %v3898 = vrot.slane %v3896, 5
      %v3899 = vsel %vm284, %v3894, %v3898
      %v3900 = vshrl.u32 %v3797, 16
      %v3902 = vrot.slane %v3900, 4
      %v3903 = vor.u32 %v3902, %v3898
      %v3904 = vrot.slane %v3903, 4
      %v3906 = vshll.u32 %v3798, 16
      %v3908 = vrot.slane %v3906, 5
      %v3909 = vsel %vm284, %v3904, %v3908
      %v3911 = vshrl.u32 %v3799, 16
      %v3913 = vrot.slane %v3911, 4
      %v3914 = vshll.u32 %v3799, 16
      %v3916 = vrot.slane %v3914, 5
      %v3917 = vor.u32 %v3913, %v3916
      %v3918 = vrot.slane %v3917, 4
      %v3920 = vshll.u32 %v3800, 16
      %v3922 = vrot.slane %v3920, 5
      %v3923 = vsel %vm284, %v3918, %v3922
      %v3924 = vshrl.u32 %v3800, 16
      %v3926 = vrot.slane %v3924, 4
      %v3927 = vor.u32 %v3926, %v3922
      %v3928 = vrot.slane %v3927, 4
      %v3930 = vshll.u32 %v3801, 16
      %v3932 = vrot.slane %v3930, 5
      %v3933 = vsel %vm284, %v3928, %v3932
      %v3935 = vshrl.u32 %v3802, 16
      %v3937 = vrot.slane %v3935, 4
      %v3938 = vshll.u32 %v3802, 16
      %v3940 = vrot.slane %v3938, 5
      %v3941 = vor.u32 %v3937, %v3940
      %v3942 = vrot.slane %v3941, 4
      %v3944 = vshll.u32 %v3803, 16
      %v3946 = vrot.slane %v3944, 5
      %v3947 = vsel %vm284, %v3942, %v3946
      %v3948 = vshrl.u32 %v3803, 16
      %v3950 = vrot.slane %v3948, 4
      %v3951 = vor.u32 %v3950, %v3946
      %v3952 = vrot.slane %v3951, 4
      %v3954 = vshll.u32 %v3804, 16
      %v3956 = vrot.slane %v3954, 5
      %v3957 = vsel %vm284, %v3952, %v3956
      %v3959 = vshrl.u32 %v3805, 16
      %v3961 = vrot.slane %v3959, 4
      %v3962 = vshll.u32 %v3805, 16
      %v3964 = vrot.slane %v3962, 5
      %v3965 = vor.u32 %v3961, %v3964
      %v3966 = vrot.slane %v3965, 4
      %v3968 = vshll.u32 %v3806, 16
      %v3970 = vrot.slane %v3968, 5
      %v3971 = vsel %vm284, %v3966, %v3970
      %v3972 = vshrl.u32 %v3806, 16
      %v3974 = vrot.slane %v3972, 4
      %v3975 = vor.u32 %v3974, %v3970
      %v3976 = vrot.slane %v3975, 4
      %v3978 = vshll.u32 %v3807, 16
      %v3980 = vrot.slane %v3978, 5
      %v3981 = vsel %vm284, %v3976, %v3980
      %v3983 = vshrl.u32 %v3808, 16
      %v3985 = vrot.slane %v3983, 4
      %v3986 = vshll.u32 %v3808, 16
      %v3988 = vrot.slane %v3986, 5
      %v3989 = vor.u32 %v3985, %v3988
      %v3990 = vrot.slane %v3989, 4
      %v3992 = vshll.u32 %v3809, 16
      %v3994 = vrot.slane %v3992, 5
      %v3995 = vsel %vm284, %v3990, %v3994
      %v3996 = vshrl.u32 %v3809, 16
      %v3998 = vrot.slane %v3996, 4
      %v3999 = vor.u32 %v3998, %v3994
      %v4000 = vrot.slane %v3999, 4
      %v4002 = vshll.u32 %v3810, 16
      %v4004 = vrot.slane %v4002, 5
      %v4005 = vsel %vm284, %v4000, %v4004
      %v4007 = vshrl.u32 %v3811, 16
      %v4009 = vrot.slane %v4007, 4
      %v4010 = vshll.u32 %v3811, 16
      %v4012 = vrot.slane %v4010, 5
      %v4013 = vor.u32 %v4009, %v4012
      %v4014 = vrot.slane %v4013, 4
      %v4016 = vshll.u32 %v3812, 16
      %v4018 = vrot.slane %v4016, 5
      %v4019 = vsel %vm284, %v4014, %v4018
      %v4020 = vshrl.u32 %v3812, 16
      %v4022 = vrot.slane %v4020, 4
      %v4023 = vor.u32 %v4022, %v4018
      %v4024 = vrot.slane %v4023, 4
      %v4026 = vshll.u32 %v3813, 16
      %v4028 = vrot.slane %v4026, 5
      %v4029 = vsel %vm284, %v4024, %v4028
      %v4031 = vshrl.u32 %v3814, 16
      %v4033 = vrot.slane %v4031, 4
      %v4034 = vshll.u32 %v3814, 16
      %v4036 = vrot.slane %v4034, 5
      %v4037 = vor.u32 %v4033, %v4036
      %v4038 = vrot.slane %v4037, 4
      %v4040 = vshll.u32 %v3815, 16
      %v4042 = vrot.slane %v4040, 5
      %v4043 = vsel %vm284, %v4038, %v4042
      %v4044 = vshrl.u32 %v3815, 16
      %v4046 = vrot.slane %v4044, 4
      %v4047 = vor.u32 %v4046, %v4042
      %v4048 = vrot.slane %v4047, 4
      %v4050 = vshll.u32 %v3816, 16
      %v4052 = vrot.slane %v4050, 5
      %v4053 = vsel %vm284, %v4048, %v4052
      %v4055 = vshrl.u32 %v3817, 16
      %v4057 = vrot.slane %v4055, 4
      %v4058 = vshll.u32 %v3817, 16
      %v4060 = vrot.slane %v4058, 5
      %v4061 = vor.u32 %v4057, %v4060
      %v4062 = vrot.slane %v4061, 4
      %v4064 = vshll.u32 %v3818, 16
      %v4066 = vrot.slane %v4064, 5
      %v4067 = vsel %vm284, %v4062, %v4066
      %v4068 = vshrl.u32 %v3818, 16
      %v4070 = vrot.slane %v4068, 4
      %v4071 = vor.u32 %v4070, %v4066
      %v4072 = vrot.slane %v4071, 4
      %v4074 = vshll.u32 %v3819, 16
      %v4076 = vrot.slane %v4074, 5
      %v4077 = vsel %vm284, %v4072, %v4076
      %v4079 = vshrl.u32 %v3820, 16
      %v4081 = vrot.slane %v4079, 4
      %v4082 = vshll.u32 %v3820, 16
      %v4084 = vrot.slane %v4082, 5
      %v4085 = vor.u32 %v4081, %v4084
      %v4086 = vrot.slane %v4085, 4
      %v4088 = vshll.u32 %v3821, 16
      %v4090 = vrot.slane %v4088, 5
      %v4091 = vsel %vm284, %v4086, %v4090
      %v4092 = vshrl.u32 %v3821, 16
      %v4094 = vrot.slane %v4092, 4
      %v4095 = vor.u32 %v4094, %v4090
      %v4096 = vrot.slane %v4095, 4
      %v4098 = vshll.u32 %v3822, 16
      %v4100 = vrot.slane %v4098, 5
      %v4101 = vsel %vm284, %v4096, %v4100
      %v4103 = vshrl.u32 %v3823, 16
      %v4105 = vrot.slane %v4103, 4
      %v4106 = vshll.u32 %v3823, 16
      %v4108 = vrot.slane %v4106, 5
      %v4109 = vor.u32 %v4105, %v4108
      %v4110 = vrot.slane %v4109, 4
      %v4112 = vshll.u32 %v3824, 16
      %v4114 = vrot.slane %v4112, 5
      %v4115 = vsel %vm284, %v4110, %v4114
      %v4116 = vshrl.u32 %v3824, 16
      %v4118 = vrot.slane %v4116, 4
      %v4119 = vor.u32 %v4118, %v4114
      %v4120 = vrot.slane %v4119, 4
      %v4122 = vshll.u32 %v3825, 16
      %v4124 = vrot.slane %v4122, 5
      %v4125 = vsel %vm284, %v4120, %v4124
      %v4127 = vshrl.u32 %v3826, 16
      %v4129 = vrot.slane %v4127, 4
      %v4130 = vshll.u32 %v3826, 16
      %v4132 = vrot.slane %v4130, 5
      %v4133 = vor.u32 %v4129, %v4132
      %v4134 = vrot.slane %v4133, 4
      %v4136 = vshll.u32 %v3827, 16
      %v4138 = vrot.slane %v4136, 5
      %v4139 = vsel %vm284, %v4134, %v4138
      %v4140 = vshrl.u32 %v3827, 16
      %v4142 = vrot.slane %v4140, 4
      %v4143 = vor.u32 %v4142, %v4138
      %v4144 = vrot.slane %v4143, 4
      %v4146 = vshll.u32 %v3828, 16
      %v4148 = vrot.slane %v4146, 5
      %v4149 = vsel %vm284, %v4144, %v4148
      %v4151 = vshrl.u32 %v3829, 16
      %v4153 = vrot.slane %v4151, 4
      %v4154 = vshll.u32 %v3829, 16
      %v4156 = vrot.slane %v4154, 5
      %v4157 = vor.u32 %v4153, %v4156
      %v4158 = vrot.slane %v4157, 4
      %v4160 = vshll.u32 %v3830, 16
      %v4162 = vrot.slane %v4160, 5
      %v4163 = vsel %vm284, %v4158, %v4162
      %v4164 = vshrl.u32 %v3830, 16
      %v4166 = vrot.slane %v4164, 4
      %v4167 = vor.u32 %v4166, %v4162
      %v4168 = vrot.slane %v4167, 4
      %v4170 = vshll.u32 %v3831, 16
      %v4172 = vrot.slane %v4170, 5
      %v4173 = vsel %vm284, %v4168, %v4172
      %v4175 = vshrl.u32 %v3832, 16
      %v4177 = vrot.slane %v4175, 4
      %v4178 = vshll.u32 %v3832, 16
      %v4180 = vrot.slane %v4178, 5
      %v4181 = vor.u32 %v4177, %v4180
      %v4182 = vrot.slane %v4181, 4
      %v4184 = vshll.u32 %v3833, 16
      %v4186 = vrot.slane %v4184, 5
      %v4187 = vsel %vm284, %v4182, %v4186
      %v4188 = vshrl.u32 %v3833, 16
      %v4190 = vrot.slane %v4188, 4
      %v4191 = vor.u32 %v4190, %v4186
      %v4192 = vrot.slane %v4191, 4
      %v4194 = vshll.u32 %v3834, 16
      %v4196 = vrot.slane %v4194, 5
      %v4197 = vsel %vm284, %v4192, %v4196
      %v4199 = vshrl.u32 %v3835, 16
      %v4201 = vrot.slane %v4199, 4
      %v4202 = vshll.u32 %v3835, 16
      %v4204 = vrot.slane %v4202, 5
      %v4205 = vor.u32 %v4201, %v4204
      %v4206 = vrot.slane %v4205, 4
      %v4208 = vshll.u32 %v3836, 16
      %v4210 = vrot.slane %v4208, 5
      %v4211 = vsel %vm284, %v4206, %v4210
      %v4212 = vshrl.u32 %v3836, 16
      %v4214 = vrot.slane %v4212, 4
      %v4215 = vor.u32 %v4214, %v4210
      %v4216 = vrot.slane %v4215, 4
      %v4218 = vshll.u32 %v3837, 16
      %v4220 = vrot.slane %v4218, 5
      %v4221 = vsel %vm284, %v4216, %v4220
      %s4222 = scalar_lea.vmem %s1, 224
      %v4223 = vld [vmem:[%s4222] sm:$0xf]
      %v4224 = vld [vmem:[%s4222 + $0x4] sm:$0xf]
      %v4225 = vld [vmem:[%s4222 + $0x8] sm:$0xf]
      %v4226 = vld [vmem:[%s4222 + $0xc] sm:$0xf]
      %v4227 = vld [vmem:[%s4222 + $0x10] sm:$0xf]
      %v4228 = vld [vmem:[%s4222 + $0x14] sm:$0xf]
      %v4229 = vld [vmem:[%s4222 + $0x18] sm:$0xf]
      %v4230 = vld [vmem:[%s4222 + $0x1c] sm:$0xf]
      %v4231 = vunpack.c.l.b16 %v3851
      %v4232 = vunpack.c.l.b16 %v3861
      %v4233 = vunpack.c.l.b16 %v3875
      %v4234 = vunpack.c.l.b16 %v3885
      %v4235 = vunpack.c.l.b16 %v3899
      %v4236 = vunpack.c.l.b16 %v3909
      %v4237 = vunpack.c.l.b16 %v3923
      %v4238 = vunpack.c.l.b16 %v3933
      %v4239 = vunpack.c.l.b16 %v3947
      %v4240 = vunpack.c.l.b16 %v3957
      %v4241 = vunpack.c.l.b16 %v3971
      %v4242 = vunpack.c.l.b16 %v3981
      %v4243 = vunpack.c.l.b16 %v3995
      %v4244 = vunpack.c.l.b16 %v4005
      %v4245 = vunpack.c.l.b16 %v4019
      %v4246 = vunpack.c.l.b16 %v4029
      %v4247 = vunpack.c.l.b16 %v4043
      %v4248 = vunpack.c.l.b16 %v4053
      %v4249 = vunpack.c.l.b16 %v4067
      %v4250 = vunpack.c.l.b16 %v4077
      %v4251 = vunpack.c.l.b16 %v4091
      %v4252 = vunpack.c.l.b16 %v4101
      %v4253 = vunpack.c.l.b16 %v4115
      %v4254 = vunpack.c.l.b16 %v4125
      %v4255 = vunpack.c.l.b16 %v4139
      %v4256 = vunpack.c.l.b16 %v4149
      %v4257 = vunpack.c.l.b16 %v4163
      %v4258 = vunpack.c.l.b16 %v4173
      %v4259 = vunpack.c.l.b16 %v4187
      %v4260 = vunpack.c.l.b16 %v4197
      %v4261 = vunpack.c.l.b16 %v4211
      %v4262 = vunpack.c.l.b16 %v4221
      %v4263 = vpack.c.b16 %v4232, %v4231
      %v4264 = vpack.c.b16 %v4234, %v4233
      %v4265 = vpack.c.b16 %v4236, %v4235
      %v4266 = vpack.c.b16 %v4238, %v4237
      %v4267 = vpack.c.b16 %v4240, %v4239
      %v4268 = vpack.c.b16 %v4242, %v4241
      %v4269 = vpack.c.b16 %v4244, %v4243
      %v4270 = vpack.c.b16 %v4246, %v4245
      %v4271 = vpack.c.b16 %v4248, %v4247
      %v4272 = vpack.c.b16 %v4250, %v4249
      %v4273 = vpack.c.b16 %v4252, %v4251
      %v4274 = vpack.c.b16 %v4254, %v4253
      %v4275 = vpack.c.b16 %v4256, %v4255
      %v4276 = vpack.c.b16 %v4258, %v4257
      %v4277 = vpack.c.b16 %v4260, %v4259
      %v4278 = vpack.c.b16 %v4262, %v4261
      %v4287 = vunpack.c.l.b16 %v4223
      %v4288 = vunpack.c.l.b16 %v4224
      %v4289 = vunpack.c.l.b16 %v4225
      %v4290 = vunpack.c.l.b16 %v4226
      %v4291 = vunpack.c.l.b16 %v4227
      %v4292 = vunpack.c.l.b16 %v4228
      %v4293 = vunpack.c.l.b16 %v4229
      %v4294 = vunpack.c.l.b16 %v4230
      %v4295 = vpack.c.b16 %v4288, %v4287
      %v4296 = vpack.c.b16 %v4290, %v4289
      %v4297 = vpack.c.b16 %v4292, %v4291
      %v4298 = vpack.c.b16 %v4294, %v4293
      %v4304 = vsel %vm750, %v4263, 0
      %v4307 = vsel %vm750, %v4264, 0
      %v4310 = vsel %vm750, %v4265, 0
      %v4313 = vsel %vm750, %v4266, 0
      %v4316 = vsel %vm750, %v4267, 0
      %v4319 = vsel %vm750, %v4268, 0
      %v4322 = vsel %vm750, %v4269, 0
      %v4325 = vsel %vm750, %v4270, 0
      %v4328 = vsel %vm750, %v4271, 0
      %v4331 = vsel %vm750, %v4272, 0
      %v4334 = vsel %vm750, %v4273, 0
      %v4337 = vsel %vm750, %v4274, 0
      %v4340 = vsel %vm750, %v4275, 0
      %v4343 = vsel %vm750, %v4276, 0
      %v4346 = vsel %vm750, %v4277, 0
      %v4349 = vsel %vm750, %v4278, 0
      %4351 = vmatprep.subr.bf16.mxu0 0
      %4352 = vmatpush1.bf16.msra.mxu0 0
      %4353 = vmatprep.subr.bf16.mxu0 0
      %4354 = vmatpush1.bf16.msra.mxu0 0
      %4355 = vmatprep.subr.bf16.mxu0 0
      %4356 = vmatpush1.bf16.msra.mxu0 0
      %4357 = vmatprep.subr.bf16.mxu0 0
      %4358 = vmatpush1.bf16.msra.mxu0 0
      %4359 = vmatprep.subr.bf16.mxu0 0
      %4360 = vmatpush1.bf16.msra.mxu0 %v4298
      %4361 = vmatprep.subr.bf16.mxu0 0
      %4362 = vmatpush1.bf16.msra.mxu0 %v4297
      %4363 = vmatprep.subr.bf16.mxu0 0
      %4364 = vmatpush1.bf16.msra.mxu0 %v4296
      %4365 = vmatprep.subr.bf16.mxu0 0
      %4366 = vmatpush1.bf16.msra.mxu0 %v4295
      %4367 = vmatprep.subr.bf16.mxu0 0
      %4368 = vmatpush2.bf16.msra.mxu0 0
      %4369 = vmatprep.subr.bf16.mxu0 0
      %4370 = vmatpush2.bf16.msra.mxu0 0
      %4371 = vmatprep.subr.bf16.mxu0 0
      %4372 = vmatpush2.bf16.msra.mxu0 0
      %4373 = vmatprep.subr.bf16.mxu0 0
      %4374 = vmatpush2.bf16.msra.mxu0 0
      %4375 = vmatprep.subr.bf16.mxu0 0
      %4376 = vmatpush2.bf16.msra.mxu0 0
      %4377 = vmatprep.subr.bf16.mxu0 0
      %4378 = vmatpush2.bf16.msra.mxu0 0
      %4379 = vmatprep.subr.bf16.mxu0 0
      %4380 = vmatpush2.bf16.msra.mxu0 0
      %4381 = vmatprep.subr.bf16.mxu0 0
      %4382 = vmatpush2.bf16.msra.mxu0 0
      %4383 = vmatprep.mubr.bf16.mxu0 0
      %4384 = vmatmul.mubr.bf16.gmra.mxu0 %v4304
      %v4385 = vpop.f32.mrf.mxu0
      %v4386 = vadd.f32 0.0, %v4385
      %v4387 = vpop.f32.mrf.mxu0
      %v4388 = vpop.f32.mrf.mxu0
      %v4389 = vadd.f32 0.0, %v4388
      %v4390 = vpop.f32.mrf.mxu0
      %4391 = vmatprep.mubr.bf16.mxu0 0
      %4392 = vmatmul.mubr.bf16.gmra.mxu0 %v4307
      %v4393 = vpop.f32.mrf.mxu0
      %v4394 = vadd.f32 0.0, %v4393
      %v4395 = vpop.f32.mrf.mxu0
      %v4396 = vpop.f32.mrf.mxu0
      %v4397 = vadd.f32 0.0, %v4396
      %v4398 = vpop.f32.mrf.mxu0
      %4399 = vmatprep.mubr.bf16.mxu0 0
      %4400 = vmatmul.mubr.bf16.gmra.mxu0 %v4310
      %v4401 = vpop.f32.mrf.mxu0
      %v4402 = vadd.f32 0.0, %v4401
      %v4403 = vpop.f32.mrf.mxu0
      %v4404 = vpop.f32.mrf.mxu0
      %v4405 = vadd.f32 0.0, %v4404
      %v4406 = vpop.f32.mrf.mxu0
      %4407 = vmatprep.mubr.bf16.mxu0 0
      %4408 = vmatmul.mubr.bf16.gmra.mxu0 %v4313
      %v4409 = vpop.f32.mrf.mxu0
      %v4410 = vadd.f32 0.0, %v4409
      %v4411 = vpop.f32.mrf.mxu0
      %v4412 = vpop.f32.mrf.mxu0
      %v4413 = vadd.f32 0.0, %v4412
      %v4414 = vpop.f32.mrf.mxu0
      %4415 = vmatprep.mubr.bf16.mxu0 0
      %4416 = vmatmul.mubr.bf16.gmra.mxu0 %v4316
      %v4417 = vpop.f32.mrf.mxu0
      %v4418 = vadd.f32 0.0, %v4417
      %v4419 = vpop.f32.mrf.mxu0
      %v4420 = vpop.f32.mrf.mxu0
      %v4421 = vadd.f32 0.0, %v4420
      %v4422 = vpop.f32.mrf.mxu0
      %4423 = vmatprep.mubr.bf16.mxu0 0
      %4424 = vmatmul.mubr.bf16.gmra.mxu0 %v4319
      %v4425 = vpop.f32.mrf.mxu0
      %v4426 = vadd.f32 0.0, %v4425
      %v4427 = vpop.f32.mrf.mxu0
      %v4428 = vpop.f32.mrf.mxu0
      %v4429 = vadd.f32 0.0, %v4428
      %v4430 = vpop.f32.mrf.mxu0
      %4431 = vmatprep.mubr.bf16.mxu0 0
      %4432 = vmatmul.mubr.bf16.gmra.mxu0 %v4322
      %v4433 = vpop.f32.mrf.mxu0
      %v4434 = vadd.f32 0.0, %v4433
      %v4435 = vpop.f32.mrf.mxu0
      %v4436 = vpop.f32.mrf.mxu0
      %v4437 = vadd.f32 0.0, %v4436
      %v4438 = vpop.f32.mrf.mxu0
      %4439 = vmatprep.mubr.bf16.mxu0 0
      %4440 = vmatmul.mubr.bf16.gmra.mxu0 %v4325
      %v4441 = vpop.f32.mrf.mxu0
      %v4442 = vadd.f32 0.0, %v4441
      %v4443 = vpop.f32.mrf.mxu0
      %v4444 = vpop.f32.mrf.mxu0
      %v4445 = vadd.f32 0.0, %v4444
      %v4446 = vpop.f32.mrf.mxu0
      %4447 = vmatprep.mubr.bf16.mxu0 0
      %4448 = vmatmul.mubr.bf16.gmra.mxu0 %v4328
      %v4449 = vpop.f32.mrf.mxu0
      %v4450 = vadd.f32 0.0, %v4449
      %v4451 = vpop.f32.mrf.mxu0
      %v4452 = vpop.f32.mrf.mxu0
      %v4453 = vadd.f32 0.0, %v4452
      %v4454 = vpop.f32.mrf.mxu0
      %4455 = vmatprep.mubr.bf16.mxu0 0
      %4456 = vmatmul.mubr.bf16.gmra.mxu0 %v4331
      %v4457 = vpop.f32.mrf.mxu0
      %v4458 = vadd.f32 0.0, %v4457
      %v4459 = vpop.f32.mrf.mxu0
      %v4460 = vpop.f32.mrf.mxu0
      %v4461 = vadd.f32 0.0, %v4460
      %v4462 = vpop.f32.mrf.mxu0
      %4463 = vmatprep.mubr.bf16.mxu0 0
      %4464 = vmatmul.mubr.bf16.gmra.mxu0 %v4334
      %v4465 = vpop.f32.mrf.mxu0
      %v4466 = vadd.f32 0.0, %v4465
      %v4467 = vpop.f32.mrf.mxu0
      %v4468 = vpop.f32.mrf.mxu0
      %v4469 = vadd.f32 0.0, %v4468
      %v4470 = vpop.f32.mrf.mxu0
      %4471 = vmatprep.mubr.bf16.mxu0 0
      %4472 = vmatmul.mubr.bf16.gmra.mxu0 %v4337
      %v4473 = vpop.f32.mrf.mxu0
      %v4474 = vadd.f32 0.0, %v4473
      %v4475 = vpop.f32.mrf.mxu0
      %v4476 = vpop.f32.mrf.mxu0
      %v4477 = vadd.f32 0.0, %v4476
      %v4478 = vpop.f32.mrf.mxu0
      %4479 = vmatprep.mubr.bf16.mxu0 0
      %4480 = vmatmul.mubr.bf16.gmra.mxu0 %v4340
      %v4481 = vpop.f32.mrf.mxu0
      %v4482 = vadd.f32 0.0, %v4481
      %v4483 = vpop.f32.mrf.mxu0
      %v4484 = vpop.f32.mrf.mxu0
      %v4485 = vadd.f32 0.0, %v4484
      %v4486 = vpop.f32.mrf.mxu0
      %4487 = vmatprep.mubr.bf16.mxu0 0
      %4488 = vmatmul.mubr.bf16.gmra.mxu0 %v4343
      %v4489 = vpop.f32.mrf.mxu0
      %v4490 = vadd.f32 0.0, %v4489
      %v4491 = vpop.f32.mrf.mxu0
      %v4492 = vpop.f32.mrf.mxu0
      %v4493 = vadd.f32 0.0, %v4492
      %v4494 = vpop.f32.mrf.mxu0
      %4495 = vmatprep.mubr.bf16.mxu0 0
      %4496 = vmatmul.mubr.bf16.gmra.mxu0 %v4346
      %v4497 = vpop.f32.mrf.mxu0
      %v4498 = vadd.f32 0.0, %v4497
      %v4499 = vpop.f32.mrf.mxu0
      %v4500 = vpop.f32.mrf.mxu0
      %v4501 = vadd.f32 0.0, %v4500
      %v4502 = vpop.f32.mrf.mxu0
      %4503 = vmatprep.mubr.bf16.mxu0 0
      %4504 = vmatmul.mubr.bf16.gmra.mxu0 %v4349
      %v4505 = vpop.f32.mrf.mxu0
      %v4506 = vadd.f32 0.0, %v4505
      %v4507 = vpop.f32.mrf.mxu0
      %v4508 = vpop.f32.mrf.mxu0
      %v4509 = vadd.f32 0.0, %v4508
      %v4510 = vpop.f32.mrf.mxu0
      %4511 = vdwg.mxu0
      %v4512 = vadd.f32 %v3758, %v4386
      %v4513 = vadd.f32 %v3759, %v4389
      %v4514 = vadd.f32 %v3760, %v4394
      %v4515 = vadd.f32 %v3761, %v4397
      %v4516 = vadd.f32 %v3762, %v4402
      %v4517 = vadd.f32 %v3763, %v4405
      %v4518 = vadd.f32 %v3764, %v4410
      %v4519 = vadd.f32 %v3765, %v4413
      %v4520 = vadd.f32 %v3766, %v4418
      %v4521 = vadd.f32 %v3767, %v4421
      %v4522 = vadd.f32 %v3768, %v4426
      %v4523 = vadd.f32 %v3769, %v4429
      %v4524 = vadd.f32 %v3770, %v4434
      %v4525 = vadd.f32 %v3771, %v4437
      %v4526 = vadd.f32 %v3772, %v4442
      %v4527 = vadd.f32 %v3773, %v4445
      %v4528 = vadd.f32 %v3774, %v4450
      %v4529 = vadd.f32 %v3775, %v4453
      %v4530 = vadd.f32 %v3776, %v4458
      %v4531 = vadd.f32 %v3777, %v4461
      %v4532 = vadd.f32 %v3778, %v4466
      %v4533 = vadd.f32 %v3779, %v4469
      %v4534 = vadd.f32 %v3780, %v4474
      %v4535 = vadd.f32 %v3781, %v4477
      %v4536 = vadd.f32 %v3782, %v4482
      %v4537 = vadd.f32 %v3783, %v4485
      %v4538 = vadd.f32 %v3784, %v4490
      %v4539 = vadd.f32 %v3785, %v4493
      %v4540 = vadd.f32 %v3786, %v4498
      %v4541 = vadd.f32 %v3787, %v4501
      %v4542 = vadd.f32 %v3788, %v4506
      %v4543 = vadd.f32 %v3789, %v4509
      %v4544 = vld [vmem:[%s3403] sm:$0xe]
      %v4545 = vld [vmem:[%s3403 + $0xc] sm:$0xe]
      %v4546 = vld [vmem:[%s3403 + $0x18] sm:$0xe]
      %v4547 = vld [vmem:[%s3403 + $0x24] sm:$0xe]
      %v4548 = vld [vmem:[%s3403 + $0x30] sm:$0xe]
      %v4549 = vld [vmem:[%s3403 + $0x3c] sm:$0xe]
      %v4550 = vld [vmem:[%s3403 + $0x48] sm:$0xe]
      %v4551 = vld [vmem:[%s3403 + $0x54] sm:$0xe]
      %v4552 = vld [vmem:[%s3403 + $0x60] sm:$0xe]
      %v4553 = vld [vmem:[%s3403 + $0x6c] sm:$0xe]
      %v4554 = vld [vmem:[%s3403 + $0x78] sm:$0xe]
      %v4555 = vld [vmem:[%s3403 + $0x84] sm:$0xe]
      %v4556 = vld [vmem:[%s3403 + $0x90] sm:$0xe]
      %v4557 = vld [vmem:[%s3403 + $0x9c] sm:$0xe]
      %v4558 = vld [vmem:[%s3403 + $0xa8] sm:$0xe]
      %v4559 = vld [vmem:[%s3403 + $0xb4] sm:$0xe]
      %v4608 = vrot.slane %v4544, 5
      %v4609 = vrot.slane %v4608, 4
      %v4610 = vrot.slane %v3791, 5
      %v4611 = vsel %vm1323, %v4609, %v4610
      %v4612 = vrot.slane %v4610, 4
      %v4613 = vrot.slane %v3792, 5
      %v4614 = vsel %vm1323, %v4612, %v4613
      %v4615 = vrot.slane %v4545, 5
      %v4616 = vrot.slane %v4615, 4
      %v4617 = vrot.slane %v3794, 5
      %v4618 = vsel %vm1323, %v4616, %v4617
      %v4619 = vrot.slane %v4617, 4
      %v4620 = vrot.slane %v3795, 5
      %v4621 = vsel %vm1323, %v4619, %v4620
      %v4622 = vrot.slane %v4546, 5
      %v4623 = vrot.slane %v4622, 4
      %v4624 = vrot.slane %v3797, 5
      %v4625 = vsel %vm1323, %v4623, %v4624
      %v4626 = vrot.slane %v4624, 4
      %v4627 = vrot.slane %v3798, 5
      %v4628 = vsel %vm1323, %v4626, %v4627
      %v4629 = vrot.slane %v4547, 5
      %v4630 = vrot.slane %v4629, 4
      %v4631 = vrot.slane %v3800, 5
      %v4632 = vsel %vm1323, %v4630, %v4631
      %v4633 = vrot.slane %v4631, 4
      %v4634 = vrot.slane %v3801, 5
      %v4635 = vsel %vm1323, %v4633, %v4634
      %v4636 = vrot.slane %v4548, 5
      %v4637 = vrot.slane %v4636, 4
      %v4638 = vrot.slane %v3803, 5
      %v4639 = vsel %vm1323, %v4637, %v4638
      %v4640 = vrot.slane %v4638, 4
      %v4641 = vrot.slane %v3804, 5
      %v4642 = vsel %vm1323, %v4640, %v4641
      %v4643 = vrot.slane %v4549, 5
      %v4644 = vrot.slane %v4643, 4
      %v4645 = vrot.slane %v3806, 5
      %v4646 = vsel %vm1323, %v4644, %v4645
      %v4647 = vrot.slane %v4645, 4
      %v4648 = vrot.slane %v3807, 5
      %v4649 = vsel %vm1323, %v4647, %v4648
      %v4650 = vrot.slane %v4550, 5
      %v4651 = vrot.slane %v4650, 4
      %v4652 = vrot.slane %v3809, 5
      %v4653 = vsel %vm1323, %v4651, %v4652
      %v4654 = vrot.slane %v4652, 4
      %v4655 = vrot.slane %v3810, 5
      %v4656 = vsel %vm1323, %v4654, %v4655
      %v4657 = vrot.slane %v4551, 5
      %v4658 = vrot.slane %v4657, 4
      %v4659 = vrot.slane %v3812, 5
      %v4660 = vsel %vm1323, %v4658, %v4659
      %v4661 = vrot.slane %v4659, 4
      %v4662 = vrot.slane %v3813, 5
      %v4663 = vsel %vm1323, %v4661, %v4662
      %v4664 = vrot.slane %v4552, 5
      %v4665 = vrot.slane %v4664, 4
      %v4666 = vrot.slane %v3815, 5
      %v4667 = vsel %vm1323, %v4665, %v4666
      %v4668 = vrot.slane %v4666, 4
      %v4669 = vrot.slane %v3816, 5
      %v4670 = vsel %vm1323, %v4668, %v4669
      %v4671 = vrot.slane %v4553, 5
      %v4672 = vrot.slane %v4671, 4
      %v4673 = vrot.slane %v3818, 5
      %v4674 = vsel %vm1323, %v4672, %v4673
      %v4675 = vrot.slane %v4673, 4
      %v4676 = vrot.slane %v3819, 5
      %v4677 = vsel %vm1323, %v4675, %v4676
      %v4678 = vrot.slane %v4554, 5
      %v4679 = vrot.slane %v4678, 4
      %v4680 = vrot.slane %v3821, 5
      %v4681 = vsel %vm1323, %v4679, %v4680
      %v4682 = vrot.slane %v4680, 4
      %v4683 = vrot.slane %v3822, 5
      %v4684 = vsel %vm1323, %v4682, %v4683
      %v4685 = vrot.slane %v4555, 5
      %v4686 = vrot.slane %v4685, 4
      %v4687 = vrot.slane %v3824, 5
      %v4688 = vsel %vm1323, %v4686, %v4687
      %v4689 = vrot.slane %v4687, 4
      %v4690 = vrot.slane %v3825, 5
      %v4691 = vsel %vm1323, %v4689, %v4690
      %v4692 = vrot.slane %v4556, 5
      %v4693 = vrot.slane %v4692, 4
      %v4694 = vrot.slane %v3827, 5
      %v4695 = vsel %vm1323, %v4693, %v4694
      %v4696 = vrot.slane %v4694, 4
      %v4697 = vrot.slane %v3828, 5
      %v4698 = vsel %vm1323, %v4696, %v4697
      %v4699 = vrot.slane %v4557, 5
      %v4700 = vrot.slane %v4699, 4
      %v4701 = vrot.slane %v3830, 5
      %v4702 = vsel %vm1323, %v4700, %v4701
      %v4703 = vrot.slane %v4701, 4
      %v4704 = vrot.slane %v3831, 5
      %v4705 = vsel %vm1323, %v4703, %v4704
      %v4706 = vrot.slane %v4558, 5
      %v4707 = vrot.slane %v4706, 4
      %v4708 = vrot.slane %v3833, 5
      %v4709 = vsel %vm1323, %v4707, %v4708
      %v4710 = vrot.slane %v4708, 4
      %v4711 = vrot.slane %v3834, 5
      %v4712 = vsel %vm1323, %v4710, %v4711
      %v4713 = vrot.slane %v4559, 5
      %v4714 = vrot.slane %v4713, 4
      %v4715 = vrot.slane %v3836, 5
      %v4716 = vsel %vm1323, %v4714, %v4715
      %v4717 = vrot.slane %v4715, 4
      %v4718 = vrot.slane %v3837, 5
      %v4719 = vsel %vm1323, %v4717, %v4718
      %s4720 = scalar_lea.vmem %s1, 256
      %v4721 = vld [vmem:[%s4720] sm:$0xf]
      %v4722 = vld [vmem:[%s4720 + $0x4] sm:$0xf]
      %v4723 = vld [vmem:[%s4720 + $0x8] sm:$0xf]
      %v4724 = vld [vmem:[%s4720 + $0xc] sm:$0xf]
      %v4725 = vld [vmem:[%s4720 + $0x10] sm:$0xf]
      %v4726 = vld [vmem:[%s4720 + $0x14] sm:$0xf]
      %v4727 = vld [vmem:[%s4720 + $0x18] sm:$0xf]
      %v4728 = vld [vmem:[%s4720 + $0x1c] sm:$0xf]
      %v4729 = vunpack.c.l.b16 %v4611
      %v4730 = vunpack.c.l.b16 %v4614
      %v4731 = vunpack.c.l.b16 %v4618
      %v4732 = vunpack.c.l.b16 %v4621
      %v4733 = vunpack.c.l.b16 %v4625
      %v4734 = vunpack.c.l.b16 %v4628
      %v4735 = vunpack.c.l.b16 %v4632
      %v4736 = vunpack.c.l.b16 %v4635
      %v4737 = vunpack.c.l.b16 %v4639
      %v4738 = vunpack.c.l.b16 %v4642
      %v4739 = vunpack.c.l.b16 %v4646
      %v4740 = vunpack.c.l.b16 %v4649
      %v4741 = vunpack.c.l.b16 %v4653
      %v4742 = vunpack.c.l.b16 %v4656
      %v4743 = vunpack.c.l.b16 %v4660
      %v4744 = vunpack.c.l.b16 %v4663
      %v4745 = vunpack.c.l.b16 %v4667
      %v4746 = vunpack.c.l.b16 %v4670
      %v4747 = vunpack.c.l.b16 %v4674
      %v4748 = vunpack.c.l.b16 %v4677
      %v4749 = vunpack.c.l.b16 %v4681
      %v4750 = vunpack.c.l.b16 %v4684
      %v4751 = vunpack.c.l.b16 %v4688
      %v4752 = vunpack.c.l.b16 %v4691
      %v4753 = vunpack.c.l.b16 %v4695
      %v4754 = vunpack.c.l.b16 %v4698
      %v4755 = vunpack.c.l.b16 %v4702
      %v4756 = vunpack.c.l.b16 %v4705
      %v4757 = vunpack.c.l.b16 %v4709
      %v4758 = vunpack.c.l.b16 %v4712
      %v4759 = vunpack.c.l.b16 %v4716
      %v4760 = vunpack.c.l.b16 %v4719
      %v4761 = vpack.c.b16 %v4730, %v4729
      %v4762 = vpack.c.b16 %v4732, %v4731
      %v4763 = vpack.c.b16 %v4734, %v4733
      %v4764 = vpack.c.b16 %v4736, %v4735
      %v4765 = vpack.c.b16 %v4738, %v4737
      %v4766 = vpack.c.b16 %v4740, %v4739
      %v4767 = vpack.c.b16 %v4742, %v4741
      %v4768 = vpack.c.b16 %v4744, %v4743
      %v4769 = vpack.c.b16 %v4746, %v4745
      %v4770 = vpack.c.b16 %v4748, %v4747
      %v4771 = vpack.c.b16 %v4750, %v4749
      %v4772 = vpack.c.b16 %v4752, %v4751
      %v4773 = vpack.c.b16 %v4754, %v4753
      %v4774 = vpack.c.b16 %v4756, %v4755
      %v4775 = vpack.c.b16 %v4758, %v4757
      %v4776 = vpack.c.b16 %v4760, %v4759
      %v4785 = vunpack.c.l.b16 %v4721
      %v4786 = vunpack.c.l.b16 %v4722
      %v4787 = vunpack.c.l.b16 %v4723
      %v4788 = vunpack.c.l.b16 %v4724
      %v4789 = vunpack.c.l.b16 %v4725
      %v4790 = vunpack.c.l.b16 %v4726
      %v4791 = vunpack.c.l.b16 %v4727
      %v4792 = vunpack.c.l.b16 %v4728
      %v4793 = vpack.c.b16 %v4786, %v4785
      %v4794 = vpack.c.b16 %v4788, %v4787
      %v4795 = vpack.c.b16 %v4790, %v4789
      %v4796 = vpack.c.b16 %v4792, %v4791
      %v4802 = vsel %vm750, %v4761, 0
      %v4805 = vsel %vm750, %v4762, 0
      %v4808 = vsel %vm750, %v4763, 0
      %v4811 = vsel %vm750, %v4764, 0
      %v4814 = vsel %vm750, %v4765, 0
      %v4817 = vsel %vm750, %v4766, 0
      %v4820 = vsel %vm750, %v4767, 0
      %v4823 = vsel %vm750, %v4768, 0
      %v4826 = vsel %vm750, %v4769, 0
      %v4829 = vsel %vm750, %v4770, 0
      %v4832 = vsel %vm750, %v4771, 0
      %v4835 = vsel %vm750, %v4772, 0
      %v4838 = vsel %vm750, %v4773, 0
      %v4841 = vsel %vm750, %v4774, 0
      %v4844 = vsel %vm750, %v4775, 0
      %v4847 = vsel %vm750, %v4776, 0
      %4849 = vmatprep.subr.bf16.mxu0 0
      %4850 = vmatpush1.bf16.msra.mxu0 0
      %4851 = vmatprep.subr.bf16.mxu0 0
      %4852 = vmatpush1.bf16.msra.mxu0 0
      %4853 = vmatprep.subr.bf16.mxu0 0
      %4854 = vmatpush1.bf16.msra.mxu0 0
      %4855 = vmatprep.subr.bf16.mxu0 0
      %4856 = vmatpush1.bf16.msra.mxu0 0
      %4857 = vmatprep.subr.bf16.mxu0 0
      %4858 = vmatpush1.bf16.msra.mxu0 %v4796
      %4859 = vmatprep.subr.bf16.mxu0 0
      %4860 = vmatpush1.bf16.msra.mxu0 %v4795
      %4861 = vmatprep.subr.bf16.mxu0 0
      %4862 = vmatpush1.bf16.msra.mxu0 %v4794
      %4863 = vmatprep.subr.bf16.mxu0 0
      %4864 = vmatpush1.bf16.msra.mxu0 %v4793
      %4865 = vmatprep.subr.bf16.mxu0 0
      %4866 = vmatpush2.bf16.msra.mxu0 0
      %4867 = vmatprep.subr.bf16.mxu0 0
      %4868 = vmatpush2.bf16.msra.mxu0 0
      %4869 = vmatprep.subr.bf16.mxu0 0
      %4870 = vmatpush2.bf16.msra.mxu0 0
      %4871 = vmatprep.subr.bf16.mxu0 0
      %4872 = vmatpush2.bf16.msra.mxu0 0
      %4873 = vmatprep.subr.bf16.mxu0 0
      %4874 = vmatpush2.bf16.msra.mxu0 0
      %4875 = vmatprep.subr.bf16.mxu0 0
      %4876 = vmatpush2.bf16.msra.mxu0 0
      %4877 = vmatprep.subr.bf16.mxu0 0
      %4878 = vmatpush2.bf16.msra.mxu0 0
      %4879 = vmatprep.subr.bf16.mxu0 0
      %4880 = vmatpush2.bf16.msra.mxu0 0
      %4881 = vmatprep.mubr.bf16.mxu0 0
      %4882 = vmatmul.mubr.bf16.gmra.mxu0 %v4802
      %v4883 = vpop.f32.mrf.mxu0
      %v4884 = vadd.f32 0.0, %v4883
      %v4885 = vpop.f32.mrf.mxu0
      %v4886 = vpop.f32.mrf.mxu0
      %v4887 = vadd.f32 0.0, %v4886
      %v4888 = vpop.f32.mrf.mxu0
      %4889 = vmatprep.mubr.bf16.mxu0 0
      %4890 = vmatmul.mubr.bf16.gmra.mxu0 %v4805
      %v4891 = vpop.f32.mrf.mxu0
      %v4892 = vadd.f32 0.0, %v4891
      %v4893 = vpop.f32.mrf.mxu0
      %v4894 = vpop.f32.mrf.mxu0
      %v4895 = vadd.f32 0.0, %v4894
      %v4896 = vpop.f32.mrf.mxu0
      %4897 = vmatprep.mubr.bf16.mxu0 0
      %4898 = vmatmul.mubr.bf16.gmra.mxu0 %v4808
      %v4899 = vpop.f32.mrf.mxu0
      %v4900 = vadd.f32 0.0, %v4899
      %v4901 = vpop.f32.mrf.mxu0
      %v4902 = vpop.f32.mrf.mxu0
      %v4903 = vadd.f32 0.0, %v4902
      %v4904 = vpop.f32.mrf.mxu0
      %4905 = vmatprep.mubr.bf16.mxu0 0
      %4906 = vmatmul.mubr.bf16.gmra.mxu0 %v4811
      %v4907 = vpop.f32.mrf.mxu0
      %v4908 = vadd.f32 0.0, %v4907
      %v4909 = vpop.f32.mrf.mxu0
      %v4910 = vpop.f32.mrf.mxu0
      %v4911 = vadd.f32 0.0, %v4910
      %v4912 = vpop.f32.mrf.mxu0
      %4913 = vmatprep.mubr.bf16.mxu0 0
      %4914 = vmatmul.mubr.bf16.gmra.mxu0 %v4814
      %v4915 = vpop.f32.mrf.mxu0
      %v4916 = vadd.f32 0.0, %v4915
      %v4917 = vpop.f32.mrf.mxu0
      %v4918 = vpop.f32.mrf.mxu0
      %v4919 = vadd.f32 0.0, %v4918
      %v4920 = vpop.f32.mrf.mxu0
      %4921 = vmatprep.mubr.bf16.mxu0 0
      %4922 = vmatmul.mubr.bf16.gmra.mxu0 %v4817
      %v4923 = vpop.f32.mrf.mxu0
      %v4924 = vadd.f32 0.0, %v4923
      %v4925 = vpop.f32.mrf.mxu0
      %v4926 = vpop.f32.mrf.mxu0
      %v4927 = vadd.f32 0.0, %v4926
      %v4928 = vpop.f32.mrf.mxu0
      %4929 = vmatprep.mubr.bf16.mxu0 0
      %4930 = vmatmul.mubr.bf16.gmra.mxu0 %v4820
      %v4931 = vpop.f32.mrf.mxu0
      %v4932 = vadd.f32 0.0, %v4931
      %v4933 = vpop.f32.mrf.mxu0
      %v4934 = vpop.f32.mrf.mxu0
      %v4935 = vadd.f32 0.0, %v4934
      %v4936 = vpop.f32.mrf.mxu0
      %4937 = vmatprep.mubr.bf16.mxu0 0
      %4938 = vmatmul.mubr.bf16.gmra.mxu0 %v4823
      %v4939 = vpop.f32.mrf.mxu0
      %v4940 = vadd.f32 0.0, %v4939
      %v4941 = vpop.f32.mrf.mxu0
      %v4942 = vpop.f32.mrf.mxu0
      %v4943 = vadd.f32 0.0, %v4942
      %v4944 = vpop.f32.mrf.mxu0
      %4945 = vmatprep.mubr.bf16.mxu0 0
      %4946 = vmatmul.mubr.bf16.gmra.mxu0 %v4826
      %v4947 = vpop.f32.mrf.mxu0
      %v4948 = vadd.f32 0.0, %v4947
      %v4949 = vpop.f32.mrf.mxu0
      %v4950 = vpop.f32.mrf.mxu0
      %v4951 = vadd.f32 0.0, %v4950
      %v4952 = vpop.f32.mrf.mxu0
      %4953 = vmatprep.mubr.bf16.mxu0 0
      %4954 = vmatmul.mubr.bf16.gmra.mxu0 %v4829
      %v4955 = vpop.f32.mrf.mxu0
      %v4956 = vadd.f32 0.0, %v4955
      %v4957 = vpop.f32.mrf.mxu0
      %v4958 = vpop.f32.mrf.mxu0
      %v4959 = vadd.f32 0.0, %v4958
      %v4960 = vpop.f32.mrf.mxu0
      %4961 = vmatprep.mubr.bf16.mxu0 0
      %4962 = vmatmul.mubr.bf16.gmra.mxu0 %v4832
      %v4963 = vpop.f32.mrf.mxu0
      %v4964 = vadd.f32 0.0, %v4963
      %v4965 = vpop.f32.mrf.mxu0
      %v4966 = vpop.f32.mrf.mxu0
      %v4967 = vadd.f32 0.0, %v4966
      %v4968 = vpop.f32.mrf.mxu0
      %4969 = vmatprep.mubr.bf16.mxu0 0
      %4970 = vmatmul.mubr.bf16.gmra.mxu0 %v4835
      %v4971 = vpop.f32.mrf.mxu0
      %v4972 = vadd.f32 0.0, %v4971
      %v4973 = vpop.f32.mrf.mxu0
      %v4974 = vpop.f32.mrf.mxu0
      %v4975 = vadd.f32 0.0, %v4974
      %v4976 = vpop.f32.mrf.mxu0
      %4977 = vmatprep.mubr.bf16.mxu0 0
      %4978 = vmatmul.mubr.bf16.gmra.mxu0 %v4838
      %v4979 = vpop.f32.mrf.mxu0
      %v4980 = vadd.f32 0.0, %v4979
      %v4981 = vpop.f32.mrf.mxu0
      %v4982 = vpop.f32.mrf.mxu0
      %v4983 = vadd.f32 0.0, %v4982
      %v4984 = vpop.f32.mrf.mxu0
      %4985 = vmatprep.mubr.bf16.mxu0 0
      %4986 = vmatmul.mubr.bf16.gmra.mxu0 %v4841
      %v4987 = vpop.f32.mrf.mxu0
      %v4988 = vadd.f32 0.0, %v4987
      %v4989 = vpop.f32.mrf.mxu0
      %v4990 = vpop.f32.mrf.mxu0
      %v4991 = vadd.f32 0.0, %v4990
      %v4992 = vpop.f32.mrf.mxu0
      %4993 = vmatprep.mubr.bf16.mxu0 0
      %4994 = vmatmul.mubr.bf16.gmra.mxu0 %v4844
      %v4995 = vpop.f32.mrf.mxu0
      %v4996 = vadd.f32 0.0, %v4995
      %v4997 = vpop.f32.mrf.mxu0
      %v4998 = vpop.f32.mrf.mxu0
      %v4999 = vadd.f32 0.0, %v4998
      %v5000 = vpop.f32.mrf.mxu0
      %5001 = vmatprep.mubr.bf16.mxu0 0
      %5002 = vmatmul.mubr.bf16.gmra.mxu0 %v4847
      %v5003 = vpop.f32.mrf.mxu0
      %v5004 = vadd.f32 0.0, %v5003
      %v5005 = vpop.f32.mrf.mxu0
      %v5006 = vpop.f32.mrf.mxu0
      %v5007 = vadd.f32 0.0, %v5006
      %v5008 = vpop.f32.mrf.mxu0
      %5009 = vdwg.mxu0
      %v5010 = vadd.f32 %v4512, %v4884
      %v5011 = vadd.f32 %v4513, %v4887
      %v5012 = vadd.f32 %v4514, %v4892
      %v5013 = vadd.f32 %v4515, %v4895
      %v5014 = vadd.f32 %v4516, %v4900
      %v5015 = vadd.f32 %v4517, %v4903
      %v5016 = vadd.f32 %v4518, %v4908
      %v5017 = vadd.f32 %v4519, %v4911
      %v5018 = vadd.f32 %v4520, %v4916
      %v5019 = vadd.f32 %v4521, %v4919
      %v5020 = vadd.f32 %v4522, %v4924
      %v5021 = vadd.f32 %v4523, %v4927
      %v5022 = vadd.f32 %v4524, %v4932
      %v5023 = vadd.f32 %v4525, %v4935
      %v5024 = vadd.f32 %v4526, %v4940
      %v5025 = vadd.f32 %v4527, %v4943
      %v5026 = vadd.f32 %v4528, %v4948
      %v5027 = vadd.f32 %v4529, %v4951
      %v5028 = vadd.f32 %v4530, %v4956
      %v5029 = vadd.f32 %v4531, %v4959
      %v5030 = vadd.f32 %v4532, %v4964
      %v5031 = vadd.f32 %v4533, %v4967
      %v5032 = vadd.f32 %v4534, %v4972
      %v5033 = vadd.f32 %v4535, %v4975
      %v5034 = vadd.f32 %v4536, %v4980
      %v5035 = vadd.f32 %v4537, %v4983
      %v5036 = vadd.f32 %v4538, %v4988
      %v5037 = vadd.f32 %v4539, %v4991
      %v5038 = vadd.f32 %v4540, %v4996
      %v5039 = vadd.f32 %v4541, %v4999
      %v5040 = vadd.f32 %v4542, %v5004
      %v5041 = vadd.f32 %v4543, %v5007
      %v5042 = vld [vmem:[%s2] sm:$0x1]
      %v5044 = vlaneseq
      %v5045 = vshrl.u32 %v5044, 7
      %v5046 = vsub.s32 0, %v5045
      %v5047 = vrot.slane %v5042, %v5046
      %v5049 = vmul.f32 %v5010, %v5047
      %v5050 = vmul.f32 %v5011, %v5047
      %v5051 = vmul.f32 %v5012, %v5047
      %v5052 = vmul.f32 %v5013, %v5047
      %v5053 = vmul.f32 %v5014, %v5047
      %v5054 = vmul.f32 %v5015, %v5047
      %v5055 = vmul.f32 %v5016, %v5047
      %v5056 = vmul.f32 %v5017, %v5047
      %v5057 = vmul.f32 %v5018, %v5047
      %v5058 = vmul.f32 %v5019, %v5047
      %v5059 = vmul.f32 %v5020, %v5047
      %v5060 = vmul.f32 %v5021, %v5047
      %v5061 = vmul.f32 %v5022, %v5047
      %v5062 = vmul.f32 %v5023, %v5047
      %v5063 = vmul.f32 %v5024, %v5047
      %v5064 = vmul.f32 %v5025, %v5047
      %v5065 = vmul.f32 %v5026, %v5047
      %v5066 = vmul.f32 %v5027, %v5047
      %v5067 = vmul.f32 %v5028, %v5047
      %v5068 = vmul.f32 %v5029, %v5047
      %v5069 = vmul.f32 %v5030, %v5047
      %v5070 = vmul.f32 %v5031, %v5047
      %v5071 = vmul.f32 %v5032, %v5047
      %v5072 = vmul.f32 %v5033, %v5047
      %v5073 = vmul.f32 %v5034, %v5047
      %v5074 = vmul.f32 %v5035, %v5047
      %v5075 = vmul.f32 %v5036, %v5047
      %v5076 = vmul.f32 %v5037, %v5047
      %v5077 = vmul.f32 %v5038, %v5047
      %v5078 = vmul.f32 %v5039, %v5047
      %v5079 = vmul.f32 %v5040, %v5047
      %v5080 = vmul.f32 %v5041, %v5047
      %v5081 = vld [vmem:[%s3] sm:$0x1]
      %v5083 = vlaneseq
      %v5084 = vshrl.u32 %v5083, 7
      %v5085 = vsub.s32 0, %v5084
      %v5086 = vrot.slane %v5081, %v5085
      %v5088 = vadd.f32 %v5049, %v5086
      %v5089 = vadd.f32 %v5050, %v5086
      %v5090 = vadd.f32 %v5051, %v5086
      %v5091 = vadd.f32 %v5052, %v5086
      %v5092 = vadd.f32 %v5053, %v5086
      %v5093 = vadd.f32 %v5054, %v5086
      %v5094 = vadd.f32 %v5055, %v5086
      %v5095 = vadd.f32 %v5056, %v5086
      %v5096 = vadd.f32 %v5057, %v5086
      %v5097 = vadd.f32 %v5058, %v5086
      %v5098 = vadd.f32 %v5059, %v5086
      %v5099 = vadd.f32 %v5060, %v5086
      %v5100 = vadd.f32 %v5061, %v5086
      %v5101 = vadd.f32 %v5062, %v5086
      %v5102 = vadd.f32 %v5063, %v5086
      %v5103 = vadd.f32 %v5064, %v5086
      %v5104 = vadd.f32 %v5065, %v5086
      %v5105 = vadd.f32 %v5066, %v5086
      %v5106 = vadd.f32 %v5067, %v5086
      %v5107 = vadd.f32 %v5068, %v5086
      %v5108 = vadd.f32 %v5069, %v5086
      %v5109 = vadd.f32 %v5070, %v5086
      %v5110 = vadd.f32 %v5071, %v5086
      %v5111 = vadd.f32 %v5072, %v5086
      %v5112 = vadd.f32 %v5073, %v5086
      %v5113 = vadd.f32 %v5074, %v5086
      %v5114 = vadd.f32 %v5075, %v5086
      %v5115 = vadd.f32 %v5076, %v5086
      %v5116 = vadd.f32 %v5077, %v5086
      %v5117 = vadd.f32 %v5078, %v5086
      %v5118 = vadd.f32 %v5079, %v5086
      %v5119 = vadd.f32 %v5080, %v5086
      %v5120 = vmax.f32 %v5088, 0.0
      %v5121 = vmax.f32 %v5089, 0.0
      %v5122 = vmax.f32 %v5090, 0.0
      %v5123 = vmax.f32 %v5091, 0.0
      %v5124 = vmax.f32 %v5092, 0.0
      %v5125 = vmax.f32 %v5093, 0.0
      %v5126 = vmax.f32 %v5094, 0.0
      %v5127 = vmax.f32 %v5095, 0.0
      %v5128 = vmax.f32 %v5096, 0.0
      %v5129 = vmax.f32 %v5097, 0.0
      %v5130 = vmax.f32 %v5098, 0.0
      %v5131 = vmax.f32 %v5099, 0.0
      %v5132 = vmax.f32 %v5100, 0.0
      %v5133 = vmax.f32 %v5101, 0.0
      %v5134 = vmax.f32 %v5102, 0.0
      %v5135 = vmax.f32 %v5103, 0.0
      %v5136 = vmax.f32 %v5104, 0.0
      %v5137 = vmax.f32 %v5105, 0.0
      %v5138 = vmax.f32 %v5106, 0.0
      %v5139 = vmax.f32 %v5107, 0.0
      %v5140 = vmax.f32 %v5108, 0.0
      %v5141 = vmax.f32 %v5109, 0.0
      %v5142 = vmax.f32 %v5110, 0.0
      %v5143 = vmax.f32 %v5111, 0.0
      %v5144 = vmax.f32 %v5112, 0.0
      %v5145 = vmax.f32 %v5113, 0.0
      %v5146 = vmax.f32 %v5114, 0.0
      %v5147 = vmax.f32 %v5115, 0.0
      %v5148 = vmax.f32 %v5116, 0.0
      %v5149 = vmax.f32 %v5117, 0.0
      %v5150 = vmax.f32 %v5118, 0.0
      %v5151 = vmax.f32 %v5119, 0.0
      %v5152 = vpack.c.bf16 %v5121, %v5120
      %v5153 = vpack.c.bf16 %v5123, %v5122
      %v5154 = vpack.c.bf16 %v5125, %v5124
      %v5155 = vpack.c.bf16 %v5127, %v5126
      %v5156 = vpack.c.bf16 %v5129, %v5128
      %v5157 = vpack.c.bf16 %v5131, %v5130
      %v5158 = vpack.c.bf16 %v5133, %v5132
      %v5159 = vpack.c.bf16 %v5135, %v5134
      %v5160 = vpack.c.bf16 %v5137, %v5136
      %v5161 = vpack.c.bf16 %v5139, %v5138
      %v5162 = vpack.c.bf16 %v5141, %v5140
      %v5163 = vpack.c.bf16 %v5143, %v5142
      %v5164 = vpack.c.bf16 %v5145, %v5144
      %v5165 = vpack.c.bf16 %v5147, %v5146
      %v5166 = vpack.c.bf16 %v5149, %v5148
      %v5167 = vpack.c.bf16 %v5151, %v5150
      %v5184 = vunpack.c.l.b16 %v5152
      %v5185 = vunpack.c.h.b16 %v5152
      %v5186 = vunpack.c.l.b16 %v5153
      %v5187 = vunpack.c.h.b16 %v5153
      %v5188 = vunpack.c.l.b16 %v5154
      %v5189 = vunpack.c.h.b16 %v5154
      %v5190 = vunpack.c.l.b16 %v5155
      %v5191 = vunpack.c.h.b16 %v5155
      %v5192 = vunpack.c.l.b16 %v5156
      %v5193 = vunpack.c.h.b16 %v5156
      %v5194 = vunpack.c.l.b16 %v5157
      %v5195 = vunpack.c.h.b16 %v5157
      %v5196 = vunpack.c.l.b16 %v5158
      %v5197 = vunpack.c.h.b16 %v5158
      %v5198 = vunpack.c.l.b16 %v5159
      %v5199 = vunpack.c.h.b16 %v5159
      %v5200 = vunpack.c.l.b16 %v5160
      %v5201 = vunpack.c.h.b16 %v5160
      %v5202 = vunpack.c.l.b16 %v5161
      %v5203 = vunpack.c.h.b16 %v5161
      %v5204 = vunpack.c.l.b16 %v5162
      %v5205 = vunpack.c.h.b16 %v5162
      %v5206 = vunpack.c.l.b16 %v5163
      %v5207 = vunpack.c.h.b16 %v5163
      %v5208 = vunpack.c.l.b16 %v5164
      %v5209 = vunpack.c.h.b16 %v5164
      %v5210 = vunpack.c.l.b16 %v5165
      %v5211 = vunpack.c.h.b16 %v5165
      %v5212 = vunpack.c.l.b16 %v5166
      %v5213 = vunpack.c.h.b16 %v5166
      %v5214 = vunpack.c.l.b16 %v5167
      %v5215 = vunpack.c.h.b16 %v5167
      %v5216 = vpack.c.b16 %v5184, %v5184
      %v5217 = vpack.c.b16 %v5185, %v5185
      %v5218 = vpack.c.b16 %v5186, %v5186
      %v5219 = vpack.c.b16 %v5187, %v5187
      %v5220 = vpack.c.b16 %v5188, %v5188
      %v5221 = vpack.c.b16 %v5189, %v5189
      %v5222 = vpack.c.b16 %v5190, %v5190
      %v5223 = vpack.c.b16 %v5191, %v5191
      %v5224 = vpack.c.b16 %v5192, %v5192
      %v5225 = vpack.c.b16 %v5193, %v5193
      %v5226 = vpack.c.b16 %v5194, %v5194
      %v5227 = vpack.c.b16 %v5195, %v5195
      %v5228 = vpack.c.b16 %v5196, %v5196
      %v5229 = vpack.c.b16 %v5197, %v5197
      %v5230 = vpack.c.b16 %v5198, %v5198
      %v5231 = vpack.c.b16 %v5199, %v5199
      %v5232 = vpack.c.b16 %v5200, %v5200
      %v5233 = vpack.c.b16 %v5201, %v5201
      %v5234 = vpack.c.b16 %v5202, %v5202
      %v5235 = vpack.c.b16 %v5203, %v5203
      %v5236 = vpack.c.b16 %v5204, %v5204
      %v5237 = vpack.c.b16 %v5205, %v5205
      %v5238 = vpack.c.b16 %v5206, %v5206
      %v5239 = vpack.c.b16 %v5207, %v5207
      %v5240 = vpack.c.b16 %v5208, %v5208
      %v5241 = vpack.c.b16 %v5209, %v5209
      %v5242 = vpack.c.b16 %v5210, %v5210
      %v5243 = vpack.c.b16 %v5211, %v5211
      %v5244 = vpack.c.b16 %v5212, %v5212
      %v5245 = vpack.c.b16 %v5213, %v5213
      %v5246 = vpack.c.b16 %v5214, %v5214
      %v5247 = vpack.c.b16 %v5215, %v5215
      %vm5280 = vcmask 519168
      %5281 = vst.msk [vmem:[%s219] sm:$0xf] %vm5280, %v5216
      %5282 = vst.msk [vmem:[%s219 + $0x4] sm:$0xf] %vm5280, %v5217
      %5283 = vst.msk [vmem:[%s219 + $0x8] sm:$0xf] %vm5280, %v5218
      %5284 = vst.msk [vmem:[%s219 + $0xc] sm:$0xf] %vm5280, %v5219
      %5285 = vst.msk [vmem:[%s219 + $0x10] sm:$0xf] %vm5280, %v5220
      %5286 = vst.msk [vmem:[%s219 + $0x14] sm:$0xf] %vm5280, %v5221
      %5287 = vst.msk [vmem:[%s219 + $0x18] sm:$0xf] %vm5280, %v5222
      %5288 = vst.msk [vmem:[%s219 + $0x1c] sm:$0xf] %vm5280, %v5223
      %5289 = vst.msk [vmem:[%s219 + $0x20] sm:$0xf] %vm5280, %v5224
      %5290 = vst.msk [vmem:[%s219 + $0x24] sm:$0xf] %vm5280, %v5225
      %5291 = vst.msk [vmem:[%s219 + $0x28] sm:$0xf] %vm5280, %v5226
      %5292 = vst.msk [vmem:[%s219 + $0x2c] sm:$0xf] %vm5280, %v5227
      %5293 = vst.msk [vmem:[%s219 + $0x30] sm:$0xf] %vm5280, %v5228
      %5294 = vst.msk [vmem:[%s219 + $0x34] sm:$0xf] %vm5280, %v5229
      %5295 = vst.msk [vmem:[%s219 + $0x38] sm:$0xf] %vm5280, %v5230
      %5296 = vst.msk [vmem:[%s219 + $0x3c] sm:$0xf] %vm5280, %v5231
      %5297 = vst.msk [vmem:[%s219 + $0x40] sm:$0xf] %vm5280, %v5232
      %5298 = vst.msk [vmem:[%s219 + $0x44] sm:$0xf] %vm5280, %v5233
      %5299 = vst.msk [vmem:[%s219 + $0x48] sm:$0xf] %vm5280, %v5234
      %5300 = vst.msk [vmem:[%s219 + $0x4c] sm:$0xf] %vm5280, %v5235
      %5301 = vst.msk [vmem:[%s219 + $0x50] sm:$0xf] %vm5280, %v5236
      %5302 = vst.msk [vmem:[%s219 + $0x54] sm:$0xf] %vm5280, %v5237
      %5303 = vst.msk [vmem:[%s219 + $0x58] sm:$0xf] %vm5280, %v5238
      %5304 = vst.msk [vmem:[%s219 + $0x5c] sm:$0xf] %vm5280, %v5239
      %5305 = vst.msk [vmem:[%s219 + $0x60] sm:$0xf] %vm5280, %v5240
      %5306 = vst.msk [vmem:[%s219 + $0x64] sm:$0xf] %vm5280, %v5241
      %5307 = vst.msk [vmem:[%s219 + $0x68] sm:$0xf] %vm5280, %v5242
      %5308 = vst.msk [vmem:[%s219 + $0x6c] sm:$0xf] %vm5280, %v5243
      %5309 = vst.msk [vmem:[%s219 + $0x70] sm:$0xf] %vm5280, %v5244
      %5310 = vst.msk [vmem:[%s219 + $0x74] sm:$0xf] %vm5280, %v5245
      %5311 = vst.msk [vmem:[%s219 + $0x78] sm:$0xf] %vm5280, %v5246
      %5312 = vst.msk [vmem:[%s219 + $0x7c] sm:$0xf] %vm5280, %v5247
      %s5313 = smul.u32 32, %s20
      %p5314 = scmp.lt.s32.totalorder %s19, 1
      %s5315 = scalar_select %p5314, %s19, 1
      %p5316 = scmp.lt.s32.totalorder %s5313, 31
      %s5317 = scalar_select %p5316, %s5313, 31
      %s5318 = smul.addr %s5315, 32
      %s5319 = sadd.s32 %s5317, %s5318
      %s5320 = smul.addr %s5319, 4
      %s5321 = scalar_lea.vmem %s4, %s5320
      // Predicated region
      $region37: #{conv_block_attention_forward.4} parent=35 // pred_check
        %p5322 = pneg %p136
      $region38: #{conv_block_attention_forward.4} parent=35 // pred_check_branch
        %5324 = sbr.rel (%p5322) target = $region40
      $region39: #{conv_block_attention_forward.4} parent=35 // pred_region
        %s5325 = smul.u32 32, %s20
      $region40: #{conv_block_attention_forward.4} parent=35 // pred_fallthru
        _
    $region36: #{conv_block_attention_forward.4} parent=5 // pred_fallthru
      _
    %p5326 = scmp.le.s32.totalorder 2, %s10
    // Predicated region
    $region41: #{conv_block_attention_forward.4} parent=5 // pred_check
      %p5327 = pneg %p5326
    $region42: #{conv_block_attention_forward.4} parent=5 // pred_check_branch
      %5329 = sbr.rel (%p5327) target = $region44
    $region43: #{conv_block_attention_forward.4} parent=5 // pred_region
      %s5330 = ssub.s32 %s10, 2
      // Predicated region
      $region45: #{conv_block_attention_forward.4} parent=43 // pred_check
        %p5331 = pneg %p142
      $region46: #{conv_block_attention_forward.4} parent=43 // pred_check_branch
        %5333 = sbr.rel (%p5331) target = $region48
      $region47: #{conv_block_attention_forward.4} parent=43 // pred_region
        %s5334 = smul.u32 32, %s22
        %p5335 = scmp.lt.s32.totalorder %s21, 1
        %s5336 = scalar_select %p5335, %s21, 1
        %p5337 = scmp.lt.s32.totalorder %s5334, 31
        %s5338 = scalar_select %p5337, %s5334, 31
        %s5339 = smul.addr %s5336, 32
        %s5340 = sadd.s32 %s5338, %s5339
        %s5341 = smul.addr %s5340, 4
        %s5342 = scalar_lea.vmem %s4, %s5341
      $region48: #{conv_block_attention_forward.4} parent=43 // pred_fallthru
        _
    $region44: #{conv_block_attention_forward.4} parent=5 // pred_fallthru
      _
  $region6: #{conv_block_attention_forward.4} parent=0 // loop_footer
    %s14 = sadd.s32 1, %s10
  $region7: #{conv_block_attention_forward.4} parent=0 // loop_footer_branch
    %9 = sbr.rel target = $region3
  $region8: #{conv_block_attention_forward.4} parent=0 // loop_exit
    _

</llo_original>
